<compile_context>
chip_gen: v6e
topology: v6e:2x2x1
jax: 0.10.0
libtpu: 0.0.40
codegen_flags: <defaults>
</compile_context>

<pallas_src>
import jax
import jax.numpy as jnp
from jax.experimental import pallas as pl
from jax.experimental.pallas import tpu as pltpu

EPS = 1e-5
VMEM_LIMIT_BYTES = 32 * 1024 * 1024   # sized against v7x's 64 MiB physical VMEM


# --------------------------- in-kernel helpers -------------------------------
def _zero_border(pad_ref, H, W, C):
    """Zero only the 1-pixel border of the (H+2, W+2, C) pad scratch."""
    pad_ref[0:1, :, :] = jnp.zeros((1, W + 2, C), jnp.float32)
    pad_ref[H + 1:H + 2, :, :] = jnp.zeros((1, W + 2, C), jnp.float32)
    pad_ref[:, 0:1, :] = jnp.zeros((H + 2, 1, C), jnp.float32)
    pad_ref[:, W + 1:W + 2, :] = jnp.zeros((H + 2, 1, C), jnp.float32)


def _conv3x3_mxu(pad_ref, w_ref, H, W, Cin, Cout):
    """3x3 conv as 9 MXU matmuls over a zero-padded (H+2, W+2, Cin) scratch."""
    acc = jnp.zeros((H * W, Cout), jnp.float32)
    for ky in range(3):                     # 9-tap static unroll (Cin-independent)
        for kx in range(3):
            win = pad_ref[ky:ky + H, kx:kx + W, :].reshape(H * W, Cin)
            acc = acc + jnp.dot(win, w_ref[ky, kx],
                                preferred_element_type=jnp.float32)
    return acc                              # (H*W, Cout), f32


# ------------------------------- kernels -------------------------------------
def _conv1_stats_kernel(x_ref, w1_ref, y1_ref, st_ref, pad_ref):
    # x_ref  : (H, W, Cin)     one image (N squeezed out by BlockSpec)
    # w1_ref : (3, 3, Cin, Cout)
    # y1_ref : (H, W, Cout)    conv1 output (pre-BN) -> HBM intermediate
    # st_ref : (2, Cout)       per-image [sum, sum of squares] of conv1 output
    # pad_ref: (H+2, W+2, Cin) VMEM scratch
    H, W, Cin = x_ref.shape
    Cout = w1_ref.shape[3]

    _zero_border(pad_ref, H, W, Cin)
    pad_ref[1:H + 1, 1:W + 1, :] = x_ref[...]

    acc = _conv3x3_mxu(pad_ref, w1_ref, H, W, Cin, Cout)

    y1_ref[...] = acc.reshape(H, W, Cout)
    st_ref[0:1, :] = jnp.sum(acc, axis=0, keepdims=True)
    st_ref[1:2, :] = jnp.sum(acc * acc, axis=0, keepdims=True)


def _bn1_relu_conv2_stats_kernel(y1_ref, s1_ref, w2_ref, y2_ref, st_ref,
                                 pad_ref):
    # y1_ref : (H, W, C)   conv1 output
    # s1_ref : (2, C)      bn1 [scale, shift] (full-batch stats, precomputed)
    # w2_ref : (3, 3, C, C)
    # y2_ref : (H, W, C)   conv2 output (pre-BN)
    # st_ref : (2, C)      per-image [sum, sum of squares] of conv2 output
    # pad_ref: (H+2, W+2, C) VMEM scratch
    H, W, C = y1_ref.shape

    scale = s1_ref[0:1, :].reshape(1, 1, C)
    shift = s1_ref[1:2, :].reshape(1, 1, C)
    h = jnp.maximum(y1_ref[...] * scale + shift, 0.0)    # fused bn1 + relu

    _zero_border(pad_ref, H, W, C)
    pad_ref[1:H + 1, 1:W + 1, :] = h

    acc = _conv3x3_mxu(pad_ref, w2_ref, H, W, C, C)

    y2_ref[...] = acc.reshape(H, W, C)
    st_ref[0:1, :] = jnp.sum(acc, axis=0, keepdims=True)
    st_ref[1:2, :] = jnp.sum(acc * acc, axis=0, keepdims=True)


def _bn2_residual_relu_kernel(y2_ref, x_ref, s2_ref, out_ref):
    # y2_ref : (H, W, C)  conv2 output; x_ref: (H, W, C) residual input
    # s2_ref : (2, C)     bn2 [scale, shift]
    H, W, C = y2_ref.shape
    scale = s2_ref[0:1, :].reshape(1, 1, C)
    shift = s2_ref[1:2, :].reshape(1, 1, C)
    out_ref[...] = jnp.maximum(y2_ref[...] * scale + shift + x_ref[...], 0.0)


# ------------------------------- wrapper --------------------------------------
def residual_block(x_nchw, w1_oihw, w2_oihw, g1, b1, g2, b2):
    """Forward pass of ResidualBlock (stride=1, downsample=None), NCHW API."""
    N, Cin, H, W = x_nchw.shape
    Cout = w1_oihw.shape[0]
    count = float(N * H * W)

    # NCHW -> NHWC (channels on lanes), OIHW -> HWIO.
    x = jnp.transpose(x_nchw, (0, 2, 3, 1)).astype(jnp.float32)
    w1 = jnp.transpose(w1_oihw, (2, 3, 1, 0)).astype(jnp.float32)
    w2 = jnp.transpose(w2_oihw, (2, 3, 1, 0)).astype(jnp.float32)

    cparams = pltpu.CompilerParams(
        dimension_semantics=("parallel",),        # batch axis -> v7x's 2 TCs
        vmem_limit_bytes=VMEM_LIMIT_BYTES)

    img = lambda c: pl.BlockSpec((None, H, W, c), lambda n: (n, 0, 0, 0))
    stat = lambda c: pl.BlockSpec((None, 2, c), lambda n: (n, 0, 0))
    wspec = lambda ci, co: pl.BlockSpec((3, 3, ci, co), lambda n: (0, 0, 0, 0))
    small = lambda c: pl.BlockSpec((2, c), lambda n: (0, 0))

    def bn_scale_shift(stats, gamma, beta):
        # stats: (N, 2, C) per-image partials -> full-batch training-mode BN.
        tot = jnp.sum(stats, axis=0)                        # (2, C)
        mean = tot[0] / count
        var = tot[1] / count - mean * mean                  # biased variance
        scale = gamma.astype(jnp.float32) * jax.lax.rsqrt(var + EPS)
        shift = beta.astype(jnp.float32) - mean * scale
        return jnp.stack([scale, shift], axis=0)            # (2, C)

    # ---- pass 1: conv1 (MXU) + per-image statistics --------------------------
    y1, st1 = pl.pallas_call(
        _conv1_stats_kernel,
        grid=(N,),
        in_specs=[img(Cin), wspec(Cin, Cout)],
        out_specs=[img(Cout), stat(Cout)],
        out_shape=[jax.ShapeDtypeStruct((N, H, W, Cout), jnp.float32),
                   jax.ShapeDtypeStruct((N, 2, Cout), jnp.float32)],
        scratch_shapes=[pltpu.VMEM((H + 2, W + 2, Cin), jnp.float32)],
        compiler_params=cparams,
    )(x, w1)
    s1 = bn_scale_shift(st1, g1, b1)

    # ---- pass 2: bn1+relu fused into conv2 (MXU) + per-image statistics ------
    y2, st2 = pl.pallas_call(
        _bn1_relu_conv2_stats_kernel,
        grid=(N,),
        in_specs=[img(Cout), small(Cout), wspec(Cout, Cout)],
        out_specs=[img(Cout), stat(Cout)],
        out_shape=[jax.ShapeDtypeStruct((N, H, W, Cout), jnp.float32),
                   jax.ShapeDtypeStruct((N, 2, Cout), jnp.float32)],
        scratch_shapes=[pltpu.VMEM((H + 2, W + 2, Cout), jnp.float32)],
        compiler_params=cparams,
    )(y1, s1, w2)
    s2 = bn_scale_shift(st2, g2, b2)

    # ---- pass 3: bn2 + residual add + relu (elementwise) ----------------------
    out_nhwc = pl.pallas_call(
        _bn2_residual_relu_kernel,
        grid=(N,),
        in_specs=[img(Cout), img(Cin), small(Cout)],
        out_specs=img(Cout),
        out_shape=jax.ShapeDtypeStruct((N, H, W, Cout), jnp.float32),
        compiler_params=cparams,
    )(y2, x, s2)

    return jnp.transpose(out_nhwc, (0, 3, 1, 2))             # NHWC -> NCHW


# ---------------- pure-JAX reference (mirrors the PyTorch forward) ------------
def _reference(x, w1, w2, g1, b1, g2, b2):
    def conv(v, w):
        return jax.lax.conv_general_dilated(
            v, w, window_strides=(1, 1), padding=((1, 1), (1, 1)),
            dimension_numbers=("NCHW", "OIHW", "NCHW"),
            precision=jax.lax.Precision.HIGHEST)

    def bn(v, g, b):
        mean = jnp.mean(v, axis=(0, 2, 3), keepdims=True)
        var = jnp.mean((v - mean) ** 2, axis=(0, 2, 3), keepdims=True)
        return ((v - mean) * jax.lax.rsqrt(var + EPS)
                * g.reshape(1, -1, 1, 1) + b.reshape(1, -1, 1, 1))

    h = jax.nn.relu(bn(conv(x, w1), g1, b1))
    h = bn(conv(h, w2), g2, b2)
    return jax.nn.relu(h + x)


if __name__ == "__main__":
    key = jax.random.PRNGKey(0)
    k1, k2, k3, k4, k5, k6, k7 = jax.random.split(key, 7)

    N, C, H, W = 2, 4, 16, 16   # in_channels == out_channels, stride=1
    x = jax.random.normal(k1, (N, C, H, W), jnp.float32)
    w1 = 0.3 * jax.random.normal(k2, (C, C, 3, 3), jnp.float32)   # conv1 (no bias)
    w2 = 0.3 * jax.random.normal(k3, (C, C, 3, 3), jnp.float32)   # conv2 (no bias)
    g1 = 1.0 + 0.1 * jax.random.normal(k4, (C,), jnp.float32)     # bn1 gamma
    b1 = 0.1 * jax.random.normal(k5, (C,), jnp.float32)           # bn1 beta
    g2 = 1.0 + 0.1 * jax.random.normal(k6, (C,), jnp.float32)     # bn2 gamma
    b2 = 0.1 * jax.random.normal(k7, (C,), jnp.float32)           # bn2 beta

    out = jax.jit(residual_block)(x, w1, w2, g1, b1, g2, b2)
    jax.block_until_ready(out)

    ref = _reference(x, w1, w2, g1, b1, g2, b2)
    err = float(jnp.max(jnp.abs(out - ref)))
    assert out.shape == (N, C, H, W)
    assert err < 2e-3, f"max abs error vs reference: {err}"
    print("KERNEL_OK")
</pallas_src>

<mosaic_0001>
module attributes {stable_mosaic.version = 11 : i64} {
  func.func @_conv1_stats_kernel(%arg0: i32, %arg1: memref<1x16x16x4xf32, #tpu.memory_space<vmem>>, %arg2: memref<3x3x4x4xf32, #tpu.memory_space<vmem>>, %arg3: memref<1x16x16x4xf32, #tpu.memory_space<vmem>>, %arg4: memref<1x2x4xf32, #tpu.memory_space<vmem>>, %arg5: memref<18x18x4xf32, #tpu.memory_space<vmem>>) attributes {dimension_semantics = [#tpu.dimension_semantics<parallel>], iteration_bounds = array<i64: 2>, scalar_prefetch = 0 : i64, scratch_operands = 1 : i64, tpu.core_type = #tpu.core_type<tc>, window_params = [{transform_indices = @transform_0, window_bounds = array<i64: 1, 16, 16, 4>}, {pipeline_mode = #tpu.pipeline_mode<synchronous>, transform_indices = @transform_1, window_bounds = array<i64: 3, 3, 4, 4>}, {transform_indices = @transform_2, window_bounds = array<i64: 1, 16, 16, 4>}, {transform_indices = @transform_3, window_bounds = array<i64: 1, 2, 4>}]} {
    %cst = arith.constant 0.000000e+00 : f32
    %0 = vector.broadcast %cst : f32 to vector<1x18x4xf32>
    %c0 = arith.constant 0 : index
    %c0_0 = arith.constant 0 : index
    %c0_1 = arith.constant 0 : index
    %1 = vector.load %arg5[%c0, %c0_0, %c0_1] : memref<18x18x4xf32, #tpu.memory_space<vmem>>, vector<1x18x4xf32>
    tpu.vector_store %arg5[%c0, %c0_0, %c0_1], %0 {strides = array<i32>} : memref<18x18x4xf32, #tpu.memory_space<vmem>>, vector<1x18x4xf32>,
    %cst_2 = arith.constant 0.000000e+00 : f32
    %2 = vector.broadcast %cst_2 : f32 to vector<1x18x4xf32>
    %c17 = arith.constant 17 : index
    %c0_3 = arith.constant 0 : index
    %c0_4 = arith.constant 0 : index
    %3 = vector.load %arg5[%c17, %c0_3, %c0_4] : memref<18x18x4xf32, #tpu.memory_space<vmem>>, vector<1x18x4xf32>
    tpu.vector_store %arg5[%c17, %c0_3, %c0_4], %2 {strides = array<i32>} : memref<18x18x4xf32, #tpu.memory_space<vmem>>, vector<1x18x4xf32>,
    %cst_5 = arith.constant 0.000000e+00 : f32
    %4 = vector.broadcast %cst_5 : f32 to vector<18x1x4xf32>
    %c0_6 = arith.constant 0 : index
    %c0_7 = arith.constant 0 : index
    %c0_8 = arith.constant 0 : index
    %5 = vector.load %arg5[%c0_6, %c0_7, %c0_8] : memref<18x18x4xf32, #tpu.memory_space<vmem>>, vector<18x1x4xf32>
    tpu.vector_store %arg5[%c0_6, %c0_7, %c0_8], %4 {strides = array<i32>} : memref<18x18x4xf32, #tpu.memory_space<vmem>>, vector<18x1x4xf32>,
    %cst_9 = arith.constant 0.000000e+00 : f32
    %6 = vector.broadcast %cst_9 : f32 to vector<18x1x4xf32>
    %c0_10 = arith.constant 0 : index
    %c17_11 = arith.constant 17 : index
    %c0_12 = arith.constant 0 : index
    %7 = vector.load %arg5[%c0_10, %c17_11, %c0_12] : memref<18x18x4xf32, #tpu.memory_space<vmem>>, vector<18x1x4xf32>
    tpu.vector_store %arg5[%c0_10, %c17_11, %c0_12], %6 {strides = array<i32>} : memref<18x18x4xf32, #tpu.memory_space<vmem>>, vector<18x1x4xf32>,
    %c0_13 = arith.constant 0 : index
    %c0_14 = arith.constant 0 : index
    %c0_15 = arith.constant 0 : index
    %c0_16 = arith.constant 0 : index
    %8 = vector.load %arg1[%c0_13, %c0_14, %c0_15, %c0_16] : memref<1x16x16x4xf32, #tpu.memory_space<vmem>>, vector<1x16x16x4xf32>
    %9 = vector.shape_cast %8 : vector<1x16x16x4xf32> to vector<16x16x4xf32>
    %c1 = arith.constant 1 : index
    %c1_17 = arith.constant 1 : index
    %c0_18 = arith.constant 0 : index
    %10 = vector.load %arg5[%c1, %c1_17, %c0_18] : memref<18x18x4xf32, #tpu.memory_space<vmem>>, vector<16x16x4xf32>
    tpu.vector_store %arg5[%c1, %c1_17, %c0_18], %9 {strides = array<i32>} : memref<18x18x4xf32, #tpu.memory_space<vmem>>, vector<16x16x4xf32>,
    %cst_19 = arith.constant 0.000000e+00 : f32
    %11 = vector.broadcast %cst_19 : f32 to vector<256x4xf32>
    %c0_20 = arith.constant 0 : index
    %c0_21 = arith.constant 0 : index
    %c0_22 = arith.constant 0 : index
    %12 = vector.load %arg5[%c0_20, %c0_21, %c0_22] : memref<18x18x4xf32, #tpu.memory_space<vmem>>, vector<16x16x4xf32>
    %13 = vector.shape_cast %12 : vector<16x16x4xf32> to vector<256x4xf32>
    %c0_23 = arith.constant 0 : index
    %c0_24 = arith.constant 0 : index
    %c0_25 = arith.constant 0 : index
    %c0_26 = arith.constant 0 : index
    %14 = vector.load %arg2[%c0_23, %c0_24, %c0_25, %c0_26] : memref<3x3x4x4xf32, #tpu.memory_space<vmem>>, vector<1x1x4x4xf32>
    %15 = vector.shape_cast %14 : vector<1x1x4x4xf32> to vector<4x4xf32>
    %cst_27 = arith.constant dense<0.000000e+00> : vector<256x4xf32>
    %16 = tpu.matmul %13, %15, %cst_27 {dimension_numbers = #tpu.dot_dimension_numbers<[1], [0], [0], [1], [0, 0, 1, 1], [], []>} : vector<256x4xf32>, vector<4x4xf32>, vector<256x4xf32> -> vector<256x4xf32>
    %17 = arith.addf %11, %16 : vector<256x4xf32>
    %c0_28 = arith.constant 0 : index
    %c1_29 = arith.constant 1 : index
    %c0_30 = arith.constant 0 : index
    %18 = vector.load %arg5[%c0_28, %c1_29, %c0_30] : memref<18x18x4xf32, #tpu.memory_space<vmem>>, vector<16x16x4xf32>
    %19 = vector.shape_cast %18 : vector<16x16x4xf32> to vector<256x4xf32>
    %c0_31 = arith.constant 0 : index
    %c1_32 = arith.constant 1 : index
    %c0_33 = arith.constant 0 : index
    %c0_34 = arith.constant 0 : index
    %20 = vector.load %arg2[%c0_31, %c1_32, %c0_33, %c0_34] : memref<3x3x4x4xf32, #tpu.memory_space<vmem>>, vector<1x1x4x4xf32>
    %21 = vector.shape_cast %20 : vector<1x1x4x4xf32> to vector<4x4xf32>
    %cst_35 = arith.constant dense<0.000000e+00> : vector<256x4xf32>
    %22 = tpu.matmul %19, %21, %cst_35 {dimension_numbers = #tpu.dot_dimension_numbers<[1], [0], [0], [1], [0, 0, 1, 1], [], []>} : vector<256x4xf32>, vector<4x4xf32>, vector<256x4xf32> -> vector<256x4xf32>
    %23 = arith.addf %17, %22 : vector<256x4xf32>
    %c0_36 = arith.constant 0 : index
    %c2 = arith.constant 2 : index
    %c0_37 = arith.constant 0 : index
    %24 = vector.load %arg5[%c0_36, %c2, %c0_37] : memref<18x18x4xf32, #tpu.memory_space<vmem>>, vector<16x16x4xf32>
    %25 = vector.shape_cast %24 : vector<16x16x4xf32> to vector<256x4xf32>
    %c0_38 = arith.constant 0 : index
    %c2_39 = arith.constant 2 : index
    %c0_40 = arith.constant 0 : index
    %c0_41 = arith.constant 0 : index
    %26 = vector.load %arg2[%c0_38, %c2_39, %c0_40, %c0_41] : memref<3x3x4x4xf32, #tpu.memory_space<vmem>>, vector<1x1x4x4xf32>
    %27 = vector.shape_cast %26 : vector<1x1x4x4xf32> to vector<4x4xf32>
    %cst_42 = arith.constant dense<0.000000e+00> : vector<256x4xf32>
    %28 = tpu.matmul %25, %27, %cst_42 {dimension_numbers = #tpu.dot_dimension_numbers<[1], [0], [0], [1], [0, 0, 1, 1], [], []>} : vector<256x4xf32>, vector<4x4xf32>, vector<256x4xf32> -> vector<256x4xf32>
    %29 = arith.addf %23, %28 : vector<256x4xf32>
    %c1_43 = arith.constant 1 : index
    %c0_44 = arith.constant 0 : index
    %c0_45 = arith.constant 0 : index
    %30 = vector.load %arg5[%c1_43, %c0_44, %c0_45] : memref<18x18x4xf32, #tpu.memory_space<vmem>>, vector<16x16x4xf32>
    %31 = vector.shape_cast %30 : vector<16x16x4xf32> to vector<256x4xf32>
    %c1_46 = arith.constant 1 : index
    %c0_47 = arith.constant 0 : index
    %c0_48 = arith.constant 0 : index
    %c0_49 = arith.constant 0 : index
    %32 = vector.load %arg2[%c1_46, %c0_47, %c0_48, %c0_49] : memref<3x3x4x4xf32, #tpu.memory_space<vmem>>, vector<1x1x4x4xf32>
    %33 = vector.shape_cast %32 : vector<1x1x4x4xf32> to vector<4x4xf32>
    %cst_50 = arith.constant dense<0.000000e+00> : vector<256x4xf32>
    %34 = tpu.matmul %31, %33, %cst_50 {dimension_numbers = #tpu.dot_dimension_numbers<[1], [0], [0], [1], [0, 0, 1, 1], [], []>} : vector<256x4xf32>, vector<4x4xf32>, vector<256x4xf32> -> vector<256x4xf32>
    %35 = arith.addf %29, %34 : vector<256x4xf32>
    %c1_51 = arith.constant 1 : index
    %c1_52 = arith.constant 1 : index
    %c0_53 = arith.constant 0 : index
    %36 = vector.load %arg5[%c1_51, %c1_52, %c0_53] : memref<18x18x4xf32, #tpu.memory_space<vmem>>, vector<16x16x4xf32>
    %37 = vector.shape_cast %36 : vector<16x16x4xf32> to vector<256x4xf32>
    %c1_54 = arith.constant 1 : index
    %c1_55 = arith.constant 1 : index
    %c0_56 = arith.constant 0 : index
    %c0_57 = arith.constant 0 : index
    %38 = vector.load %arg2[%c1_54, %c1_55, %c0_56, %c0_57] : memref<3x3x4x4xf32, #tpu.memory_space<vmem>>, vector<1x1x4x4xf32>
    %39 = vector.shape_cast %38 : vector<1x1x4x4xf32> to vector<4x4xf32>
    %cst_58 = arith.constant dense<0.000000e+00> : vector<256x4xf32>
    %40 = tpu.matmul %37, %39, %cst_58 {dimension_numbers = #tpu.dot_dimension_numbers<[1], [0], [0], [1], [0, 0, 1, 1], [], []>} : vector<256x4xf32>, vector<4x4xf32>, vector<256x4xf32> -> vector<256x4xf32>
    %41 = arith.addf %35, %40 : vector<256x4xf32>
    %c1_59 = arith.constant 1 : index
    %c2_60 = arith.constant 2 : index
    %c0_61 = arith.constant 0 : index
    %42 = vector.load %arg5[%c1_59, %c2_60, %c0_61] : memref<18x18x4xf32, #tpu.memory_space<vmem>>, vector<16x16x4xf32>
    %43 = vector.shape_cast %42 : vector<16x16x4xf32> to vector<256x4xf32>
    %c1_62 = arith.constant 1 : index
    %c2_63 = arith.constant 2 : index
    %c0_64 = arith.constant 0 : index
    %c0_65 = arith.constant 0 : index
    %44 = vector.load %arg2[%c1_62, %c2_63, %c0_64, %c0_65] : memref<3x3x4x4xf32, #tpu.memory_space<vmem>>, vector<1x1x4x4xf32>
    %45 = vector.shape_cast %44 : vector<1x1x4x4xf32> to vector<4x4xf32>
    %cst_66 = arith.constant dense<0.000000e+00> : vector<256x4xf32>
    %46 = tpu.matmul %43, %45, %cst_66 {dimension_numbers = #tpu.dot_dimension_numbers<[1], [0], [0], [1], [0, 0, 1, 1], [], []>} : vector<256x4xf32>, vector<4x4xf32>, vector<256x4xf32> -> vector<256x4xf32>
    %47 = arith.addf %41, %46 : vector<256x4xf32>
    %c2_67 = arith.constant 2 : index
    %c0_68 = arith.constant 0 : index
    %c0_69 = arith.constant 0 : index
    %48 = vector.load %arg5[%c2_67, %c0_68, %c0_69] : memref<18x18x4xf32, #tpu.memory_space<vmem>>, vector<16x16x4xf32>
    %49 = vector.shape_cast %48 : vector<16x16x4xf32> to vector<256x4xf32>
    %c2_70 = arith.constant 2 : index
    %c0_71 = arith.constant 0 : index
    %c0_72 = arith.constant 0 : index
    %c0_73 = arith.constant 0 : index
    %50 = vector.load %arg2[%c2_70, %c0_71, %c0_72, %c0_73] : memref<3x3x4x4xf32, #tpu.memory_space<vmem>>, vector<1x1x4x4xf32>
    %51 = vector.shape_cast %50 : vector<1x1x4x4xf32> to vector<4x4xf32>
    %cst_74 = arith.constant dense<0.000000e+00> : vector<256x4xf32>
    %52 = tpu.matmul %49, %51, %cst_74 {dimension_numbers = #tpu.dot_dimension_numbers<[1], [0], [0], [1], [0, 0, 1, 1], [], []>} : vector<256x4xf32>, vector<4x4xf32>, vector<256x4xf32> -> vector<256x4xf32>
    %53 = arith.addf %47, %52 : vector<256x4xf32>
    %c2_75 = arith.constant 2 : index
    %c1_76 = arith.constant 1 : index
    %c0_77 = arith.constant 0 : index
    %54 = vector.load %arg5[%c2_75, %c1_76, %c0_77] : memref<18x18x4xf32, #tpu.memory_space<vmem>>, vector<16x16x4xf32>
    %55 = vector.shape_cast %54 : vector<16x16x4xf32> to vector<256x4xf32>
    %c2_78 = arith.constant 2 : index
    %c1_79 = arith.constant 1 : index
    %c0_80 = arith.constant 0 : index
    %c0_81 = arith.constant 0 : index
    %56 = vector.load %arg2[%c2_78, %c1_79, %c0_80, %c0_81] : memref<3x3x4x4xf32, #tpu.memory_space<vmem>>, vector<1x1x4x4xf32>
    %57 = vector.shape_cast %56 : vector<1x1x4x4xf32> to vector<4x4xf32>
    %cst_82 = arith.constant dense<0.000000e+00> : vector<256x4xf32>
    %58 = tpu.matmul %55, %57, %cst_82 {dimension_numbers = #tpu.dot_dimension_numbers<[1], [0], [0], [1], [0, 0, 1, 1], [], []>} : vector<256x4xf32>, vector<4x4xf32>, vector<256x4xf32> -> vector<256x4xf32>
    %59 = arith.addf %53, %58 : vector<256x4xf32>
    %c2_83 = arith.constant 2 : index
    %c2_84 = arith.constant 2 : index
    %c0_85 = arith.constant 0 : index
    %60 = vector.load %arg5[%c2_83, %c2_84, %c0_85] : memref<18x18x4xf32, #tpu.memory_space<vmem>>, vector<16x16x4xf32>
    %61 = vector.shape_cast %60 : vector<16x16x4xf32> to vector<256x4xf32>
    %c2_86 = arith.constant 2 : index
    %c2_87 = arith.constant 2 : index
    %c0_88 = arith.constant 0 : index
    %c0_89 = arith.constant 0 : index
    %62 = vector.load %arg2[%c2_86, %c2_87, %c0_88, %c0_89] : memref<3x3x4x4xf32, #tpu.memory_space<vmem>>, vector<1x1x4x4xf32>
    %63 = vector.shape_cast %62 : vector<1x1x4x4xf32> to vector<4x4xf32>
    %cst_90 = arith.constant dense<0.000000e+00> : vector<256x4xf32>
    %64 = tpu.matmul %61, %63, %cst_90 {dimension_numbers = #tpu.dot_dimension_numbers<[1], [0], [0], [1], [0, 0, 1, 1], [], []>} : vector<256x4xf32>, vector<4x4xf32>, vector<256x4xf32> -> vector<256x4xf32>
    %65 = arith.addf %59, %64 : vector<256x4xf32>
    %66 = vector.shape_cast %65 : vector<256x4xf32> to vector<16x16x4xf32>
    %c0_91 = arith.constant 0 : index
    %c0_92 = arith.constant 0 : index
    %c0_93 = arith.constant 0 : index
    %c0_94 = arith.constant 0 : index
    %67 = vector.load %arg3[%c0_91, %c0_92, %c0_93, %c0_94] : memref<1x16x16x4xf32, #tpu.memory_space<vmem>>, vector<1x16x16x4xf32>
    %68 = vector.shape_cast %67 : vector<1x16x16x4xf32> to vector<16x16x4xf32>
    %69 = vector.shape_cast %66 : vector<16x16x4xf32> to vector<1x16x16x4xf32>
    tpu.vector_store %arg3[%c0_91, %c0_92, %c0_93, %c0_94], %69 {strides = array<i32>} : memref<1x16x16x4xf32, #tpu.memory_space<vmem>>, vector<1x16x16x4xf32>,
    %cst_95 = arith.constant dense<0.000000e+00> : vector<4xf32>
    %70 = vector.multi_reduction <add>, %65, %cst_95 [0] : vector<256x4xf32> to vector<4xf32>
    %71 = vector.shape_cast %70 : vector<4xf32> to vector<1x4xf32>
    %c0_96 = arith.constant 0 : index
    %c0_97 = arith.constant 0 : index
    %c0_98 = arith.constant 0 : index
    %72 = vector.load %arg4[%c0_96, %c0_97, %c0_98] : memref<1x2x4xf32, #tpu.memory_space<vmem>>, vector<1x1x4xf32>
    %73 = vector.shape_cast %72 : vector<1x1x4xf32> to vector<1x4xf32>
    %74 = vector.shape_cast %71 : vector<1x4xf32> to vector<1x1x4xf32>
    tpu.vector_store %arg4[%c0_96, %c0_97, %c0_98], %74 {strides = array<i32>} : memref<1x2x4xf32, #tpu.memory_space<vmem>>, vector<1x1x4xf32>,
    %75 = arith.mulf %65, %65 : vector<256x4xf32>
    %cst_99 = arith.constant dense<0.000000e+00> : vector<4xf32>
    %76 = vector.multi_reduction <add>, %75, %cst_99 [0] : vector<256x4xf32> to vector<4xf32>
    %77 = vector.shape_cast %76 : vector<4xf32> to vector<1x4xf32>
    %c0_100 = arith.constant 0 : index
    %c1_101 = arith.constant 1 : index
    %c0_102 = arith.constant 0 : index
    %78 = vector.load %arg4[%c0_100, %c1_101, %c0_102] : memref<1x2x4xf32, #tpu.memory_space<vmem>>, vector<1x1x4xf32>
    %79 = vector.shape_cast %78 : vector<1x1x4xf32> to vector<1x4xf32>
    %80 = vector.shape_cast %77 : vector<1x4xf32> to vector<1x1x4xf32>
    tpu.vector_store %arg4[%c0_100, %c1_101, %c0_102], %80 {strides = array<i32>} : memref<1x2x4xf32, #tpu.memory_space<vmem>>, vector<1x1x4xf32>,
    return
  }
  func.func @transform_0(%arg0: i32) -> (i32, i32, i32, i32) {
    %c0_i32 = arith.constant 0 : i32
    %c0_i32_0 = arith.constant 0 : i32
    %c0_i32_1 = arith.constant 0 : i32
    %c0_i32_2 = arith.constant 0 : i32
    return %arg0, %c0_i32, %c0_i32_0, %c0_i32_1 : i32, i32, i32, i32
  }
  func.func @transform_1(%arg0: i32) -> (i32, i32, i32, i32) {
    %c0_i32 = arith.constant 0 : i32
    %c0_i32_0 = arith.constant 0 : i32
    %c0_i32_1 = arith.constant 0 : i32
    %c0_i32_2 = arith.constant 0 : i32
    %c0_i32_3 = arith.constant 0 : i32
    return %c0_i32, %c0_i32_0, %c0_i32_1, %c0_i32_2 : i32, i32, i32, i32
  }
  func.func @transform_2(%arg0: i32) -> (i32, i32, i32, i32) {
    %c0_i32 = arith.constant 0 : i32
    %c0_i32_0 = arith.constant 0 : i32
    %c0_i32_1 = arith.constant 0 : i32
    %c0_i32_2 = arith.constant 0 : i32
    return %arg0, %c0_i32, %c0_i32_0, %c0_i32_1 : i32, i32, i32, i32
  }
  func.func @transform_3(%arg0: i32) -> (i32, i32, i32) {
    %c0_i32 = arith.constant 0 : i32
    %c0_i32_0 = arith.constant 0 : i32
    %c0_i32_1 = arith.constant 0 : i32
    return %arg0, %c0_i32, %c0_i32_0 : i32, i32, i32
  }
}

module attributes {stable_mosaic.version = 11 : i64} {
  func.func @_bn2_residual_relu_kernel(%arg0: i32, %arg1: memref<1x16x16x4xf32, #tpu.memory_space<vmem>>, %arg2: memref<1x16x16x4xf32, #tpu.memory_space<vmem>>, %arg3: memref<2x4xf32, #tpu.memory_space<vmem>>, %arg4: memref<1x16x16x4xf32, #tpu.memory_space<vmem>>) attributes {dimension_semantics = [#tpu.dimension_semantics<parallel>], iteration_bounds = array<i64: 2>, scalar_prefetch = 0 : i64, scratch_operands = 0 : i64, tpu.core_type = #tpu.core_type<tc>, window_params = [{transform_indices = @transform_0, window_bounds = array<i64: 1, 16, 16, 4>}, {transform_indices = @transform_1, window_bounds = array<i64: 1, 16, 16, 4>}, {pipeline_mode = #tpu.pipeline_mode<synchronous>, transform_indices = @transform_2, window_bounds = array<i64: 2, 4>}, {transform_indices = @transform_3, window_bounds = array<i64: 1, 16, 16, 4>}]} {
    %c0 = arith.constant 0 : index
    %c0_0 = arith.constant 0 : index
    %0 = vector.load %arg3[%c0, %c0_0] : memref<2x4xf32, #tpu.memory_space<vmem>>, vector<1x4xf32>
    %1 = vector.shape_cast %0 : vector<1x4xf32> to vector<1x1x4xf32>
    %c1 = arith.constant 1 : index
    %c0_1 = arith.constant 0 : index
    %2 = vector.load %arg3[%c1, %c0_1] : memref<2x4xf32, #tpu.memory_space<vmem>>, vector<1x4xf32>
    %3 = vector.shape_cast %2 : vector<1x4xf32> to vector<1x1x4xf32>
    %c0_2 = arith.constant 0 : index
    %c0_3 = arith.constant 0 : index
    %c0_4 = arith.constant 0 : index
    %c0_5 = arith.constant 0 : index
    %4 = vector.load %arg1[%c0_2, %c0_3, %c0_4, %c0_5] : memref<1x16x16x4xf32, #tpu.memory_space<vmem>>, vector<1x16x16x4xf32>
    %5 = vector.shape_cast %4 : vector<1x16x16x4xf32> to vector<16x16x4xf32>
    %6 = vector.broadcast %1 : vector<1x1x4xf32> to vector<16x16x4xf32>
    %7 = arith.mulf %5, %6 : vector<16x16x4xf32>
    %8 = vector.broadcast %3 : vector<1x1x4xf32> to vector<16x16x4xf32>
    %9 = arith.addf %7, %8 : vector<16x16x4xf32>
    %c0_6 = arith.constant 0 : index
    %c0_7 = arith.constant 0 : index
    %c0_8 = arith.constant 0 : index
    %c0_9 = arith.constant 0 : index
    %10 = vector.load %arg2[%c0_6, %c0_7, %c0_8, %c0_9] : memref<1x16x16x4xf32, #tpu.memory_space<vmem>>, vector<1x16x16x4xf32>
    %11 = vector.shape_cast %10 : vector<1x16x16x4xf32> to vector<16x16x4xf32>
    %12 = arith.addf %9, %11 : vector<16x16x4xf32>
    %cst = arith.constant 0.000000e+00 : f32
    %13 = vector.broadcast %cst : f32 to vector<16x16x4xf32>
    %14 = arith.maximumf %12, %13 : vector<16x16x4xf32>
    %c0_10 = arith.constant 0 : index
    %c0_11 = arith.constant 0 : index
    %c0_12 = arith.constant 0 : index
    %c0_13 = arith.constant 0 : index
    %15 = vector.load %arg4[%c0_10, %c0_11, %c0_12, %c0_13] : memref<1x16x16x4xf32, #tpu.memory_space<vmem>>, vector<1x16x16x4xf32>
    %16 = vector.shape_cast %15 : vector<1x16x16x4xf32> to vector<16x16x4xf32>
    %17 = vector.shape_cast %14 : vector<16x16x4xf32> to vector<1x16x16x4xf32>
    tpu.vector_store %arg4[%c0_10, %c0_11, %c0_12, %c0_13], %17 {strides = array<i32>} : memref<1x16x16x4xf32, #tpu.memory_space<vmem>>, vector<1x16x16x4xf32>,
    return
  }
  func.func @transform_0(%arg0: i32) -> (i32, i32, i32, i32) {
    %c0_i32 = arith.constant 0 : i32
    %c0_i32_0 = arith.constant 0 : i32
    %c0_i32_1 = arith.constant 0 : i32
    %c0_i32_2 = arith.constant 0 : i32
    return %arg0, %c0_i32, %c0_i32_0, %c0_i32_1 : i32, i32, i32, i32
  }
  func.func @transform_1(%arg0: i32) -> (i32, i32, i32, i32) {
    %c0_i32 = arith.constant 0 : i32
    %c0_i32_0 = arith.constant 0 : i32
    %c0_i32_1 = arith.constant 0 : i32
    %c0_i32_2 = arith.constant 0 : i32
    return %arg0, %c0_i32, %c0_i32_0, %c0_i32_1 : i32, i32, i32, i32
  }
  func.func @transform_2(%arg0: i32) -> (i32, i32) {
    %c0_i32 = arith.constant 0 : i32
    %c0_i32_0 = arith.constant 0 : i32
    %c0_i32_1 = arith.constant 0 : i32
    return %c0_i32, %c0_i32_0 : i32, i32
  }
  func.func @transform_3(%arg0: i32) -> (i32, i32, i32, i32) {
    %c0_i32 = arith.constant 0 : i32
    %c0_i32_0 = arith.constant 0 : i32
    %c0_i32_1 = arith.constant 0 : i32
    %c0_i32_2 = arith.constant 0 : i32
    return %arg0, %c0_i32, %c0_i32_0, %c0_i32_1 : i32, i32, i32, i32
  }
}

module attributes {stable_mosaic.version = 11 : i64} {
  func.func @_bn1_relu_conv2_stats_kernel(%arg0: i32, %arg1: memref<1x16x16x4xf32, #tpu.memory_space<vmem>>, %arg2: memref<2x4xf32, #tpu.memory_space<vmem>>, %arg3: memref<3x3x4x4xf32, #tpu.memory_space<vmem>>, %arg4: memref<1x16x16x4xf32, #tpu.memory_space<vmem>>, %arg5: memref<1x2x4xf32, #tpu.memory_space<vmem>>, %arg6: memref<18x18x4xf32, #tpu.memory_space<vmem>>) attributes {dimension_semantics = [#tpu.dimension_semantics<parallel>], iteration_bounds = array<i64: 2>, scalar_prefetch = 0 : i64, scratch_operands = 1 : i64, tpu.core_type = #tpu.core_type<tc>, window_params = [{transform_indices = @transform_0, window_bounds = array<i64: 1, 16, 16, 4>}, {pipeline_mode = #tpu.pipeline_mode<synchronous>, transform_indices = @transform_1, window_bounds = array<i64: 2, 4>}, {pipeline_mode = #tpu.pipeline_mode<synchronous>, transform_indices = @transform_2, window_bounds = array<i64: 3, 3, 4, 4>}, {transform_indices = @transform_3, window_bounds = array<i64: 1, 16, 16, 4>}, {transform_indices = @transform_4, window_bounds = array<i64: 1, 2, 4>}]} {
    %c0 = arith.constant 0 : index
    %c0_0 = arith.constant 0 : index
    %0 = vector.load %arg2[%c0, %c0_0] : memref<2x4xf32, #tpu.memory_space<vmem>>, vector<1x4xf32>
    %1 = vector.shape_cast %0 : vector<1x4xf32> to vector<1x1x4xf32>
    %c1 = arith.constant 1 : index
    %c0_1 = arith.constant 0 : index
    %2 = vector.load %arg2[%c1, %c0_1] : memref<2x4xf32, #tpu.memory_space<vmem>>, vector<1x4xf32>
    %3 = vector.shape_cast %2 : vector<1x4xf32> to vector<1x1x4xf32>
    %c0_2 = arith.constant 0 : index
    %c0_3 = arith.constant 0 : index
    %c0_4 = arith.constant 0 : index
    %c0_5 = arith.constant 0 : index
    %4 = vector.load %arg1[%c0_2, %c0_3, %c0_4, %c0_5] : memref<1x16x16x4xf32, #tpu.memory_space<vmem>>, vector<1x16x16x4xf32>
    %5 = vector.shape_cast %4 : vector<1x16x16x4xf32> to vector<16x16x4xf32>
    %6 = vector.broadcast %1 : vector<1x1x4xf32> to vector<16x16x4xf32>
    %7 = arith.mulf %5, %6 : vector<16x16x4xf32>
    %8 = vector.broadcast %3 : vector<1x1x4xf32> to vector<16x16x4xf32>
    %9 = arith.addf %7, %8 : vector<16x16x4xf32>
    %cst = arith.constant 0.000000e+00 : f32
    %10 = vector.broadcast %cst : f32 to vector<16x16x4xf32>
    %11 = arith.maximumf %9, %10 : vector<16x16x4xf32>
    %cst_6 = arith.constant 0.000000e+00 : f32
    %12 = vector.broadcast %cst_6 : f32 to vector<1x18x4xf32>
    %c0_7 = arith.constant 0 : index
    %c0_8 = arith.constant 0 : index
    %c0_9 = arith.constant 0 : index
    %13 = vector.load %arg6[%c0_7, %c0_8, %c0_9] : memref<18x18x4xf32, #tpu.memory_space<vmem>>, vector<1x18x4xf32>
    tpu.vector_store %arg6[%c0_7, %c0_8, %c0_9], %12 {strides = array<i32>} : memref<18x18x4xf32, #tpu.memory_space<vmem>>, vector<1x18x4xf32>,
    %cst_10 = arith.constant 0.000000e+00 : f32
    %14 = vector.broadcast %cst_10 : f32 to vector<1x18x4xf32>
    %c17 = arith.constant 17 : index
    %c0_11 = arith.constant 0 : index
    %c0_12 = arith.constant 0 : index
    %15 = vector.load %arg6[%c17, %c0_11, %c0_12] : memref<18x18x4xf32, #tpu.memory_space<vmem>>, vector<1x18x4xf32>
    tpu.vector_store %arg6[%c17, %c0_11, %c0_12], %14 {strides = array<i32>} : memref<18x18x4xf32, #tpu.memory_space<vmem>>, vector<1x18x4xf32>,
    %cst_13 = arith.constant 0.000000e+00 : f32
    %16 = vector.broadcast %cst_13 : f32 to vector<18x1x4xf32>
    %c0_14 = arith.constant 0 : index
    %c0_15 = arith.constant 0 : index
    %c0_16 = arith.constant 0 : index
    %17 = vector.load %arg6[%c0_14, %c0_15, %c0_16] : memref<18x18x4xf32, #tpu.memory_space<vmem>>, vector<18x1x4xf32>
    tpu.vector_store %arg6[%c0_14, %c0_15, %c0_16], %16 {strides = array<i32>} : memref<18x18x4xf32, #tpu.memory_space<vmem>>, vector<18x1x4xf32>,
    %cst_17 = arith.constant 0.000000e+00 : f32
    %18 = vector.broadcast %cst_17 : f32 to vector<18x1x4xf32>
    %c0_18 = arith.constant 0 : index
    %c17_19 = arith.constant 17 : index
    %c0_20 = arith.constant 0 : index
    %19 = vector.load %arg6[%c0_18, %c17_19, %c0_20] : memref<18x18x4xf32, #tpu.memory_space<vmem>>, vector<18x1x4xf32>
    tpu.vector_store %arg6[%c0_18, %c17_19, %c0_20], %18 {strides = array<i32>} : memref<18x18x4xf32, #tpu.memory_space<vmem>>, vector<18x1x4xf32>,
    %c1_21 = arith.constant 1 : index
    %c1_22 = arith.constant 1 : index
    %c0_23 = arith.constant 0 : index
    %20 = vector.load %arg6[%c1_21, %c1_22, %c0_23] : memref<18x18x4xf32, #tpu.memory_space<vmem>>, vector<16x16x4xf32>
    tpu.vector_store %arg6[%c1_21, %c1_22, %c0_23], %11 {strides = array<i32>} : memref<18x18x4xf32, #tpu.memory_space<vmem>>, vector<16x16x4xf32>,
    %cst_24 = arith.constant 0.000000e+00 : f32
    %21 = vector.broadcast %cst_24 : f32 to vector<256x4xf32>
    %c0_25 = arith.constant 0 : index
    %c0_26 = arith.constant 0 : index
    %c0_27 = arith.constant 0 : index
    %22 = vector.load %arg6[%c0_25, %c0_26, %c0_27] : memref<18x18x4xf32, #tpu.memory_space<vmem>>, vector<16x16x4xf32>
    %23 = vector.shape_cast %22 : vector<16x16x4xf32> to vector<256x4xf32>
    %c0_28 = arith.constant 0 : index
    %c0_29 = arith.constant 0 : index
    %c0_30 = arith.constant 0 : index
    %c0_31 = arith.constant 0 : index
    %24 = vector.load %arg3[%c0_28, %c0_29, %c0_30, %c0_31] : memref<3x3x4x4xf32, #tpu.memory_space<vmem>>, vector<1x1x4x4xf32>
    %25 = vector.shape_cast %24 : vector<1x1x4x4xf32> to vector<4x4xf32>
    %cst_32 = arith.constant dense<0.000000e+00> : vector<256x4xf32>
    %26 = tpu.matmul %23, %25, %cst_32 {dimension_numbers = #tpu.dot_dimension_numbers<[1], [0], [0], [1], [0, 0, 1, 1], [], []>} : vector<256x4xf32>, vector<4x4xf32>, vector<256x4xf32> -> vector<256x4xf32>
    %27 = arith.addf %21, %26 : vector<256x4xf32>
    %c0_33 = arith.constant 0 : index
    %c1_34 = arith.constant 1 : index
    %c0_35 = arith.constant 0 : index
    %28 = vector.load %arg6[%c0_33, %c1_34, %c0_35] : memref<18x18x4xf32, #tpu.memory_space<vmem>>, vector<16x16x4xf32>
    %29 = vector.shape_cast %28 : vector<16x16x4xf32> to vector<256x4xf32>
    %c0_36 = arith.constant 0 : index
    %c1_37 = arith.constant 1 : index
    %c0_38 = arith.constant 0 : index
    %c0_39 = arith.constant 0 : index
    %30 = vector.load %arg3[%c0_36, %c1_37, %c0_38, %c0_39] : memref<3x3x4x4xf32, #tpu.memory_space<vmem>>, vector<1x1x4x4xf32>
    %31 = vector.shape_cast %30 : vector<1x1x4x4xf32> to vector<4x4xf32>
    %cst_40 = arith.constant dense<0.000000e+00> : vector<256x4xf32>
    %32 = tpu.matmul %29, %31, %cst_40 {dimension_numbers = #tpu.dot_dimension_numbers<[1], [0], [0], [1], [0, 0, 1, 1], [], []>} : vector<256x4xf32>, vector<4x4xf32>, vector<256x4xf32> -> vector<256x4xf32>
    %33 = arith.addf %27, %32 : vector<256x4xf32>
    %c0_41 = arith.constant 0 : index
    %c2 = arith.constant 2 : index
    %c0_42 = arith.constant 0 : index
    %34 = vector.load %arg6[%c0_41, %c2, %c0_42] : memref<18x18x4xf32, #tpu.memory_space<vmem>>, vector<16x16x4xf32>
    %35 = vector.shape_cast %34 : vector<16x16x4xf32> to vector<256x4xf32>
    %c0_43 = arith.constant 0 : index
    %c2_44 = arith.constant 2 : index
    %c0_45 = arith.constant 0 : index
    %c0_46 = arith.constant 0 : index
    %36 = vector.load %arg3[%c0_43, %c2_44, %c0_45, %c0_46] : memref<3x3x4x4xf32, #tpu.memory_space<vmem>>, vector<1x1x4x4xf32>
    %37 = vector.shape_cast %36 : vector<1x1x4x4xf32> to vector<4x4xf32>
    %cst_47 = arith.constant dense<0.000000e+00> : vector<256x4xf32>
    %38 = tpu.matmul %35, %37, %cst_47 {dimension_numbers = #tpu.dot_dimension_numbers<[1], [0], [0], [1], [0, 0, 1, 1], [], []>} : vector<256x4xf32>, vector<4x4xf32>, vector<256x4xf32> -> vector<256x4xf32>
    %39 = arith.addf %33, %38 : vector<256x4xf32>
    %c1_48 = arith.constant 1 : index
    %c0_49 = arith.constant 0 : index
    %c0_50 = arith.constant 0 : index
    %40 = vector.load %arg6[%c1_48, %c0_49, %c0_50] : memref<18x18x4xf32, #tpu.memory_space<vmem>>, vector<16x16x4xf32>
    %41 = vector.shape_cast %40 : vector<16x16x4xf32> to vector<256x4xf32>
    %c1_51 = arith.constant 1 : index
    %c0_52 = arith.constant 0 : index
    %c0_53 = arith.constant 0 : index
    %c0_54 = arith.constant 0 : index
    %42 = vector.load %arg3[%c1_51, %c0_52, %c0_53, %c0_54] : memref<3x3x4x4xf32, #tpu.memory_space<vmem>>, vector<1x1x4x4xf32>
    %43 = vector.shape_cast %42 : vector<1x1x4x4xf32> to vector<4x4xf32>
    %cst_55 = arith.constant dense<0.000000e+00> : vector<256x4xf32>
    %44 = tpu.matmul %41, %43, %cst_55 {dimension_numbers = #tpu.dot_dimension_numbers<[1], [0], [0], [1], [0, 0, 1, 1], [], []>} : vector<256x4xf32>, vector<4x4xf32>, vector<256x4xf32> -> vector<256x4xf32>
    %45 = arith.addf %39, %44 : vector<256x4xf32>
    %c1_56 = arith.constant 1 : index
    %c1_57 = arith.constant 1 : index
    %c0_58 = arith.constant 0 : index
    %46 = vector.load %arg6[%c1_56, %c1_57, %c0_58] : memref<18x18x4xf32, #tpu.memory_space<vmem>>, vector<16x16x4xf32>
    %47 = vector.shape_cast %46 : vector<16x16x4xf32> to vector<256x4xf32>
    %c1_59 = arith.constant 1 : index
    %c1_60 = arith.constant 1 : index
    %c0_61 = arith.constant 0 : index
    %c0_62 = arith.constant 0 : index
    %48 = vector.load %arg3[%c1_59, %c1_60, %c0_61, %c0_62] : memref<3x3x4x4xf32, #tpu.memory_space<vmem>>, vector<1x1x4x4xf32>
    %49 = vector.shape_cast %48 : vector<1x1x4x4xf32> to vector<4x4xf32>
    %cst_63 = arith.constant dense<0.000000e+00> : vector<256x4xf32>
    %50 = tpu.matmul %47, %49, %cst_63 {dimension_numbers = #tpu.dot_dimension_numbers<[1], [0], [0], [1], [0, 0, 1, 1], [], []>} : vector<256x4xf32>, vector<4x4xf32>, vector<256x4xf32> -> vector<256x4xf32>
    %51 = arith.addf %45, %50 : vector<256x4xf32>
    %c1_64 = arith.constant 1 : index
    %c2_65 = arith.constant 2 : index
    %c0_66 = arith.constant 0 : index
    %52 = vector.load %arg6[%c1_64, %c2_65, %c0_66] : memref<18x18x4xf32, #tpu.memory_space<vmem>>, vector<16x16x4xf32>
    %53 = vector.shape_cast %52 : vector<16x16x4xf32> to vector<256x4xf32>
    %c1_67 = arith.constant 1 : index
    %c2_68 = arith.constant 2 : index
    %c0_69 = arith.constant 0 : index
    %c0_70 = arith.constant 0 : index
    %54 = vector.load %arg3[%c1_67, %c2_68, %c0_69, %c0_70] : memref<3x3x4x4xf32, #tpu.memory_space<vmem>>, vector<1x1x4x4xf32>
    %55 = vector.shape_cast %54 : vector<1x1x4x4xf32> to vector<4x4xf32>
    %cst_71 = arith.constant dense<0.000000e+00> : vector<256x4xf32>
    %56 = tpu.matmul %53, %55, %cst_71 {dimension_numbers = #tpu.dot_dimension_numbers<[1], [0], [0], [1], [0, 0, 1, 1], [], []>} : vector<256x4xf32>, vector<4x4xf32>, vector<256x4xf32> -> vector<256x4xf32>
    %57 = arith.addf %51, %56 : vector<256x4xf32>
    %c2_72 = arith.constant 2 : index
    %c0_73 = arith.constant 0 : index
    %c0_74 = arith.constant 0 : index
    %58 = vector.load %arg6[%c2_72, %c0_73, %c0_74] : memref<18x18x4xf32, #tpu.memory_space<vmem>>, vector<16x16x4xf32>
    %59 = vector.shape_cast %58 : vector<16x16x4xf32> to vector<256x4xf32>
    %c2_75 = arith.constant 2 : index
    %c0_76 = arith.constant 0 : index
    %c0_77 = arith.constant 0 : index
    %c0_78 = arith.constant 0 : index
    %60 = vector.load %arg3[%c2_75, %c0_76, %c0_77, %c0_78] : memref<3x3x4x4xf32, #tpu.memory_space<vmem>>, vector<1x1x4x4xf32>
    %61 = vector.shape_cast %60 : vector<1x1x4x4xf32> to vector<4x4xf32>
    %cst_79 = arith.constant dense<0.000000e+00> : vector<256x4xf32>
    %62 = tpu.matmul %59, %61, %cst_79 {dimension_numbers = #tpu.dot_dimension_numbers<[1], [0], [0], [1], [0, 0, 1, 1], [], []>} : vector<256x4xf32>, vector<4x4xf32>, vector<256x4xf32> -> vector<256x4xf32>
    %63 = arith.addf %57, %62 : vector<256x4xf32>
    %c2_80 = arith.constant 2 : index
    %c1_81 = arith.constant 1 : index
    %c0_82 = arith.constant 0 : index
    %64 = vector.load %arg6[%c2_80, %c1_81, %c0_82] : memref<18x18x4xf32, #tpu.memory_space<vmem>>, vector<16x16x4xf32>
    %65 = vector.shape_cast %64 : vector<16x16x4xf32> to vector<256x4xf32>
    %c2_83 = arith.constant 2 : index
    %c1_84 = arith.constant 1 : index
    %c0_85 = arith.constant 0 : index
    %c0_86 = arith.constant 0 : index
    %66 = vector.load %arg3[%c2_83, %c1_84, %c0_85, %c0_86] : memref<3x3x4x4xf32, #tpu.memory_space<vmem>>, vector<1x1x4x4xf32>
    %67 = vector.shape_cast %66 : vector<1x1x4x4xf32> to vector<4x4xf32>
    %cst_87 = arith.constant dense<0.000000e+00> : vector<256x4xf32>
    %68 = tpu.matmul %65, %67, %cst_87 {dimension_numbers = #tpu.dot_dimension_numbers<[1], [0], [0], [1], [0, 0, 1, 1], [], []>} : vector<256x4xf32>, vector<4x4xf32>, vector<256x4xf32> -> vector<256x4xf32>
    %69 = arith.addf %63, %68 : vector<256x4xf32>
    %c2_88 = arith.constant 2 : index
    %c2_89 = arith.constant 2 : index
    %c0_90 = arith.constant 0 : index
    %70 = vector.load %arg6[%c2_88, %c2_89, %c0_90] : memref<18x18x4xf32, #tpu.memory_space<vmem>>, vector<16x16x4xf32>
    %71 = vector.shape_cast %70 : vector<16x16x4xf32> to vector<256x4xf32>
    %c2_91 = arith.constant 2 : index
    %c2_92 = arith.constant 2 : index
    %c0_93 = arith.constant 0 : index
    %c0_94 = arith.constant 0 : index
    %72 = vector.load %arg3[%c2_91, %c2_92, %c0_93, %c0_94] : memref<3x3x4x4xf32, #tpu.memory_space<vmem>>, vector<1x1x4x4xf32>
    %73 = vector.shape_cast %72 : vector<1x1x4x4xf32> to vector<4x4xf32>
    %cst_95 = arith.constant dense<0.000000e+00> : vector<256x4xf32>
    %74 = tpu.matmul %71, %73, %cst_95 {dimension_numbers = #tpu.dot_dimension_numbers<[1], [0], [0], [1], [0, 0, 1, 1], [], []>} : vector<256x4xf32>, vector<4x4xf32>, vector<256x4xf32> -> vector<256x4xf32>
    %75 = arith.addf %69, %74 : vector<256x4xf32>
    %76 = vector.shape_cast %75 : vector<256x4xf32> to vector<16x16x4xf32>
    %c0_96 = arith.constant 0 : index
    %c0_97 = arith.constant 0 : index
    %c0_98 = arith.constant 0 : index
    %c0_99 = arith.constant 0 : index
    %77 = vector.load %arg4[%c0_96, %c0_97, %c0_98, %c0_99] : memref<1x16x16x4xf32, #tpu.memory_space<vmem>>, vector<1x16x16x4xf32>
    %78 = vector.shape_cast %77 : vector<1x16x16x4xf32> to vector<16x16x4xf32>
    %79 = vector.shape_cast %76 : vector<16x16x4xf32> to vector<1x16x16x4xf32>
    tpu.vector_store %arg4[%c0_96, %c0_97, %c0_98, %c0_99], %79 {strides = array<i32>} : memref<1x16x16x4xf32, #tpu.memory_space<vmem>>, vector<1x16x16x4xf32>,
    %cst_100 = arith.constant dense<0.000000e+00> : vector<4xf32>
    %80 = vector.multi_reduction <add>, %75, %cst_100 [0] : vector<256x4xf32> to vector<4xf32>
    %81 = vector.shape_cast %80 : vector<4xf32> to vector<1x4xf32>
    %c0_101 = arith.constant 0 : index
    %c0_102 = arith.constant 0 : index
    %c0_103 = arith.constant 0 : index
    %82 = vector.load %arg5[%c0_101, %c0_102, %c0_103] : memref<1x2x4xf32, #tpu.memory_space<vmem>>, vector<1x1x4xf32>
    %83 = vector.shape_cast %82 : vector<1x1x4xf32> to vector<1x4xf32>
    %84 = vector.shape_cast %81 : vector<1x4xf32> to vector<1x1x4xf32>
    tpu.vector_store %arg5[%c0_101, %c0_102, %c0_103], %84 {strides = array<i32>} : memref<1x2x4xf32, #tpu.memory_space<vmem>>, vector<1x1x4xf32>,
    %85 = arith.mulf %75, %75 : vector<256x4xf32>
    %cst_104 = arith.constant dense<0.000000e+00> : vector<4xf32>
    %86 = vector.multi_reduction <add>, %85, %cst_104 [0] : vector<256x4xf32> to vector<4xf32>
    %87 = vector.shape_cast %86 : vector<4xf32> to vector<1x4xf32>
    %c0_105 = arith.constant 0 : index
    %c1_106 = arith.constant 1 : index
    %c0_107 = arith.constant 0 : index
    %88 = vector.load %arg5[%c0_105, %c1_106, %c0_107] : memref<1x2x4xf32, #tpu.memory_space<vmem>>, vector<1x1x4xf32>
    %89 = vector.shape_cast %88 : vector<1x1x4xf32> to vector<1x4xf32>
    %90 = vector.shape_cast %87 : vector<1x4xf32> to vector<1x1x4xf32>
    tpu.vector_store %arg5[%c0_105, %c1_106, %c0_107], %90 {strides = array<i32>} : memref<1x2x4xf32, #tpu.memory_space<vmem>>, vector<1x1x4xf32>,
    return
  }
  func.func @transform_0(%arg0: i32) -> (i32, i32, i32, i32) {
    %c0_i32 = arith.constant 0 : i32
    %c0_i32_0 = arith.constant 0 : i32
    %c0_i32_1 = arith.constant 0 : i32
    %c0_i32_2 = arith.constant 0 : i32
    return %arg0, %c0_i32, %c0_i32_0, %c0_i32_1 : i32, i32, i32, i32
  }
  func.func @transform_1(%arg0: i32) -> (i32, i32) {
    %c0_i32 = arith.constant 0 : i32
    %c0_i32_0 = arith.constant 0 : i32
    %c0_i32_1 = arith.constant 0 : i32
    return %c0_i32, %c0_i32_0 : i32, i32
  }
  func.func @transform_2(%arg0: i32) -> (i32, i32, i32, i32) {
    %c0_i32 = arith.constant 0 : i32
    %c0_i32_0 = arith.constant 0 : i32
    %c0_i32_1 = arith.constant 0 : i32
    %c0_i32_2 = arith.constant 0 : i32
    %c0_i32_3 = arith.constant 0 : i32
    return %c0_i32, %c0_i32_0, %c0_i32_1, %c0_i32_2 : i32, i32, i32, i32
  }
  func.func @transform_3(%arg0: i32) -> (i32, i32, i32, i32) {
    %c0_i32 = arith.constant 0 : i32
    %c0_i32_0 = arith.constant 0 : i32
    %c0_i32_1 = arith.constant 0 : i32
    %c0_i32_2 = arith.constant 0 : i32
    return %arg0, %c0_i32, %c0_i32_0, %c0_i32_1 : i32, i32, i32, i32
  }
  func.func @transform_4(%arg0: i32) -> (i32, i32, i32) {
    %c0_i32 = arith.constant 0 : i32
    %c0_i32_0 = arith.constant 0 : i32
    %c0_i32_1 = arith.constant 0 : i32
    return %arg0, %c0_i32, %c0_i32_0 : i32, i32, i32
  }
}

</mosaic_0001>

<llo_original>
// kernel: residual_block.5
$region0: #{residual_block.5}
  #allocation0 [shape = 'u32[]', space=smem, size = 0x4, offset = 0x4, fixed_abs, tag = 'smem constant byte address 0x4 - core index']
  #allocation1 [shape = 'u32[144,128]{1,0:T(1,128)}', space=vmem, size = 0x12000, scoped, tag = 'internal scratch']
  %s0 = inlined_call_operand.vmem [shape: f32[2,16,16,4], index: 0, kind: input, shape index: {}]
  %s1 = inlined_call_operand.vmem [shape: f32[2,16,16,4], index: 1, kind: input, shape index: {}]
  %s2 = inlined_call_operand.vmem [shape: f32[2,4], index: 2, kind: input, shape index: {}]
  %s3 = inlined_call_operand.vmem [shape: f32[2,16,16,4], index: 3, kind: output, shape index: {}]
  %s4 = sld [smem:[#allocation0]]
  $region45: #{residual_block.5} parent=0
    _
  %s6 = ssub.s32 1, %s4
  %s7 = scalar_select 0, %s6, %s4
  loop: start=0, step=1, limit=4
  $region2: #{residual_block.5} parent=0 // loop_pre_header
    _
  $region3: #{residual_block.5} parent=0 // loop_header
    %s9 = sphi 0, %s13
    %p10 = scmp.ge.s32.totalorder %s9, 4
    %s19 = sphi 0, %s21
    %s22 = sphi 0, %s19
    %s23 = sphi 0, %s22
    %s39 = sphi 0, %s23
    %s45 = sphi 0, %s47
    %s48 = sphi 0, %s45
    %s49 = sphi 0, %s48
    %s65 = sphi 0, %s49
    %s69 = sphi 0, %s69
    %s71 = sphi 0, %s69
    %s72 = sphi 0, %s71
    %s86 = sphi 0, %s72
    %s92 = sphi 0, %s94
    %s95 = sphi 0, %s92
    %s96 = sphi 0, %s95
    %s112 = sphi 0, %s96
  $region4: #{residual_block.5} parent=0 // loop_header_branch
    %12 = sbr.rel (%p10) target = $region8
  $region5: #{residual_block.5} parent=0 // loop_body
    %s14 = ssub.s32 %s9, 1
    %s15 = ssub.s32 %s9, 2
    %s16 = sadd.s32 %s9, 1
    %s17 = ssub.s32 %s9, %s16
    %p18 = scmp.eq.s32.totalorder %s17, 0
    %s20 = sadd.s32 %s19, 1
    %s21 = scalar_select %p18, %s19, %s20
    %p24 = pneg %p18
    %p25 = scmp.eq.s32.totalorder %s9, 1
    %p26 = por %p24, %p25
    %p27 = scmp.ne.s32.totalorder %s19, %s22
    %p28 = scmp.eq.s32.totalorder %s9, 0
    %p29 = por %p27, %p28
    %p30 = scmp.ne.s32.totalorder %s19, %s22
    %p31 = scmp.eq.s32.totalorder %s14, 1
    %p32 = por %p30, %p31
    %p33 = scmp.ne.s32.totalorder %s22, %s23
    %p34 = scmp.eq.s32.totalorder %s14, 0
    %p35 = por %p33, %p34
    %p36 = scmp.ne.s32.totalorder %s22, %s23
    %p37 = scmp.eq.s32.totalorder %s15, 1
    %p38 = por %p36, %p37
    %p40 = scmp.ne.s32.totalorder %s23, %s39
    %p41 = scmp.eq.s32.totalorder %s15, 0
    %p42 = por %p40, %p41
    %s43 = ssub.s32 %s9, %s16
    %p44 = scmp.eq.s32.totalorder %s43, 0
    %s46 = sadd.s32 %s45, 1
    %s47 = scalar_select %p44, %s45, %s46
    %p50 = pneg %p44
    %p51 = scmp.eq.s32.totalorder %s9, 1
    %p52 = por %p50, %p51
    %p53 = scmp.ne.s32.totalorder %s45, %s48
    %p54 = scmp.eq.s32.totalorder %s9, 0
    %p55 = por %p53, %p54
    %p56 = scmp.ne.s32.totalorder %s45, %s48
    %p57 = scmp.eq.s32.totalorder %s14, 1
    %p58 = por %p56, %p57
    %p59 = scmp.ne.s32.totalorder %s48, %s49
    %p60 = scmp.eq.s32.totalorder %s14, 0
    %p61 = por %p59, %p60
    %p62 = scmp.ne.s32.totalorder %s48, %s49
    %p63 = scmp.eq.s32.totalorder %s15, 1
    %p64 = por %p62, %p63
    %p66 = scmp.ne.s32.totalorder %s49, %s65
    %p67 = scmp.eq.s32.totalorder %s15, 0
    %p68 = por %p66, %p67
    %s70 = sadd.s32 %s69, 1
    %p73 = scmp.eq.s32.totalorder %s9, 1
    %p74 = scmp.ne.s32.totalorder %s69, %s71
    %p75 = scmp.eq.s32.totalorder %s9, 0
    %p76 = por %p74, %p75
    %p77 = scmp.ne.s32.totalorder %s69, %s71
    %p78 = scmp.eq.s32.totalorder %s14, 1
    %p79 = por %p77, %p78
    %p80 = scmp.ne.s32.totalorder %s71, %s72
    %p81 = scmp.eq.s32.totalorder %s14, 0
    %p82 = por %p80, %p81
    %p83 = scmp.ne.s32.totalorder %s71, %s72
    %p84 = scmp.eq.s32.totalorder %s15, 1
    %p85 = por %p83, %p84
    %p87 = scmp.ne.s32.totalorder %s72, %s86
    %p88 = scmp.eq.s32.totalorder %s15, 0
    %p89 = por %p87, %p88
    %s90 = ssub.s32 %s9, %s16
    %p91 = scmp.eq.s32.totalorder %s90, 0
    %s93 = sadd.s32 %s92, 1
    %s94 = scalar_select %p91, %s92, %s93
    %p97 = pneg %p91
    %p98 = scmp.eq.s32.totalorder %s9, 1
    %p99 = por %p97, %p98
    %p100 = scmp.ne.s32.totalorder %s92, %s95
    %p101 = scmp.eq.s32.totalorder %s9, 0
    %p102 = por %p100, %p101
    %p103 = scmp.ne.s32.totalorder %s92, %s95
    %p104 = scmp.eq.s32.totalorder %s14, 1
    %p105 = por %p103, %p104
    %p106 = scmp.ne.s32.totalorder %s95, %s96
    %p107 = scmp.eq.s32.totalorder %s14, 0
    %p108 = por %p106, %p107
    %p109 = scmp.ne.s32.totalorder %s95, %s96
    %p110 = scmp.eq.s32.totalorder %s15, 1
    %p111 = por %p109, %p110
    %p113 = scmp.ne.s32.totalorder %s96, %s112
    %p114 = scmp.eq.s32.totalorder %s15, 0
    %p115 = por %p113, %p114
    %p116 = scmp.le.s32.totalorder 1, %s9
    %p117 = scmp.lt.s32.totalorder %s9, 3
    %p118 = pnand %p116, %p117
    %p119 = pneg %p118
    // Predicated region
    $region9: #{residual_block.5} parent=5 // pred_check
      _
    $region10: #{residual_block.5} parent=5 // pred_check_branch
      %121 = sbr.rel (%p118) target = $region12
    $region11: #{residual_block.5} parent=5 // pred_region
      %s122 = ssub.s32 %s9, 1
      // Predicated region
      $region13: #{residual_block.5} parent=11 // pred_check
        %p123 = pneg %p82
      $region14: #{residual_block.5} parent=11 // pred_check_branch
        %125 = sbr.rel (%p123) target = $region16
      $region15: #{residual_block.5} parent=11 // pred_region
        _
      $region16: #{residual_block.5} parent=11 // pred_fallthru
        _
    $region12: #{residual_block.5} parent=5 // pred_fallthru
      _
    %p126 = scmp.lt.s32.totalorder %s9, 2
    // Predicated region
    $region17: #{residual_block.5} parent=5 // pred_check
      %p127 = pneg %p126
    $region18: #{residual_block.5} parent=5 // pred_check_branch
      %129 = sbr.rel (%p127) target = $region20
    $region19: #{residual_block.5} parent=5 // pred_region
      // Predicated region
      $region21: #{residual_block.5} parent=19 // pred_check
        %p130 = pneg %p29
      $region22: #{residual_block.5} parent=19 // pred_check_branch
        %132 = sbr.rel (%p130) target = $region24
      $region23: #{residual_block.5} parent=19 // pred_region
        %p133 = scmp.lt.s32.totalorder %s9, 1
        %s134 = scalar_select %p133, %s9, 1
        %s135 = smul.addr %s134, 32
        %s136 = smul.addr %s135, 8
        %s137 = scalar_lea.vmem %s0, %s136
      $region24: #{residual_block.5} parent=19 // pred_fallthru
        _
      // Predicated region
      $region25: #{residual_block.5} parent=19 // pred_check
        %p138 = pneg %p55
      $region26: #{residual_block.5} parent=19 // pred_check_branch
        %140 = sbr.rel (%p138) target = $region28
      $region27: #{residual_block.5} parent=19 // pred_region
        %p141 = scmp.lt.s32.totalorder %s9, 1
        %s142 = scalar_select %p141, %s9, 1
        %s143 = smul.addr %s142, 32
        %s144 = smul.addr %s143, 8
        %s145 = scalar_lea.vmem %s1, %s144
      $region28: #{residual_block.5} parent=19 // pred_fallthru
        _
    $region20: #{residual_block.5} parent=5 // pred_fallthru
      _
    %p146 = scmp.le.s32.totalorder 1, %s9
    %p147 = scmp.lt.s32.totalorder %s9, 3
    %p148 = pnand %p146, %p147
    %p149 = pneg %p148
    // Predicated region
    $region29: #{residual_block.5} parent=5 // pred_check
      _
    $region30: #{residual_block.5} parent=5 // pred_check_branch
      %151 = sbr.rel (%p148) target = $region32
    $region31: #{residual_block.5} parent=5 // pred_region
      %s152 = ssub.s32 %s9, 1
      %p153 = scmp.lt.s32.totalorder %s14, 1
      %s154 = scalar_select %p153, %s14, 1
      %s155 = smul.addr %s154, 32
      %s156 = smul.addr %s155, 8
      %s157 = scalar_lea.vmem %s0, %s156
      %p158 = pneg %p35
      %p159 = pneg %p32
      %p160 = scmp.lt.s32.totalorder %s14, 1
      %s161 = scalar_select %p160, %s14, 1
      %s162 = smul.addr %s161, 32
      %s163 = smul.addr %s162, 8
      %s164 = scalar_lea.vmem %s1, %s163
      %p165 = pneg %p61
      %p166 = pneg %p58
      %p167 = pneg %p82
      %p168 = pneg %p79
      %p169 = pneg %p108
      %p170 = pneg %p105
      %p171 = scmp.lt.s32.totalorder %s14, 1
      %s172 = scalar_select %p171, %s14, 1
      %s173 = smul.addr %s172, 32
      %s174 = smul.addr %s173, 8
      %s175 = scalar_lea.vmem %s3, %s174
      %p176 = scmp.lt.s32.totalorder %s14, 1
      %s177 = scalar_select %p176, %s14, 1
      %s178 = smul.addr %s177, 32
      %s179 = smul.addr %s178, 8
      %s180 = scalar_lea.vmem %s0, %s179
      %p181 = scmp.lt.s32.totalorder %s14, 1
      %s182 = scalar_select %p181, %s14, 1
      %s183 = smul.addr %s182, 32
      %s184 = smul.addr %s183, 8
      %s185 = scalar_lea.vmem %s1, %s184
      %p186 = scmp.lt.s32.totalorder %s14, 1
      %s187 = scalar_select %p186, %s14, 1
      %s188 = smul.addr %s187, 32
      %s189 = smul.addr %s188, 8
      %s190 = scalar_lea.vmem %s3, %s189
      %v191 = vld [vmem:[%s2] sm:$0x1]
      %v192 = vld [vmem:[%s2 + $0x1] sm:$0x1]
      %v193 = vld [vmem:[%s180] sm:$0xff]
      %v194 = vld [vmem:[%s180 + $0x8] sm:$0xff]
      %v195 = vld [vmem:[%s180 + $0x10] sm:$0xff]
      %v196 = vld [vmem:[%s180 + $0x18] sm:$0xff]
      %v197 = vld [vmem:[%s180 + $0x20] sm:$0xff]
      %v198 = vld [vmem:[%s180 + $0x28] sm:$0xff]
      %v199 = vld [vmem:[%s180 + $0x30] sm:$0xff]
      %v200 = vld [vmem:[%s180 + $0x38] sm:$0xff]
      %v201 = vld [vmem:[%s180 + $0x40] sm:$0xff]
      %v202 = vld [vmem:[%s180 + $0x48] sm:$0xff]
      %v203 = vld [vmem:[%s180 + $0x50] sm:$0xff]
      %v204 = vld [vmem:[%s180 + $0x58] sm:$0xff]
      %v205 = vld [vmem:[%s180 + $0x60] sm:$0xff]
      %v206 = vld [vmem:[%s180 + $0x68] sm:$0xff]
      %v207 = vld [vmem:[%s180 + $0x70] sm:$0xff]
      %v208 = vld [vmem:[%s180 + $0x78] sm:$0xff]
      %v209 = vld [vmem:[%s180 + $0x80] sm:$0xff]
      %v210 = vld [vmem:[%s180 + $0x88] sm:$0xff]
      %v211 = vld [vmem:[%s180 + $0x90] sm:$0xff]
      %v212 = vld [vmem:[%s180 + $0x98] sm:$0xff]
      %v213 = vld [vmem:[%s180 + $0xa0] sm:$0xff]
      %v214 = vld [vmem:[%s180 + $0xa8] sm:$0xff]
      %v215 = vld [vmem:[%s180 + $0xb0] sm:$0xff]
      %v216 = vld [vmem:[%s180 + $0xb8] sm:$0xff]
      %v217 = vld [vmem:[%s180 + $0xc0] sm:$0xff]
      %v218 = vld [vmem:[%s180 + $0xc8] sm:$0xff]
      %v219 = vld [vmem:[%s180 + $0xd0] sm:$0xff]
      %v220 = vld [vmem:[%s180 + $0xd8] sm:$0xff]
      %v221 = vld [vmem:[%s180 + $0xe0] sm:$0xff]
      %v222 = vld [vmem:[%s180 + $0xe8] sm:$0xff]
      %v223 = vld [vmem:[%s180 + $0xf0] sm:$0xff]
      %v224 = vld [vmem:[%s180 + $0xf8] sm:$0xff]
      %v225 = vlaneseq
      %v226 = vshrl.u32 %v225, 7
      %v227 = vsub.s32 0, %v226
      %v228 = vrot.slane %v191, %v227
      %v229 = vmul.f32 %v193, %v228
      %v230 = vmul.f32 %v194, %v228
      %v231 = vmul.f32 %v195, %v228
      %v232 = vmul.f32 %v196, %v228
      %v233 = vmul.f32 %v197, %v228
      %v234 = vmul.f32 %v198, %v228
      %v235 = vmul.f32 %v199, %v228
      %v236 = vmul.f32 %v200, %v228
      %v237 = vmul.f32 %v201, %v228
      %v238 = vmul.f32 %v202, %v228
      %v239 = vmul.f32 %v203, %v228
      %v240 = vmul.f32 %v204, %v228
      %v241 = vmul.f32 %v205, %v228
      %v242 = vmul.f32 %v206, %v228
      %v243 = vmul.f32 %v207, %v228
      %v244 = vmul.f32 %v208, %v228
      %v245 = vmul.f32 %v209, %v228
      %v246 = vmul.f32 %v210, %v228
      %v247 = vmul.f32 %v211, %v228
      %v248 = vmul.f32 %v212, %v228
      %v249 = vmul.f32 %v213, %v228
      %v250 = vmul.f32 %v214, %v228
      %v251 = vmul.f32 %v215, %v228
      %v252 = vmul.f32 %v216, %v228
      %v253 = vmul.f32 %v217, %v228
      %v254 = vmul.f32 %v218, %v228
      %v255 = vmul.f32 %v219, %v228
      %v256 = vmul.f32 %v220, %v228
      %v257 = vmul.f32 %v221, %v228
      %v258 = vmul.f32 %v222, %v228
      %v259 = vmul.f32 %v223, %v228
      %v260 = vmul.f32 %v224, %v228
      %v261 = vlaneseq
      %v262 = vshrl.u32 %v261, 7
      %v263 = vsub.s32 0, %v262
      %v264 = vrot.slane %v192, %v263
      %v265 = vadd.f32 %v229, %v264
      %v266 = vadd.f32 %v230, %v264
      %v267 = vadd.f32 %v231, %v264
      %v268 = vadd.f32 %v232, %v264
      %v269 = vadd.f32 %v233, %v264
      %v270 = vadd.f32 %v234, %v264
      %v271 = vadd.f32 %v235, %v264
      %v272 = vadd.f32 %v236, %v264
      %v273 = vadd.f32 %v237, %v264
      %v274 = vadd.f32 %v238, %v264
      %v275 = vadd.f32 %v239, %v264
      %v276 = vadd.f32 %v240, %v264
      %v277 = vadd.f32 %v241, %v264
      %v278 = vadd.f32 %v242, %v264
      %v279 = vadd.f32 %v243, %v264
      %v280 = vadd.f32 %v244, %v264
      %v281 = vadd.f32 %v245, %v264
      %v282 = vadd.f32 %v246, %v264
      %v283 = vadd.f32 %v247, %v264
      %v284 = vadd.f32 %v248, %v264
      %v285 = vadd.f32 %v249, %v264
      %v286 = vadd.f32 %v250, %v264
      %v287 = vadd.f32 %v251, %v264
      %v288 = vadd.f32 %v252, %v264
      %v289 = vadd.f32 %v253, %v264
      %v290 = vadd.f32 %v254, %v264
      %v291 = vadd.f32 %v255, %v264
      %v292 = vadd.f32 %v256, %v264
      %v293 = vadd.f32 %v257, %v264
      %v294 = vadd.f32 %v258, %v264
      %v295 = vadd.f32 %v259, %v264
      %v296 = vadd.f32 %v260, %v264
      %v297 = vld [vmem:[%s185] sm:$0xff]
      %v298 = vld [vmem:[%s185 + $0x8] sm:$0xff]
      %v299 = vld [vmem:[%s185 + $0x10] sm:$0xff]
      %v300 = vld [vmem:[%s185 + $0x18] sm:$0xff]
      %v301 = vld [vmem:[%s185 + $0x20] sm:$0xff]
      %v302 = vld [vmem:[%s185 + $0x28] sm:$0xff]
      %v303 = vld [vmem:[%s185 + $0x30] sm:$0xff]
      %v304 = vld [vmem:[%s185 + $0x38] sm:$0xff]
      %v305 = vld [vmem:[%s185 + $0x40] sm:$0xff]
      %v306 = vld [vmem:[%s185 + $0x48] sm:$0xff]
      %v307 = vld [vmem:[%s185 + $0x50] sm:$0xff]
      %v308 = vld [vmem:[%s185 + $0x58] sm:$0xff]
      %v309 = vld [vmem:[%s185 + $0x60] sm:$0xff]
      %v310 = vld [vmem:[%s185 + $0x68] sm:$0xff]
      %v311 = vld [vmem:[%s185 + $0x70] sm:$0xff]
      %v312 = vld [vmem:[%s185 + $0x78] sm:$0xff]
      %v313 = vld [vmem:[%s185 + $0x80] sm:$0xff]
      %v314 = vld [vmem:[%s185 + $0x88] sm:$0xff]
      %v315 = vld [vmem:[%s185 + $0x90] sm:$0xff]
      %v316 = vld [vmem:[%s185 + $0x98] sm:$0xff]
      %v317 = vld [vmem:[%s185 + $0xa0] sm:$0xff]
      %v318 = vld [vmem:[%s185 + $0xa8] sm:$0xff]
      %v319 = vld [vmem:[%s185 + $0xb0] sm:$0xff]
      %v320 = vld [vmem:[%s185 + $0xb8] sm:$0xff]
      %v321 = vld [vmem:[%s185 + $0xc0] sm:$0xff]
      %v322 = vld [vmem:[%s185 + $0xc8] sm:$0xff]
      %v323 = vld [vmem:[%s185 + $0xd0] sm:$0xff]
      %v324 = vld [vmem:[%s185 + $0xd8] sm:$0xff]
      %v325 = vld [vmem:[%s185 + $0xe0] sm:$0xff]
      %v326 = vld [vmem:[%s185 + $0xe8] sm:$0xff]
      %v327 = vld [vmem:[%s185 + $0xf0] sm:$0xff]
      %v328 = vld [vmem:[%s185 + $0xf8] sm:$0xff]
      %v329 = vadd.f32 %v265, %v297
      %v330 = vadd.f32 %v266, %v298
      %v331 = vadd.f32 %v267, %v299
      %v332 = vadd.f32 %v268, %v300
      %v333 = vadd.f32 %v269, %v301
      %v334 = vadd.f32 %v270, %v302
      %v335 = vadd.f32 %v271, %v303
      %v336 = vadd.f32 %v272, %v304
      %v337 = vadd.f32 %v273, %v305
      %v338 = vadd.f32 %v274, %v306
      %v339 = vadd.f32 %v275, %v307
      %v340 = vadd.f32 %v276, %v308
      %v341 = vadd.f32 %v277, %v309
      %v342 = vadd.f32 %v278, %v310
      %v343 = vadd.f32 %v279, %v311
      %v344 = vadd.f32 %v280, %v312
      %v345 = vadd.f32 %v281, %v313
      %v346 = vadd.f32 %v282, %v314
      %v347 = vadd.f32 %v283, %v315
      %v348 = vadd.f32 %v284, %v316
      %v349 = vadd.f32 %v285, %v317
      %v350 = vadd.f32 %v286, %v318
      %v351 = vadd.f32 %v287, %v319
      %v352 = vadd.f32 %v288, %v320
      %v353 = vadd.f32 %v289, %v321
      %v354 = vadd.f32 %v290, %v322
      %v355 = vadd.f32 %v291, %v323
      %v356 = vadd.f32 %v292, %v324
      %v357 = vadd.f32 %v293, %v325
      %v358 = vadd.f32 %v294, %v326
      %v359 = vadd.f32 %v295, %v327
      %v360 = vadd.f32 %v296, %v328
      %v361 = vmax.f32 %v329, 0.0
      %v362 = vmax.f32 %v330, 0.0
      %v363 = vmax.f32 %v331, 0.0
      %v364 = vmax.f32 %v332, 0.0
      %v365 = vmax.f32 %v333, 0.0
      %v366 = vmax.f32 %v334, 0.0
      %v367 = vmax.f32 %v335, 0.0
      %v368 = vmax.f32 %v336, 0.0
      %v369 = vmax.f32 %v337, 0.0
      %v370 = vmax.f32 %v338, 0.0
      %v371 = vmax.f32 %v339, 0.0
      %v372 = vmax.f32 %v340, 0.0
      %v373 = vmax.f32 %v341, 0.0
      %v374 = vmax.f32 %v342, 0.0
      %v375 = vmax.f32 %v343, 0.0
      %v376 = vmax.f32 %v344, 0.0
      %v377 = vmax.f32 %v345, 0.0
      %v378 = vmax.f32 %v346, 0.0
      %v379 = vmax.f32 %v347, 0.0
      %v380 = vmax.f32 %v348, 0.0
      %v381 = vmax.f32 %v349, 0.0
      %v382 = vmax.f32 %v350, 0.0
      %v383 = vmax.f32 %v351, 0.0
      %v384 = vmax.f32 %v352, 0.0
      %v385 = vmax.f32 %v353, 0.0
      %v386 = vmax.f32 %v354, 0.0
      %v387 = vmax.f32 %v355, 0.0
      %v388 = vmax.f32 %v356, 0.0
      %v389 = vmax.f32 %v357, 0.0
      %v390 = vmax.f32 %v358, 0.0
      %v391 = vmax.f32 %v359, 0.0
      %v392 = vmax.f32 %v360, 0.0
      %vm393 = vcmask 31744
      %394 = vst.msk [vmem:[%s190] sm:$0xff] %vm393, %v361
      %395 = vst.msk [vmem:[%s190 + $0x8] sm:$0xff] %vm393, %v362
      %396 = vst.msk [vmem:[%s190 + $0x10] sm:$0xff] %vm393, %v363
      %397 = vst.msk [vmem:[%s190 + $0x18] sm:$0xff] %vm393, %v364
      %398 = vst.msk [vmem:[%s190 + $0x20] sm:$0xff] %vm393, %v365
      %399 = vst.msk [vmem:[%s190 + $0x28] sm:$0xff] %vm393, %v366
      %400 = vst.msk [vmem:[%s190 + $0x30] sm:$0xff] %vm393, %v367
      %401 = vst.msk [vmem:[%s190 + $0x38] sm:$0xff] %vm393, %v368
      %402 = vst.msk [vmem:[%s190 + $0x40] sm:$0xff] %vm393, %v369
      %403 = vst.msk [vmem:[%s190 + $0x48] sm:$0xff] %vm393, %v370
      %404 = vst.msk [vmem:[%s190 + $0x50] sm:$0xff] %vm393, %v371
      %405 = vst.msk [vmem:[%s190 + $0x58] sm:$0xff] %vm393, %v372
      %406 = vst.msk [vmem:[%s190 + $0x60] sm:$0xff] %vm393, %v373
      %407 = vst.msk [vmem:[%s190 + $0x68] sm:$0xff] %vm393, %v374
      %408 = vst.msk [vmem:[%s190 + $0x70] sm:$0xff] %vm393, %v375
      %409 = vst.msk [vmem:[%s190 + $0x78] sm:$0xff] %vm393, %v376
      %410 = vst.msk [vmem:[%s190 + $0x80] sm:$0xff] %vm393, %v377
      %411 = vst.msk [vmem:[%s190 + $0x88] sm:$0xff] %vm393, %v378
      %412 = vst.msk [vmem:[%s190 + $0x90] sm:$0xff] %vm393, %v379
      %413 = vst.msk [vmem:[%s190 + $0x98] sm:$0xff] %vm393, %v380
      %414 = vst.msk [vmem:[%s190 + $0xa0] sm:$0xff] %vm393, %v381
      %415 = vst.msk [vmem:[%s190 + $0xa8] sm:$0xff] %vm393, %v382
      %416 = vst.msk [vmem:[%s190 + $0xb0] sm:$0xff] %vm393, %v383
      %417 = vst.msk [vmem:[%s190 + $0xb8] sm:$0xff] %vm393, %v384
      %418 = vst.msk [vmem:[%s190 + $0xc0] sm:$0xff] %vm393, %v385
      %419 = vst.msk [vmem:[%s190 + $0xc8] sm:$0xff] %vm393, %v386
      %420 = vst.msk [vmem:[%s190 + $0xd0] sm:$0xff] %vm393, %v387
      %421 = vst.msk [vmem:[%s190 + $0xd8] sm:$0xff] %vm393, %v388
      %422 = vst.msk [vmem:[%s190 + $0xe0] sm:$0xff] %vm393, %v389
      %423 = vst.msk [vmem:[%s190 + $0xe8] sm:$0xff] %vm393, %v390
      %424 = vst.msk [vmem:[%s190 + $0xf0] sm:$0xff] %vm393, %v391
      %425 = vst.msk [vmem:[%s190 + $0xf8] sm:$0xff] %vm393, %v392
      %p426 = scmp.lt.s32.totalorder %s14, 1
      %s427 = scalar_select %p426, %s14, 1
      %s428 = smul.addr %s427, 32
      %s429 = smul.addr %s428, 8
      %s430 = scalar_lea.vmem %s3, %s429
      // Predicated region
      $region33: #{residual_block.5} parent=31 // pred_check
        %p431 = pneg %p105
      $region34: #{residual_block.5} parent=31 // pred_check_branch
        %433 = sbr.rel (%p431) target = $region36
      $region35: #{residual_block.5} parent=31 // pred_region
        _
      $region36: #{residual_block.5} parent=31 // pred_fallthru
        _
    $region32: #{residual_block.5} parent=5 // pred_fallthru
      _
    %p434 = scmp.le.s32.totalorder 2, %s9
    // Predicated region
    $region37: #{residual_block.5} parent=5 // pred_check
      %p435 = pneg %p434
    $region38: #{residual_block.5} parent=5 // pred_check_branch
      %437 = sbr.rel (%p435) target = $region40
    $region39: #{residual_block.5} parent=5 // pred_region
      %s438 = ssub.s32 %s9, 2
      // Predicated region
      $region41: #{residual_block.5} parent=39 // pred_check
        %p439 = pneg %p111
      $region42: #{residual_block.5} parent=39 // pred_check_branch
        %441 = sbr.rel (%p439) target = $region44
      $region43: #{residual_block.5} parent=39 // pred_region
        %p442 = scmp.lt.s32.totalorder %s15, 1
        %s443 = scalar_select %p442, %s15, 1
        %s444 = smul.addr %s443, 32
        %s445 = smul.addr %s444, 8
        %s446 = scalar_lea.vmem %s3, %s445
      $region44: #{residual_block.5} parent=39 // pred_fallthru
        _
    $region40: #{residual_block.5} parent=5 // pred_fallthru
      _
  $region6: #{residual_block.5} parent=0 // loop_footer
    %s13 = sadd.s32 1, %s9
  $region7: #{residual_block.5} parent=0 // loop_footer_branch
    %8 = sbr.rel target = $region3
  $region8: #{residual_block.5} parent=0 // loop_exit
    _

// kernel: residual_block.3
$region0: #{residual_block.3}
  #allocation0 [shape = 'u32[]', space=smem, size = 0x4, offset = 0x4, fixed_abs, tag = 'smem constant byte address 0x4 - core index']
  #allocation1 [shape = 'u32[144,128]{1,0:T(1,128)}', space=vmem, size = 0x12000, scoped, tag = 'internal scratch']
  #allocation2 [shape = 'f32[18,18,4]{2,1,0:T(8,128)}', space=vmem, size = 0x36000, scoped, tag = 'scratch operand']
  %s0 = inlined_call_operand.vmem [shape: f32[2,16,16,4], index: 0, kind: input, shape index: {}]
  %s1 = inlined_call_operand.vmem [shape: f32[3,3,4,4], index: 1, kind: input, shape index: {}]
  %s2 = inlined_call_operand.vmem [shape: f32[2,16,16,4], index: 2, kind: output, shape index: {0}]
  %s3 = inlined_call_operand.vmem [shape: f32[2,2,4], index: 3, kind: output, shape index: {1}]
  %4 = xla_tuple %s2, %s3
  %s5 = sld [smem:[#allocation0]]
  $region49: #{residual_block.3} parent=0
    _
  %s7 = ssub.s32 1, %s5
  %s8 = scalar_select 0, %s7, %s5
  loop: start=0, step=1, limit=4
  $region2: #{residual_block.3} parent=0 // loop_pre_header
    _
  $region3: #{residual_block.3} parent=0 // loop_header
    %s10 = sphi 0, %s14
    %p11 = scmp.ge.s32.totalorder %s10, 4
    %s20 = sphi 0, %s22
    %s23 = sphi 0, %s20
    %s24 = sphi 0, %s23
    %s40 = sphi 0, %s24
    %s44 = sphi 0, %s44
    %s46 = sphi 0, %s44
    %s47 = sphi 0, %s46
    %s61 = sphi 0, %s47
    %s67 = sphi 0, %s69
    %s70 = sphi 0, %s67
    %s71 = sphi 0, %s70
    %s87 = sphi 0, %s71
    %s93 = sphi 0, %s95
    %s96 = sphi 0, %s93
    %s97 = sphi 0, %s96
    %s113 = sphi 0, %s97
  $region4: #{residual_block.3} parent=0 // loop_header_branch
    %13 = sbr.rel (%p11) target = $region8
  $region5: #{residual_block.3} parent=0 // loop_body
    %s15 = ssub.s32 %s10, 1
    %s16 = ssub.s32 %s10, 2
    %s17 = sadd.s32 %s10, 1
    %s18 = ssub.s32 %s10, %s17
    %p19 = scmp.eq.s32.totalorder %s18, 0
    %s21 = sadd.s32 %s20, 1
    %s22 = scalar_select %p19, %s20, %s21
    %p25 = pneg %p19
    %p26 = scmp.eq.s32.totalorder %s10, 1
    %p27 = por %p25, %p26
    %p28 = scmp.ne.s32.totalorder %s20, %s23
    %p29 = scmp.eq.s32.totalorder %s10, 0
    %p30 = por %p28, %p29
    %p31 = scmp.ne.s32.totalorder %s20, %s23
    %p32 = scmp.eq.s32.totalorder %s15, 1
    %p33 = por %p31, %p32
    %p34 = scmp.ne.s32.totalorder %s23, %s24
    %p35 = scmp.eq.s32.totalorder %s15, 0
    %p36 = por %p34, %p35
    %p37 = scmp.ne.s32.totalorder %s23, %s24
    %p38 = scmp.eq.s32.totalorder %s16, 1
    %p39 = por %p37, %p38
    %p41 = scmp.ne.s32.totalorder %s24, %s40
    %p42 = scmp.eq.s32.totalorder %s16, 0
    %p43 = por %p41, %p42
    %s45 = sadd.s32 %s44, 1
    %p48 = scmp.eq.s32.totalorder %s10, 1
    %p49 = scmp.ne.s32.totalorder %s44, %s46
    %p50 = scmp.eq.s32.totalorder %s10, 0
    %p51 = por %p49, %p50
    %p52 = scmp.ne.s32.totalorder %s44, %s46
    %p53 = scmp.eq.s32.totalorder %s15, 1
    %p54 = por %p52, %p53
    %p55 = scmp.ne.s32.totalorder %s46, %s47
    %p56 = scmp.eq.s32.totalorder %s15, 0
    %p57 = por %p55, %p56
    %p58 = scmp.ne.s32.totalorder %s46, %s47
    %p59 = scmp.eq.s32.totalorder %s16, 1
    %p60 = por %p58, %p59
    %p62 = scmp.ne.s32.totalorder %s47, %s61
    %p63 = scmp.eq.s32.totalorder %s16, 0
    %p64 = por %p62, %p63
    %s65 = ssub.s32 %s10, %s17
    %p66 = scmp.eq.s32.totalorder %s65, 0
    %s68 = sadd.s32 %s67, 1
    %s69 = scalar_select %p66, %s67, %s68
    %p72 = pneg %p66
    %p73 = scmp.eq.s32.totalorder %s10, 1
    %p74 = por %p72, %p73
    %p75 = scmp.ne.s32.totalorder %s67, %s70
    %p76 = scmp.eq.s32.totalorder %s10, 0
    %p77 = por %p75, %p76
    %p78 = scmp.ne.s32.totalorder %s67, %s70
    %p79 = scmp.eq.s32.totalorder %s15, 1
    %p80 = por %p78, %p79
    %p81 = scmp.ne.s32.totalorder %s70, %s71
    %p82 = scmp.eq.s32.totalorder %s15, 0
    %p83 = por %p81, %p82
    %p84 = scmp.ne.s32.totalorder %s70, %s71
    %p85 = scmp.eq.s32.totalorder %s16, 1
    %p86 = por %p84, %p85
    %p88 = scmp.ne.s32.totalorder %s71, %s87
    %p89 = scmp.eq.s32.totalorder %s16, 0
    %p90 = por %p88, %p89
    %s91 = ssub.s32 %s10, %s17
    %p92 = scmp.eq.s32.totalorder %s91, 0
    %s94 = sadd.s32 %s93, 1
    %s95 = scalar_select %p92, %s93, %s94
    %p98 = pneg %p92
    %p99 = scmp.eq.s32.totalorder %s10, 1
    %p100 = por %p98, %p99
    %p101 = scmp.ne.s32.totalorder %s93, %s96
    %p102 = scmp.eq.s32.totalorder %s10, 0
    %p103 = por %p101, %p102
    %p104 = scmp.ne.s32.totalorder %s93, %s96
    %p105 = scmp.eq.s32.totalorder %s15, 1
    %p106 = por %p104, %p105
    %p107 = scmp.ne.s32.totalorder %s96, %s97
    %p108 = scmp.eq.s32.totalorder %s15, 0
    %p109 = por %p107, %p108
    %p110 = scmp.ne.s32.totalorder %s96, %s97
    %p111 = scmp.eq.s32.totalorder %s16, 1
    %p112 = por %p110, %p111
    %p114 = scmp.ne.s32.totalorder %s97, %s113
    %p115 = scmp.eq.s32.totalorder %s16, 0
    %p116 = por %p114, %p115
    %p117 = scmp.le.s32.totalorder 1, %s10
    %p118 = scmp.lt.s32.totalorder %s10, 3
    %p119 = pnand %p117, %p118
    %p120 = pneg %p119
    // Predicated region
    $region9: #{residual_block.3} parent=5 // pred_check
      _
    $region10: #{residual_block.3} parent=5 // pred_check_branch
      %122 = sbr.rel (%p119) target = $region12
    $region11: #{residual_block.3} parent=5 // pred_region
      %s123 = ssub.s32 %s10, 1
      // Predicated region
      $region13: #{residual_block.3} parent=11 // pred_check
        %p124 = pneg %p57
      $region14: #{residual_block.3} parent=11 // pred_check_branch
        %126 = sbr.rel (%p124) target = $region16
      $region15: #{residual_block.3} parent=11 // pred_region
        _
      $region16: #{residual_block.3} parent=11 // pred_fallthru
        _
    $region12: #{residual_block.3} parent=5 // pred_fallthru
      _
    %p127 = scmp.lt.s32.totalorder %s10, 2
    // Predicated region
    $region17: #{residual_block.3} parent=5 // pred_check
      %p128 = pneg %p127
    $region18: #{residual_block.3} parent=5 // pred_check_branch
      %130 = sbr.rel (%p128) target = $region20
    $region19: #{residual_block.3} parent=5 // pred_region
      // Predicated region
      $region21: #{residual_block.3} parent=19 // pred_check
        %p131 = pneg %p30
      $region22: #{residual_block.3} parent=19 // pred_check_branch
        %133 = sbr.rel (%p131) target = $region24
      $region23: #{residual_block.3} parent=19 // pred_region
        %p134 = scmp.lt.s32.totalorder %s10, 1
        %s135 = scalar_select %p134, %s10, 1
        %s136 = smul.addr %s135, 32
        %s137 = smul.addr %s136, 8
        %s138 = scalar_lea.vmem %s0, %s137
      $region24: #{residual_block.3} parent=19 // pred_fallthru
        _
    $region20: #{residual_block.3} parent=5 // pred_fallthru
      _
    %p139 = scmp.le.s32.totalorder 1, %s10
    %p140 = scmp.lt.s32.totalorder %s10, 3
    %p141 = pnand %p139, %p140
    %p142 = pneg %p141
    // Predicated region
    $region25: #{residual_block.3} parent=5 // pred_check
      _
    $region26: #{residual_block.3} parent=5 // pred_check_branch
      %144 = sbr.rel (%p141) target = $region28
    $region27: #{residual_block.3} parent=5 // pred_region
      %s145 = ssub.s32 %s10, 1
      %p146 = scmp.lt.s32.totalorder %s15, 1
      %s147 = scalar_select %p146, %s15, 1
      %s148 = smul.addr %s147, 32
      %s149 = smul.addr %s148, 8
      %s150 = scalar_lea.vmem %s0, %s149
      %p151 = pneg %p36
      %p152 = pneg %p33
      %p153 = pneg %p57
      %p154 = pneg %p54
      %p155 = pneg %p83
      %p156 = pneg %p80
      %p157 = scmp.lt.s32.totalorder %s15, 1
      %s158 = scalar_select %p157, %s15, 1
      %s159 = smul.addr %s158, 32
      %s160 = smul.addr %s159, 8
      %s161 = scalar_lea.vmem %s2, %s160
      %p162 = pneg %p109
      %p163 = pneg %p106
      %p164 = scmp.lt.s32.totalorder %s15, 1
      %s165 = scalar_select %p164, %s15, 1
      %s166 = smul.addr %s165, 2
      %s167 = scalar_lea.vmem %s3, %s166
      %p168 = scmp.lt.s32.totalorder %s15, 1
      %s169 = scalar_select %p168, %s15, 1
      %s170 = smul.addr %s169, 32
      %s171 = smul.addr %s170, 8
      %s172 = scalar_lea.vmem %s0, %s171
      %p173 = scmp.lt.s32.totalorder %s15, 1
      %s174 = scalar_select %p173, %s15, 1
      %s175 = smul.addr %s174, 32
      %s176 = smul.addr %s175, 8
      %s177 = scalar_lea.vmem %s2, %s176
      %p178 = scmp.lt.s32.totalorder %s15, 1
      %s179 = scalar_select %p178, %s15, 1
      %s180 = smul.addr %s179, 2
      %s181 = scalar_lea.vmem %s3, %s180
      %vm182 = vcmask 31744
      %183 = vst.msk [vmem:[#allocation2] sm:$0xff] %vm182, 0.0
      %184 = vst.msk [vmem:[#allocation2 + $0x8] sm:$0xff] %vm182, 0.0
      %vm185 = vcmask 25600
      %186 = vst.msk [vmem:[#allocation2 + $0x10] sm:$0x3] %vm185, 0.0
      %s187 = scalar_lea.vmem [#allocation2], 408
      %188 = vst.msk [vmem:[%s187] sm:$0xff] %vm182, 0.0
      %189 = vst.msk [vmem:[%s187 + $0x8] sm:$0xff] %vm182, 0.0
      %190 = vst.msk [vmem:[%s187 + $0x10] sm:$0x3] %vm185, 0.0
      %vm191 = vcmask 24576
      %192 = vst.msk [vmem:[#allocation2] sm:$0x1] %vm191, 0.0
      %193 = vst.msk [vmem:[#allocation2 + $0x18] sm:$0x1] %vm191, 0.0
      %194 = vst.msk [vmem:[#allocation2 + $0x30] sm:$0x1] %vm191, 0.0
      %195 = vst.msk [vmem:[#allocation2 + $0x48] sm:$0x1] %vm191, 0.0
      %196 = vst.msk [vmem:[#allocation2 + $0x60] sm:$0x1] %vm191, 0.0
      %197 = vst.msk [vmem:[#allocation2 + $0x78] sm:$0x1] %vm191, 0.0
      %198 = vst.msk [vmem:[#allocation2 + $0x90] sm:$0x1] %vm191, 0.0
      %199 = vst.msk [vmem:[#allocation2 + $0xa8] sm:$0x1] %vm191, 0.0
      %200 = vst.msk [vmem:[#allocation2 + $0xc0] sm:$0x1] %vm191, 0.0
      %201 = vst.msk [vmem:[#allocation2 + $0xd8] sm:$0x1] %vm191, 0.0
      %202 = vst.msk [vmem:[#allocation2 + $0xf0] sm:$0x1] %vm191, 0.0
      %203 = vst.msk [vmem:[#allocation2 + $0x108] sm:$0x1] %vm191, 0.0
      %204 = vst.msk [vmem:[#allocation2 + $0x120] sm:$0x1] %vm191, 0.0
      %205 = vst.msk [vmem:[#allocation2 + $0x138] sm:$0x1] %vm191, 0.0
      %206 = vst.msk [vmem:[#allocation2 + $0x150] sm:$0x1] %vm191, 0.0
      %207 = vst.msk [vmem:[#allocation2 + $0x168] sm:$0x1] %vm191, 0.0
      %208 = vst.msk [vmem:[#allocation2 + $0x180] sm:$0x1] %vm191, 0.0
      %209 = vst.msk [vmem:[#allocation2 + $0x198] sm:$0x1] %vm191, 0.0
      %210 = vst.msk [vmem:[#allocation2 + $0x11] sm:$0x1] %vm191, 0.0
      %211 = vst.msk [vmem:[#allocation2 + $0x29] sm:$0x1] %vm191, 0.0
      %212 = vst.msk [vmem:[#allocation2 + $0x41] sm:$0x1] %vm191, 0.0
      %213 = vst.msk [vmem:[#allocation2 + $0x59] sm:$0x1] %vm191, 0.0
      %214 = vst.msk [vmem:[#allocation2 + $0x71] sm:$0x1] %vm191, 0.0
      %215 = vst.msk [vmem:[#allocation2 + $0x89] sm:$0x1] %vm191, 0.0
      %216 = vst.msk [vmem:[#allocation2 + $0xa1] sm:$0x1] %vm191, 0.0
      %217 = vst.msk [vmem:[#allocation2 + $0xb9] sm:$0x1] %vm191, 0.0
      %218 = vst.msk [vmem:[#allocation2 + $0xd1] sm:$0x1] %vm191, 0.0
      %219 = vst.msk [vmem:[#allocation2 + $0xe9] sm:$0x1] %vm191, 0.0
      %220 = vst.msk [vmem:[#allocation2 + $0x101] sm:$0x1] %vm191, 0.0
      %221 = vst.msk [vmem:[#allocation2 + $0x119] sm:$0x1] %vm191, 0.0
      %222 = vst.msk [vmem:[#allocation2 + $0x131] sm:$0x1] %vm191, 0.0
      %223 = vst.msk [vmem:[#allocation2 + $0x149] sm:$0x1] %vm191, 0.0
      %224 = vst.msk [vmem:[#allocation2 + $0x161] sm:$0x1] %vm191, 0.0
      %225 = vst.msk [vmem:[#allocation2 + $0x179] sm:$0x1] %vm191, 0.0
      %226 = vst.msk [vmem:[#allocation2 + $0x191] sm:$0x1] %vm191, 0.0
      %227 = vst.msk [vmem:[#allocation2 + $0x1a9] sm:$0x1] %vm191, 0.0
      %v228 = vld [vmem:[%s172] sm:$0xff]
      %v229 = vld [vmem:[%s172 + $0x8] sm:$0xff]
      %v230 = vld [vmem:[%s172 + $0x10] sm:$0xff]
      %v231 = vld [vmem:[%s172 + $0x18] sm:$0xff]
      %v232 = vld [vmem:[%s172 + $0x20] sm:$0xff]
      %v233 = vld [vmem:[%s172 + $0x28] sm:$0xff]
      %v234 = vld [vmem:[%s172 + $0x30] sm:$0xff]
      %v235 = vld [vmem:[%s172 + $0x38] sm:$0xff]
      %v236 = vld [vmem:[%s172 + $0x40] sm:$0xff]
      %v237 = vld [vmem:[%s172 + $0x48] sm:$0xff]
      %v238 = vld [vmem:[%s172 + $0x50] sm:$0xff]
      %v239 = vld [vmem:[%s172 + $0x58] sm:$0xff]
      %v240 = vld [vmem:[%s172 + $0x60] sm:$0xff]
      %v241 = vld [vmem:[%s172 + $0x68] sm:$0xff]
      %v242 = vld [vmem:[%s172 + $0x70] sm:$0xff]
      %v243 = vld [vmem:[%s172 + $0x78] sm:$0xff]
      %v244 = vld [vmem:[%s172 + $0x80] sm:$0xff]
      %v245 = vld [vmem:[%s172 + $0x88] sm:$0xff]
      %v246 = vld [vmem:[%s172 + $0x90] sm:$0xff]
      %v247 = vld [vmem:[%s172 + $0x98] sm:$0xff]
      %v248 = vld [vmem:[%s172 + $0xa0] sm:$0xff]
      %v249 = vld [vmem:[%s172 + $0xa8] sm:$0xff]
      %v250 = vld [vmem:[%s172 + $0xb0] sm:$0xff]
      %v251 = vld [vmem:[%s172 + $0xb8] sm:$0xff]
      %v252 = vld [vmem:[%s172 + $0xc0] sm:$0xff]
      %v253 = vld [vmem:[%s172 + $0xc8] sm:$0xff]
      %v254 = vld [vmem:[%s172 + $0xd0] sm:$0xff]
      %v255 = vld [vmem:[%s172 + $0xd8] sm:$0xff]
      %v256 = vld [vmem:[%s172 + $0xe0] sm:$0xff]
      %v257 = vld [vmem:[%s172 + $0xe8] sm:$0xff]
      %v258 = vld [vmem:[%s172 + $0xf0] sm:$0xff]
      %v259 = vld [vmem:[%s172 + $0xf8] sm:$0xff]
      %s260 = scalar_lea.vmem [#allocation2], 24
      %261 = vst.msk [vmem:[%s260 + $0x1] sm:$0xff] %vm182, %v228
      %262 = vst.msk [vmem:[%s260 + $0x9] sm:$0xff] %vm182, %v229
      %263 = vst.msk [vmem:[%s260 + $0x19] sm:$0xff] %vm182, %v230
      %264 = vst.msk [vmem:[%s260 + $0x21] sm:$0xff] %vm182, %v231
      %265 = vst.msk [vmem:[%s260 + $0x31] sm:$0xff] %vm182, %v232
      %266 = vst.msk [vmem:[%s260 + $0x39] sm:$0xff] %vm182, %v233
      %267 = vst.msk [vmem:[%s260 + $0x49] sm:$0xff] %vm182, %v234
      %268 = vst.msk [vmem:[%s260 + $0x51] sm:$0xff] %vm182, %v235
      %269 = vst.msk [vmem:[%s260 + $0x61] sm:$0xff] %vm182, %v236
      %270 = vst.msk [vmem:[%s260 + $0x69] sm:$0xff] %vm182, %v237
      %271 = vst.msk [vmem:[%s260 + $0x79] sm:$0xff] %vm182, %v238
      %272 = vst.msk [vmem:[%s260 + $0x81] sm:$0xff] %vm182, %v239
      %273 = vst.msk [vmem:[%s260 + $0x91] sm:$0xff] %vm182, %v240
      %274 = vst.msk [vmem:[%s260 + $0x99] sm:$0xff] %vm182, %v241
      %275 = vst.msk [vmem:[%s260 + $0xa9] sm:$0xff] %vm182, %v242
      %276 = vst.msk [vmem:[%s260 + $0xb1] sm:$0xff] %vm182, %v243
      %277 = vst.msk [vmem:[%s260 + $0xc1] sm:$0xff] %vm182, %v244
      %278 = vst.msk [vmem:[%s260 + $0xc9] sm:$0xff] %vm182, %v245
      %279 = vst.msk [vmem:[%s260 + $0xd9] sm:$0xff] %vm182, %v246
      %280 = vst.msk [vmem:[%s260 + $0xe1] sm:$0xff] %vm182, %v247
      %281 = vst.msk [vmem:[%s260 + $0xf1] sm:$0xff] %vm182, %v248
      %282 = vst.msk [vmem:[%s260 + $0xf9] sm:$0xff] %vm182, %v249
      %283 = vst.msk [vmem:[%s260 + $0x109] sm:$0xff] %vm182, %v250
      %284 = vst.msk [vmem:[%s260 + $0x111] sm:$0xff] %vm182, %v251
      %285 = vst.msk [vmem:[%s260 + $0x121] sm:$0xff] %vm182, %v252
      %286 = vst.msk [vmem:[%s260 + $0x129] sm:$0xff] %vm182, %v253
      %287 = vst.msk [vmem:[%s260 + $0x139] sm:$0xff] %vm182, %v254
      %288 = vst.msk [vmem:[%s260 + $0x141] sm:$0xff] %vm182, %v255
      %289 = vst.msk [vmem:[%s260 + $0x151] sm:$0xff] %vm182, %v256
      %290 = vst.msk [vmem:[%s260 + $0x159] sm:$0xff] %vm182, %v257
      %291 = vst.msk [vmem:[%s260 + $0x169] sm:$0xff] %vm182, %v258
      %292 = vst.msk [vmem:[%s260 + $0x171] sm:$0xff] %vm182, %v259
      %v293 = vld [vmem:[#allocation2] sm:$0xff]
      %v294 = vld [vmem:[#allocation2 + $0x8] sm:$0xff]
      %v295 = vld [vmem:[#allocation2 + $0x18] sm:$0xff]
      %v296 = vld [vmem:[#allocation2 + $0x20] sm:$0xff]
      %v297 = vld [vmem:[#allocation2 + $0x30] sm:$0xff]
      %v298 = vld [vmem:[#allocation2 + $0x38] sm:$0xff]
      %v299 = vld [vmem:[#allocation2 + $0x48] sm:$0xff]
      %v300 = vld [vmem:[#allocation2 + $0x50] sm:$0xff]
      %v301 = vld [vmem:[#allocation2 + $0x60] sm:$0xff]
      %v302 = vld [vmem:[#allocation2 + $0x68] sm:$0xff]
      %v303 = vld [vmem:[#allocation2 + $0x78] sm:$0xff]
      %v304 = vld [vmem:[#allocation2 + $0x80] sm:$0xff]
      %v305 = vld [vmem:[#allocation2 + $0x90] sm:$0xff]
      %v306 = vld [vmem:[#allocation2 + $0x98] sm:$0xff]
      %v307 = vld [vmem:[#allocation2 + $0xa8] sm:$0xff]
      %v308 = vld [vmem:[#allocation2 + $0xb0] sm:$0xff]
      %v309 = vld [vmem:[#allocation2 + $0xc0] sm:$0xff]
      %v310 = vld [vmem:[#allocation2 + $0xc8] sm:$0xff]
      %v311 = vld [vmem:[#allocation2 + $0xd8] sm:$0xff]
      %v312 = vld [vmem:[#allocation2 + $0xe0] sm:$0xff]
      %v313 = vld [vmem:[#allocation2 + $0xf0] sm:$0xff]
      %v314 = vld [vmem:[#allocation2 + $0xf8] sm:$0xff]
      %v315 = vld [vmem:[#allocation2 + $0x108] sm:$0xff]
      %v316 = vld [vmem:[#allocation2 + $0x110] sm:$0xff]
      %v317 = vld [vmem:[#allocation2 + $0x120] sm:$0xff]
      %v318 = vld [vmem:[#allocation2 + $0x128] sm:$0xff]
      %v319 = vld [vmem:[#allocation2 + $0x138] sm:$0xff]
      %v320 = vld [vmem:[#allocation2 + $0x140] sm:$0xff]
      %v321 = vld [vmem:[#allocation2 + $0x150] sm:$0xff]
      %v322 = vld [vmem:[#allocation2 + $0x158] sm:$0xff]
      %v323 = vld [vmem:[#allocation2 + $0x168] sm:$0xff]
      %v324 = vld [vmem:[#allocation2 + $0x170] sm:$0xff]
      %v325 = vld [vmem:[%s1] sm:$0xf]
      %v326 = vld [vmem:[#allocation2 + $0x1] sm:$0xff]
      %v327 = vld [vmem:[#allocation2 + $0x9] sm:$0xff]
      %v328 = vld [vmem:[#allocation2 + $0x19] sm:$0xff]
      %v329 = vld [vmem:[#allocation2 + $0x21] sm:$0xff]
      %v330 = vld [vmem:[#allocation2 + $0x31] sm:$0xff]
      %v331 = vld [vmem:[#allocation2 + $0x39] sm:$0xff]
      %v332 = vld [vmem:[#allocation2 + $0x49] sm:$0xff]
      %v333 = vld [vmem:[#allocation2 + $0x51] sm:$0xff]
      %v334 = vld [vmem:[#allocation2 + $0x61] sm:$0xff]
      %v335 = vld [vmem:[#allocation2 + $0x69] sm:$0xff]
      %v336 = vld [vmem:[#allocation2 + $0x79] sm:$0xff]
      %v337 = vld [vmem:[#allocation2 + $0x81] sm:$0xff]
      %v338 = vld [vmem:[#allocation2 + $0x91] sm:$0xff]
      %v339 = vld [vmem:[#allocation2 + $0x99] sm:$0xff]
      %v340 = vld [vmem:[#allocation2 + $0xa9] sm:$0xff]
      %v341 = vld [vmem:[#allocation2 + $0xb1] sm:$0xff]
      %v342 = vld [vmem:[#allocation2 + $0xc1] sm:$0xff]
      %v343 = vld [vmem:[#allocation2 + $0xc9] sm:$0xff]
      %v344 = vld [vmem:[#allocation2 + $0xd9] sm:$0xff]
      %v345 = vld [vmem:[#allocation2 + $0xe1] sm:$0xff]
      %v346 = vld [vmem:[#allocation2 + $0xf1] sm:$0xff]
      %v347 = vld [vmem:[#allocation2 + $0xf9] sm:$0xff]
      %v348 = vld [vmem:[#allocation2 + $0x109] sm:$0xff]
      %v349 = vld [vmem:[#allocation2 + $0x111] sm:$0xff]
      %v350 = vld [vmem:[#allocation2 + $0x121] sm:$0xff]
      %v351 = vld [vmem:[#allocation2 + $0x129] sm:$0xff]
      %v352 = vld [vmem:[#allocation2 + $0x139] sm:$0xff]
      %v353 = vld [vmem:[#allocation2 + $0x141] sm:$0xff]
      %v354 = vld [vmem:[#allocation2 + $0x151] sm:$0xff]
      %v355 = vld [vmem:[#allocation2 + $0x159] sm:$0xff]
      %v356 = vld [vmem:[#allocation2 + $0x169] sm:$0xff]
      %v357 = vld [vmem:[#allocation2 + $0x171] sm:$0xff]
      %s358 = scalar_lea.vmem %s1, 4
      %v359 = vld [vmem:[%s358] sm:$0xf]
      %v361 = vsel %vm182, %v326, 0
      %v364 = vsel %vm182, %v327, 0
      %v367 = vsel %vm182, %v328, 0
      %v370 = vsel %vm182, %v329, 0
      %v373 = vsel %vm182, %v330, 0
      %v376 = vsel %vm182, %v331, 0
      %v379 = vsel %vm182, %v332, 0
      %v382 = vsel %vm182, %v333, 0
      %v385 = vsel %vm182, %v334, 0
      %v388 = vsel %vm182, %v335, 0
      %v391 = vsel %vm182, %v336, 0
      %v394 = vsel %vm182, %v337, 0
      %v397 = vsel %vm182, %v338, 0
      %v400 = vsel %vm182, %v339, 0
      %v403 = vsel %vm182, %v340, 0
      %v406 = vsel %vm182, %v341, 0
      %v409 = vsel %vm182, %v342, 0
      %v412 = vsel %vm182, %v343, 0
      %v415 = vsel %vm182, %v344, 0
      %v418 = vsel %vm182, %v345, 0
      %v421 = vsel %vm182, %v346, 0
      %v424 = vsel %vm182, %v347, 0
      %v427 = vsel %vm182, %v348, 0
      %v430 = vsel %vm182, %v349, 0
      %v433 = vsel %vm182, %v350, 0
      %v436 = vsel %vm182, %v351, 0
      %v439 = vsel %vm182, %v352, 0
      %v442 = vsel %vm182, %v353, 0
      %v445 = vsel %vm182, %v354, 0
      %v448 = vsel %vm182, %v355, 0
      %v451 = vsel %vm182, %v356, 0
      %v454 = vsel %vm182, %v357, 0
      %vm456 = vcmask 1043456
      %v458 = vsel %vm456, %v359, 0
      %460 = vmatprep.subr.mxu0 0.0
      %461 = vmatpush1.msra.mxu0 0.0
      %462 = vmatprep.subr.mxu0 0.0
      %463 = vmatpush1.msra.mxu0 0.0
      %464 = vmatprep.subr.mxu0 0.0
      %465 = vmatpush1.msra.mxu0 0.0
      %466 = vmatprep.subr.mxu0 0.0
      %467 = vmatpush1.msra.mxu0 0.0
      %468 = vmatprep.subr.mxu0 0.0
      %469 = vmatpush1.msra.mxu0 0.0
      %470 = vmatprep.subr.mxu0 0.0
      %471 = vmatpush1.msra.mxu0 0.0
      %472 = vmatprep.subr.mxu0 0.0
      %473 = vmatpush1.msra.mxu0 0.0
      %474 = vmatprep.subr.mxu0 0.0
      %475 = vmatpush1.msra.mxu0 0.0
      %476 = vmatprep.subr.mxu0 0.0
      %477 = vmatpush1.msra.mxu0 0.0
      %478 = vmatprep.subr.mxu0 0.0
      %479 = vmatpush1.msra.mxu0 0.0
      %480 = vmatprep.subr.mxu0 0.0
      %481 = vmatpush1.msra.mxu0 0.0
      %482 = vmatprep.subr.mxu0 0.0
      %483 = vmatpush1.msra.mxu0 0.0
      %484 = vmatprep.subr.mxu0 0.0
      %485 = vmatpush1.msra.mxu0 0.0
      %486 = vmatprep.subr.mxu0 0.0
      %487 = vmatpush1.msra.mxu0 0.0
      %488 = vmatprep.subr.mxu0 0.0
      %489 = vmatpush1.msra.mxu0 0.0
      %490 = vmatprep.subr.mxu0 0.0
      %491 = vmatpush1.msra.mxu0 %v458
      %492 = vmatprep.subr.mxu0 0.0
      %493 = vmatpush2.msra.mxu0 0.0
      %494 = vmatprep.subr.mxu0 0.0
      %495 = vmatpush2.msra.mxu0 0.0
      %496 = vmatprep.subr.mxu0 0.0
      %497 = vmatpush2.msra.mxu0 0.0
      %498 = vmatprep.subr.mxu0 0.0
      %499 = vmatpush2.msra.mxu0 0.0
      %500 = vmatprep.subr.mxu0 0.0
      %501 = vmatpush2.msra.mxu0 0.0
      %502 = vmatprep.subr.mxu0 0.0
      %503 = vmatpush2.msra.mxu0 0.0
      %504 = vmatprep.subr.mxu0 0.0
      %505 = vmatpush2.msra.mxu0 0.0
      %506 = vmatprep.subr.mxu0 0.0
      %507 = vmatpush2.msra.mxu0 0.0
      %508 = vmatprep.subr.mxu0 0.0
      %509 = vmatpush2.msra.mxu0 0.0
      %510 = vmatprep.subr.mxu0 0.0
      %511 = vmatpush2.msra.mxu0 0.0
      %512 = vmatprep.subr.mxu0 0.0
      %513 = vmatpush2.msra.mxu0 0.0
      %514 = vmatprep.subr.mxu0 0.0
      %515 = vmatpush2.msra.mxu0 0.0
      %516 = vmatprep.subr.mxu0 0.0
      %517 = vmatpush2.msra.mxu0 0.0
      %518 = vmatprep.subr.mxu0 0.0
      %519 = vmatpush2.msra.mxu0 0.0
      %520 = vmatprep.subr.mxu0 0.0
      %521 = vmatpush2.msra.mxu0 0.0
      %522 = vmatprep.subr.mxu0 0.0
      %523 = vmatpush2.msra.mxu0 0.0
      %524 = vmatprep.mubr.f32.mxu0 0.0
      %525 = vmatmul.mubr.f32.gmra.mxu0 %v361
      %v526 = vpop.f32.mrf.mxu0
      %v527 = vadd.f32 0.0, %v526
      %v528 = vpop.f32.mrf.mxu0
      %529 = vmatprep.mubr.f32.mxu0 0.0
      %530 = vmatmul.mubr.f32.gmra.mxu0 %v364
      %v531 = vpop.f32.mrf.mxu0
      %v532 = vadd.f32 0.0, %v531
      %v533 = vpop.f32.mrf.mxu0
      %534 = vmatprep.mubr.f32.mxu0 0.0
      %535 = vmatmul.mubr.f32.gmra.mxu0 %v367
      %v536 = vpop.f32.mrf.mxu0
      %v537 = vadd.f32 0.0, %v536
      %v538 = vpop.f32.mrf.mxu0
      %539 = vmatprep.mubr.f32.mxu0 0.0
      %540 = vmatmul.mubr.f32.gmra.mxu0 %v370
      %v541 = vpop.f32.mrf.mxu0
      %v542 = vadd.f32 0.0, %v541
      %v543 = vpop.f32.mrf.mxu0
      %544 = vmatprep.mubr.f32.mxu0 0.0
      %545 = vmatmul.mubr.f32.gmra.mxu0 %v373
      %v546 = vpop.f32.mrf.mxu0
      %v547 = vadd.f32 0.0, %v546
      %v548 = vpop.f32.mrf.mxu0
      %549 = vmatprep.mubr.f32.mxu0 0.0
      %550 = vmatmul.mubr.f32.gmra.mxu0 %v376
      %v551 = vpop.f32.mrf.mxu0
      %v552 = vadd.f32 0.0, %v551
      %v553 = vpop.f32.mrf.mxu0
      %554 = vmatprep.mubr.f32.mxu0 0.0
      %555 = vmatmul.mubr.f32.gmra.mxu0 %v379
      %v556 = vpop.f32.mrf.mxu0
      %v557 = vadd.f32 0.0, %v556
      %v558 = vpop.f32.mrf.mxu0
      %559 = vmatprep.mubr.f32.mxu0 0.0
      %560 = vmatmul.mubr.f32.gmra.mxu0 %v382
      %v561 = vpop.f32.mrf.mxu0
      %v562 = vadd.f32 0.0, %v561
      %v563 = vpop.f32.mrf.mxu0
      %564 = vmatprep.mubr.f32.mxu0 0.0
      %565 = vmatmul.mubr.f32.gmra.mxu0 %v385
      %v566 = vpop.f32.mrf.mxu0
      %v567 = vadd.f32 0.0, %v566
      %v568 = vpop.f32.mrf.mxu0
      %569 = vmatprep.mubr.f32.mxu0 0.0
      %570 = vmatmul.mubr.f32.gmra.mxu0 %v388
      %v571 = vpop.f32.mrf.mxu0
      %v572 = vadd.f32 0.0, %v571
      %v573 = vpop.f32.mrf.mxu0
      %574 = vmatprep.mubr.f32.mxu0 0.0
      %575 = vmatmul.mubr.f32.gmra.mxu0 %v391
      %v576 = vpop.f32.mrf.mxu0
      %v577 = vadd.f32 0.0, %v576
      %v578 = vpop.f32.mrf.mxu0
      %579 = vmatprep.mubr.f32.mxu0 0.0
      %580 = vmatmul.mubr.f32.gmra.mxu0 %v394
      %v581 = vpop.f32.mrf.mxu0
      %v582 = vadd.f32 0.0, %v581
      %v583 = vpop.f32.mrf.mxu0
      %584 = vmatprep.mubr.f32.mxu0 0.0
      %585 = vmatmul.mubr.f32.gmra.mxu0 %v397
      %v586 = vpop.f32.mrf.mxu0
      %v587 = vadd.f32 0.0, %v586
      %v588 = vpop.f32.mrf.mxu0
      %589 = vmatprep.mubr.f32.mxu0 0.0
      %590 = vmatmul.mubr.f32.gmra.mxu0 %v400
      %v591 = vpop.f32.mrf.mxu0
      %v592 = vadd.f32 0.0, %v591
      %v593 = vpop.f32.mrf.mxu0
      %594 = vmatprep.mubr.f32.mxu0 0.0
      %595 = vmatmul.mubr.f32.gmra.mxu0 %v403
      %v596 = vpop.f32.mrf.mxu0
      %v597 = vadd.f32 0.0, %v596
      %v598 = vpop.f32.mrf.mxu0
      %599 = vmatprep.mubr.f32.mxu0 0.0
      %600 = vmatmul.mubr.f32.gmra.mxu0 %v406
      %v601 = vpop.f32.mrf.mxu0
      %v602 = vadd.f32 0.0, %v601
      %v603 = vpop.f32.mrf.mxu0
      %604 = vmatprep.mubr.f32.mxu0 0.0
      %605 = vmatmul.mubr.f32.gmra.mxu0 %v409
      %v606 = vpop.f32.mrf.mxu0
      %v607 = vadd.f32 0.0, %v606
      %v608 = vpop.f32.mrf.mxu0
      %609 = vmatprep.mubr.f32.mxu0 0.0
      %610 = vmatmul.mubr.f32.gmra.mxu0 %v412
      %v611 = vpop.f32.mrf.mxu0
      %v612 = vadd.f32 0.0, %v611
      %v613 = vpop.f32.mrf.mxu0
      %614 = vmatprep.mubr.f32.mxu0 0.0
      %615 = vmatmul.mubr.f32.gmra.mxu0 %v415
      %v616 = vpop.f32.mrf.mxu0
      %v617 = vadd.f32 0.0, %v616
      %v618 = vpop.f32.mrf.mxu0
      %619 = vmatprep.mubr.f32.mxu0 0.0
      %620 = vmatmul.mubr.f32.gmra.mxu0 %v418
      %v621 = vpop.f32.mrf.mxu0
      %v622 = vadd.f32 0.0, %v621
      %v623 = vpop.f32.mrf.mxu0
      %624 = vmatprep.mubr.f32.mxu0 0.0
      %625 = vmatmul.mubr.f32.gmra.mxu0 %v421
      %v626 = vpop.f32.mrf.mxu0
      %v627 = vadd.f32 0.0, %v626
      %v628 = vpop.f32.mrf.mxu0
      %629 = vmatprep.mubr.f32.mxu0 0.0
      %630 = vmatmul.mubr.f32.gmra.mxu0 %v424
      %v631 = vpop.f32.mrf.mxu0
      %v632 = vadd.f32 0.0, %v631
      %v633 = vpop.f32.mrf.mxu0
      %634 = vmatprep.mubr.f32.mxu0 0.0
      %635 = vmatmul.mubr.f32.gmra.mxu0 %v427
      %v636 = vpop.f32.mrf.mxu0
      %v637 = vadd.f32 0.0, %v636
      %v638 = vpop.f32.mrf.mxu0
      %639 = vmatprep.mubr.f32.mxu0 0.0
      %640 = vmatmul.mubr.f32.gmra.mxu0 %v430
      %v641 = vpop.f32.mrf.mxu0
      %v642 = vadd.f32 0.0, %v641
      %v643 = vpop.f32.mrf.mxu0
      %644 = vmatprep.mubr.f32.mxu0 0.0
      %645 = vmatmul.mubr.f32.gmra.mxu0 %v433
      %v646 = vpop.f32.mrf.mxu0
      %v647 = vadd.f32 0.0, %v646
      %v648 = vpop.f32.mrf.mxu0
      %649 = vmatprep.mubr.f32.mxu0 0.0
      %650 = vmatmul.mubr.f32.gmra.mxu0 %v436
      %v651 = vpop.f32.mrf.mxu0
      %v652 = vadd.f32 0.0, %v651
      %v653 = vpop.f32.mrf.mxu0
      %654 = vmatprep.mubr.f32.mxu0 0.0
      %655 = vmatmul.mubr.f32.gmra.mxu0 %v439
      %v656 = vpop.f32.mrf.mxu0
      %v657 = vadd.f32 0.0, %v656
      %v658 = vpop.f32.mrf.mxu0
      %659 = vmatprep.mubr.f32.mxu0 0.0
      %660 = vmatmul.mubr.f32.gmra.mxu0 %v442
      %v661 = vpop.f32.mrf.mxu0
      %v662 = vadd.f32 0.0, %v661
      %v663 = vpop.f32.mrf.mxu0
      %664 = vmatprep.mubr.f32.mxu0 0.0
      %665 = vmatmul.mubr.f32.gmra.mxu0 %v445
      %v666 = vpop.f32.mrf.mxu0
      %v667 = vadd.f32 0.0, %v666
      %v668 = vpop.f32.mrf.mxu0
      %669 = vmatprep.mubr.f32.mxu0 0.0
      %670 = vmatmul.mubr.f32.gmra.mxu0 %v448
      %v671 = vpop.f32.mrf.mxu0
      %v672 = vadd.f32 0.0, %v671
      %v673 = vpop.f32.mrf.mxu0
      %674 = vmatprep.mubr.f32.mxu0 0.0
      %675 = vmatmul.mubr.f32.gmra.mxu0 %v451
      %v676 = vpop.f32.mrf.mxu0
      %v677 = vadd.f32 0.0, %v676
      %v678 = vpop.f32.mrf.mxu0
      %679 = vmatprep.mubr.f32.mxu0 0.0
      %680 = vmatmul.mubr.f32.gmra.mxu0 %v454
      %v681 = vpop.f32.mrf.mxu0
      %v682 = vadd.f32 0.0, %v681
      %v683 = vpop.f32.mrf.mxu0
      %684 = vdwg.mxu0
      %v686 = vsel %vm182, %v293, 0
      %v689 = vsel %vm182, %v294, 0
      %v692 = vsel %vm182, %v295, 0
      %v695 = vsel %vm182, %v296, 0
      %v698 = vsel %vm182, %v297, 0
      %v701 = vsel %vm182, %v298, 0
      %v704 = vsel %vm182, %v299, 0
      %v707 = vsel %vm182, %v300, 0
      %v710 = vsel %vm182, %v301, 0
      %v713 = vsel %vm182, %v302, 0
      %v716 = vsel %vm182, %v303, 0
      %v719 = vsel %vm182, %v304, 0
      %v722 = vsel %vm182, %v305, 0
      %v725 = vsel %vm182, %v306, 0
      %v728 = vsel %vm182, %v307, 0
      %v731 = vsel %vm182, %v308, 0
      %v734 = vsel %vm182, %v309, 0
      %v737 = vsel %vm182, %v310, 0
      %v740 = vsel %vm182, %v311, 0
      %v743 = vsel %vm182, %v312, 0
      %v746 = vsel %vm182, %v313, 0
      %v749 = vsel %vm182, %v314, 0
      %v752 = vsel %vm182, %v315, 0
      %v755 = vsel %vm182, %v316, 0
      %v758 = vsel %vm182, %v317, 0
      %v761 = vsel %vm182, %v318, 0
      %v764 = vsel %vm182, %v319, 0
      %v767 = vsel %vm182, %v320, 0
      %v770 = vsel %vm182, %v321, 0
      %v773 = vsel %vm182, %v322, 0
      %v776 = vsel %vm182, %v323, 0
      %v779 = vsel %vm182, %v324, 0
      %v782 = vsel %vm456, %v325, 0
      %784 = vmatprep.subr.mxu0 0.0
      %785 = vmatpush1.msra.mxu0 0.0
      %786 = vmatprep.subr.mxu0 0.0
      %787 = vmatpush1.msra.mxu0 0.0
      %788 = vmatprep.subr.mxu0 0.0
      %789 = vmatpush1.msra.mxu0 0.0
      %790 = vmatprep.subr.mxu0 0.0
      %791 = vmatpush1.msra.mxu0 0.0
      %792 = vmatprep.subr.mxu0 0.0
      %793 = vmatpush1.msra.mxu0 0.0
      %794 = vmatprep.subr.mxu0 0.0
      %795 = vmatpush1.msra.mxu0 0.0
      %796 = vmatprep.subr.mxu0 0.0
      %797 = vmatpush1.msra.mxu0 0.0
      %798 = vmatprep.subr.mxu0 0.0
      %799 = vmatpush1.msra.mxu0 0.0
      %800 = vmatprep.subr.mxu0 0.0
      %801 = vmatpush1.msra.mxu0 0.0
      %802 = vmatprep.subr.mxu0 0.0
      %803 = vmatpush1.msra.mxu0 0.0
      %804 = vmatprep.subr.mxu0 0.0
      %805 = vmatpush1.msra.mxu0 0.0
      %806 = vmatprep.subr.mxu0 0.0
      %807 = vmatpush1.msra.mxu0 0.0
      %808 = vmatprep.subr.mxu0 0.0
      %809 = vmatpush1.msra.mxu0 0.0
      %810 = vmatprep.subr.mxu0 0.0
      %811 = vmatpush1.msra.mxu0 0.0
      %812 = vmatprep.subr.mxu0 0.0
      %813 = vmatpush1.msra.mxu0 0.0
      %814 = vmatprep.subr.mxu0 0.0
      %815 = vmatpush1.msra.mxu0 %v782
      %816 = vmatprep.subr.mxu0 0.0
      %817 = vmatpush2.msra.mxu0 0.0
      %818 = vmatprep.subr.mxu0 0.0
      %819 = vmatpush2.msra.mxu0 0.0
      %820 = vmatprep.subr.mxu0 0.0
      %821 = vmatpush2.msra.mxu0 0.0
      %822 = vmatprep.subr.mxu0 0.0
      %823 = vmatpush2.msra.mxu0 0.0
      %824 = vmatprep.subr.mxu0 0.0
      %825 = vmatpush2.msra.mxu0 0.0
      %826 = vmatprep.subr.mxu0 0.0
      %827 = vmatpush2.msra.mxu0 0.0
      %828 = vmatprep.subr.mxu0 0.0
      %829 = vmatpush2.msra.mxu0 0.0
      %830 = vmatprep.subr.mxu0 0.0
      %831 = vmatpush2.msra.mxu0 0.0
      %832 = vmatprep.subr.mxu0 0.0
      %833 = vmatpush2.msra.mxu0 0.0
      %834 = vmatprep.subr.mxu0 0.0
      %835 = vmatpush2.msra.mxu0 0.0
      %836 = vmatprep.subr.mxu0 0.0
      %837 = vmatpush2.msra.mxu0 0.0
      %838 = vmatprep.subr.mxu0 0.0
      %839 = vmatpush2.msra.mxu0 0.0
      %840 = vmatprep.subr.mxu0 0.0
      %841 = vmatpush2.msra.mxu0 0.0
      %842 = vmatprep.subr.mxu0 0.0
      %843 = vmatpush2.msra.mxu0 0.0
      %844 = vmatprep.subr.mxu0 0.0
      %845 = vmatpush2.msra.mxu0 0.0
      %846 = vmatprep.subr.mxu0 0.0
      %847 = vmatpush2.msra.mxu0 0.0
      %848 = vmatprep.mubr.f32.mxu0 0.0
      %849 = vmatmul.mubr.f32.gmra.mxu0 %v686
      %v850 = vpop.f32.mrf.mxu0
      %v851 = vadd.f32 %v527, %v850
      %v852 = vpop.f32.mrf.mxu0
      %853 = vmatprep.mubr.f32.mxu0 0.0
      %854 = vmatmul.mubr.f32.gmra.mxu0 %v689
      %v855 = vpop.f32.mrf.mxu0
      %v856 = vadd.f32 %v532, %v855
      %v857 = vpop.f32.mrf.mxu0
      %858 = vmatprep.mubr.f32.mxu0 0.0
      %859 = vmatmul.mubr.f32.gmra.mxu0 %v692
      %v860 = vpop.f32.mrf.mxu0
      %v861 = vadd.f32 %v537, %v860
      %v862 = vpop.f32.mrf.mxu0
      %863 = vmatprep.mubr.f32.mxu0 0.0
      %864 = vmatmul.mubr.f32.gmra.mxu0 %v695
      %v865 = vpop.f32.mrf.mxu0
      %v866 = vadd.f32 %v542, %v865
      %v867 = vpop.f32.mrf.mxu0
      %868 = vmatprep.mubr.f32.mxu0 0.0
      %869 = vmatmul.mubr.f32.gmra.mxu0 %v698
      %v870 = vpop.f32.mrf.mxu0
      %v871 = vadd.f32 %v547, %v870
      %v872 = vpop.f32.mrf.mxu0
      %873 = vmatprep.mubr.f32.mxu0 0.0
      %874 = vmatmul.mubr.f32.gmra.mxu0 %v701
      %v875 = vpop.f32.mrf.mxu0
      %v876 = vadd.f32 %v552, %v875
      %v877 = vpop.f32.mrf.mxu0
      %878 = vmatprep.mubr.f32.mxu0 0.0
      %879 = vmatmul.mubr.f32.gmra.mxu0 %v704
      %v880 = vpop.f32.mrf.mxu0
      %v881 = vadd.f32 %v557, %v880
      %v882 = vpop.f32.mrf.mxu0
      %883 = vmatprep.mubr.f32.mxu0 0.0
      %884 = vmatmul.mubr.f32.gmra.mxu0 %v707
      %v885 = vpop.f32.mrf.mxu0
      %v886 = vadd.f32 %v562, %v885
      %v887 = vpop.f32.mrf.mxu0
      %888 = vmatprep.mubr.f32.mxu0 0.0
      %889 = vmatmul.mubr.f32.gmra.mxu0 %v710
      %v890 = vpop.f32.mrf.mxu0
      %v891 = vadd.f32 %v567, %v890
      %v892 = vpop.f32.mrf.mxu0
      %893 = vmatprep.mubr.f32.mxu0 0.0
      %894 = vmatmul.mubr.f32.gmra.mxu0 %v713
      %v895 = vpop.f32.mrf.mxu0
      %v896 = vadd.f32 %v572, %v895
      %v897 = vpop.f32.mrf.mxu0
      %898 = vmatprep.mubr.f32.mxu0 0.0
      %899 = vmatmul.mubr.f32.gmra.mxu0 %v716
      %v900 = vpop.f32.mrf.mxu0
      %v901 = vadd.f32 %v577, %v900
      %v902 = vpop.f32.mrf.mxu0
      %903 = vmatprep.mubr.f32.mxu0 0.0
      %904 = vmatmul.mubr.f32.gmra.mxu0 %v719
      %v905 = vpop.f32.mrf.mxu0
      %v906 = vadd.f32 %v582, %v905
      %v907 = vpop.f32.mrf.mxu0
      %908 = vmatprep.mubr.f32.mxu0 0.0
      %909 = vmatmul.mubr.f32.gmra.mxu0 %v722
      %v910 = vpop.f32.mrf.mxu0
      %v911 = vadd.f32 %v587, %v910
      %v912 = vpop.f32.mrf.mxu0
      %913 = vmatprep.mubr.f32.mxu0 0.0
      %914 = vmatmul.mubr.f32.gmra.mxu0 %v725
      %v915 = vpop.f32.mrf.mxu0
      %v916 = vadd.f32 %v592, %v915
      %v917 = vpop.f32.mrf.mxu0
      %918 = vmatprep.mubr.f32.mxu0 0.0
      %919 = vmatmul.mubr.f32.gmra.mxu0 %v728
      %v920 = vpop.f32.mrf.mxu0
      %v921 = vadd.f32 %v597, %v920
      %v922 = vpop.f32.mrf.mxu0
      %923 = vmatprep.mubr.f32.mxu0 0.0
      %924 = vmatmul.mubr.f32.gmra.mxu0 %v731
      %v925 = vpop.f32.mrf.mxu0
      %v926 = vadd.f32 %v602, %v925
      %v927 = vpop.f32.mrf.mxu0
      %928 = vmatprep.mubr.f32.mxu0 0.0
      %929 = vmatmul.mubr.f32.gmra.mxu0 %v734
      %v930 = vpop.f32.mrf.mxu0
      %v931 = vadd.f32 %v607, %v930
      %v932 = vpop.f32.mrf.mxu0
      %933 = vmatprep.mubr.f32.mxu0 0.0
      %934 = vmatmul.mubr.f32.gmra.mxu0 %v737
      %v935 = vpop.f32.mrf.mxu0
      %v936 = vadd.f32 %v612, %v935
      %v937 = vpop.f32.mrf.mxu0
      %938 = vmatprep.mubr.f32.mxu0 0.0
      %939 = vmatmul.mubr.f32.gmra.mxu0 %v740
      %v940 = vpop.f32.mrf.mxu0
      %v941 = vadd.f32 %v617, %v940
      %v942 = vpop.f32.mrf.mxu0
      %943 = vmatprep.mubr.f32.mxu0 0.0
      %944 = vmatmul.mubr.f32.gmra.mxu0 %v743
      %v945 = vpop.f32.mrf.mxu0
      %v946 = vadd.f32 %v622, %v945
      %v947 = vpop.f32.mrf.mxu0
      %948 = vmatprep.mubr.f32.mxu0 0.0
      %949 = vmatmul.mubr.f32.gmra.mxu0 %v746
      %v950 = vpop.f32.mrf.mxu0
      %v951 = vadd.f32 %v627, %v950
      %v952 = vpop.f32.mrf.mxu0
      %953 = vmatprep.mubr.f32.mxu0 0.0
      %954 = vmatmul.mubr.f32.gmra.mxu0 %v749
      %v955 = vpop.f32.mrf.mxu0
      %v956 = vadd.f32 %v632, %v955
      %v957 = vpop.f32.mrf.mxu0
      %958 = vmatprep.mubr.f32.mxu0 0.0
      %959 = vmatmul.mubr.f32.gmra.mxu0 %v752
      %v960 = vpop.f32.mrf.mxu0
      %v961 = vadd.f32 %v637, %v960
      %v962 = vpop.f32.mrf.mxu0
      %963 = vmatprep.mubr.f32.mxu0 0.0
      %964 = vmatmul.mubr.f32.gmra.mxu0 %v755
      %v965 = vpop.f32.mrf.mxu0
      %v966 = vadd.f32 %v642, %v965
      %v967 = vpop.f32.mrf.mxu0
      %968 = vmatprep.mubr.f32.mxu0 0.0
      %969 = vmatmul.mubr.f32.gmra.mxu0 %v758
      %v970 = vpop.f32.mrf.mxu0
      %v971 = vadd.f32 %v647, %v970
      %v972 = vpop.f32.mrf.mxu0
      %973 = vmatprep.mubr.f32.mxu0 0.0
      %974 = vmatmul.mubr.f32.gmra.mxu0 %v761
      %v975 = vpop.f32.mrf.mxu0
      %v976 = vadd.f32 %v652, %v975
      %v977 = vpop.f32.mrf.mxu0
      %978 = vmatprep.mubr.f32.mxu0 0.0
      %979 = vmatmul.mubr.f32.gmra.mxu0 %v764
      %v980 = vpop.f32.mrf.mxu0
      %v981 = vadd.f32 %v657, %v980
      %v982 = vpop.f32.mrf.mxu0
      %983 = vmatprep.mubr.f32.mxu0 0.0
      %984 = vmatmul.mubr.f32.gmra.mxu0 %v767
      %v985 = vpop.f32.mrf.mxu0
      %v986 = vadd.f32 %v662, %v985
      %v987 = vpop.f32.mrf.mxu0
      %988 = vmatprep.mubr.f32.mxu0 0.0
      %989 = vmatmul.mubr.f32.gmra.mxu0 %v770
      %v990 = vpop.f32.mrf.mxu0
      %v991 = vadd.f32 %v667, %v990
      %v992 = vpop.f32.mrf.mxu0
      %993 = vmatprep.mubr.f32.mxu0 0.0
      %994 = vmatmul.mubr.f32.gmra.mxu0 %v773
      %v995 = vpop.f32.mrf.mxu0
      %v996 = vadd.f32 %v672, %v995
      %v997 = vpop.f32.mrf.mxu0
      %998 = vmatprep.mubr.f32.mxu0 0.0
      %999 = vmatmul.mubr.f32.gmra.mxu0 %v776
      %v1000 = vpop.f32.mrf.mxu0
      %v1001 = vadd.f32 %v677, %v1000
      %v1002 = vpop.f32.mrf.mxu0
      %1003 = vmatprep.mubr.f32.mxu0 0.0
      %1004 = vmatmul.mubr.f32.gmra.mxu0 %v779
      %v1005 = vpop.f32.mrf.mxu0
      %v1006 = vadd.f32 %v682, %v1005
      %v1007 = vpop.f32.mrf.mxu0
      %1008 = vdwg.mxu0
      %v1009 = vld [vmem:[#allocation2 + $0x2] sm:$0xff]
      %v1010 = vld [vmem:[#allocation2 + $0xa] sm:$0xff]
      %v1011 = vld [vmem:[#allocation2 + $0x1a] sm:$0xff]
      %v1012 = vld [vmem:[#allocation2 + $0x22] sm:$0xff]
      %v1013 = vld [vmem:[#allocation2 + $0x32] sm:$0xff]
      %v1014 = vld [vmem:[#allocation2 + $0x3a] sm:$0xff]
      %v1015 = vld [vmem:[#allocation2 + $0x4a] sm:$0xff]
      %v1016 = vld [vmem:[#allocation2 + $0x52] sm:$0xff]
      %v1017 = vld [vmem:[#allocation2 + $0x62] sm:$0xff]
      %v1018 = vld [vmem:[#allocation2 + $0x6a] sm:$0xff]
      %v1019 = vld [vmem:[#allocation2 + $0x7a] sm:$0xff]
      %v1020 = vld [vmem:[#allocation2 + $0x82] sm:$0xff]
      %v1021 = vld [vmem:[#allocation2 + $0x92] sm:$0xff]
      %v1022 = vld [vmem:[#allocation2 + $0x9a] sm:$0xff]
      %v1023 = vld [vmem:[#allocation2 + $0xaa] sm:$0xff]
      %v1024 = vld [vmem:[#allocation2 + $0xb2] sm:$0xff]
      %v1025 = vld [vmem:[#allocation2 + $0xc2] sm:$0xff]
      %v1026 = vld [vmem:[#allocation2 + $0xca] sm:$0xff]
      %v1027 = vld [vmem:[#allocation2 + $0xda] sm:$0xff]
      %v1028 = vld [vmem:[#allocation2 + $0xe2] sm:$0xff]
      %v1029 = vld [vmem:[#allocation2 + $0xf2] sm:$0xff]
      %v1030 = vld [vmem:[#allocation2 + $0xfa] sm:$0xff]
      %v1031 = vld [vmem:[#allocation2 + $0x10a] sm:$0xff]
      %v1032 = vld [vmem:[#allocation2 + $0x112] sm:$0xff]
      %v1033 = vld [vmem:[#allocation2 + $0x122] sm:$0xff]
      %v1034 = vld [vmem:[#allocation2 + $0x12a] sm:$0xff]
      %v1035 = vld [vmem:[#allocation2 + $0x13a] sm:$0xff]
      %v1036 = vld [vmem:[#allocation2 + $0x142] sm:$0xff]
      %v1037 = vld [vmem:[#allocation2 + $0x152] sm:$0xff]
      %v1038 = vld [vmem:[#allocation2 + $0x15a] sm:$0xff]
      %v1039 = vld [vmem:[#allocation2 + $0x16a] sm:$0xff]
      %v1040 = vld [vmem:[#allocation2 + $0x172] sm:$0xff]
      %s1041 = scalar_lea.vmem %s1, 8
      %v1042 = vld [vmem:[%s1041] sm:$0xf]
      %v1044 = vsel %vm182, %v1009, 0
      %v1047 = vsel %vm182, %v1010, 0
      %v1050 = vsel %vm182, %v1011, 0
      %v1053 = vsel %vm182, %v1012, 0
      %v1056 = vsel %vm182, %v1013, 0
      %v1059 = vsel %vm182, %v1014, 0
      %v1062 = vsel %vm182, %v1015, 0
      %v1065 = vsel %vm182, %v1016, 0
      %v1068 = vsel %vm182, %v1017, 0
      %v1071 = vsel %vm182, %v1018, 0
      %v1074 = vsel %vm182, %v1019, 0
      %v1077 = vsel %vm182, %v1020, 0
      %v1080 = vsel %vm182, %v1021, 0
      %v1083 = vsel %vm182, %v1022, 0
      %v1086 = vsel %vm182, %v1023, 0
      %v1089 = vsel %vm182, %v1024, 0
      %v1092 = vsel %vm182, %v1025, 0
      %v1095 = vsel %vm182, %v1026, 0
      %v1098 = vsel %vm182, %v1027, 0
      %v1101 = vsel %vm182, %v1028, 0
      %v1104 = vsel %vm182, %v1029, 0
      %v1107 = vsel %vm182, %v1030, 0
      %v1110 = vsel %vm182, %v1031, 0
      %v1113 = vsel %vm182, %v1032, 0
      %v1116 = vsel %vm182, %v1033, 0
      %v1119 = vsel %vm182, %v1034, 0
      %v1122 = vsel %vm182, %v1035, 0
      %v1125 = vsel %vm182, %v1036, 0
      %v1128 = vsel %vm182, %v1037, 0
      %v1131 = vsel %vm182, %v1038, 0
      %v1134 = vsel %vm182, %v1039, 0
      %v1137 = vsel %vm182, %v1040, 0
      %v1140 = vsel %vm456, %v1042, 0
      %1142 = vmatprep.subr.mxu0 0.0
      %1143 = vmatpush1.msra.mxu0 0.0
      %1144 = vmatprep.subr.mxu0 0.0
      %1145 = vmatpush1.msra.mxu0 0.0
      %1146 = vmatprep.subr.mxu0 0.0
      %1147 = vmatpush1.msra.mxu0 0.0
      %1148 = vmatprep.subr.mxu0 0.0
      %1149 = vmatpush1.msra.mxu0 0.0
      %1150 = vmatprep.subr.mxu0 0.0
      %1151 = vmatpush1.msra.mxu0 0.0
      %1152 = vmatprep.subr.mxu0 0.0
      %1153 = vmatpush1.msra.mxu0 0.0
      %1154 = vmatprep.subr.mxu0 0.0
      %1155 = vmatpush1.msra.mxu0 0.0
      %1156 = vmatprep.subr.mxu0 0.0
      %1157 = vmatpush1.msra.mxu0 0.0
      %1158 = vmatprep.subr.mxu0 0.0
      %1159 = vmatpush1.msra.mxu0 0.0
      %1160 = vmatprep.subr.mxu0 0.0
      %1161 = vmatpush1.msra.mxu0 0.0
      %1162 = vmatprep.subr.mxu0 0.0
      %1163 = vmatpush1.msra.mxu0 0.0
      %1164 = vmatprep.subr.mxu0 0.0
      %1165 = vmatpush1.msra.mxu0 0.0
      %1166 = vmatprep.subr.mxu0 0.0
      %1167 = vmatpush1.msra.mxu0 0.0
      %1168 = vmatprep.subr.mxu0 0.0
      %1169 = vmatpush1.msra.mxu0 0.0
      %1170 = vmatprep.subr.mxu0 0.0
      %1171 = vmatpush1.msra.mxu0 0.0
      %1172 = vmatprep.subr.mxu0 0.0
      %1173 = vmatpush1.msra.mxu0 %v1140
      %1174 = vmatprep.subr.mxu0 0.0
      %1175 = vmatpush2.msra.mxu0 0.0
      %1176 = vmatprep.subr.mxu0 0.0
      %1177 = vmatpush2.msra.mxu0 0.0
      %1178 = vmatprep.subr.mxu0 0.0
      %1179 = vmatpush2.msra.mxu0 0.0
      %1180 = vmatprep.subr.mxu0 0.0
      %1181 = vmatpush2.msra.mxu0 0.0
      %1182 = vmatprep.subr.mxu0 0.0
      %1183 = vmatpush2.msra.mxu0 0.0
      %1184 = vmatprep.subr.mxu0 0.0
      %1185 = vmatpush2.msra.mxu0 0.0
      %1186 = vmatprep.subr.mxu0 0.0
      %1187 = vmatpush2.msra.mxu0 0.0
      %1188 = vmatprep.subr.mxu0 0.0
      %1189 = vmatpush2.msra.mxu0 0.0
      %1190 = vmatprep.subr.mxu0 0.0
      %1191 = vmatpush2.msra.mxu0 0.0
      %1192 = vmatprep.subr.mxu0 0.0
      %1193 = vmatpush2.msra.mxu0 0.0
      %1194 = vmatprep.subr.mxu0 0.0
      %1195 = vmatpush2.msra.mxu0 0.0
      %1196 = vmatprep.subr.mxu0 0.0
      %1197 = vmatpush2.msra.mxu0 0.0
      %1198 = vmatprep.subr.mxu0 0.0
      %1199 = vmatpush2.msra.mxu0 0.0
      %1200 = vmatprep.subr.mxu0 0.0
      %1201 = vmatpush2.msra.mxu0 0.0
      %1202 = vmatprep.subr.mxu0 0.0
      %1203 = vmatpush2.msra.mxu0 0.0
      %1204 = vmatprep.subr.mxu0 0.0
      %1205 = vmatpush2.msra.mxu0 0.0
      %1206 = vmatprep.mubr.f32.mxu0 0.0
      %1207 = vmatmul.mubr.f32.gmra.mxu0 %v1044
      %v1208 = vpop.f32.mrf.mxu0
      %v1209 = vadd.f32 0.0, %v1208
      %v1210 = vpop.f32.mrf.mxu0
      %1211 = vmatprep.mubr.f32.mxu0 0.0
      %1212 = vmatmul.mubr.f32.gmra.mxu0 %v1047
      %v1213 = vpop.f32.mrf.mxu0
      %v1214 = vadd.f32 0.0, %v1213
      %v1215 = vpop.f32.mrf.mxu0
      %1216 = vmatprep.mubr.f32.mxu0 0.0
      %1217 = vmatmul.mubr.f32.gmra.mxu0 %v1050
      %v1218 = vpop.f32.mrf.mxu0
      %v1219 = vadd.f32 0.0, %v1218
      %v1220 = vpop.f32.mrf.mxu0
      %1221 = vmatprep.mubr.f32.mxu0 0.0
      %1222 = vmatmul.mubr.f32.gmra.mxu0 %v1053
      %v1223 = vpop.f32.mrf.mxu0
      %v1224 = vadd.f32 0.0, %v1223
      %v1225 = vpop.f32.mrf.mxu0
      %1226 = vmatprep.mubr.f32.mxu0 0.0
      %1227 = vmatmul.mubr.f32.gmra.mxu0 %v1056
      %v1228 = vpop.f32.mrf.mxu0
      %v1229 = vadd.f32 0.0, %v1228
      %v1230 = vpop.f32.mrf.mxu0
      %1231 = vmatprep.mubr.f32.mxu0 0.0
      %1232 = vmatmul.mubr.f32.gmra.mxu0 %v1059
      %v1233 = vpop.f32.mrf.mxu0
      %v1234 = vadd.f32 0.0, %v1233
      %v1235 = vpop.f32.mrf.mxu0
      %1236 = vmatprep.mubr.f32.mxu0 0.0
      %1237 = vmatmul.mubr.f32.gmra.mxu0 %v1062
      %v1238 = vpop.f32.mrf.mxu0
      %v1239 = vadd.f32 0.0, %v1238
      %v1240 = vpop.f32.mrf.mxu0
      %1241 = vmatprep.mubr.f32.mxu0 0.0
      %1242 = vmatmul.mubr.f32.gmra.mxu0 %v1065
      %v1243 = vpop.f32.mrf.mxu0
      %v1244 = vadd.f32 0.0, %v1243
      %v1245 = vpop.f32.mrf.mxu0
      %1246 = vmatprep.mubr.f32.mxu0 0.0
      %1247 = vmatmul.mubr.f32.gmra.mxu0 %v1068
      %v1248 = vpop.f32.mrf.mxu0
      %v1249 = vadd.f32 0.0, %v1248
      %v1250 = vpop.f32.mrf.mxu0
      %1251 = vmatprep.mubr.f32.mxu0 0.0
      %1252 = vmatmul.mubr.f32.gmra.mxu0 %v1071
      %v1253 = vpop.f32.mrf.mxu0
      %v1254 = vadd.f32 0.0, %v1253
      %v1255 = vpop.f32.mrf.mxu0
      %1256 = vmatprep.mubr.f32.mxu0 0.0
      %1257 = vmatmul.mubr.f32.gmra.mxu0 %v1074
      %v1258 = vpop.f32.mrf.mxu0
      %v1259 = vadd.f32 0.0, %v1258
      %v1260 = vpop.f32.mrf.mxu0
      %1261 = vmatprep.mubr.f32.mxu0 0.0
      %1262 = vmatmul.mubr.f32.gmra.mxu0 %v1077
      %v1263 = vpop.f32.mrf.mxu0
      %v1264 = vadd.f32 0.0, %v1263
      %v1265 = vpop.f32.mrf.mxu0
      %1266 = vmatprep.mubr.f32.mxu0 0.0
      %1267 = vmatmul.mubr.f32.gmra.mxu0 %v1080
      %v1268 = vpop.f32.mrf.mxu0
      %v1269 = vadd.f32 0.0, %v1268
      %v1270 = vpop.f32.mrf.mxu0
      %1271 = vmatprep.mubr.f32.mxu0 0.0
      %1272 = vmatmul.mubr.f32.gmra.mxu0 %v1083
      %v1273 = vpop.f32.mrf.mxu0
      %v1274 = vadd.f32 0.0, %v1273
      %v1275 = vpop.f32.mrf.mxu0
      %1276 = vmatprep.mubr.f32.mxu0 0.0
      %1277 = vmatmul.mubr.f32.gmra.mxu0 %v1086
      %v1278 = vpop.f32.mrf.mxu0
      %v1279 = vadd.f32 0.0, %v1278
      %v1280 = vpop.f32.mrf.mxu0
      %1281 = vmatprep.mubr.f32.mxu0 0.0
      %1282 = vmatmul.mubr.f32.gmra.mxu0 %v1089
      %v1283 = vpop.f32.mrf.mxu0
      %v1284 = vadd.f32 0.0, %v1283
      %v1285 = vpop.f32.mrf.mxu0
      %1286 = vmatprep.mubr.f32.mxu0 0.0
      %1287 = vmatmul.mubr.f32.gmra.mxu0 %v1092
      %v1288 = vpop.f32.mrf.mxu0
      %v1289 = vadd.f32 0.0, %v1288
      %v1290 = vpop.f32.mrf.mxu0
      %1291 = vmatprep.mubr.f32.mxu0 0.0
      %1292 = vmatmul.mubr.f32.gmra.mxu0 %v1095
      %v1293 = vpop.f32.mrf.mxu0
      %v1294 = vadd.f32 0.0, %v1293
      %v1295 = vpop.f32.mrf.mxu0
      %1296 = vmatprep.mubr.f32.mxu0 0.0
      %1297 = vmatmul.mubr.f32.gmra.mxu0 %v1098
      %v1298 = vpop.f32.mrf.mxu0
      %v1299 = vadd.f32 0.0, %v1298
      %v1300 = vpop.f32.mrf.mxu0
      %1301 = vmatprep.mubr.f32.mxu0 0.0
      %1302 = vmatmul.mubr.f32.gmra.mxu0 %v1101
      %v1303 = vpop.f32.mrf.mxu0
      %v1304 = vadd.f32 0.0, %v1303
      %v1305 = vpop.f32.mrf.mxu0
      %1306 = vmatprep.mubr.f32.mxu0 0.0
      %1307 = vmatmul.mubr.f32.gmra.mxu0 %v1104
      %v1308 = vpop.f32.mrf.mxu0
      %v1309 = vadd.f32 0.0, %v1308
      %v1310 = vpop.f32.mrf.mxu0
      %1311 = vmatprep.mubr.f32.mxu0 0.0
      %1312 = vmatmul.mubr.f32.gmra.mxu0 %v1107
      %v1313 = vpop.f32.mrf.mxu0
      %v1314 = vadd.f32 0.0, %v1313
      %v1315 = vpop.f32.mrf.mxu0
      %1316 = vmatprep.mubr.f32.mxu0 0.0
      %1317 = vmatmul.mubr.f32.gmra.mxu0 %v1110
      %v1318 = vpop.f32.mrf.mxu0
      %v1319 = vadd.f32 0.0, %v1318
      %v1320 = vpop.f32.mrf.mxu0
      %1321 = vmatprep.mubr.f32.mxu0 0.0
      %1322 = vmatmul.mubr.f32.gmra.mxu0 %v1113
      %v1323 = vpop.f32.mrf.mxu0
      %v1324 = vadd.f32 0.0, %v1323
      %v1325 = vpop.f32.mrf.mxu0
      %1326 = vmatprep.mubr.f32.mxu0 0.0
      %1327 = vmatmul.mubr.f32.gmra.mxu0 %v1116
      %v1328 = vpop.f32.mrf.mxu0
      %v1329 = vadd.f32 0.0, %v1328
      %v1330 = vpop.f32.mrf.mxu0
      %1331 = vmatprep.mubr.f32.mxu0 0.0
      %1332 = vmatmul.mubr.f32.gmra.mxu0 %v1119
      %v1333 = vpop.f32.mrf.mxu0
      %v1334 = vadd.f32 0.0, %v1333
      %v1335 = vpop.f32.mrf.mxu0
      %1336 = vmatprep.mubr.f32.mxu0 0.0
      %1337 = vmatmul.mubr.f32.gmra.mxu0 %v1122
      %v1338 = vpop.f32.mrf.mxu0
      %v1339 = vadd.f32 0.0, %v1338
      %v1340 = vpop.f32.mrf.mxu0
      %1341 = vmatprep.mubr.f32.mxu0 0.0
      %1342 = vmatmul.mubr.f32.gmra.mxu0 %v1125
      %v1343 = vpop.f32.mrf.mxu0
      %v1344 = vadd.f32 0.0, %v1343
      %v1345 = vpop.f32.mrf.mxu0
      %1346 = vmatprep.mubr.f32.mxu0 0.0
      %1347 = vmatmul.mubr.f32.gmra.mxu0 %v1128
      %v1348 = vpop.f32.mrf.mxu0
      %v1349 = vadd.f32 0.0, %v1348
      %v1350 = vpop.f32.mrf.mxu0
      %1351 = vmatprep.mubr.f32.mxu0 0.0
      %1352 = vmatmul.mubr.f32.gmra.mxu0 %v1131
      %v1353 = vpop.f32.mrf.mxu0
      %v1354 = vadd.f32 0.0, %v1353
      %v1355 = vpop.f32.mrf.mxu0
      %1356 = vmatprep.mubr.f32.mxu0 0.0
      %1357 = vmatmul.mubr.f32.gmra.mxu0 %v1134
      %v1358 = vpop.f32.mrf.mxu0
      %v1359 = vadd.f32 0.0, %v1358
      %v1360 = vpop.f32.mrf.mxu0
      %1361 = vmatprep.mubr.f32.mxu0 0.0
      %1362 = vmatmul.mubr.f32.gmra.mxu0 %v1137
      %v1363 = vpop.f32.mrf.mxu0
      %v1364 = vadd.f32 0.0, %v1363
      %v1365 = vpop.f32.mrf.mxu0
      %1366 = vdwg.mxu0
      %v1367 = vadd.f32 %v851, %v1209
      %v1368 = vadd.f32 %v856, %v1214
      %v1369 = vadd.f32 %v861, %v1219
      %v1370 = vadd.f32 %v866, %v1224
      %v1371 = vadd.f32 %v871, %v1229
      %v1372 = vadd.f32 %v876, %v1234
      %v1373 = vadd.f32 %v881, %v1239
      %v1374 = vadd.f32 %v886, %v1244
      %v1375 = vadd.f32 %v891, %v1249
      %v1376 = vadd.f32 %v896, %v1254
      %v1377 = vadd.f32 %v901, %v1259
      %v1378 = vadd.f32 %v906, %v1264
      %v1379 = vadd.f32 %v911, %v1269
      %v1380 = vadd.f32 %v916, %v1274
      %v1381 = vadd.f32 %v921, %v1279
      %v1382 = vadd.f32 %v926, %v1284
      %v1383 = vadd.f32 %v931, %v1289
      %v1384 = vadd.f32 %v936, %v1294
      %v1385 = vadd.f32 %v941, %v1299
      %v1386 = vadd.f32 %v946, %v1304
      %v1387 = vadd.f32 %v951, %v1309
      %v1388 = vadd.f32 %v956, %v1314
      %v1389 = vadd.f32 %v961, %v1319
      %v1390 = vadd.f32 %v966, %v1324
      %v1391 = vadd.f32 %v971, %v1329
      %v1392 = vadd.f32 %v976, %v1334
      %v1393 = vadd.f32 %v981, %v1339
      %v1394 = vadd.f32 %v986, %v1344
      %v1395 = vadd.f32 %v991, %v1349
      %v1396 = vadd.f32 %v996, %v1354
      %v1397 = vadd.f32 %v1001, %v1359
      %v1398 = vadd.f32 %v1006, %v1364
      %v1399 = vld [vmem:[%s260] sm:$0xff]
      %v1400 = vld [vmem:[%s260 + $0x8] sm:$0xff]
      %v1401 = vld [vmem:[%s260 + $0x18] sm:$0xff]
      %v1402 = vld [vmem:[%s260 + $0x20] sm:$0xff]
      %v1403 = vld [vmem:[%s260 + $0x30] sm:$0xff]
      %v1404 = vld [vmem:[%s260 + $0x38] sm:$0xff]
      %v1405 = vld [vmem:[%s260 + $0x48] sm:$0xff]
      %v1406 = vld [vmem:[%s260 + $0x50] sm:$0xff]
      %v1407 = vld [vmem:[%s260 + $0x60] sm:$0xff]
      %v1408 = vld [vmem:[%s260 + $0x68] sm:$0xff]
      %v1409 = vld [vmem:[%s260 + $0x78] sm:$0xff]
      %v1410 = vld [vmem:[%s260 + $0x80] sm:$0xff]
      %v1411 = vld [vmem:[%s260 + $0x90] sm:$0xff]
      %v1412 = vld [vmem:[%s260 + $0x98] sm:$0xff]
      %v1413 = vld [vmem:[%s260 + $0xa8] sm:$0xff]
      %v1414 = vld [vmem:[%s260 + $0xb0] sm:$0xff]
      %v1415 = vld [vmem:[%s260 + $0xc0] sm:$0xff]
      %v1416 = vld [vmem:[%s260 + $0xc8] sm:$0xff]
      %v1417 = vld [vmem:[%s260 + $0xd8] sm:$0xff]
      %v1418 = vld [vmem:[%s260 + $0xe0] sm:$0xff]
      %v1419 = vld [vmem:[%s260 + $0xf0] sm:$0xff]
      %v1420 = vld [vmem:[%s260 + $0xf8] sm:$0xff]
      %v1421 = vld [vmem:[%s260 + $0x108] sm:$0xff]
      %v1422 = vld [vmem:[%s260 + $0x110] sm:$0xff]
      %v1423 = vld [vmem:[%s260 + $0x120] sm:$0xff]
      %v1424 = vld [vmem:[%s260 + $0x128] sm:$0xff]
      %v1425 = vld [vmem:[%s260 + $0x138] sm:$0xff]
      %v1426 = vld [vmem:[%s260 + $0x140] sm:$0xff]
      %v1427 = vld [vmem:[%s260 + $0x150] sm:$0xff]
      %v1428 = vld [vmem:[%s260 + $0x158] sm:$0xff]
      %v1429 = vld [vmem:[%s260 + $0x168] sm:$0xff]
      %v1430 = vld [vmem:[%s260 + $0x170] sm:$0xff]
      %s1431 = scalar_lea.vmem %s1, 12
      %v1432 = vld [vmem:[%s1431] sm:$0xf]
      %v1434 = vsel %vm182, %v1399, 0
      %v1437 = vsel %vm182, %v1400, 0
      %v1440 = vsel %vm182, %v1401, 0
      %v1443 = vsel %vm182, %v1402, 0
      %v1446 = vsel %vm182, %v1403, 0
      %v1449 = vsel %vm182, %v1404, 0
      %v1452 = vsel %vm182, %v1405, 0
      %v1455 = vsel %vm182, %v1406, 0
      %v1458 = vsel %vm182, %v1407, 0
      %v1461 = vsel %vm182, %v1408, 0
      %v1464 = vsel %vm182, %v1409, 0
      %v1467 = vsel %vm182, %v1410, 0
      %v1470 = vsel %vm182, %v1411, 0
      %v1473 = vsel %vm182, %v1412, 0
      %v1476 = vsel %vm182, %v1413, 0
      %v1479 = vsel %vm182, %v1414, 0
      %v1482 = vsel %vm182, %v1415, 0
      %v1485 = vsel %vm182, %v1416, 0
      %v1488 = vsel %vm182, %v1417, 0
      %v1491 = vsel %vm182, %v1418, 0
      %v1494 = vsel %vm182, %v1419, 0
      %v1497 = vsel %vm182, %v1420, 0
      %v1500 = vsel %vm182, %v1421, 0
      %v1503 = vsel %vm182, %v1422, 0
      %v1506 = vsel %vm182, %v1423, 0
      %v1509 = vsel %vm182, %v1424, 0
      %v1512 = vsel %vm182, %v1425, 0
      %v1515 = vsel %vm182, %v1426, 0
      %v1518 = vsel %vm182, %v1427, 0
      %v1521 = vsel %vm182, %v1428, 0
      %v1524 = vsel %vm182, %v1429, 0
      %v1527 = vsel %vm182, %v1430, 0
      %v1530 = vsel %vm456, %v1432, 0
      %1532 = vmatprep.subr.mxu0 0.0
      %1533 = vmatpush1.msra.mxu0 0.0
      %1534 = vmatprep.subr.mxu0 0.0
      %1535 = vmatpush1.msra.mxu0 0.0
      %1536 = vmatprep.subr.mxu0 0.0
      %1537 = vmatpush1.msra.mxu0 0.0
      %1538 = vmatprep.subr.mxu0 0.0
      %1539 = vmatpush1.msra.mxu0 0.0
      %1540 = vmatprep.subr.mxu0 0.0
      %1541 = vmatpush1.msra.mxu0 0.0
      %1542 = vmatprep.subr.mxu0 0.0
      %1543 = vmatpush1.msra.mxu0 0.0
      %1544 = vmatprep.subr.mxu0 0.0
      %1545 = vmatpush1.msra.mxu0 0.0
      %1546 = vmatprep.subr.mxu0 0.0
      %1547 = vmatpush1.msra.mxu0 0.0
      %1548 = vmatprep.subr.mxu0 0.0
      %1549 = vmatpush1.msra.mxu0 0.0
      %1550 = vmatprep.subr.mxu0 0.0
      %1551 = vmatpush1.msra.mxu0 0.0
      %1552 = vmatprep.subr.mxu0 0.0
      %1553 = vmatpush1.msra.mxu0 0.0
      %1554 = vmatprep.subr.mxu0 0.0
      %1555 = vmatpush1.msra.mxu0 0.0
      %1556 = vmatprep.subr.mxu0 0.0
      %1557 = vmatpush1.msra.mxu0 0.0
      %1558 = vmatprep.subr.mxu0 0.0
      %1559 = vmatpush1.msra.mxu0 0.0
      %1560 = vmatprep.subr.mxu0 0.0
      %1561 = vmatpush1.msra.mxu0 0.0
      %1562 = vmatprep.subr.mxu0 0.0
      %1563 = vmatpush1.msra.mxu0 %v1530
      %1564 = vmatprep.subr.mxu0 0.0
      %1565 = vmatpush2.msra.mxu0 0.0
      %1566 = vmatprep.subr.mxu0 0.0
      %1567 = vmatpush2.msra.mxu0 0.0
      %1568 = vmatprep.subr.mxu0 0.0
      %1569 = vmatpush2.msra.mxu0 0.0
      %1570 = vmatprep.subr.mxu0 0.0
      %1571 = vmatpush2.msra.mxu0 0.0
      %1572 = vmatprep.subr.mxu0 0.0
      %1573 = vmatpush2.msra.mxu0 0.0
      %1574 = vmatprep.subr.mxu0 0.0
      %1575 = vmatpush2.msra.mxu0 0.0
      %1576 = vmatprep.subr.mxu0 0.0
      %1577 = vmatpush2.msra.mxu0 0.0
      %1578 = vmatprep.subr.mxu0 0.0
      %1579 = vmatpush2.msra.mxu0 0.0
      %1580 = vmatprep.subr.mxu0 0.0
      %1581 = vmatpush2.msra.mxu0 0.0
      %1582 = vmatprep.subr.mxu0 0.0
      %1583 = vmatpush2.msra.mxu0 0.0
      %1584 = vmatprep.subr.mxu0 0.0
      %1585 = vmatpush2.msra.mxu0 0.0
      %1586 = vmatprep.subr.mxu0 0.0
      %1587 = vmatpush2.msra.mxu0 0.0
      %1588 = vmatprep.subr.mxu0 0.0
      %1589 = vmatpush2.msra.mxu0 0.0
      %1590 = vmatprep.subr.mxu0 0.0
      %1591 = vmatpush2.msra.mxu0 0.0
      %1592 = vmatprep.subr.mxu0 0.0
      %1593 = vmatpush2.msra.mxu0 0.0
      %1594 = vmatprep.subr.mxu0 0.0
      %1595 = vmatpush2.msra.mxu0 0.0
      %1596 = vmatprep.mubr.f32.mxu0 0.0
      %1597 = vmatmul.mubr.f32.gmra.mxu0 %v1434
      %v1598 = vpop.f32.mrf.mxu0
      %v1599 = vadd.f32 0.0, %v1598
      %v1600 = vpop.f32.mrf.mxu0
      %1601 = vmatprep.mubr.f32.mxu0 0.0
      %1602 = vmatmul.mubr.f32.gmra.mxu0 %v1437
      %v1603 = vpop.f32.mrf.mxu0
      %v1604 = vadd.f32 0.0, %v1603
      %v1605 = vpop.f32.mrf.mxu0
      %1606 = vmatprep.mubr.f32.mxu0 0.0
      %1607 = vmatmul.mubr.f32.gmra.mxu0 %v1440
      %v1608 = vpop.f32.mrf.mxu0
      %v1609 = vadd.f32 0.0, %v1608
      %v1610 = vpop.f32.mrf.mxu0
      %1611 = vmatprep.mubr.f32.mxu0 0.0
      %1612 = vmatmul.mubr.f32.gmra.mxu0 %v1443
      %v1613 = vpop.f32.mrf.mxu0
      %v1614 = vadd.f32 0.0, %v1613
      %v1615 = vpop.f32.mrf.mxu0
      %1616 = vmatprep.mubr.f32.mxu0 0.0
      %1617 = vmatmul.mubr.f32.gmra.mxu0 %v1446
      %v1618 = vpop.f32.mrf.mxu0
      %v1619 = vadd.f32 0.0, %v1618
      %v1620 = vpop.f32.mrf.mxu0
      %1621 = vmatprep.mubr.f32.mxu0 0.0
      %1622 = vmatmul.mubr.f32.gmra.mxu0 %v1449
      %v1623 = vpop.f32.mrf.mxu0
      %v1624 = vadd.f32 0.0, %v1623
      %v1625 = vpop.f32.mrf.mxu0
      %1626 = vmatprep.mubr.f32.mxu0 0.0
      %1627 = vmatmul.mubr.f32.gmra.mxu0 %v1452
      %v1628 = vpop.f32.mrf.mxu0
      %v1629 = vadd.f32 0.0, %v1628
      %v1630 = vpop.f32.mrf.mxu0
      %1631 = vmatprep.mubr.f32.mxu0 0.0
      %1632 = vmatmul.mubr.f32.gmra.mxu0 %v1455
      %v1633 = vpop.f32.mrf.mxu0
      %v1634 = vadd.f32 0.0, %v1633
      %v1635 = vpop.f32.mrf.mxu0
      %1636 = vmatprep.mubr.f32.mxu0 0.0
      %1637 = vmatmul.mubr.f32.gmra.mxu0 %v1458
      %v1638 = vpop.f32.mrf.mxu0
      %v1639 = vadd.f32 0.0, %v1638
      %v1640 = vpop.f32.mrf.mxu0
      %1641 = vmatprep.mubr.f32.mxu0 0.0
      %1642 = vmatmul.mubr.f32.gmra.mxu0 %v1461
      %v1643 = vpop.f32.mrf.mxu0
      %v1644 = vadd.f32 0.0, %v1643
      %v1645 = vpop.f32.mrf.mxu0
      %1646 = vmatprep.mubr.f32.mxu0 0.0
      %1647 = vmatmul.mubr.f32.gmra.mxu0 %v1464
      %v1648 = vpop.f32.mrf.mxu0
      %v1649 = vadd.f32 0.0, %v1648
      %v1650 = vpop.f32.mrf.mxu0
      %1651 = vmatprep.mubr.f32.mxu0 0.0
      %1652 = vmatmul.mubr.f32.gmra.mxu0 %v1467
      %v1653 = vpop.f32.mrf.mxu0
      %v1654 = vadd.f32 0.0, %v1653
      %v1655 = vpop.f32.mrf.mxu0
      %1656 = vmatprep.mubr.f32.mxu0 0.0
      %1657 = vmatmul.mubr.f32.gmra.mxu0 %v1470
      %v1658 = vpop.f32.mrf.mxu0
      %v1659 = vadd.f32 0.0, %v1658
      %v1660 = vpop.f32.mrf.mxu0
      %1661 = vmatprep.mubr.f32.mxu0 0.0
      %1662 = vmatmul.mubr.f32.gmra.mxu0 %v1473
      %v1663 = vpop.f32.mrf.mxu0
      %v1664 = vadd.f32 0.0, %v1663
      %v1665 = vpop.f32.mrf.mxu0
      %1666 = vmatprep.mubr.f32.mxu0 0.0
      %1667 = vmatmul.mubr.f32.gmra.mxu0 %v1476
      %v1668 = vpop.f32.mrf.mxu0
      %v1669 = vadd.f32 0.0, %v1668
      %v1670 = vpop.f32.mrf.mxu0
      %1671 = vmatprep.mubr.f32.mxu0 0.0
      %1672 = vmatmul.mubr.f32.gmra.mxu0 %v1479
      %v1673 = vpop.f32.mrf.mxu0
      %v1674 = vadd.f32 0.0, %v1673
      %v1675 = vpop.f32.mrf.mxu0
      %1676 = vmatprep.mubr.f32.mxu0 0.0
      %1677 = vmatmul.mubr.f32.gmra.mxu0 %v1482
      %v1678 = vpop.f32.mrf.mxu0
      %v1679 = vadd.f32 0.0, %v1678
      %v1680 = vpop.f32.mrf.mxu0
      %1681 = vmatprep.mubr.f32.mxu0 0.0
      %1682 = vmatmul.mubr.f32.gmra.mxu0 %v1485
      %v1683 = vpop.f32.mrf.mxu0
      %v1684 = vadd.f32 0.0, %v1683
      %v1685 = vpop.f32.mrf.mxu0
      %1686 = vmatprep.mubr.f32.mxu0 0.0
      %1687 = vmatmul.mubr.f32.gmra.mxu0 %v1488
      %v1688 = vpop.f32.mrf.mxu0
      %v1689 = vadd.f32 0.0, %v1688
      %v1690 = vpop.f32.mrf.mxu0
      %1691 = vmatprep.mubr.f32.mxu0 0.0
      %1692 = vmatmul.mubr.f32.gmra.mxu0 %v1491
      %v1693 = vpop.f32.mrf.mxu0
      %v1694 = vadd.f32 0.0, %v1693
      %v1695 = vpop.f32.mrf.mxu0
      %1696 = vmatprep.mubr.f32.mxu0 0.0
      %1697 = vmatmul.mubr.f32.gmra.mxu0 %v1494
      %v1698 = vpop.f32.mrf.mxu0
      %v1699 = vadd.f32 0.0, %v1698
      %v1700 = vpop.f32.mrf.mxu0
      %1701 = vmatprep.mubr.f32.mxu0 0.0
      %1702 = vmatmul.mubr.f32.gmra.mxu0 %v1497
      %v1703 = vpop.f32.mrf.mxu0
      %v1704 = vadd.f32 0.0, %v1703
      %v1705 = vpop.f32.mrf.mxu0
      %1706 = vmatprep.mubr.f32.mxu0 0.0
      %1707 = vmatmul.mubr.f32.gmra.mxu0 %v1500
      %v1708 = vpop.f32.mrf.mxu0
      %v1709 = vadd.f32 0.0, %v1708
      %v1710 = vpop.f32.mrf.mxu0
      %1711 = vmatprep.mubr.f32.mxu0 0.0
      %1712 = vmatmul.mubr.f32.gmra.mxu0 %v1503
      %v1713 = vpop.f32.mrf.mxu0
      %v1714 = vadd.f32 0.0, %v1713
      %v1715 = vpop.f32.mrf.mxu0
      %1716 = vmatprep.mubr.f32.mxu0 0.0
      %1717 = vmatmul.mubr.f32.gmra.mxu0 %v1506
      %v1718 = vpop.f32.mrf.mxu0
      %v1719 = vadd.f32 0.0, %v1718
      %v1720 = vpop.f32.mrf.mxu0
      %1721 = vmatprep.mubr.f32.mxu0 0.0
      %1722 = vmatmul.mubr.f32.gmra.mxu0 %v1509
      %v1723 = vpop.f32.mrf.mxu0
      %v1724 = vadd.f32 0.0, %v1723
      %v1725 = vpop.f32.mrf.mxu0
      %1726 = vmatprep.mubr.f32.mxu0 0.0
      %1727 = vmatmul.mubr.f32.gmra.mxu0 %v1512
      %v1728 = vpop.f32.mrf.mxu0
      %v1729 = vadd.f32 0.0, %v1728
      %v1730 = vpop.f32.mrf.mxu0
      %1731 = vmatprep.mubr.f32.mxu0 0.0
      %1732 = vmatmul.mubr.f32.gmra.mxu0 %v1515
      %v1733 = vpop.f32.mrf.mxu0
      %v1734 = vadd.f32 0.0, %v1733
      %v1735 = vpop.f32.mrf.mxu0
      %1736 = vmatprep.mubr.f32.mxu0 0.0
      %1737 = vmatmul.mubr.f32.gmra.mxu0 %v1518
      %v1738 = vpop.f32.mrf.mxu0
      %v1739 = vadd.f32 0.0, %v1738
      %v1740 = vpop.f32.mrf.mxu0
      %1741 = vmatprep.mubr.f32.mxu0 0.0
      %1742 = vmatmul.mubr.f32.gmra.mxu0 %v1521
      %v1743 = vpop.f32.mrf.mxu0
      %v1744 = vadd.f32 0.0, %v1743
      %v1745 = vpop.f32.mrf.mxu0
      %1746 = vmatprep.mubr.f32.mxu0 0.0
      %1747 = vmatmul.mubr.f32.gmra.mxu0 %v1524
      %v1748 = vpop.f32.mrf.mxu0
      %v1749 = vadd.f32 0.0, %v1748
      %v1750 = vpop.f32.mrf.mxu0
      %1751 = vmatprep.mubr.f32.mxu0 0.0
      %1752 = vmatmul.mubr.f32.gmra.mxu0 %v1527
      %v1753 = vpop.f32.mrf.mxu0
      %v1754 = vadd.f32 0.0, %v1753
      %v1755 = vpop.f32.mrf.mxu0
      %1756 = vdwg.mxu0
      %v1757 = vadd.f32 %v1367, %v1599
      %v1758 = vadd.f32 %v1368, %v1604
      %v1759 = vadd.f32 %v1369, %v1609
      %v1760 = vadd.f32 %v1370, %v1614
      %v1761 = vadd.f32 %v1371, %v1619
      %v1762 = vadd.f32 %v1372, %v1624
      %v1763 = vadd.f32 %v1373, %v1629
      %v1764 = vadd.f32 %v1374, %v1634
      %v1765 = vadd.f32 %v1375, %v1639
      %v1766 = vadd.f32 %v1376, %v1644
      %v1767 = vadd.f32 %v1377, %v1649
      %v1768 = vadd.f32 %v1378, %v1654
      %v1769 = vadd.f32 %v1379, %v1659
      %v1770 = vadd.f32 %v1380, %v1664
      %v1771 = vadd.f32 %v1381, %v1669
      %v1772 = vadd.f32 %v1382, %v1674
      %v1773 = vadd.f32 %v1383, %v1679
      %v1774 = vadd.f32 %v1384, %v1684
      %v1775 = vadd.f32 %v1385, %v1689
      %v1776 = vadd.f32 %v1386, %v1694
      %v1777 = vadd.f32 %v1387, %v1699
      %v1778 = vadd.f32 %v1388, %v1704
      %v1779 = vadd.f32 %v1389, %v1709
      %v1780 = vadd.f32 %v1390, %v1714
      %v1781 = vadd.f32 %v1391, %v1719
      %v1782 = vadd.f32 %v1392, %v1724
      %v1783 = vadd.f32 %v1393, %v1729
      %v1784 = vadd.f32 %v1394, %v1734
      %v1785 = vadd.f32 %v1395, %v1739
      %v1786 = vadd.f32 %v1396, %v1744
      %v1787 = vadd.f32 %v1397, %v1749
      %v1788 = vadd.f32 %v1398, %v1754
      %v1789 = vld [vmem:[%s260 + $0x1] sm:$0xff]
      %v1790 = vld [vmem:[%s260 + $0x9] sm:$0xff]
      %v1791 = vld [vmem:[%s260 + $0x19] sm:$0xff]
      %v1792 = vld [vmem:[%s260 + $0x21] sm:$0xff]
      %v1793 = vld [vmem:[%s260 + $0x31] sm:$0xff]
      %v1794 = vld [vmem:[%s260 + $0x39] sm:$0xff]
      %v1795 = vld [vmem:[%s260 + $0x49] sm:$0xff]
      %v1796 = vld [vmem:[%s260 + $0x51] sm:$0xff]
      %v1797 = vld [vmem:[%s260 + $0x61] sm:$0xff]
      %v1798 = vld [vmem:[%s260 + $0x69] sm:$0xff]
      %v1799 = vld [vmem:[%s260 + $0x79] sm:$0xff]
      %v1800 = vld [vmem:[%s260 + $0x81] sm:$0xff]
      %v1801 = vld [vmem:[%s260 + $0x91] sm:$0xff]
      %v1802 = vld [vmem:[%s260 + $0x99] sm:$0xff]
      %v1803 = vld [vmem:[%s260 + $0xa9] sm:$0xff]
      %v1804 = vld [vmem:[%s260 + $0xb1] sm:$0xff]
      %v1805 = vld [vmem:[%s260 + $0xc1] sm:$0xff]
      %v1806 = vld [vmem:[%s260 + $0xc9] sm:$0xff]
      %v1807 = vld [vmem:[%s260 + $0xd9] sm:$0xff]
      %v1808 = vld [vmem:[%s260 + $0xe1] sm:$0xff]
      %v1809 = vld [vmem:[%s260 + $0xf1] sm:$0xff]
      %v1810 = vld [vmem:[%s260 + $0xf9] sm:$0xff]
      %v1811 = vld [vmem:[%s260 + $0x109] sm:$0xff]
      %v1812 = vld [vmem:[%s260 + $0x111] sm:$0xff]
      %v1813 = vld [vmem:[%s260 + $0x121] sm:$0xff]
      %v1814 = vld [vmem:[%s260 + $0x129] sm:$0xff]
      %v1815 = vld [vmem:[%s260 + $0x139] sm:$0xff]
      %v1816 = vld [vmem:[%s260 + $0x141] sm:$0xff]
      %v1817 = vld [vmem:[%s260 + $0x151] sm:$0xff]
      %v1818 = vld [vmem:[%s260 + $0x159] sm:$0xff]
      %v1819 = vld [vmem:[%s260 + $0x169] sm:$0xff]
      %v1820 = vld [vmem:[%s260 + $0x171] sm:$0xff]
      %s1821 = scalar_lea.vmem %s1, 16
      %v1822 = vld [vmem:[%s1821] sm:$0xf]
      %v1824 = vsel %vm182, %v1789, 0
      %v1827 = vsel %vm182, %v1790, 0
      %v1830 = vsel %vm182, %v1791, 0
      %v1833 = vsel %vm182, %v1792, 0
      %v1836 = vsel %vm182, %v1793, 0
      %v1839 = vsel %vm182, %v1794, 0
      %v1842 = vsel %vm182, %v1795, 0
      %v1845 = vsel %vm182, %v1796, 0
      %v1848 = vsel %vm182, %v1797, 0
      %v1851 = vsel %vm182, %v1798, 0
      %v1854 = vsel %vm182, %v1799, 0
      %v1857 = vsel %vm182, %v1800, 0
      %v1860 = vsel %vm182, %v1801, 0
      %v1863 = vsel %vm182, %v1802, 0
      %v1866 = vsel %vm182, %v1803, 0
      %v1869 = vsel %vm182, %v1804, 0
      %v1872 = vsel %vm182, %v1805, 0
      %v1875 = vsel %vm182, %v1806, 0
      %v1878 = vsel %vm182, %v1807, 0
      %v1881 = vsel %vm182, %v1808, 0
      %v1884 = vsel %vm182, %v1809, 0
      %v1887 = vsel %vm182, %v1810, 0
      %v1890 = vsel %vm182, %v1811, 0
      %v1893 = vsel %vm182, %v1812, 0
      %v1896 = vsel %vm182, %v1813, 0
      %v1899 = vsel %vm182, %v1814, 0
      %v1902 = vsel %vm182, %v1815, 0
      %v1905 = vsel %vm182, %v1816, 0
      %v1908 = vsel %vm182, %v1817, 0
      %v1911 = vsel %vm182, %v1818, 0
      %v1914 = vsel %vm182, %v1819, 0
      %v1917 = vsel %vm182, %v1820, 0
      %v1920 = vsel %vm456, %v1822, 0
      %1922 = vmatprep.subr.mxu0 0.0
      %1923 = vmatpush1.msra.mxu0 0.0
      %1924 = vmatprep.subr.mxu0 0.0
      %1925 = vmatpush1.msra.mxu0 0.0
      %1926 = vmatprep.subr.mxu0 0.0
      %1927 = vmatpush1.msra.mxu0 0.0
      %1928 = vmatprep.subr.mxu0 0.0
      %1929 = vmatpush1.msra.mxu0 0.0
      %1930 = vmatprep.subr.mxu0 0.0
      %1931 = vmatpush1.msra.mxu0 0.0
      %1932 = vmatprep.subr.mxu0 0.0
      %1933 = vmatpush1.msra.mxu0 0.0
      %1934 = vmatprep.subr.mxu0 0.0
      %1935 = vmatpush1.msra.mxu0 0.0
      %1936 = vmatprep.subr.mxu0 0.0
      %1937 = vmatpush1.msra.mxu0 0.0
      %1938 = vmatprep.subr.mxu0 0.0
      %1939 = vmatpush1.msra.mxu0 0.0
      %1940 = vmatprep.subr.mxu0 0.0
      %1941 = vmatpush1.msra.mxu0 0.0
      %1942 = vmatprep.subr.mxu0 0.0
      %1943 = vmatpush1.msra.mxu0 0.0
      %1944 = vmatprep.subr.mxu0 0.0
      %1945 = vmatpush1.msra.mxu0 0.0
      %1946 = vmatprep.subr.mxu0 0.0
      %1947 = vmatpush1.msra.mxu0 0.0
      %1948 = vmatprep.subr.mxu0 0.0
      %1949 = vmatpush1.msra.mxu0 0.0
      %1950 = vmatprep.subr.mxu0 0.0
      %1951 = vmatpush1.msra.mxu0 0.0
      %1952 = vmatprep.subr.mxu0 0.0
      %1953 = vmatpush1.msra.mxu0 %v1920
      %1954 = vmatprep.subr.mxu0 0.0
      %1955 = vmatpush2.msra.mxu0 0.0
      %1956 = vmatprep.subr.mxu0 0.0
      %1957 = vmatpush2.msra.mxu0 0.0
      %1958 = vmatprep.subr.mxu0 0.0
      %1959 = vmatpush2.msra.mxu0 0.0
      %1960 = vmatprep.subr.mxu0 0.0
      %1961 = vmatpush2.msra.mxu0 0.0
      %1962 = vmatprep.subr.mxu0 0.0
      %1963 = vmatpush2.msra.mxu0 0.0
      %1964 = vmatprep.subr.mxu0 0.0
      %1965 = vmatpush2.msra.mxu0 0.0
      %1966 = vmatprep.subr.mxu0 0.0
      %1967 = vmatpush2.msra.mxu0 0.0
      %1968 = vmatprep.subr.mxu0 0.0
      %1969 = vmatpush2.msra.mxu0 0.0
      %1970 = vmatprep.subr.mxu0 0.0
      %1971 = vmatpush2.msra.mxu0 0.0
      %1972 = vmatprep.subr.mxu0 0.0
      %1973 = vmatpush2.msra.mxu0 0.0
      %1974 = vmatprep.subr.mxu0 0.0
      %1975 = vmatpush2.msra.mxu0 0.0
      %1976 = vmatprep.subr.mxu0 0.0
      %1977 = vmatpush2.msra.mxu0 0.0
      %1978 = vmatprep.subr.mxu0 0.0
      %1979 = vmatpush2.msra.mxu0 0.0
      %1980 = vmatprep.subr.mxu0 0.0
      %1981 = vmatpush2.msra.mxu0 0.0
      %1982 = vmatprep.subr.mxu0 0.0
      %1983 = vmatpush2.msra.mxu0 0.0
      %1984 = vmatprep.subr.mxu0 0.0
      %1985 = vmatpush2.msra.mxu0 0.0
      %1986 = vmatprep.mubr.f32.mxu0 0.0
      %1987 = vmatmul.mubr.f32.gmra.mxu0 %v1824
      %v1988 = vpop.f32.mrf.mxu0
      %v1989 = vadd.f32 0.0, %v1988
      %v1990 = vpop.f32.mrf.mxu0
      %1991 = vmatprep.mubr.f32.mxu0 0.0
      %1992 = vmatmul.mubr.f32.gmra.mxu0 %v1827
      %v1993 = vpop.f32.mrf.mxu0
      %v1994 = vadd.f32 0.0, %v1993
      %v1995 = vpop.f32.mrf.mxu0
      %1996 = vmatprep.mubr.f32.mxu0 0.0
      %1997 = vmatmul.mubr.f32.gmra.mxu0 %v1830
      %v1998 = vpop.f32.mrf.mxu0
      %v1999 = vadd.f32 0.0, %v1998
      %v2000 = vpop.f32.mrf.mxu0
      %2001 = vmatprep.mubr.f32.mxu0 0.0
      %2002 = vmatmul.mubr.f32.gmra.mxu0 %v1833
      %v2003 = vpop.f32.mrf.mxu0
      %v2004 = vadd.f32 0.0, %v2003
      %v2005 = vpop.f32.mrf.mxu0
      %2006 = vmatprep.mubr.f32.mxu0 0.0
      %2007 = vmatmul.mubr.f32.gmra.mxu0 %v1836
      %v2008 = vpop.f32.mrf.mxu0
      %v2009 = vadd.f32 0.0, %v2008
      %v2010 = vpop.f32.mrf.mxu0
      %2011 = vmatprep.mubr.f32.mxu0 0.0
      %2012 = vmatmul.mubr.f32.gmra.mxu0 %v1839
      %v2013 = vpop.f32.mrf.mxu0
      %v2014 = vadd.f32 0.0, %v2013
      %v2015 = vpop.f32.mrf.mxu0
      %2016 = vmatprep.mubr.f32.mxu0 0.0
      %2017 = vmatmul.mubr.f32.gmra.mxu0 %v1842
      %v2018 = vpop.f32.mrf.mxu0
      %v2019 = vadd.f32 0.0, %v2018
      %v2020 = vpop.f32.mrf.mxu0
      %2021 = vmatprep.mubr.f32.mxu0 0.0
      %2022 = vmatmul.mubr.f32.gmra.mxu0 %v1845
      %v2023 = vpop.f32.mrf.mxu0
      %v2024 = vadd.f32 0.0, %v2023
      %v2025 = vpop.f32.mrf.mxu0
      %2026 = vmatprep.mubr.f32.mxu0 0.0
      %2027 = vmatmul.mubr.f32.gmra.mxu0 %v1848
      %v2028 = vpop.f32.mrf.mxu0
      %v2029 = vadd.f32 0.0, %v2028
      %v2030 = vpop.f32.mrf.mxu0
      %2031 = vmatprep.mubr.f32.mxu0 0.0
      %2032 = vmatmul.mubr.f32.gmra.mxu0 %v1851
      %v2033 = vpop.f32.mrf.mxu0
      %v2034 = vadd.f32 0.0, %v2033
      %v2035 = vpop.f32.mrf.mxu0
      %2036 = vmatprep.mubr.f32.mxu0 0.0
      %2037 = vmatmul.mubr.f32.gmra.mxu0 %v1854
      %v2038 = vpop.f32.mrf.mxu0
      %v2039 = vadd.f32 0.0, %v2038
      %v2040 = vpop.f32.mrf.mxu0
      %2041 = vmatprep.mubr.f32.mxu0 0.0
      %2042 = vmatmul.mubr.f32.gmra.mxu0 %v1857
      %v2043 = vpop.f32.mrf.mxu0
      %v2044 = vadd.f32 0.0, %v2043
      %v2045 = vpop.f32.mrf.mxu0
      %2046 = vmatprep.mubr.f32.mxu0 0.0
      %2047 = vmatmul.mubr.f32.gmra.mxu0 %v1860
      %v2048 = vpop.f32.mrf.mxu0
      %v2049 = vadd.f32 0.0, %v2048
      %v2050 = vpop.f32.mrf.mxu0
      %2051 = vmatprep.mubr.f32.mxu0 0.0
      %2052 = vmatmul.mubr.f32.gmra.mxu0 %v1863
      %v2053 = vpop.f32.mrf.mxu0
      %v2054 = vadd.f32 0.0, %v2053
      %v2055 = vpop.f32.mrf.mxu0
      %2056 = vmatprep.mubr.f32.mxu0 0.0
      %2057 = vmatmul.mubr.f32.gmra.mxu0 %v1866
      %v2058 = vpop.f32.mrf.mxu0
      %v2059 = vadd.f32 0.0, %v2058
      %v2060 = vpop.f32.mrf.mxu0
      %2061 = vmatprep.mubr.f32.mxu0 0.0
      %2062 = vmatmul.mubr.f32.gmra.mxu0 %v1869
      %v2063 = vpop.f32.mrf.mxu0
      %v2064 = vadd.f32 0.0, %v2063
      %v2065 = vpop.f32.mrf.mxu0
      %2066 = vmatprep.mubr.f32.mxu0 0.0
      %2067 = vmatmul.mubr.f32.gmra.mxu0 %v1872
      %v2068 = vpop.f32.mrf.mxu0
      %v2069 = vadd.f32 0.0, %v2068
      %v2070 = vpop.f32.mrf.mxu0
      %2071 = vmatprep.mubr.f32.mxu0 0.0
      %2072 = vmatmul.mubr.f32.gmra.mxu0 %v1875
      %v2073 = vpop.f32.mrf.mxu0
      %v2074 = vadd.f32 0.0, %v2073
      %v2075 = vpop.f32.mrf.mxu0
      %2076 = vmatprep.mubr.f32.mxu0 0.0
      %2077 = vmatmul.mubr.f32.gmra.mxu0 %v1878
      %v2078 = vpop.f32.mrf.mxu0
      %v2079 = vadd.f32 0.0, %v2078
      %v2080 = vpop.f32.mrf.mxu0
      %2081 = vmatprep.mubr.f32.mxu0 0.0
      %2082 = vmatmul.mubr.f32.gmra.mxu0 %v1881
      %v2083 = vpop.f32.mrf.mxu0
      %v2084 = vadd.f32 0.0, %v2083
      %v2085 = vpop.f32.mrf.mxu0
      %2086 = vmatprep.mubr.f32.mxu0 0.0
      %2087 = vmatmul.mubr.f32.gmra.mxu0 %v1884
      %v2088 = vpop.f32.mrf.mxu0
      %v2089 = vadd.f32 0.0, %v2088
      %v2090 = vpop.f32.mrf.mxu0
      %2091 = vmatprep.mubr.f32.mxu0 0.0
      %2092 = vmatmul.mubr.f32.gmra.mxu0 %v1887
      %v2093 = vpop.f32.mrf.mxu0
      %v2094 = vadd.f32 0.0, %v2093
      %v2095 = vpop.f32.mrf.mxu0
      %2096 = vmatprep.mubr.f32.mxu0 0.0
      %2097 = vmatmul.mubr.f32.gmra.mxu0 %v1890
      %v2098 = vpop.f32.mrf.mxu0
      %v2099 = vadd.f32 0.0, %v2098
      %v2100 = vpop.f32.mrf.mxu0
      %2101 = vmatprep.mubr.f32.mxu0 0.0
      %2102 = vmatmul.mubr.f32.gmra.mxu0 %v1893
      %v2103 = vpop.f32.mrf.mxu0
      %v2104 = vadd.f32 0.0, %v2103
      %v2105 = vpop.f32.mrf.mxu0
      %2106 = vmatprep.mubr.f32.mxu0 0.0
      %2107 = vmatmul.mubr.f32.gmra.mxu0 %v1896
      %v2108 = vpop.f32.mrf.mxu0
      %v2109 = vadd.f32 0.0, %v2108
      %v2110 = vpop.f32.mrf.mxu0
      %2111 = vmatprep.mubr.f32.mxu0 0.0
      %2112 = vmatmul.mubr.f32.gmra.mxu0 %v1899
      %v2113 = vpop.f32.mrf.mxu0
      %v2114 = vadd.f32 0.0, %v2113
      %v2115 = vpop.f32.mrf.mxu0
      %2116 = vmatprep.mubr.f32.mxu0 0.0
      %2117 = vmatmul.mubr.f32.gmra.mxu0 %v1902
      %v2118 = vpop.f32.mrf.mxu0
      %v2119 = vadd.f32 0.0, %v2118
      %v2120 = vpop.f32.mrf.mxu0
      %2121 = vmatprep.mubr.f32.mxu0 0.0
      %2122 = vmatmul.mubr.f32.gmra.mxu0 %v1905
      %v2123 = vpop.f32.mrf.mxu0
      %v2124 = vadd.f32 0.0, %v2123
      %v2125 = vpop.f32.mrf.mxu0
      %2126 = vmatprep.mubr.f32.mxu0 0.0
      %2127 = vmatmul.mubr.f32.gmra.mxu0 %v1908
      %v2128 = vpop.f32.mrf.mxu0
      %v2129 = vadd.f32 0.0, %v2128
      %v2130 = vpop.f32.mrf.mxu0
      %2131 = vmatprep.mubr.f32.mxu0 0.0
      %2132 = vmatmul.mubr.f32.gmra.mxu0 %v1911
      %v2133 = vpop.f32.mrf.mxu0
      %v2134 = vadd.f32 0.0, %v2133
      %v2135 = vpop.f32.mrf.mxu0
      %2136 = vmatprep.mubr.f32.mxu0 0.0
      %2137 = vmatmul.mubr.f32.gmra.mxu0 %v1914
      %v2138 = vpop.f32.mrf.mxu0
      %v2139 = vadd.f32 0.0, %v2138
      %v2140 = vpop.f32.mrf.mxu0
      %2141 = vmatprep.mubr.f32.mxu0 0.0
      %2142 = vmatmul.mubr.f32.gmra.mxu0 %v1917
      %v2143 = vpop.f32.mrf.mxu0
      %v2144 = vadd.f32 0.0, %v2143
      %v2145 = vpop.f32.mrf.mxu0
      %2146 = vdwg.mxu0
      %v2147 = vadd.f32 %v1757, %v1989
      %v2148 = vadd.f32 %v1758, %v1994
      %v2149 = vadd.f32 %v1759, %v1999
      %v2150 = vadd.f32 %v1760, %v2004
      %v2151 = vadd.f32 %v1761, %v2009
      %v2152 = vadd.f32 %v1762, %v2014
      %v2153 = vadd.f32 %v1763, %v2019
      %v2154 = vadd.f32 %v1764, %v2024
      %v2155 = vadd.f32 %v1765, %v2029
      %v2156 = vadd.f32 %v1766, %v2034
      %v2157 = vadd.f32 %v1767, %v2039
      %v2158 = vadd.f32 %v1768, %v2044
      %v2159 = vadd.f32 %v1769, %v2049
      %v2160 = vadd.f32 %v1770, %v2054
      %v2161 = vadd.f32 %v1771, %v2059
      %v2162 = vadd.f32 %v1772, %v2064
      %v2163 = vadd.f32 %v1773, %v2069
      %v2164 = vadd.f32 %v1774, %v2074
      %v2165 = vadd.f32 %v1775, %v2079
      %v2166 = vadd.f32 %v1776, %v2084
      %v2167 = vadd.f32 %v1777, %v2089
      %v2168 = vadd.f32 %v1778, %v2094
      %v2169 = vadd.f32 %v1779, %v2099
      %v2170 = vadd.f32 %v1780, %v2104
      %v2171 = vadd.f32 %v1781, %v2109
      %v2172 = vadd.f32 %v1782, %v2114
      %v2173 = vadd.f32 %v1783, %v2119
      %v2174 = vadd.f32 %v1784, %v2124
      %v2175 = vadd.f32 %v1785, %v2129
      %v2176 = vadd.f32 %v1786, %v2134
      %v2177 = vadd.f32 %v1787, %v2139
      %v2178 = vadd.f32 %v1788, %v2144
      %v2179 = vld [vmem:[%s260 + $0x2] sm:$0xff]
      %v2180 = vld [vmem:[%s260 + $0xa] sm:$0xff]
      %v2181 = vld [vmem:[%s260 + $0x1a] sm:$0xff]
      %v2182 = vld [vmem:[%s260 + $0x22] sm:$0xff]
      %v2183 = vld [vmem:[%s260 + $0x32] sm:$0xff]
      %v2184 = vld [vmem:[%s260 + $0x3a] sm:$0xff]
      %v2185 = vld [vmem:[%s260 + $0x4a] sm:$0xff]
      %v2186 = vld [vmem:[%s260 + $0x52] sm:$0xff]
      %v2187 = vld [vmem:[%s260 + $0x62] sm:$0xff]
      %v2188 = vld [vmem:[%s260 + $0x6a] sm:$0xff]
      %v2189 = vld [vmem:[%s260 + $0x7a] sm:$0xff]
      %v2190 = vld [vmem:[%s260 + $0x82] sm:$0xff]
      %v2191 = vld [vmem:[%s260 + $0x92] sm:$0xff]
      %v2192 = vld [vmem:[%s260 + $0x9a] sm:$0xff]
      %v2193 = vld [vmem:[%s260 + $0xaa] sm:$0xff]
      %v2194 = vld [vmem:[%s260 + $0xb2] sm:$0xff]
      %v2195 = vld [vmem:[%s260 + $0xc2] sm:$0xff]
      %v2196 = vld [vmem:[%s260 + $0xca] sm:$0xff]
      %v2197 = vld [vmem:[%s260 + $0xda] sm:$0xff]
      %v2198 = vld [vmem:[%s260 + $0xe2] sm:$0xff]
      %v2199 = vld [vmem:[%s260 + $0xf2] sm:$0xff]
      %v2200 = vld [vmem:[%s260 + $0xfa] sm:$0xff]
      %v2201 = vld [vmem:[%s260 + $0x10a] sm:$0xff]
      %v2202 = vld [vmem:[%s260 + $0x112] sm:$0xff]
      %v2203 = vld [vmem:[%s260 + $0x122] sm:$0xff]
      %v2204 = vld [vmem:[%s260 + $0x12a] sm:$0xff]
      %v2205 = vld [vmem:[%s260 + $0x13a] sm:$0xff]
      %v2206 = vld [vmem:[%s260 + $0x142] sm:$0xff]
      %v2207 = vld [vmem:[%s260 + $0x152] sm:$0xff]
      %v2208 = vld [vmem:[%s260 + $0x15a] sm:$0xff]
      %v2209 = vld [vmem:[%s260 + $0x16a] sm:$0xff]
      %v2210 = vld [vmem:[%s260 + $0x172] sm:$0xff]
      %s2211 = scalar_lea.vmem %s1, 20
      %v2212 = vld [vmem:[%s2211] sm:$0xf]
      %v2214 = vsel %vm182, %v2179, 0
      %v2217 = vsel %vm182, %v2180, 0
      %v2220 = vsel %vm182, %v2181, 0
      %v2223 = vsel %vm182, %v2182, 0
      %v2226 = vsel %vm182, %v2183, 0
      %v2229 = vsel %vm182, %v2184, 0
      %v2232 = vsel %vm182, %v2185, 0
      %v2235 = vsel %vm182, %v2186, 0
      %v2238 = vsel %vm182, %v2187, 0
      %v2241 = vsel %vm182, %v2188, 0
      %v2244 = vsel %vm182, %v2189, 0
      %v2247 = vsel %vm182, %v2190, 0
      %v2250 = vsel %vm182, %v2191, 0
      %v2253 = vsel %vm182, %v2192, 0
      %v2256 = vsel %vm182, %v2193, 0
      %v2259 = vsel %vm182, %v2194, 0
      %v2262 = vsel %vm182, %v2195, 0
      %v2265 = vsel %vm182, %v2196, 0
      %v2268 = vsel %vm182, %v2197, 0
      %v2271 = vsel %vm182, %v2198, 0
      %v2274 = vsel %vm182, %v2199, 0
      %v2277 = vsel %vm182, %v2200, 0
      %v2280 = vsel %vm182, %v2201, 0
      %v2283 = vsel %vm182, %v2202, 0
      %v2286 = vsel %vm182, %v2203, 0
      %v2289 = vsel %vm182, %v2204, 0
      %v2292 = vsel %vm182, %v2205, 0
      %v2295 = vsel %vm182, %v2206, 0
      %v2298 = vsel %vm182, %v2207, 0
      %v2301 = vsel %vm182, %v2208, 0
      %v2304 = vsel %vm182, %v2209, 0
      %v2307 = vsel %vm182, %v2210, 0
      %v2310 = vsel %vm456, %v2212, 0
      %2312 = vmatprep.subr.mxu0 0.0
      %2313 = vmatpush1.msra.mxu0 0.0
      %2314 = vmatprep.subr.mxu0 0.0
      %2315 = vmatpush1.msra.mxu0 0.0
      %2316 = vmatprep.subr.mxu0 0.0
      %2317 = vmatpush1.msra.mxu0 0.0
      %2318 = vmatprep.subr.mxu0 0.0
      %2319 = vmatpush1.msra.mxu0 0.0
      %2320 = vmatprep.subr.mxu0 0.0
      %2321 = vmatpush1.msra.mxu0 0.0
      %2322 = vmatprep.subr.mxu0 0.0
      %2323 = vmatpush1.msra.mxu0 0.0
      %2324 = vmatprep.subr.mxu0 0.0
      %2325 = vmatpush1.msra.mxu0 0.0
      %2326 = vmatprep.subr.mxu0 0.0
      %2327 = vmatpush1.msra.mxu0 0.0
      %2328 = vmatprep.subr.mxu0 0.0
      %2329 = vmatpush1.msra.mxu0 0.0
      %2330 = vmatprep.subr.mxu0 0.0
      %2331 = vmatpush1.msra.mxu0 0.0
      %2332 = vmatprep.subr.mxu0 0.0
      %2333 = vmatpush1.msra.mxu0 0.0
      %2334 = vmatprep.subr.mxu0 0.0
      %2335 = vmatpush1.msra.mxu0 0.0
      %2336 = vmatprep.subr.mxu0 0.0
      %2337 = vmatpush1.msra.mxu0 0.0
      %2338 = vmatprep.subr.mxu0 0.0
      %2339 = vmatpush1.msra.mxu0 0.0
      %2340 = vmatprep.subr.mxu0 0.0
      %2341 = vmatpush1.msra.mxu0 0.0
      %2342 = vmatprep.subr.mxu0 0.0
      %2343 = vmatpush1.msra.mxu0 %v2310
      %2344 = vmatprep.subr.mxu0 0.0
      %2345 = vmatpush2.msra.mxu0 0.0
      %2346 = vmatprep.subr.mxu0 0.0
      %2347 = vmatpush2.msra.mxu0 0.0
      %2348 = vmatprep.subr.mxu0 0.0
      %2349 = vmatpush2.msra.mxu0 0.0
      %2350 = vmatprep.subr.mxu0 0.0
      %2351 = vmatpush2.msra.mxu0 0.0
      %2352 = vmatprep.subr.mxu0 0.0
      %2353 = vmatpush2.msra.mxu0 0.0
      %2354 = vmatprep.subr.mxu0 0.0
      %2355 = vmatpush2.msra.mxu0 0.0
      %2356 = vmatprep.subr.mxu0 0.0
      %2357 = vmatpush2.msra.mxu0 0.0
      %2358 = vmatprep.subr.mxu0 0.0
      %2359 = vmatpush2.msra.mxu0 0.0
      %2360 = vmatprep.subr.mxu0 0.0
      %2361 = vmatpush2.msra.mxu0 0.0
      %2362 = vmatprep.subr.mxu0 0.0
      %2363 = vmatpush2.msra.mxu0 0.0
      %2364 = vmatprep.subr.mxu0 0.0
      %2365 = vmatpush2.msra.mxu0 0.0
      %2366 = vmatprep.subr.mxu0 0.0
      %2367 = vmatpush2.msra.mxu0 0.0
      %2368 = vmatprep.subr.mxu0 0.0
      %2369 = vmatpush2.msra.mxu0 0.0
      %2370 = vmatprep.subr.mxu0 0.0
      %2371 = vmatpush2.msra.mxu0 0.0
      %2372 = vmatprep.subr.mxu0 0.0
      %2373 = vmatpush2.msra.mxu0 0.0
      %2374 = vmatprep.subr.mxu0 0.0
      %2375 = vmatpush2.msra.mxu0 0.0
      %2376 = vmatprep.mubr.f32.mxu0 0.0
      %2377 = vmatmul.mubr.f32.gmra.mxu0 %v2214
      %v2378 = vpop.f32.mrf.mxu0
      %v2379 = vadd.f32 0.0, %v2378
      %v2380 = vpop.f32.mrf.mxu0
      %2381 = vmatprep.mubr.f32.mxu0 0.0
      %2382 = vmatmul.mubr.f32.gmra.mxu0 %v2217
      %v2383 = vpop.f32.mrf.mxu0
      %v2384 = vadd.f32 0.0, %v2383
      %v2385 = vpop.f32.mrf.mxu0
      %2386 = vmatprep.mubr.f32.mxu0 0.0
      %2387 = vmatmul.mubr.f32.gmra.mxu0 %v2220
      %v2388 = vpop.f32.mrf.mxu0
      %v2389 = vadd.f32 0.0, %v2388
      %v2390 = vpop.f32.mrf.mxu0
      %2391 = vmatprep.mubr.f32.mxu0 0.0
      %2392 = vmatmul.mubr.f32.gmra.mxu0 %v2223
      %v2393 = vpop.f32.mrf.mxu0
      %v2394 = vadd.f32 0.0, %v2393
      %v2395 = vpop.f32.mrf.mxu0
      %2396 = vmatprep.mubr.f32.mxu0 0.0
      %2397 = vmatmul.mubr.f32.gmra.mxu0 %v2226
      %v2398 = vpop.f32.mrf.mxu0
      %v2399 = vadd.f32 0.0, %v2398
      %v2400 = vpop.f32.mrf.mxu0
      %2401 = vmatprep.mubr.f32.mxu0 0.0
      %2402 = vmatmul.mubr.f32.gmra.mxu0 %v2229
      %v2403 = vpop.f32.mrf.mxu0
      %v2404 = vadd.f32 0.0, %v2403
      %v2405 = vpop.f32.mrf.mxu0
      %2406 = vmatprep.mubr.f32.mxu0 0.0
      %2407 = vmatmul.mubr.f32.gmra.mxu0 %v2232
      %v2408 = vpop.f32.mrf.mxu0
      %v2409 = vadd.f32 0.0, %v2408
      %v2410 = vpop.f32.mrf.mxu0
      %2411 = vmatprep.mubr.f32.mxu0 0.0
      %2412 = vmatmul.mubr.f32.gmra.mxu0 %v2235
      %v2413 = vpop.f32.mrf.mxu0
      %v2414 = vadd.f32 0.0, %v2413
      %v2415 = vpop.f32.mrf.mxu0
      %2416 = vmatprep.mubr.f32.mxu0 0.0
      %2417 = vmatmul.mubr.f32.gmra.mxu0 %v2238
      %v2418 = vpop.f32.mrf.mxu0
      %v2419 = vadd.f32 0.0, %v2418
      %v2420 = vpop.f32.mrf.mxu0
      %2421 = vmatprep.mubr.f32.mxu0 0.0
      %2422 = vmatmul.mubr.f32.gmra.mxu0 %v2241
      %v2423 = vpop.f32.mrf.mxu0
      %v2424 = vadd.f32 0.0, %v2423
      %v2425 = vpop.f32.mrf.mxu0
      %2426 = vmatprep.mubr.f32.mxu0 0.0
      %2427 = vmatmul.mubr.f32.gmra.mxu0 %v2244
      %v2428 = vpop.f32.mrf.mxu0
      %v2429 = vadd.f32 0.0, %v2428
      %v2430 = vpop.f32.mrf.mxu0
      %2431 = vmatprep.mubr.f32.mxu0 0.0
      %2432 = vmatmul.mubr.f32.gmra.mxu0 %v2247
      %v2433 = vpop.f32.mrf.mxu0
      %v2434 = vadd.f32 0.0, %v2433
      %v2435 = vpop.f32.mrf.mxu0
      %2436 = vmatprep.mubr.f32.mxu0 0.0
      %2437 = vmatmul.mubr.f32.gmra.mxu0 %v2250
      %v2438 = vpop.f32.mrf.mxu0
      %v2439 = vadd.f32 0.0, %v2438
      %v2440 = vpop.f32.mrf.mxu0
      %2441 = vmatprep.mubr.f32.mxu0 0.0
      %2442 = vmatmul.mubr.f32.gmra.mxu0 %v2253
      %v2443 = vpop.f32.mrf.mxu0
      %v2444 = vadd.f32 0.0, %v2443
      %v2445 = vpop.f32.mrf.mxu0
      %2446 = vmatprep.mubr.f32.mxu0 0.0
      %2447 = vmatmul.mubr.f32.gmra.mxu0 %v2256
      %v2448 = vpop.f32.mrf.mxu0
      %v2449 = vadd.f32 0.0, %v2448
      %v2450 = vpop.f32.mrf.mxu0
      %2451 = vmatprep.mubr.f32.mxu0 0.0
      %2452 = vmatmul.mubr.f32.gmra.mxu0 %v2259
      %v2453 = vpop.f32.mrf.mxu0
      %v2454 = vadd.f32 0.0, %v2453
      %v2455 = vpop.f32.mrf.mxu0
      %2456 = vmatprep.mubr.f32.mxu0 0.0
      %2457 = vmatmul.mubr.f32.gmra.mxu0 %v2262
      %v2458 = vpop.f32.mrf.mxu0
      %v2459 = vadd.f32 0.0, %v2458
      %v2460 = vpop.f32.mrf.mxu0
      %2461 = vmatprep.mubr.f32.mxu0 0.0
      %2462 = vmatmul.mubr.f32.gmra.mxu0 %v2265
      %v2463 = vpop.f32.mrf.mxu0
      %v2464 = vadd.f32 0.0, %v2463
      %v2465 = vpop.f32.mrf.mxu0
      %2466 = vmatprep.mubr.f32.mxu0 0.0
      %2467 = vmatmul.mubr.f32.gmra.mxu0 %v2268
      %v2468 = vpop.f32.mrf.mxu0
      %v2469 = vadd.f32 0.0, %v2468
      %v2470 = vpop.f32.mrf.mxu0
      %2471 = vmatprep.mubr.f32.mxu0 0.0
      %2472 = vmatmul.mubr.f32.gmra.mxu0 %v2271
      %v2473 = vpop.f32.mrf.mxu0
      %v2474 = vadd.f32 0.0, %v2473
      %v2475 = vpop.f32.mrf.mxu0
      %2476 = vmatprep.mubr.f32.mxu0 0.0
      %2477 = vmatmul.mubr.f32.gmra.mxu0 %v2274
      %v2478 = vpop.f32.mrf.mxu0
      %v2479 = vadd.f32 0.0, %v2478
      %v2480 = vpop.f32.mrf.mxu0
      %2481 = vmatprep.mubr.f32.mxu0 0.0
      %2482 = vmatmul.mubr.f32.gmra.mxu0 %v2277
      %v2483 = vpop.f32.mrf.mxu0
      %v2484 = vadd.f32 0.0, %v2483
      %v2485 = vpop.f32.mrf.mxu0
      %2486 = vmatprep.mubr.f32.mxu0 0.0
      %2487 = vmatmul.mubr.f32.gmra.mxu0 %v2280
      %v2488 = vpop.f32.mrf.mxu0
      %v2489 = vadd.f32 0.0, %v2488
      %v2490 = vpop.f32.mrf.mxu0
      %2491 = vmatprep.mubr.f32.mxu0 0.0
      %2492 = vmatmul.mubr.f32.gmra.mxu0 %v2283
      %v2493 = vpop.f32.mrf.mxu0
      %v2494 = vadd.f32 0.0, %v2493
      %v2495 = vpop.f32.mrf.mxu0
      %2496 = vmatprep.mubr.f32.mxu0 0.0
      %2497 = vmatmul.mubr.f32.gmra.mxu0 %v2286
      %v2498 = vpop.f32.mrf.mxu0
      %v2499 = vadd.f32 0.0, %v2498
      %v2500 = vpop.f32.mrf.mxu0
      %2501 = vmatprep.mubr.f32.mxu0 0.0
      %2502 = vmatmul.mubr.f32.gmra.mxu0 %v2289
      %v2503 = vpop.f32.mrf.mxu0
      %v2504 = vadd.f32 0.0, %v2503
      %v2505 = vpop.f32.mrf.mxu0
      %2506 = vmatprep.mubr.f32.mxu0 0.0
      %2507 = vmatmul.mubr.f32.gmra.mxu0 %v2292
      %v2508 = vpop.f32.mrf.mxu0
      %v2509 = vadd.f32 0.0, %v2508
      %v2510 = vpop.f32.mrf.mxu0
      %2511 = vmatprep.mubr.f32.mxu0 0.0
      %2512 = vmatmul.mubr.f32.gmra.mxu0 %v2295
      %v2513 = vpop.f32.mrf.mxu0
      %v2514 = vadd.f32 0.0, %v2513
      %v2515 = vpop.f32.mrf.mxu0
      %2516 = vmatprep.mubr.f32.mxu0 0.0
      %2517 = vmatmul.mubr.f32.gmra.mxu0 %v2298
      %v2518 = vpop.f32.mrf.mxu0
      %v2519 = vadd.f32 0.0, %v2518
      %v2520 = vpop.f32.mrf.mxu0
      %2521 = vmatprep.mubr.f32.mxu0 0.0
      %2522 = vmatmul.mubr.f32.gmra.mxu0 %v2301
      %v2523 = vpop.f32.mrf.mxu0
      %v2524 = vadd.f32 0.0, %v2523
      %v2525 = vpop.f32.mrf.mxu0
      %2526 = vmatprep.mubr.f32.mxu0 0.0
      %2527 = vmatmul.mubr.f32.gmra.mxu0 %v2304
      %v2528 = vpop.f32.mrf.mxu0
      %v2529 = vadd.f32 0.0, %v2528
      %v2530 = vpop.f32.mrf.mxu0
      %2531 = vmatprep.mubr.f32.mxu0 0.0
      %2532 = vmatmul.mubr.f32.gmra.mxu0 %v2307
      %v2533 = vpop.f32.mrf.mxu0
      %v2534 = vadd.f32 0.0, %v2533
      %v2535 = vpop.f32.mrf.mxu0
      %2536 = vdwg.mxu0
      %v2537 = vadd.f32 %v2147, %v2379
      %v2538 = vadd.f32 %v2148, %v2384
      %v2539 = vadd.f32 %v2149, %v2389
      %v2540 = vadd.f32 %v2150, %v2394
      %v2541 = vadd.f32 %v2151, %v2399
      %v2542 = vadd.f32 %v2152, %v2404
      %v2543 = vadd.f32 %v2153, %v2409
      %v2544 = vadd.f32 %v2154, %v2414
      %v2545 = vadd.f32 %v2155, %v2419
      %v2546 = vadd.f32 %v2156, %v2424
      %v2547 = vadd.f32 %v2157, %v2429
      %v2548 = vadd.f32 %v2158, %v2434
      %v2549 = vadd.f32 %v2159, %v2439
      %v2550 = vadd.f32 %v2160, %v2444
      %v2551 = vadd.f32 %v2161, %v2449
      %v2552 = vadd.f32 %v2162, %v2454
      %v2553 = vadd.f32 %v2163, %v2459
      %v2554 = vadd.f32 %v2164, %v2464
      %v2555 = vadd.f32 %v2165, %v2469
      %v2556 = vadd.f32 %v2166, %v2474
      %v2557 = vadd.f32 %v2167, %v2479
      %v2558 = vadd.f32 %v2168, %v2484
      %v2559 = vadd.f32 %v2169, %v2489
      %v2560 = vadd.f32 %v2170, %v2494
      %v2561 = vadd.f32 %v2171, %v2499
      %v2562 = vadd.f32 %v2172, %v2504
      %v2563 = vadd.f32 %v2173, %v2509
      %v2564 = vadd.f32 %v2174, %v2514
      %v2565 = vadd.f32 %v2175, %v2519
      %v2566 = vadd.f32 %v2176, %v2524
      %v2567 = vadd.f32 %v2177, %v2529
      %v2568 = vadd.f32 %v2178, %v2534
      %s2569 = scalar_lea.vmem [#allocation2], 48
      %v2570 = vld [vmem:[%s2569] sm:$0xff]
      %v2571 = vld [vmem:[%s2569 + $0x8] sm:$0xff]
      %v2572 = vld [vmem:[%s2569 + $0x18] sm:$0xff]
      %v2573 = vld [vmem:[%s2569 + $0x20] sm:$0xff]
      %v2574 = vld [vmem:[%s2569 + $0x30] sm:$0xff]
      %v2575 = vld [vmem:[%s2569 + $0x38] sm:$0xff]
      %v2576 = vld [vmem:[%s2569 + $0x48] sm:$0xff]
      %v2577 = vld [vmem:[%s2569 + $0x50] sm:$0xff]
      %v2578 = vld [vmem:[%s2569 + $0x60] sm:$0xff]
      %v2579 = vld [vmem:[%s2569 + $0x68] sm:$0xff]
      %v2580 = vld [vmem:[%s2569 + $0x78] sm:$0xff]
      %v2581 = vld [vmem:[%s2569 + $0x80] sm:$0xff]
      %v2582 = vld [vmem:[%s2569 + $0x90] sm:$0xff]
      %v2583 = vld [vmem:[%s2569 + $0x98] sm:$0xff]
      %v2584 = vld [vmem:[%s2569 + $0xa8] sm:$0xff]
      %v2585 = vld [vmem:[%s2569 + $0xb0] sm:$0xff]
      %v2586 = vld [vmem:[%s2569 + $0xc0] sm:$0xff]
      %v2587 = vld [vmem:[%s2569 + $0xc8] sm:$0xff]
      %v2588 = vld [vmem:[%s2569 + $0xd8] sm:$0xff]
      %v2589 = vld [vmem:[%s2569 + $0xe0] sm:$0xff]
      %v2590 = vld [vmem:[%s2569 + $0xf0] sm:$0xff]
      %v2591 = vld [vmem:[%s2569 + $0xf8] sm:$0xff]
      %v2592 = vld [vmem:[%s2569 + $0x108] sm:$0xff]
      %v2593 = vld [vmem:[%s2569 + $0x110] sm:$0xff]
      %v2594 = vld [vmem:[%s2569 + $0x120] sm:$0xff]
      %v2595 = vld [vmem:[%s2569 + $0x128] sm:$0xff]
      %v2596 = vld [vmem:[%s2569 + $0x138] sm:$0xff]
      %v2597 = vld [vmem:[%s2569 + $0x140] sm:$0xff]
      %v2598 = vld [vmem:[%s2569 + $0x150] sm:$0xff]
      %v2599 = vld [vmem:[%s2569 + $0x158] sm:$0xff]
      %v2600 = vld [vmem:[%s2569 + $0x168] sm:$0xff]
      %v2601 = vld [vmem:[%s2569 + $0x170] sm:$0xff]
      %s2602 = scalar_lea.vmem %s1, 24
      %v2603 = vld [vmem:[%s2602] sm:$0xf]
      %v2605 = vsel %vm182, %v2570, 0
      %v2608 = vsel %vm182, %v2571, 0
      %v2611 = vsel %vm182, %v2572, 0
      %v2614 = vsel %vm182, %v2573, 0
      %v2617 = vsel %vm182, %v2574, 0
      %v2620 = vsel %vm182, %v2575, 0
      %v2623 = vsel %vm182, %v2576, 0
      %v2626 = vsel %vm182, %v2577, 0
      %v2629 = vsel %vm182, %v2578, 0
      %v2632 = vsel %vm182, %v2579, 0
      %v2635 = vsel %vm182, %v2580, 0
      %v2638 = vsel %vm182, %v2581, 0
      %v2641 = vsel %vm182, %v2582, 0
      %v2644 = vsel %vm182, %v2583, 0
      %v2647 = vsel %vm182, %v2584, 0
      %v2650 = vsel %vm182, %v2585, 0
      %v2653 = vsel %vm182, %v2586, 0
      %v2656 = vsel %vm182, %v2587, 0
      %v2659 = vsel %vm182, %v2588, 0
      %v2662 = vsel %vm182, %v2589, 0
      %v2665 = vsel %vm182, %v2590, 0
      %v2668 = vsel %vm182, %v2591, 0
      %v2671 = vsel %vm182, %v2592, 0
      %v2674 = vsel %vm182, %v2593, 0
      %v2677 = vsel %vm182, %v2594, 0
      %v2680 = vsel %vm182, %v2595, 0
      %v2683 = vsel %vm182, %v2596, 0
      %v2686 = vsel %vm182, %v2597, 0
      %v2689 = vsel %vm182, %v2598, 0
      %v2692 = vsel %vm182, %v2599, 0
      %v2695 = vsel %vm182, %v2600, 0
      %v2698 = vsel %vm182, %v2601, 0
      %v2701 = vsel %vm456, %v2603, 0
      %2703 = vmatprep.subr.mxu0 0.0
      %2704 = vmatpush1.msra.mxu0 0.0
      %2705 = vmatprep.subr.mxu0 0.0
      %2706 = vmatpush1.msra.mxu0 0.0
      %2707 = vmatprep.subr.mxu0 0.0
      %2708 = vmatpush1.msra.mxu0 0.0
      %2709 = vmatprep.subr.mxu0 0.0
      %2710 = vmatpush1.msra.mxu0 0.0
      %2711 = vmatprep.subr.mxu0 0.0
      %2712 = vmatpush1.msra.mxu0 0.0
      %2713 = vmatprep.subr.mxu0 0.0
      %2714 = vmatpush1.msra.mxu0 0.0
      %2715 = vmatprep.subr.mxu0 0.0
      %2716 = vmatpush1.msra.mxu0 0.0
      %2717 = vmatprep.subr.mxu0 0.0
      %2718 = vmatpush1.msra.mxu0 0.0
      %2719 = vmatprep.subr.mxu0 0.0
      %2720 = vmatpush1.msra.mxu0 0.0
      %2721 = vmatprep.subr.mxu0 0.0
      %2722 = vmatpush1.msra.mxu0 0.0
      %2723 = vmatprep.subr.mxu0 0.0
      %2724 = vmatpush1.msra.mxu0 0.0
      %2725 = vmatprep.subr.mxu0 0.0
      %2726 = vmatpush1.msra.mxu0 0.0
      %2727 = vmatprep.subr.mxu0 0.0
      %2728 = vmatpush1.msra.mxu0 0.0
      %2729 = vmatprep.subr.mxu0 0.0
      %2730 = vmatpush1.msra.mxu0 0.0
      %2731 = vmatprep.subr.mxu0 0.0
      %2732 = vmatpush1.msra.mxu0 0.0
      %2733 = vmatprep.subr.mxu0 0.0
      %2734 = vmatpush1.msra.mxu0 %v2701
      %2735 = vmatprep.subr.mxu0 0.0
      %2736 = vmatpush2.msra.mxu0 0.0
      %2737 = vmatprep.subr.mxu0 0.0
      %2738 = vmatpush2.msra.mxu0 0.0
      %2739 = vmatprep.subr.mxu0 0.0
      %2740 = vmatpush2.msra.mxu0 0.0
      %2741 = vmatprep.subr.mxu0 0.0
      %2742 = vmatpush2.msra.mxu0 0.0
      %2743 = vmatprep.subr.mxu0 0.0
      %2744 = vmatpush2.msra.mxu0 0.0
      %2745 = vmatprep.subr.mxu0 0.0
      %2746 = vmatpush2.msra.mxu0 0.0
      %2747 = vmatprep.subr.mxu0 0.0
      %2748 = vmatpush2.msra.mxu0 0.0
      %2749 = vmatprep.subr.mxu0 0.0
      %2750 = vmatpush2.msra.mxu0 0.0
      %2751 = vmatprep.subr.mxu0 0.0
      %2752 = vmatpush2.msra.mxu0 0.0
      %2753 = vmatprep.subr.mxu0 0.0
      %2754 = vmatpush2.msra.mxu0 0.0
      %2755 = vmatprep.subr.mxu0 0.0
      %2756 = vmatpush2.msra.mxu0 0.0
      %2757 = vmatprep.subr.mxu0 0.0
      %2758 = vmatpush2.msra.mxu0 0.0
      %2759 = vmatprep.subr.mxu0 0.0
      %2760 = vmatpush2.msra.mxu0 0.0
      %2761 = vmatprep.subr.mxu0 0.0
      %2762 = vmatpush2.msra.mxu0 0.0
      %2763 = vmatprep.subr.mxu0 0.0
      %2764 = vmatpush2.msra.mxu0 0.0
      %2765 = vmatprep.subr.mxu0 0.0
      %2766 = vmatpush2.msra.mxu0 0.0
      %2767 = vmatprep.mubr.f32.mxu0 0.0
      %2768 = vmatmul.mubr.f32.gmra.mxu0 %v2605
      %v2769 = vpop.f32.mrf.mxu0
      %v2770 = vadd.f32 0.0, %v2769
      %v2771 = vpop.f32.mrf.mxu0
      %2772 = vmatprep.mubr.f32.mxu0 0.0
      %2773 = vmatmul.mubr.f32.gmra.mxu0 %v2608
      %v2774 = vpop.f32.mrf.mxu0
      %v2775 = vadd.f32 0.0, %v2774
      %v2776 = vpop.f32.mrf.mxu0
      %2777 = vmatprep.mubr.f32.mxu0 0.0
      %2778 = vmatmul.mubr.f32.gmra.mxu0 %v2611
      %v2779 = vpop.f32.mrf.mxu0
      %v2780 = vadd.f32 0.0, %v2779
      %v2781 = vpop.f32.mrf.mxu0
      %2782 = vmatprep.mubr.f32.mxu0 0.0
      %2783 = vmatmul.mubr.f32.gmra.mxu0 %v2614
      %v2784 = vpop.f32.mrf.mxu0
      %v2785 = vadd.f32 0.0, %v2784
      %v2786 = vpop.f32.mrf.mxu0
      %2787 = vmatprep.mubr.f32.mxu0 0.0
      %2788 = vmatmul.mubr.f32.gmra.mxu0 %v2617
      %v2789 = vpop.f32.mrf.mxu0
      %v2790 = vadd.f32 0.0, %v2789
      %v2791 = vpop.f32.mrf.mxu0
      %2792 = vmatprep.mubr.f32.mxu0 0.0
      %2793 = vmatmul.mubr.f32.gmra.mxu0 %v2620
      %v2794 = vpop.f32.mrf.mxu0
      %v2795 = vadd.f32 0.0, %v2794
      %v2796 = vpop.f32.mrf.mxu0
      %2797 = vmatprep.mubr.f32.mxu0 0.0
      %2798 = vmatmul.mubr.f32.gmra.mxu0 %v2623
      %v2799 = vpop.f32.mrf.mxu0
      %v2800 = vadd.f32 0.0, %v2799
      %v2801 = vpop.f32.mrf.mxu0
      %2802 = vmatprep.mubr.f32.mxu0 0.0
      %2803 = vmatmul.mubr.f32.gmra.mxu0 %v2626
      %v2804 = vpop.f32.mrf.mxu0
      %v2805 = vadd.f32 0.0, %v2804
      %v2806 = vpop.f32.mrf.mxu0
      %2807 = vmatprep.mubr.f32.mxu0 0.0
      %2808 = vmatmul.mubr.f32.gmra.mxu0 %v2629
      %v2809 = vpop.f32.mrf.mxu0
      %v2810 = vadd.f32 0.0, %v2809
      %v2811 = vpop.f32.mrf.mxu0
      %2812 = vmatprep.mubr.f32.mxu0 0.0
      %2813 = vmatmul.mubr.f32.gmra.mxu0 %v2632
      %v2814 = vpop.f32.mrf.mxu0
      %v2815 = vadd.f32 0.0, %v2814
      %v2816 = vpop.f32.mrf.mxu0
      %2817 = vmatprep.mubr.f32.mxu0 0.0
      %2818 = vmatmul.mubr.f32.gmra.mxu0 %v2635
      %v2819 = vpop.f32.mrf.mxu0
      %v2820 = vadd.f32 0.0, %v2819
      %v2821 = vpop.f32.mrf.mxu0
      %2822 = vmatprep.mubr.f32.mxu0 0.0
      %2823 = vmatmul.mubr.f32.gmra.mxu0 %v2638
      %v2824 = vpop.f32.mrf.mxu0
      %v2825 = vadd.f32 0.0, %v2824
      %v2826 = vpop.f32.mrf.mxu0
      %2827 = vmatprep.mubr.f32.mxu0 0.0
      %2828 = vmatmul.mubr.f32.gmra.mxu0 %v2641
      %v2829 = vpop.f32.mrf.mxu0
      %v2830 = vadd.f32 0.0, %v2829
      %v2831 = vpop.f32.mrf.mxu0
      %2832 = vmatprep.mubr.f32.mxu0 0.0
      %2833 = vmatmul.mubr.f32.gmra.mxu0 %v2644
      %v2834 = vpop.f32.mrf.mxu0
      %v2835 = vadd.f32 0.0, %v2834
      %v2836 = vpop.f32.mrf.mxu0
      %2837 = vmatprep.mubr.f32.mxu0 0.0
      %2838 = vmatmul.mubr.f32.gmra.mxu0 %v2647
      %v2839 = vpop.f32.mrf.mxu0
      %v2840 = vadd.f32 0.0, %v2839
      %v2841 = vpop.f32.mrf.mxu0
      %2842 = vmatprep.mubr.f32.mxu0 0.0
      %2843 = vmatmul.mubr.f32.gmra.mxu0 %v2650
      %v2844 = vpop.f32.mrf.mxu0
      %v2845 = vadd.f32 0.0, %v2844
      %v2846 = vpop.f32.mrf.mxu0
      %2847 = vmatprep.mubr.f32.mxu0 0.0
      %2848 = vmatmul.mubr.f32.gmra.mxu0 %v2653
      %v2849 = vpop.f32.mrf.mxu0
      %v2850 = vadd.f32 0.0, %v2849
      %v2851 = vpop.f32.mrf.mxu0
      %2852 = vmatprep.mubr.f32.mxu0 0.0
      %2853 = vmatmul.mubr.f32.gmra.mxu0 %v2656
      %v2854 = vpop.f32.mrf.mxu0
      %v2855 = vadd.f32 0.0, %v2854
      %v2856 = vpop.f32.mrf.mxu0
      %2857 = vmatprep.mubr.f32.mxu0 0.0
      %2858 = vmatmul.mubr.f32.gmra.mxu0 %v2659
      %v2859 = vpop.f32.mrf.mxu0
      %v2860 = vadd.f32 0.0, %v2859
      %v2861 = vpop.f32.mrf.mxu0
      %2862 = vmatprep.mubr.f32.mxu0 0.0
      %2863 = vmatmul.mubr.f32.gmra.mxu0 %v2662
      %v2864 = vpop.f32.mrf.mxu0
      %v2865 = vadd.f32 0.0, %v2864
      %v2866 = vpop.f32.mrf.mxu0
      %2867 = vmatprep.mubr.f32.mxu0 0.0
      %2868 = vmatmul.mubr.f32.gmra.mxu0 %v2665
      %v2869 = vpop.f32.mrf.mxu0
      %v2870 = vadd.f32 0.0, %v2869
      %v2871 = vpop.f32.mrf.mxu0
      %2872 = vmatprep.mubr.f32.mxu0 0.0
      %2873 = vmatmul.mubr.f32.gmra.mxu0 %v2668
      %v2874 = vpop.f32.mrf.mxu0
      %v2875 = vadd.f32 0.0, %v2874
      %v2876 = vpop.f32.mrf.mxu0
      %2877 = vmatprep.mubr.f32.mxu0 0.0
      %2878 = vmatmul.mubr.f32.gmra.mxu0 %v2671
      %v2879 = vpop.f32.mrf.mxu0
      %v2880 = vadd.f32 0.0, %v2879
      %v2881 = vpop.f32.mrf.mxu0
      %2882 = vmatprep.mubr.f32.mxu0 0.0
      %2883 = vmatmul.mubr.f32.gmra.mxu0 %v2674
      %v2884 = vpop.f32.mrf.mxu0
      %v2885 = vadd.f32 0.0, %v2884
      %v2886 = vpop.f32.mrf.mxu0
      %2887 = vmatprep.mubr.f32.mxu0 0.0
      %2888 = vmatmul.mubr.f32.gmra.mxu0 %v2677
      %v2889 = vpop.f32.mrf.mxu0
      %v2890 = vadd.f32 0.0, %v2889
      %v2891 = vpop.f32.mrf.mxu0
      %2892 = vmatprep.mubr.f32.mxu0 0.0
      %2893 = vmatmul.mubr.f32.gmra.mxu0 %v2680
      %v2894 = vpop.f32.mrf.mxu0
      %v2895 = vadd.f32 0.0, %v2894
      %v2896 = vpop.f32.mrf.mxu0
      %2897 = vmatprep.mubr.f32.mxu0 0.0
      %2898 = vmatmul.mubr.f32.gmra.mxu0 %v2683
      %v2899 = vpop.f32.mrf.mxu0
      %v2900 = vadd.f32 0.0, %v2899
      %v2901 = vpop.f32.mrf.mxu0
      %2902 = vmatprep.mubr.f32.mxu0 0.0
      %2903 = vmatmul.mubr.f32.gmra.mxu0 %v2686
      %v2904 = vpop.f32.mrf.mxu0
      %v2905 = vadd.f32 0.0, %v2904
      %v2906 = vpop.f32.mrf.mxu0
      %2907 = vmatprep.mubr.f32.mxu0 0.0
      %2908 = vmatmul.mubr.f32.gmra.mxu0 %v2689
      %v2909 = vpop.f32.mrf.mxu0
      %v2910 = vadd.f32 0.0, %v2909
      %v2911 = vpop.f32.mrf.mxu0
      %2912 = vmatprep.mubr.f32.mxu0 0.0
      %2913 = vmatmul.mubr.f32.gmra.mxu0 %v2692
      %v2914 = vpop.f32.mrf.mxu0
      %v2915 = vadd.f32 0.0, %v2914
      %v2916 = vpop.f32.mrf.mxu0
      %2917 = vmatprep.mubr.f32.mxu0 0.0
      %2918 = vmatmul.mubr.f32.gmra.mxu0 %v2695
      %v2919 = vpop.f32.mrf.mxu0
      %v2920 = vadd.f32 0.0, %v2919
      %v2921 = vpop.f32.mrf.mxu0
      %2922 = vmatprep.mubr.f32.mxu0 0.0
      %2923 = vmatmul.mubr.f32.gmra.mxu0 %v2698
      %v2924 = vpop.f32.mrf.mxu0
      %v2925 = vadd.f32 0.0, %v2924
      %v2926 = vpop.f32.mrf.mxu0
      %2927 = vdwg.mxu0
      %v2928 = vadd.f32 %v2537, %v2770
      %v2929 = vadd.f32 %v2538, %v2775
      %v2930 = vadd.f32 %v2539, %v2780
      %v2931 = vadd.f32 %v2540, %v2785
      %v2932 = vadd.f32 %v2541, %v2790
      %v2933 = vadd.f32 %v2542, %v2795
      %v2934 = vadd.f32 %v2543, %v2800
      %v2935 = vadd.f32 %v2544, %v2805
      %v2936 = vadd.f32 %v2545, %v2810
      %v2937 = vadd.f32 %v2546, %v2815
      %v2938 = vadd.f32 %v2547, %v2820
      %v2939 = vadd.f32 %v2548, %v2825
      %v2940 = vadd.f32 %v2549, %v2830
      %v2941 = vadd.f32 %v2550, %v2835
      %v2942 = vadd.f32 %v2551, %v2840
      %v2943 = vadd.f32 %v2552, %v2845
      %v2944 = vadd.f32 %v2553, %v2850
      %v2945 = vadd.f32 %v2554, %v2855
      %v2946 = vadd.f32 %v2555, %v2860
      %v2947 = vadd.f32 %v2556, %v2865
      %v2948 = vadd.f32 %v2557, %v2870
      %v2949 = vadd.f32 %v2558, %v2875
      %v2950 = vadd.f32 %v2559, %v2880
      %v2951 = vadd.f32 %v2560, %v2885
      %v2952 = vadd.f32 %v2561, %v2890
      %v2953 = vadd.f32 %v2562, %v2895
      %v2954 = vadd.f32 %v2563, %v2900
      %v2955 = vadd.f32 %v2564, %v2905
      %v2956 = vadd.f32 %v2565, %v2910
      %v2957 = vadd.f32 %v2566, %v2915
      %v2958 = vadd.f32 %v2567, %v2920
      %v2959 = vadd.f32 %v2568, %v2925
      %v2960 = vld [vmem:[%s2569 + $0x1] sm:$0xff]
      %v2961 = vld [vmem:[%s2569 + $0x9] sm:$0xff]
      %v2962 = vld [vmem:[%s2569 + $0x19] sm:$0xff]
      %v2963 = vld [vmem:[%s2569 + $0x21] sm:$0xff]
      %v2964 = vld [vmem:[%s2569 + $0x31] sm:$0xff]
      %v2965 = vld [vmem:[%s2569 + $0x39] sm:$0xff]
      %v2966 = vld [vmem:[%s2569 + $0x49] sm:$0xff]
      %v2967 = vld [vmem:[%s2569 + $0x51] sm:$0xff]
      %v2968 = vld [vmem:[%s2569 + $0x61] sm:$0xff]
      %v2969 = vld [vmem:[%s2569 + $0x69] sm:$0xff]
      %v2970 = vld [vmem:[%s2569 + $0x79] sm:$0xff]
      %v2971 = vld [vmem:[%s2569 + $0x81] sm:$0xff]
      %v2972 = vld [vmem:[%s2569 + $0x91] sm:$0xff]
      %v2973 = vld [vmem:[%s2569 + $0x99] sm:$0xff]
      %v2974 = vld [vmem:[%s2569 + $0xa9] sm:$0xff]
      %v2975 = vld [vmem:[%s2569 + $0xb1] sm:$0xff]
      %v2976 = vld [vmem:[%s2569 + $0xc1] sm:$0xff]
      %v2977 = vld [vmem:[%s2569 + $0xc9] sm:$0xff]
      %v2978 = vld [vmem:[%s2569 + $0xd9] sm:$0xff]
      %v2979 = vld [vmem:[%s2569 + $0xe1] sm:$0xff]
      %v2980 = vld [vmem:[%s2569 + $0xf1] sm:$0xff]
      %v2981 = vld [vmem:[%s2569 + $0xf9] sm:$0xff]
      %v2982 = vld [vmem:[%s2569 + $0x109] sm:$0xff]
      %v2983 = vld [vmem:[%s2569 + $0x111] sm:$0xff]
      %v2984 = vld [vmem:[%s2569 + $0x121] sm:$0xff]
      %v2985 = vld [vmem:[%s2569 + $0x129] sm:$0xff]
      %v2986 = vld [vmem:[%s2569 + $0x139] sm:$0xff]
      %v2987 = vld [vmem:[%s2569 + $0x141] sm:$0xff]
      %v2988 = vld [vmem:[%s2569 + $0x151] sm:$0xff]
      %v2989 = vld [vmem:[%s2569 + $0x159] sm:$0xff]
      %v2990 = vld [vmem:[%s2569 + $0x169] sm:$0xff]
      %v2991 = vld [vmem:[%s2569 + $0x171] sm:$0xff]
      %s2992 = scalar_lea.vmem %s1, 28
      %v2993 = vld [vmem:[%s2992] sm:$0xf]
      %v2995 = vsel %vm182, %v2960, 0
      %v2998 = vsel %vm182, %v2961, 0
      %v3001 = vsel %vm182, %v2962, 0
      %v3004 = vsel %vm182, %v2963, 0
      %v3007 = vsel %vm182, %v2964, 0
      %v3010 = vsel %vm182, %v2965, 0
      %v3013 = vsel %vm182, %v2966, 0
      %v3016 = vsel %vm182, %v2967, 0
      %v3019 = vsel %vm182, %v2968, 0
      %v3022 = vsel %vm182, %v2969, 0
      %v3025 = vsel %vm182, %v2970, 0
      %v3028 = vsel %vm182, %v2971, 0
      %v3031 = vsel %vm182, %v2972, 0
      %v3034 = vsel %vm182, %v2973, 0
      %v3037 = vsel %vm182, %v2974, 0
      %v3040 = vsel %vm182, %v2975, 0
      %v3043 = vsel %vm182, %v2976, 0
      %v3046 = vsel %vm182, %v2977, 0
      %v3049 = vsel %vm182, %v2978, 0
      %v3052 = vsel %vm182, %v2979, 0
      %v3055 = vsel %vm182, %v2980, 0
      %v3058 = vsel %vm182, %v2981, 0
      %v3061 = vsel %vm182, %v2982, 0
      %v3064 = vsel %vm182, %v2983, 0
      %v3067 = vsel %vm182, %v2984, 0
      %v3070 = vsel %vm182, %v2985, 0
      %v3073 = vsel %vm182, %v2986, 0
      %v3076 = vsel %vm182, %v2987, 0
      %v3079 = vsel %vm182, %v2988, 0
      %v3082 = vsel %vm182, %v2989, 0
      %v3085 = vsel %vm182, %v2990, 0
      %v3088 = vsel %vm182, %v2991, 0
      %v3091 = vsel %vm456, %v2993, 0
      %3093 = vmatprep.subr.mxu0 0.0
      %3094 = vmatpush1.msra.mxu0 0.0
      %3095 = vmatprep.subr.mxu0 0.0
      %3096 = vmatpush1.msra.mxu0 0.0
      %3097 = vmatprep.subr.mxu0 0.0
      %3098 = vmatpush1.msra.mxu0 0.0
      %3099 = vmatprep.subr.mxu0 0.0
      %3100 = vmatpush1.msra.mxu0 0.0
      %3101 = vmatprep.subr.mxu0 0.0
      %3102 = vmatpush1.msra.mxu0 0.0
      %3103 = vmatprep.subr.mxu0 0.0
      %3104 = vmatpush1.msra.mxu0 0.0
      %3105 = vmatprep.subr.mxu0 0.0
      %3106 = vmatpush1.msra.mxu0 0.0
      %3107 = vmatprep.subr.mxu0 0.0
      %3108 = vmatpush1.msra.mxu0 0.0
      %3109 = vmatprep.subr.mxu0 0.0
      %3110 = vmatpush1.msra.mxu0 0.0
      %3111 = vmatprep.subr.mxu0 0.0
      %3112 = vmatpush1.msra.mxu0 0.0
      %3113 = vmatprep.subr.mxu0 0.0
      %3114 = vmatpush1.msra.mxu0 0.0
      %3115 = vmatprep.subr.mxu0 0.0
      %3116 = vmatpush1.msra.mxu0 0.0
      %3117 = vmatprep.subr.mxu0 0.0
      %3118 = vmatpush1.msra.mxu0 0.0
      %3119 = vmatprep.subr.mxu0 0.0
      %3120 = vmatpush1.msra.mxu0 0.0
      %3121 = vmatprep.subr.mxu0 0.0
      %3122 = vmatpush1.msra.mxu0 0.0
      %3123 = vmatprep.subr.mxu0 0.0
      %3124 = vmatpush1.msra.mxu0 %v3091
      %3125 = vmatprep.subr.mxu0 0.0
      %3126 = vmatpush2.msra.mxu0 0.0
      %3127 = vmatprep.subr.mxu0 0.0
      %3128 = vmatpush2.msra.mxu0 0.0
      %3129 = vmatprep.subr.mxu0 0.0
      %3130 = vmatpush2.msra.mxu0 0.0
      %3131 = vmatprep.subr.mxu0 0.0
      %3132 = vmatpush2.msra.mxu0 0.0
      %3133 = vmatprep.subr.mxu0 0.0
      %3134 = vmatpush2.msra.mxu0 0.0
      %3135 = vmatprep.subr.mxu0 0.0
      %3136 = vmatpush2.msra.mxu0 0.0
      %3137 = vmatprep.subr.mxu0 0.0
      %3138 = vmatpush2.msra.mxu0 0.0
      %3139 = vmatprep.subr.mxu0 0.0
      %3140 = vmatpush2.msra.mxu0 0.0
      %3141 = vmatprep.subr.mxu0 0.0
      %3142 = vmatpush2.msra.mxu0 0.0
      %3143 = vmatprep.subr.mxu0 0.0
      %3144 = vmatpush2.msra.mxu0 0.0
      %3145 = vmatprep.subr.mxu0 0.0
      %3146 = vmatpush2.msra.mxu0 0.0
      %3147 = vmatprep.subr.mxu0 0.0
      %3148 = vmatpush2.msra.mxu0 0.0
      %3149 = vmatprep.subr.mxu0 0.0
      %3150 = vmatpush2.msra.mxu0 0.0
      %3151 = vmatprep.subr.mxu0 0.0
      %3152 = vmatpush2.msra.mxu0 0.0
      %3153 = vmatprep.subr.mxu0 0.0
      %3154 = vmatpush2.msra.mxu0 0.0
      %3155 = vmatprep.subr.mxu0 0.0
      %3156 = vmatpush2.msra.mxu0 0.0
      %3157 = vmatprep.mubr.f32.mxu0 0.0
      %3158 = vmatmul.mubr.f32.gmra.mxu0 %v2995
      %v3159 = vpop.f32.mrf.mxu0
      %v3160 = vadd.f32 0.0, %v3159
      %v3161 = vpop.f32.mrf.mxu0
      %3162 = vmatprep.mubr.f32.mxu0 0.0
      %3163 = vmatmul.mubr.f32.gmra.mxu0 %v2998
      %v3164 = vpop.f32.mrf.mxu0
      %v3165 = vadd.f32 0.0, %v3164
      %v3166 = vpop.f32.mrf.mxu0
      %3167 = vmatprep.mubr.f32.mxu0 0.0
      %3168 = vmatmul.mubr.f32.gmra.mxu0 %v3001
      %v3169 = vpop.f32.mrf.mxu0
      %v3170 = vadd.f32 0.0, %v3169
      %v3171 = vpop.f32.mrf.mxu0
      %3172 = vmatprep.mubr.f32.mxu0 0.0
      %3173 = vmatmul.mubr.f32.gmra.mxu0 %v3004
      %v3174 = vpop.f32.mrf.mxu0
      %v3175 = vadd.f32 0.0, %v3174
      %v3176 = vpop.f32.mrf.mxu0
      %3177 = vmatprep.mubr.f32.mxu0 0.0
      %3178 = vmatmul.mubr.f32.gmra.mxu0 %v3007
      %v3179 = vpop.f32.mrf.mxu0
      %v3180 = vadd.f32 0.0, %v3179
      %v3181 = vpop.f32.mrf.mxu0
      %3182 = vmatprep.mubr.f32.mxu0 0.0
      %3183 = vmatmul.mubr.f32.gmra.mxu0 %v3010
      %v3184 = vpop.f32.mrf.mxu0
      %v3185 = vadd.f32 0.0, %v3184
      %v3186 = vpop.f32.mrf.mxu0
      %3187 = vmatprep.mubr.f32.mxu0 0.0
      %3188 = vmatmul.mubr.f32.gmra.mxu0 %v3013
      %v3189 = vpop.f32.mrf.mxu0
      %v3190 = vadd.f32 0.0, %v3189
      %v3191 = vpop.f32.mrf.mxu0
      %3192 = vmatprep.mubr.f32.mxu0 0.0
      %3193 = vmatmul.mubr.f32.gmra.mxu0 %v3016
      %v3194 = vpop.f32.mrf.mxu0
      %v3195 = vadd.f32 0.0, %v3194
      %v3196 = vpop.f32.mrf.mxu0
      %3197 = vmatprep.mubr.f32.mxu0 0.0
      %3198 = vmatmul.mubr.f32.gmra.mxu0 %v3019
      %v3199 = vpop.f32.mrf.mxu0
      %v3200 = vadd.f32 0.0, %v3199
      %v3201 = vpop.f32.mrf.mxu0
      %3202 = vmatprep.mubr.f32.mxu0 0.0
      %3203 = vmatmul.mubr.f32.gmra.mxu0 %v3022
      %v3204 = vpop.f32.mrf.mxu0
      %v3205 = vadd.f32 0.0, %v3204
      %v3206 = vpop.f32.mrf.mxu0
      %3207 = vmatprep.mubr.f32.mxu0 0.0
      %3208 = vmatmul.mubr.f32.gmra.mxu0 %v3025
      %v3209 = vpop.f32.mrf.mxu0
      %v3210 = vadd.f32 0.0, %v3209
      %v3211 = vpop.f32.mrf.mxu0
      %3212 = vmatprep.mubr.f32.mxu0 0.0
      %3213 = vmatmul.mubr.f32.gmra.mxu0 %v3028
      %v3214 = vpop.f32.mrf.mxu0
      %v3215 = vadd.f32 0.0, %v3214
      %v3216 = vpop.f32.mrf.mxu0
      %3217 = vmatprep.mubr.f32.mxu0 0.0
      %3218 = vmatmul.mubr.f32.gmra.mxu0 %v3031
      %v3219 = vpop.f32.mrf.mxu0
      %v3220 = vadd.f32 0.0, %v3219
      %v3221 = vpop.f32.mrf.mxu0
      %3222 = vmatprep.mubr.f32.mxu0 0.0
      %3223 = vmatmul.mubr.f32.gmra.mxu0 %v3034
      %v3224 = vpop.f32.mrf.mxu0
      %v3225 = vadd.f32 0.0, %v3224
      %v3226 = vpop.f32.mrf.mxu0
      %3227 = vmatprep.mubr.f32.mxu0 0.0
      %3228 = vmatmul.mubr.f32.gmra.mxu0 %v3037
      %v3229 = vpop.f32.mrf.mxu0
      %v3230 = vadd.f32 0.0, %v3229
      %v3231 = vpop.f32.mrf.mxu0
      %3232 = vmatprep.mubr.f32.mxu0 0.0
      %3233 = vmatmul.mubr.f32.gmra.mxu0 %v3040
      %v3234 = vpop.f32.mrf.mxu0
      %v3235 = vadd.f32 0.0, %v3234
      %v3236 = vpop.f32.mrf.mxu0
      %3237 = vmatprep.mubr.f32.mxu0 0.0
      %3238 = vmatmul.mubr.f32.gmra.mxu0 %v3043
      %v3239 = vpop.f32.mrf.mxu0
      %v3240 = vadd.f32 0.0, %v3239
      %v3241 = vpop.f32.mrf.mxu0
      %3242 = vmatprep.mubr.f32.mxu0 0.0
      %3243 = vmatmul.mubr.f32.gmra.mxu0 %v3046
      %v3244 = vpop.f32.mrf.mxu0
      %v3245 = vadd.f32 0.0, %v3244
      %v3246 = vpop.f32.mrf.mxu0
      %3247 = vmatprep.mubr.f32.mxu0 0.0
      %3248 = vmatmul.mubr.f32.gmra.mxu0 %v3049
      %v3249 = vpop.f32.mrf.mxu0
      %v3250 = vadd.f32 0.0, %v3249
      %v3251 = vpop.f32.mrf.mxu0
      %3252 = vmatprep.mubr.f32.mxu0 0.0
      %3253 = vmatmul.mubr.f32.gmra.mxu0 %v3052
      %v3254 = vpop.f32.mrf.mxu0
      %v3255 = vadd.f32 0.0, %v3254
      %v3256 = vpop.f32.mrf.mxu0
      %3257 = vmatprep.mubr.f32.mxu0 0.0
      %3258 = vmatmul.mubr.f32.gmra.mxu0 %v3055
      %v3259 = vpop.f32.mrf.mxu0
      %v3260 = vadd.f32 0.0, %v3259
      %v3261 = vpop.f32.mrf.mxu0
      %3262 = vmatprep.mubr.f32.mxu0 0.0
      %3263 = vmatmul.mubr.f32.gmra.mxu0 %v3058
      %v3264 = vpop.f32.mrf.mxu0
      %v3265 = vadd.f32 0.0, %v3264
      %v3266 = vpop.f32.mrf.mxu0
      %3267 = vmatprep.mubr.f32.mxu0 0.0
      %3268 = vmatmul.mubr.f32.gmra.mxu0 %v3061
      %v3269 = vpop.f32.mrf.mxu0
      %v3270 = vadd.f32 0.0, %v3269
      %v3271 = vpop.f32.mrf.mxu0
      %3272 = vmatprep.mubr.f32.mxu0 0.0
      %3273 = vmatmul.mubr.f32.gmra.mxu0 %v3064
      %v3274 = vpop.f32.mrf.mxu0
      %v3275 = vadd.f32 0.0, %v3274
      %v3276 = vpop.f32.mrf.mxu0
      %3277 = vmatprep.mubr.f32.mxu0 0.0
      %3278 = vmatmul.mubr.f32.gmra.mxu0 %v3067
      %v3279 = vpop.f32.mrf.mxu0
      %v3280 = vadd.f32 0.0, %v3279
      %v3281 = vpop.f32.mrf.mxu0
      %3282 = vmatprep.mubr.f32.mxu0 0.0
      %3283 = vmatmul.mubr.f32.gmra.mxu0 %v3070
      %v3284 = vpop.f32.mrf.mxu0
      %v3285 = vadd.f32 0.0, %v3284
      %v3286 = vpop.f32.mrf.mxu0
      %3287 = vmatprep.mubr.f32.mxu0 0.0
      %3288 = vmatmul.mubr.f32.gmra.mxu0 %v3073
      %v3289 = vpop.f32.mrf.mxu0
      %v3290 = vadd.f32 0.0, %v3289
      %v3291 = vpop.f32.mrf.mxu0
      %3292 = vmatprep.mubr.f32.mxu0 0.0
      %3293 = vmatmul.mubr.f32.gmra.mxu0 %v3076
      %v3294 = vpop.f32.mrf.mxu0
      %v3295 = vadd.f32 0.0, %v3294
      %v3296 = vpop.f32.mrf.mxu0
      %3297 = vmatprep.mubr.f32.mxu0 0.0
      %3298 = vmatmul.mubr.f32.gmra.mxu0 %v3079
      %v3299 = vpop.f32.mrf.mxu0
      %v3300 = vadd.f32 0.0, %v3299
      %v3301 = vpop.f32.mrf.mxu0
      %3302 = vmatprep.mubr.f32.mxu0 0.0
      %3303 = vmatmul.mubr.f32.gmra.mxu0 %v3082
      %v3304 = vpop.f32.mrf.mxu0
      %v3305 = vadd.f32 0.0, %v3304
      %v3306 = vpop.f32.mrf.mxu0
      %3307 = vmatprep.mubr.f32.mxu0 0.0
      %3308 = vmatmul.mubr.f32.gmra.mxu0 %v3085
      %v3309 = vpop.f32.mrf.mxu0
      %v3310 = vadd.f32 0.0, %v3309
      %v3311 = vpop.f32.mrf.mxu0
      %3312 = vmatprep.mubr.f32.mxu0 0.0
      %3313 = vmatmul.mubr.f32.gmra.mxu0 %v3088
      %v3314 = vpop.f32.mrf.mxu0
      %v3315 = vadd.f32 0.0, %v3314
      %v3316 = vpop.f32.mrf.mxu0
      %3317 = vdwg.mxu0
      %v3318 = vadd.f32 %v2928, %v3160
      %v3319 = vadd.f32 %v2929, %v3165
      %v3320 = vadd.f32 %v2930, %v3170
      %v3321 = vadd.f32 %v2931, %v3175
      %v3322 = vadd.f32 %v2932, %v3180
      %v3323 = vadd.f32 %v2933, %v3185
      %v3324 = vadd.f32 %v2934, %v3190
      %v3325 = vadd.f32 %v2935, %v3195
      %v3326 = vadd.f32 %v2936, %v3200
      %v3327 = vadd.f32 %v2937, %v3205
      %v3328 = vadd.f32 %v2938, %v3210
      %v3329 = vadd.f32 %v2939, %v3215
      %v3330 = vadd.f32 %v2940, %v3220
      %v3331 = vadd.f32 %v2941, %v3225
      %v3332 = vadd.f32 %v2942, %v3230
      %v3333 = vadd.f32 %v2943, %v3235
      %v3334 = vadd.f32 %v2944, %v3240
      %v3335 = vadd.f32 %v2945, %v3245
      %v3336 = vadd.f32 %v2946, %v3250
      %v3337 = vadd.f32 %v2947, %v3255
      %v3338 = vadd.f32 %v2948, %v3260
      %v3339 = vadd.f32 %v2949, %v3265
      %v3340 = vadd.f32 %v2950, %v3270
      %v3341 = vadd.f32 %v2951, %v3275
      %v3342 = vadd.f32 %v2952, %v3280
      %v3343 = vadd.f32 %v2953, %v3285
      %v3344 = vadd.f32 %v2954, %v3290
      %v3345 = vadd.f32 %v2955, %v3295
      %v3346 = vadd.f32 %v2956, %v3300
      %v3347 = vadd.f32 %v2957, %v3305
      %v3348 = vadd.f32 %v2958, %v3310
      %v3349 = vadd.f32 %v2959, %v3315
      %v3350 = vld [vmem:[%s2569 + $0x2] sm:$0xff]
      %v3351 = vld [vmem:[%s2569 + $0xa] sm:$0xff]
      %v3352 = vld [vmem:[%s2569 + $0x1a] sm:$0xff]
      %v3353 = vld [vmem:[%s2569 + $0x22] sm:$0xff]
      %v3354 = vld [vmem:[%s2569 + $0x32] sm:$0xff]
      %v3355 = vld [vmem:[%s2569 + $0x3a] sm:$0xff]
      %v3356 = vld [vmem:[%s2569 + $0x4a] sm:$0xff]
      %v3357 = vld [vmem:[%s2569 + $0x52] sm:$0xff]
      %v3358 = vld [vmem:[%s2569 + $0x62] sm:$0xff]
      %v3359 = vld [vmem:[%s2569 + $0x6a] sm:$0xff]
      %v3360 = vld [vmem:[%s2569 + $0x7a] sm:$0xff]
      %v3361 = vld [vmem:[%s2569 + $0x82] sm:$0xff]
      %v3362 = vld [vmem:[%s2569 + $0x92] sm:$0xff]
      %v3363 = vld [vmem:[%s2569 + $0x9a] sm:$0xff]
      %v3364 = vld [vmem:[%s2569 + $0xaa] sm:$0xff]
      %v3365 = vld [vmem:[%s2569 + $0xb2] sm:$0xff]
      %v3366 = vld [vmem:[%s2569 + $0xc2] sm:$0xff]
      %v3367 = vld [vmem:[%s2569 + $0xca] sm:$0xff]
      %v3368 = vld [vmem:[%s2569 + $0xda] sm:$0xff]
      %v3369 = vld [vmem:[%s2569 + $0xe2] sm:$0xff]
      %v3370 = vld [vmem:[%s2569 + $0xf2] sm:$0xff]
      %v3371 = vld [vmem:[%s2569 + $0xfa] sm:$0xff]
      %v3372 = vld [vmem:[%s2569 + $0x10a] sm:$0xff]
      %v3373 = vld [vmem:[%s2569 + $0x112] sm:$0xff]
      %v3374 = vld [vmem:[%s2569 + $0x122] sm:$0xff]
      %v3375 = vld [vmem:[%s2569 + $0x12a] sm:$0xff]
      %v3376 = vld [vmem:[%s2569 + $0x13a] sm:$0xff]
      %v3377 = vld [vmem:[%s2569 + $0x142] sm:$0xff]
      %v3378 = vld [vmem:[%s2569 + $0x152] sm:$0xff]
      %v3379 = vld [vmem:[%s2569 + $0x15a] sm:$0xff]
      %v3380 = vld [vmem:[%s2569 + $0x16a] sm:$0xff]
      %v3381 = vld [vmem:[%s2569 + $0x172] sm:$0xff]
      %s3382 = scalar_lea.vmem %s1, 32
      %v3383 = vld [vmem:[%s3382] sm:$0xf]
      %v3385 = vsel %vm182, %v3350, 0
      %v3388 = vsel %vm182, %v3351, 0
      %v3391 = vsel %vm182, %v3352, 0
      %v3394 = vsel %vm182, %v3353, 0
      %v3397 = vsel %vm182, %v3354, 0
      %v3400 = vsel %vm182, %v3355, 0
      %v3403 = vsel %vm182, %v3356, 0
      %v3406 = vsel %vm182, %v3357, 0
      %v3409 = vsel %vm182, %v3358, 0
      %v3412 = vsel %vm182, %v3359, 0
      %v3415 = vsel %vm182, %v3360, 0
      %v3418 = vsel %vm182, %v3361, 0
      %v3421 = vsel %vm182, %v3362, 0
      %v3424 = vsel %vm182, %v3363, 0
      %v3427 = vsel %vm182, %v3364, 0
      %v3430 = vsel %vm182, %v3365, 0
      %v3433 = vsel %vm182, %v3366, 0
      %v3436 = vsel %vm182, %v3367, 0
      %v3439 = vsel %vm182, %v3368, 0
      %v3442 = vsel %vm182, %v3369, 0
      %v3445 = vsel %vm182, %v3370, 0
      %v3448 = vsel %vm182, %v3371, 0
      %v3451 = vsel %vm182, %v3372, 0
      %v3454 = vsel %vm182, %v3373, 0
      %v3457 = vsel %vm182, %v3374, 0
      %v3460 = vsel %vm182, %v3375, 0
      %v3463 = vsel %vm182, %v3376, 0
      %v3466 = vsel %vm182, %v3377, 0
      %v3469 = vsel %vm182, %v3378, 0
      %v3472 = vsel %vm182, %v3379, 0
      %v3475 = vsel %vm182, %v3380, 0
      %v3478 = vsel %vm182, %v3381, 0
      %v3481 = vsel %vm456, %v3383, 0
      %3483 = vmatprep.subr.mxu0 0.0
      %3484 = vmatpush1.msra.mxu0 0.0
      %3485 = vmatprep.subr.mxu0 0.0
      %3486 = vmatpush1.msra.mxu0 0.0
      %3487 = vmatprep.subr.mxu0 0.0
      %3488 = vmatpush1.msra.mxu0 0.0
      %3489 = vmatprep.subr.mxu0 0.0
      %3490 = vmatpush1.msra.mxu0 0.0
      %3491 = vmatprep.subr.mxu0 0.0
      %3492 = vmatpush1.msra.mxu0 0.0
      %3493 = vmatprep.subr.mxu0 0.0
      %3494 = vmatpush1.msra.mxu0 0.0
      %3495 = vmatprep.subr.mxu0 0.0
      %3496 = vmatpush1.msra.mxu0 0.0
      %3497 = vmatprep.subr.mxu0 0.0
      %3498 = vmatpush1.msra.mxu0 0.0
      %3499 = vmatprep.subr.mxu0 0.0
      %3500 = vmatpush1.msra.mxu0 0.0
      %3501 = vmatprep.subr.mxu0 0.0
      %3502 = vmatpush1.msra.mxu0 0.0
      %3503 = vmatprep.subr.mxu0 0.0
      %3504 = vmatpush1.msra.mxu0 0.0
      %3505 = vmatprep.subr.mxu0 0.0
      %3506 = vmatpush1.msra.mxu0 0.0
      %3507 = vmatprep.subr.mxu0 0.0
      %3508 = vmatpush1.msra.mxu0 0.0
      %3509 = vmatprep.subr.mxu0 0.0
      %3510 = vmatpush1.msra.mxu0 0.0
      %3511 = vmatprep.subr.mxu0 0.0
      %3512 = vmatpush1.msra.mxu0 0.0
      %3513 = vmatprep.subr.mxu0 0.0
      %3514 = vmatpush1.msra.mxu0 %v3481
      %3515 = vmatprep.subr.mxu0 0.0
      %3516 = vmatpush2.msra.mxu0 0.0
      %3517 = vmatprep.subr.mxu0 0.0
      %3518 = vmatpush2.msra.mxu0 0.0
      %3519 = vmatprep.subr.mxu0 0.0
      %3520 = vmatpush2.msra.mxu0 0.0
      %3521 = vmatprep.subr.mxu0 0.0
      %3522 = vmatpush2.msra.mxu0 0.0
      %3523 = vmatprep.subr.mxu0 0.0
      %3524 = vmatpush2.msra.mxu0 0.0
      %3525 = vmatprep.subr.mxu0 0.0
      %3526 = vmatpush2.msra.mxu0 0.0
      %3527 = vmatprep.subr.mxu0 0.0
      %3528 = vmatpush2.msra.mxu0 0.0
      %3529 = vmatprep.subr.mxu0 0.0
      %3530 = vmatpush2.msra.mxu0 0.0
      %3531 = vmatprep.subr.mxu0 0.0
      %3532 = vmatpush2.msra.mxu0 0.0
      %3533 = vmatprep.subr.mxu0 0.0
      %3534 = vmatpush2.msra.mxu0 0.0
      %3535 = vmatprep.subr.mxu0 0.0
      %3536 = vmatpush2.msra.mxu0 0.0
      %3537 = vmatprep.subr.mxu0 0.0
      %3538 = vmatpush2.msra.mxu0 0.0
      %3539 = vmatprep.subr.mxu0 0.0
      %3540 = vmatpush2.msra.mxu0 0.0
      %3541 = vmatprep.subr.mxu0 0.0
      %3542 = vmatpush2.msra.mxu0 0.0
      %3543 = vmatprep.subr.mxu0 0.0
      %3544 = vmatpush2.msra.mxu0 0.0
      %3545 = vmatprep.subr.mxu0 0.0
      %3546 = vmatpush2.msra.mxu0 0.0
      %3547 = vmatprep.mubr.f32.mxu0 0.0
      %3548 = vmatmul.mubr.f32.gmra.mxu0 %v3385
      %v3549 = vpop.f32.mrf.mxu0
      %v3550 = vadd.f32 0.0, %v3549
      %v3551 = vpop.f32.mrf.mxu0
      %3552 = vmatprep.mubr.f32.mxu0 0.0
      %3553 = vmatmul.mubr.f32.gmra.mxu0 %v3388
      %v3554 = vpop.f32.mrf.mxu0
      %v3555 = vadd.f32 0.0, %v3554
      %v3556 = vpop.f32.mrf.mxu0
      %3557 = vmatprep.mubr.f32.mxu0 0.0
      %3558 = vmatmul.mubr.f32.gmra.mxu0 %v3391
      %v3559 = vpop.f32.mrf.mxu0
      %v3560 = vadd.f32 0.0, %v3559
      %v3561 = vpop.f32.mrf.mxu0
      %3562 = vmatprep.mubr.f32.mxu0 0.0
      %3563 = vmatmul.mubr.f32.gmra.mxu0 %v3394
      %v3564 = vpop.f32.mrf.mxu0
      %v3565 = vadd.f32 0.0, %v3564
      %v3566 = vpop.f32.mrf.mxu0
      %3567 = vmatprep.mubr.f32.mxu0 0.0
      %3568 = vmatmul.mubr.f32.gmra.mxu0 %v3397
      %v3569 = vpop.f32.mrf.mxu0
      %v3570 = vadd.f32 0.0, %v3569
      %v3571 = vpop.f32.mrf.mxu0
      %3572 = vmatprep.mubr.f32.mxu0 0.0
      %3573 = vmatmul.mubr.f32.gmra.mxu0 %v3400
      %v3574 = vpop.f32.mrf.mxu0
      %v3575 = vadd.f32 0.0, %v3574
      %v3576 = vpop.f32.mrf.mxu0
      %3577 = vmatprep.mubr.f32.mxu0 0.0
      %3578 = vmatmul.mubr.f32.gmra.mxu0 %v3403
      %v3579 = vpop.f32.mrf.mxu0
      %v3580 = vadd.f32 0.0, %v3579
      %v3581 = vpop.f32.mrf.mxu0
      %3582 = vmatprep.mubr.f32.mxu0 0.0
      %3583 = vmatmul.mubr.f32.gmra.mxu0 %v3406
      %v3584 = vpop.f32.mrf.mxu0
      %v3585 = vadd.f32 0.0, %v3584
      %v3586 = vpop.f32.mrf.mxu0
      %3587 = vmatprep.mubr.f32.mxu0 0.0
      %3588 = vmatmul.mubr.f32.gmra.mxu0 %v3409
      %v3589 = vpop.f32.mrf.mxu0
      %v3590 = vadd.f32 0.0, %v3589
      %v3591 = vpop.f32.mrf.mxu0
      %3592 = vmatprep.mubr.f32.mxu0 0.0
      %3593 = vmatmul.mubr.f32.gmra.mxu0 %v3412
      %v3594 = vpop.f32.mrf.mxu0
      %v3595 = vadd.f32 0.0, %v3594
      %v3596 = vpop.f32.mrf.mxu0
      %3597 = vmatprep.mubr.f32.mxu0 0.0
      %3598 = vmatmul.mubr.f32.gmra.mxu0 %v3415
      %v3599 = vpop.f32.mrf.mxu0
      %v3600 = vadd.f32 0.0, %v3599
      %v3601 = vpop.f32.mrf.mxu0
      %3602 = vmatprep.mubr.f32.mxu0 0.0
      %3603 = vmatmul.mubr.f32.gmra.mxu0 %v3418
      %v3604 = vpop.f32.mrf.mxu0
      %v3605 = vadd.f32 0.0, %v3604
      %v3606 = vpop.f32.mrf.mxu0
      %3607 = vmatprep.mubr.f32.mxu0 0.0
      %3608 = vmatmul.mubr.f32.gmra.mxu0 %v3421
      %v3609 = vpop.f32.mrf.mxu0
      %v3610 = vadd.f32 0.0, %v3609
      %v3611 = vpop.f32.mrf.mxu0
      %3612 = vmatprep.mubr.f32.mxu0 0.0
      %3613 = vmatmul.mubr.f32.gmra.mxu0 %v3424
      %v3614 = vpop.f32.mrf.mxu0
      %v3615 = vadd.f32 0.0, %v3614
      %v3616 = vpop.f32.mrf.mxu0
      %3617 = vmatprep.mubr.f32.mxu0 0.0
      %3618 = vmatmul.mubr.f32.gmra.mxu0 %v3427
      %v3619 = vpop.f32.mrf.mxu0
      %v3620 = vadd.f32 0.0, %v3619
      %v3621 = vpop.f32.mrf.mxu0
      %3622 = vmatprep.mubr.f32.mxu0 0.0
      %3623 = vmatmul.mubr.f32.gmra.mxu0 %v3430
      %v3624 = vpop.f32.mrf.mxu0
      %v3625 = vadd.f32 0.0, %v3624
      %v3626 = vpop.f32.mrf.mxu0
      %3627 = vmatprep.mubr.f32.mxu0 0.0
      %3628 = vmatmul.mubr.f32.gmra.mxu0 %v3433
      %v3629 = vpop.f32.mrf.mxu0
      %v3630 = vadd.f32 0.0, %v3629
      %v3631 = vpop.f32.mrf.mxu0
      %3632 = vmatprep.mubr.f32.mxu0 0.0
      %3633 = vmatmul.mubr.f32.gmra.mxu0 %v3436
      %v3634 = vpop.f32.mrf.mxu0
      %v3635 = vadd.f32 0.0, %v3634
      %v3636 = vpop.f32.mrf.mxu0
      %3637 = vmatprep.mubr.f32.mxu0 0.0
      %3638 = vmatmul.mubr.f32.gmra.mxu0 %v3439
      %v3639 = vpop.f32.mrf.mxu0
      %v3640 = vadd.f32 0.0, %v3639
      %v3641 = vpop.f32.mrf.mxu0
      %3642 = vmatprep.mubr.f32.mxu0 0.0
      %3643 = vmatmul.mubr.f32.gmra.mxu0 %v3442
      %v3644 = vpop.f32.mrf.mxu0
      %v3645 = vadd.f32 0.0, %v3644
      %v3646 = vpop.f32.mrf.mxu0
      %3647 = vmatprep.mubr.f32.mxu0 0.0
      %3648 = vmatmul.mubr.f32.gmra.mxu0 %v3445
      %v3649 = vpop.f32.mrf.mxu0
      %v3650 = vadd.f32 0.0, %v3649
      %v3651 = vpop.f32.mrf.mxu0
      %3652 = vmatprep.mubr.f32.mxu0 0.0
      %3653 = vmatmul.mubr.f32.gmra.mxu0 %v3448
      %v3654 = vpop.f32.mrf.mxu0
      %v3655 = vadd.f32 0.0, %v3654
      %v3656 = vpop.f32.mrf.mxu0
      %3657 = vmatprep.mubr.f32.mxu0 0.0
      %3658 = vmatmul.mubr.f32.gmra.mxu0 %v3451
      %v3659 = vpop.f32.mrf.mxu0
      %v3660 = vadd.f32 0.0, %v3659
      %v3661 = vpop.f32.mrf.mxu0
      %3662 = vmatprep.mubr.f32.mxu0 0.0
      %3663 = vmatmul.mubr.f32.gmra.mxu0 %v3454
      %v3664 = vpop.f32.mrf.mxu0
      %v3665 = vadd.f32 0.0, %v3664
      %v3666 = vpop.f32.mrf.mxu0
      %3667 = vmatprep.mubr.f32.mxu0 0.0
      %3668 = vmatmul.mubr.f32.gmra.mxu0 %v3457
      %v3669 = vpop.f32.mrf.mxu0
      %v3670 = vadd.f32 0.0, %v3669
      %v3671 = vpop.f32.mrf.mxu0
      %3672 = vmatprep.mubr.f32.mxu0 0.0
      %3673 = vmatmul.mubr.f32.gmra.mxu0 %v3460
      %v3674 = vpop.f32.mrf.mxu0
      %v3675 = vadd.f32 0.0, %v3674
      %v3676 = vpop.f32.mrf.mxu0
      %3677 = vmatprep.mubr.f32.mxu0 0.0
      %3678 = vmatmul.mubr.f32.gmra.mxu0 %v3463
      %v3679 = vpop.f32.mrf.mxu0
      %v3680 = vadd.f32 0.0, %v3679
      %v3681 = vpop.f32.mrf.mxu0
      %3682 = vmatprep.mubr.f32.mxu0 0.0
      %3683 = vmatmul.mubr.f32.gmra.mxu0 %v3466
      %v3684 = vpop.f32.mrf.mxu0
      %v3685 = vadd.f32 0.0, %v3684
      %v3686 = vpop.f32.mrf.mxu0
      %3687 = vmatprep.mubr.f32.mxu0 0.0
      %3688 = vmatmul.mubr.f32.gmra.mxu0 %v3469
      %v3689 = vpop.f32.mrf.mxu0
      %v3690 = vadd.f32 0.0, %v3689
      %v3691 = vpop.f32.mrf.mxu0
      %3692 = vmatprep.mubr.f32.mxu0 0.0
      %3693 = vmatmul.mubr.f32.gmra.mxu0 %v3472
      %v3694 = vpop.f32.mrf.mxu0
      %v3695 = vadd.f32 0.0, %v3694
      %v3696 = vpop.f32.mrf.mxu0
      %3697 = vmatprep.mubr.f32.mxu0 0.0
      %3698 = vmatmul.mubr.f32.gmra.mxu0 %v3475
      %v3699 = vpop.f32.mrf.mxu0
      %v3700 = vadd.f32 0.0, %v3699
      %v3701 = vpop.f32.mrf.mxu0
      %3702 = vmatprep.mubr.f32.mxu0 0.0
      %3703 = vmatmul.mubr.f32.gmra.mxu0 %v3478
      %v3704 = vpop.f32.mrf.mxu0
      %v3705 = vadd.f32 0.0, %v3704
      %v3706 = vpop.f32.mrf.mxu0
      %3707 = vdwg.mxu0
      %v3708 = vadd.f32 %v3318, %v3550
      %v3709 = vadd.f32 %v3319, %v3555
      %v3710 = vadd.f32 %v3320, %v3560
      %v3711 = vadd.f32 %v3321, %v3565
      %v3712 = vadd.f32 %v3322, %v3570
      %v3713 = vadd.f32 %v3323, %v3575
      %v3714 = vadd.f32 %v3324, %v3580
      %v3715 = vadd.f32 %v3325, %v3585
      %v3716 = vadd.f32 %v3326, %v3590
      %v3717 = vadd.f32 %v3327, %v3595
      %v3718 = vadd.f32 %v3328, %v3600
      %v3719 = vadd.f32 %v3329, %v3605
      %v3720 = vadd.f32 %v3330, %v3610
      %v3721 = vadd.f32 %v3331, %v3615
      %v3722 = vadd.f32 %v3332, %v3620
      %v3723 = vadd.f32 %v3333, %v3625
      %v3724 = vadd.f32 %v3334, %v3630
      %v3725 = vadd.f32 %v3335, %v3635
      %v3726 = vadd.f32 %v3336, %v3640
      %v3727 = vadd.f32 %v3337, %v3645
      %v3728 = vadd.f32 %v3338, %v3650
      %v3729 = vadd.f32 %v3339, %v3655
      %v3730 = vadd.f32 %v3340, %v3660
      %v3731 = vadd.f32 %v3341, %v3665
      %v3732 = vadd.f32 %v3342, %v3670
      %v3733 = vadd.f32 %v3343, %v3675
      %v3734 = vadd.f32 %v3344, %v3680
      %v3735 = vadd.f32 %v3345, %v3685
      %v3736 = vadd.f32 %v3346, %v3690
      %v3737 = vadd.f32 %v3347, %v3695
      %v3738 = vadd.f32 %v3348, %v3700
      %v3739 = vadd.f32 %v3349, %v3705
      %3740 = vst.msk [vmem:[%s177] sm:$0xff] %vm182, %v3708
      %3741 = vst.msk [vmem:[%s177 + $0x8] sm:$0xff] %vm182, %v3709
      %3742 = vst.msk [vmem:[%s177 + $0x10] sm:$0xff] %vm182, %v3710
      %3743 = vst.msk [vmem:[%s177 + $0x18] sm:$0xff] %vm182, %v3711
      %3744 = vst.msk [vmem:[%s177 + $0x20] sm:$0xff] %vm182, %v3712
      %3745 = vst.msk [vmem:[%s177 + $0x28] sm:$0xff] %vm182, %v3713
      %3746 = vst.msk [vmem:[%s177 + $0x30] sm:$0xff] %vm182, %v3714
      %3747 = vst.msk [vmem:[%s177 + $0x38] sm:$0xff] %vm182, %v3715
      %3748 = vst.msk [vmem:[%s177 + $0x40] sm:$0xff] %vm182, %v3716
      %3749 = vst.msk [vmem:[%s177 + $0x48] sm:$0xff] %vm182, %v3717
      %3750 = vst.msk [vmem:[%s177 + $0x50] sm:$0xff] %vm182, %v3718
      %3751 = vst.msk [vmem:[%s177 + $0x58] sm:$0xff] %vm182, %v3719
      %3752 = vst.msk [vmem:[%s177 + $0x60] sm:$0xff] %vm182, %v3720
      %3753 = vst.msk [vmem:[%s177 + $0x68] sm:$0xff] %vm182, %v3721
      %3754 = vst.msk [vmem:[%s177 + $0x70] sm:$0xff] %vm182, %v3722
      %3755 = vst.msk [vmem:[%s177 + $0x78] sm:$0xff] %vm182, %v3723
      %3756 = vst.msk [vmem:[%s177 + $0x80] sm:$0xff] %vm182, %v3724
      %3757 = vst.msk [vmem:[%s177 + $0x88] sm:$0xff] %vm182, %v3725
      %3758 = vst.msk [vmem:[%s177 + $0x90] sm:$0xff] %vm182, %v3726
      %3759 = vst.msk [vmem:[%s177 + $0x98] sm:$0xff] %vm182, %v3727
      %3760 = vst.msk [vmem:[%s177 + $0xa0] sm:$0xff] %vm182, %v3728
      %3761 = vst.msk [vmem:[%s177 + $0xa8] sm:$0xff] %vm182, %v3729
      %3762 = vst.msk [vmem:[%s177 + $0xb0] sm:$0xff] %vm182, %v3730
      %3763 = vst.msk [vmem:[%s177 + $0xb8] sm:$0xff] %vm182, %v3731
      %3764 = vst.msk [vmem:[%s177 + $0xc0] sm:$0xff] %vm182, %v3732
      %3765 = vst.msk [vmem:[%s177 + $0xc8] sm:$0xff] %vm182, %v3733
      %3766 = vst.msk [vmem:[%s177 + $0xd0] sm:$0xff] %vm182, %v3734
      %3767 = vst.msk [vmem:[%s177 + $0xd8] sm:$0xff] %vm182, %v3735
      %3768 = vst.msk [vmem:[%s177 + $0xe0] sm:$0xff] %vm182, %v3736
      %3769 = vst.msk [vmem:[%s177 + $0xe8] sm:$0xff] %vm182, %v3737
      %3770 = vst.msk [vmem:[%s177 + $0xf0] sm:$0xff] %vm182, %v3738
      %3771 = vst.msk [vmem:[%s177 + $0xf8] sm:$0xff] %vm182, %v3739
      %v3772 = vsel %vm182, %v3708, 0.0
      %v3773 = vsel %vm182, %v3709, 0.0
      %v3774 = vadd.f32 %v3772, %v3773
      %v3775 = vsel %vm182, %v3710, 0.0
      %v3776 = vadd.f32 %v3774, %v3775
      %v3777 = vsel %vm182, %v3711, 0.0
      %v3778 = vadd.f32 %v3776, %v3777
      %v3779 = vsel %vm182, %v3712, 0.0
      %v3780 = vadd.f32 %v3778, %v3779
      %v3781 = vsel %vm182, %v3713, 0.0
      %v3782 = vadd.f32 %v3780, %v3781
      %v3783 = vsel %vm182, %v3714, 0.0
      %v3784 = vadd.f32 %v3782, %v3783
      %v3785 = vsel %vm182, %v3715, 0.0
      %v3786 = vadd.f32 %v3784, %v3785
      %v3787 = vsel %vm182, %v3716, 0.0
      %v3788 = vadd.f32 %v3786, %v3787
      %v3789 = vsel %vm182, %v3717, 0.0
      %v3790 = vadd.f32 %v3788, %v3789
      %v3791 = vsel %vm182, %v3718, 0.0
      %v3792 = vadd.f32 %v3790, %v3791
      %v3793 = vsel %vm182, %v3719, 0.0
      %v3794 = vadd.f32 %v3792, %v3793
      %v3795 = vsel %vm182, %v3720, 0.0
      %v3796 = vadd.f32 %v3794, %v3795
      %v3797 = vsel %vm182, %v3721, 0.0
      %v3798 = vadd.f32 %v3796, %v3797
      %v3799 = vsel %vm182, %v3722, 0.0
      %v3800 = vadd.f32 %v3798, %v3799
      %v3801 = vsel %vm182, %v3723, 0.0
      %v3802 = vadd.f32 %v3800, %v3801
      %v3803 = vsel %vm182, %v3724, 0.0
      %v3804 = vadd.f32 %v3802, %v3803
      %v3805 = vsel %vm182, %v3725, 0.0
      %v3806 = vadd.f32 %v3804, %v3805
      %v3807 = vsel %vm182, %v3726, 0.0
      %v3808 = vadd.f32 %v3806, %v3807
      %v3809 = vsel %vm182, %v3727, 0.0
      %v3810 = vadd.f32 %v3808, %v3809
      %v3811 = vsel %vm182, %v3728, 0.0
      %v3812 = vadd.f32 %v3810, %v3811
      %v3813 = vsel %vm182, %v3729, 0.0
      %v3814 = vadd.f32 %v3812, %v3813
      %v3815 = vsel %vm182, %v3730, 0.0
      %v3816 = vadd.f32 %v3814, %v3815
      %v3817 = vsel %vm182, %v3731, 0.0
      %v3818 = vadd.f32 %v3816, %v3817
      %v3819 = vsel %vm182, %v3732, 0.0
      %v3820 = vadd.f32 %v3818, %v3819
      %v3821 = vsel %vm182, %v3733, 0.0
      %v3822 = vadd.f32 %v3820, %v3821
      %v3823 = vsel %vm182, %v3734, 0.0
      %v3824 = vadd.f32 %v3822, %v3823
      %v3825 = vsel %vm182, %v3735, 0.0
      %v3826 = vadd.f32 %v3824, %v3825
      %v3827 = vsel %vm182, %v3736, 0.0
      %v3828 = vadd.f32 %v3826, %v3827
      %v3829 = vsel %vm182, %v3737, 0.0
      %v3830 = vadd.f32 %v3828, %v3829
      %v3831 = vsel %vm182, %v3738, 0.0
      %v3832 = vadd.f32 %v3830, %v3831
      %v3833 = vsel %vm182, %v3739, 0.0
      %v3834 = vadd.f32 %v3832, %v3833
      %v3835 = vrot.slane %v3834, 4
      %v3836 = vadd.f32 %v3834, %v3835
      %v3837 = vrot.slane %v3836, 2
      %v3838 = vadd.f32 %v3836, %v3837
      %v3839 = vrot.slane %v3838, 1
      %v3840 = vadd.f32 %v3838, %v3839
      %3841 = vst.msk [vmem:[%s181] sm:$0x1] %vm191, %v3840
      %v3842 = vmul.f32 %v3708, %v3708
      %v3843 = vmul.f32 %v3709, %v3709
      %v3844 = vmul.f32 %v3710, %v3710
      %v3845 = vmul.f32 %v3711, %v3711
      %v3846 = vmul.f32 %v3712, %v3712
      %v3847 = vmul.f32 %v3713, %v3713
      %v3848 = vmul.f32 %v3714, %v3714
      %v3849 = vmul.f32 %v3715, %v3715
      %v3850 = vmul.f32 %v3716, %v3716
      %v3851 = vmul.f32 %v3717, %v3717
      %v3852 = vmul.f32 %v3718, %v3718
      %v3853 = vmul.f32 %v3719, %v3719
      %v3854 = vmul.f32 %v3720, %v3720
      %v3855 = vmul.f32 %v3721, %v3721
      %v3856 = vmul.f32 %v3722, %v3722
      %v3857 = vmul.f32 %v3723, %v3723
      %v3858 = vmul.f32 %v3724, %v3724
      %v3859 = vmul.f32 %v3725, %v3725
      %v3860 = vmul.f32 %v3726, %v3726
      %v3861 = vmul.f32 %v3727, %v3727
      %v3862 = vmul.f32 %v3728, %v3728
      %v3863 = vmul.f32 %v3729, %v3729
      %v3864 = vmul.f32 %v3730, %v3730
      %v3865 = vmul.f32 %v3731, %v3731
      %v3866 = vmul.f32 %v3732, %v3732
      %v3867 = vmul.f32 %v3733, %v3733
      %v3868 = vmul.f32 %v3734, %v3734
      %v3869 = vmul.f32 %v3735, %v3735
      %v3870 = vmul.f32 %v3736, %v3736
      %v3871 = vmul.f32 %v3737, %v3737
      %v3872 = vmul.f32 %v3738, %v3738
      %v3873 = vmul.f32 %v3739, %v3739
      %v3874 = vsel %vm182, %v3842, 0.0
      %v3875 = vsel %vm182, %v3843, 0.0
      %v3876 = vadd.f32 %v3874, %v3875
      %v3877 = vsel %vm182, %v3844, 0.0
      %v3878 = vadd.f32 %v3876, %v3877
      %v3879 = vsel %vm182, %v3845, 0.0
      %v3880 = vadd.f32 %v3878, %v3879
      %v3881 = vsel %vm182, %v3846, 0.0
      %v3882 = vadd.f32 %v3880, %v3881
      %v3883 = vsel %vm182, %v3847, 0.0
      %v3884 = vadd.f32 %v3882, %v3883
      %v3885 = vsel %vm182, %v3848, 0.0
      %v3886 = vadd.f32 %v3884, %v3885
      %v3887 = vsel %vm182, %v3849, 0.0
      %v3888 = vadd.f32 %v3886, %v3887
      %v3889 = vsel %vm182, %v3850, 0.0
      %v3890 = vadd.f32 %v3888, %v3889
      %v3891 = vsel %vm182, %v3851, 0.0
      %v3892 = vadd.f32 %v3890, %v3891
      %v3893 = vsel %vm182, %v3852, 0.0
      %v3894 = vadd.f32 %v3892, %v3893
      %v3895 = vsel %vm182, %v3853, 0.0
      %v3896 = vadd.f32 %v3894, %v3895
      %v3897 = vsel %vm182, %v3854, 0.0
      %v3898 = vadd.f32 %v3896, %v3897
      %v3899 = vsel %vm182, %v3855, 0.0
      %v3900 = vadd.f32 %v3898, %v3899
      %v3901 = vsel %vm182, %v3856, 0.0
      %v3902 = vadd.f32 %v3900, %v3901
      %v3903 = vsel %vm182, %v3857, 0.0
      %v3904 = vadd.f32 %v3902, %v3903
      %v3905 = vsel %vm182, %v3858, 0.0
      %v3906 = vadd.f32 %v3904, %v3905
      %v3907 = vsel %vm182, %v3859, 0.0
      %v3908 = vadd.f32 %v3906, %v3907
      %v3909 = vsel %vm182, %v3860, 0.0
      %v3910 = vadd.f32 %v3908, %v3909
      %v3911 = vsel %vm182, %v3861, 0.0
      %v3912 = vadd.f32 %v3910, %v3911
      %v3913 = vsel %vm182, %v3862, 0.0
      %v3914 = vadd.f32 %v3912, %v3913
      %v3915 = vsel %vm182, %v3863, 0.0
      %v3916 = vadd.f32 %v3914, %v3915
      %v3917 = vsel %vm182, %v3864, 0.0
      %v3918 = vadd.f32 %v3916, %v3917
      %v3919 = vsel %vm182, %v3865, 0.0
      %v3920 = vadd.f32 %v3918, %v3919
      %v3921 = vsel %vm182, %v3866, 0.0
      %v3922 = vadd.f32 %v3920, %v3921
      %v3923 = vsel %vm182, %v3867, 0.0
      %v3924 = vadd.f32 %v3922, %v3923
      %v3925 = vsel %vm182, %v3868, 0.0
      %v3926 = vadd.f32 %v3924, %v3925
      %v3927 = vsel %vm182, %v3869, 0.0
      %v3928 = vadd.f32 %v3926, %v3927
      %v3929 = vsel %vm182, %v3870, 0.0
      %v3930 = vadd.f32 %v3928, %v3929
      %v3931 = vsel %vm182, %v3871, 0.0
      %v3932 = vadd.f32 %v3930, %v3931
      %v3933 = vsel %vm182, %v3872, 0.0
      %v3934 = vadd.f32 %v3932, %v3933
      %v3935 = vsel %vm182, %v3873, 0.0
      %v3936 = vadd.f32 %v3934, %v3935
      %v3937 = vrot.slane %v3936, 4
      %v3938 = vadd.f32 %v3936, %v3937
      %v3939 = vrot.slane %v3938, 2
      %v3940 = vadd.f32 %v3938, %v3939
      %v3941 = vrot.slane %v3940, 1
      %v3942 = vadd.f32 %v3940, %v3941
      %3943 = vst.msk [vmem:[%s181 + $0x1] sm:$0x1] %vm191, %v3942
      %p3944 = scmp.lt.s32.totalorder %s15, 1
      %s3945 = scalar_select %p3944, %s15, 1
      %s3946 = smul.addr %s3945, 32
      %s3947 = smul.addr %s3946, 8
      %s3948 = scalar_lea.vmem %s2, %s3947
      %p3949 = scmp.lt.s32.totalorder %s15, 1
      %s3950 = scalar_select %p3949, %s15, 1
      %s3951 = smul.addr %s3950, 2
      %s3952 = scalar_lea.vmem %s3, %s3951
      // Predicated region
      $region29: #{residual_block.3} parent=27 // pred_check
        %p3953 = pneg %p80
      $region30: #{residual_block.3} parent=27 // pred_check_branch
        %3955 = sbr.rel (%p3953) target = $region32
      $region31: #{residual_block.3} parent=27 // pred_region
        _
      $region32: #{residual_block.3} parent=27 // pred_fallthru
        _
      // Predicated region
      $region33: #{residual_block.3} parent=27 // pred_check
        %p3956 = pneg %p106
      $region34: #{residual_block.3} parent=27 // pred_check_branch
        %3958 = sbr.rel (%p3956) target = $region36
      $region35: #{residual_block.3} parent=27 // pred_region
        _
      $region36: #{residual_block.3} parent=27 // pred_fallthru
        _
    $region28: #{residual_block.3} parent=5 // pred_fallthru
      _
    %p3959 = scmp.le.s32.totalorder 2, %s10
    // Predicated region
    $region37: #{residual_block.3} parent=5 // pred_check
      %p3960 = pneg %p3959
    $region38: #{residual_block.3} parent=5 // pred_check_branch
      %3962 = sbr.rel (%p3960) target = $region40
    $region39: #{residual_block.3} parent=5 // pred_region
      %s3963 = ssub.s32 %s10, 2
      // Predicated region
      $region41: #{residual_block.3} parent=39 // pred_check
        %p3964 = pneg %p86
      $region42: #{residual_block.3} parent=39 // pred_check_branch
        %3966 = sbr.rel (%p3964) target = $region44
      $region43: #{residual_block.3} parent=39 // pred_region
        %p3967 = scmp.lt.s32.totalorder %s16, 1
        %s3968 = scalar_select %p3967, %s16, 1
        %s3969 = smul.addr %s3968, 32
        %s3970 = smul.addr %s3969, 8
        %s3971 = scalar_lea.vmem %s2, %s3970
      $region44: #{residual_block.3} parent=39 // pred_fallthru
        _
      // Predicated region
      $region45: #{residual_block.3} parent=39 // pred_check
        %p3972 = pneg %p112
      $region46: #{residual_block.3} parent=39 // pred_check_branch
        %3974 = sbr.rel (%p3972) target = $region48
      $region47: #{residual_block.3} parent=39 // pred_region
        %p3975 = scmp.lt.s32.totalorder %s16, 1
        %s3976 = scalar_select %p3975, %s16, 1
        %s3977 = smul.addr %s3976, 2
        %s3978 = scalar_lea.vmem %s3, %s3977
      $region48: #{residual_block.3} parent=39 // pred_fallthru
        _
    $region40: #{residual_block.3} parent=5 // pred_fallthru
      _
  $region6: #{residual_block.3} parent=0 // loop_footer
    %s14 = sadd.s32 1, %s10
  $region7: #{residual_block.3} parent=0 // loop_footer_branch
    %9 = sbr.rel target = $region3
  $region8: #{residual_block.3} parent=0 // loop_exit
    _

// kernel: residual_block.4
$region0: #{residual_block.4}
  #allocation0 [shape = 'u32[]', space=smem, size = 0x4, offset = 0x4, fixed_abs, tag = 'smem constant byte address 0x4 - core index']
  #allocation1 [shape = 'u32[144,128]{1,0:T(1,128)}', space=vmem, size = 0x12000, scoped, tag = 'internal scratch']
  #allocation2 [shape = 'f32[18,18,4]{2,1,0:T(8,128)}', space=vmem, size = 0x36000, scoped, tag = 'scratch operand']
  %s0 = inlined_call_operand.vmem [shape: f32[2,16,16,4], index: 0, kind: input, shape index: {}]
  %s1 = inlined_call_operand.vmem [shape: f32[2,4], index: 1, kind: input, shape index: {}]
  %s2 = inlined_call_operand.vmem [shape: f32[3,3,4,4], index: 2, kind: input, shape index: {}]
  %s3 = inlined_call_operand.vmem [shape: f32[2,16,16,4], index: 3, kind: output, shape index: {0}]
  %s4 = inlined_call_operand.vmem [shape: f32[2,2,4], index: 4, kind: output, shape index: {1}]
  %5 = xla_tuple %s3, %s4
  %s6 = sld [smem:[#allocation0]]
  $region53: #{residual_block.4} parent=0
    _
  %s8 = ssub.s32 1, %s6
  %s9 = scalar_select 0, %s8, %s6
  loop: start=0, step=1, limit=4
  $region2: #{residual_block.4} parent=0 // loop_pre_header
    _
  $region3: #{residual_block.4} parent=0 // loop_header
    %s11 = sphi 0, %s15
    %p12 = scmp.ge.s32.totalorder %s11, 4
    %s21 = sphi 0, %s23
    %s24 = sphi 0, %s21
    %s25 = sphi 0, %s24
    %s41 = sphi 0, %s25
    %s45 = sphi 0, %s45
    %s47 = sphi 0, %s45
    %s48 = sphi 0, %s47
    %s62 = sphi 0, %s48
    %s66 = sphi 0, %s66
    %s68 = sphi 0, %s66
    %s69 = sphi 0, %s68
    %s83 = sphi 0, %s69
    %s89 = sphi 0, %s91
    %s92 = sphi 0, %s89
    %s93 = sphi 0, %s92
    %s109 = sphi 0, %s93
    %s115 = sphi 0, %s117
    %s118 = sphi 0, %s115
    %s119 = sphi 0, %s118
    %s135 = sphi 0, %s119
  $region4: #{residual_block.4} parent=0 // loop_header_branch
    %14 = sbr.rel (%p12) target = $region8
  $region5: #{residual_block.4} parent=0 // loop_body
    %s16 = ssub.s32 %s11, 1
    %s17 = ssub.s32 %s11, 2
    %s18 = sadd.s32 %s11, 1
    %s19 = ssub.s32 %s11, %s18
    %p20 = scmp.eq.s32.totalorder %s19, 0
    %s22 = sadd.s32 %s21, 1
    %s23 = scalar_select %p20, %s21, %s22
    %p26 = pneg %p20
    %p27 = scmp.eq.s32.totalorder %s11, 1
    %p28 = por %p26, %p27
    %p29 = scmp.ne.s32.totalorder %s21, %s24
    %p30 = scmp.eq.s32.totalorder %s11, 0
    %p31 = por %p29, %p30
    %p32 = scmp.ne.s32.totalorder %s21, %s24
    %p33 = scmp.eq.s32.totalorder %s16, 1
    %p34 = por %p32, %p33
    %p35 = scmp.ne.s32.totalorder %s24, %s25
    %p36 = scmp.eq.s32.totalorder %s16, 0
    %p37 = por %p35, %p36
    %p38 = scmp.ne.s32.totalorder %s24, %s25
    %p39 = scmp.eq.s32.totalorder %s17, 1
    %p40 = por %p38, %p39
    %p42 = scmp.ne.s32.totalorder %s25, %s41
    %p43 = scmp.eq.s32.totalorder %s17, 0
    %p44 = por %p42, %p43
    %s46 = sadd.s32 %s45, 1
    %p49 = scmp.eq.s32.totalorder %s11, 1
    %p50 = scmp.ne.s32.totalorder %s45, %s47
    %p51 = scmp.eq.s32.totalorder %s11, 0
    %p52 = por %p50, %p51
    %p53 = scmp.ne.s32.totalorder %s45, %s47
    %p54 = scmp.eq.s32.totalorder %s16, 1
    %p55 = por %p53, %p54
    %p56 = scmp.ne.s32.totalorder %s47, %s48
    %p57 = scmp.eq.s32.totalorder %s16, 0
    %p58 = por %p56, %p57
    %p59 = scmp.ne.s32.totalorder %s47, %s48
    %p60 = scmp.eq.s32.totalorder %s17, 1
    %p61 = por %p59, %p60
    %p63 = scmp.ne.s32.totalorder %s48, %s62
    %p64 = scmp.eq.s32.totalorder %s17, 0
    %p65 = por %p63, %p64
    %s67 = sadd.s32 %s66, 1
    %p70 = scmp.eq.s32.totalorder %s11, 1
    %p71 = scmp.ne.s32.totalorder %s66, %s68
    %p72 = scmp.eq.s32.totalorder %s11, 0
    %p73 = por %p71, %p72
    %p74 = scmp.ne.s32.totalorder %s66, %s68
    %p75 = scmp.eq.s32.totalorder %s16, 1
    %p76 = por %p74, %p75
    %p77 = scmp.ne.s32.totalorder %s68, %s69
    %p78 = scmp.eq.s32.totalorder %s16, 0
    %p79 = por %p77, %p78
    %p80 = scmp.ne.s32.totalorder %s68, %s69
    %p81 = scmp.eq.s32.totalorder %s17, 1
    %p82 = por %p80, %p81
    %p84 = scmp.ne.s32.totalorder %s69, %s83
    %p85 = scmp.eq.s32.totalorder %s17, 0
    %p86 = por %p84, %p85
    %s87 = ssub.s32 %s11, %s18
    %p88 = scmp.eq.s32.totalorder %s87, 0
    %s90 = sadd.s32 %s89, 1
    %s91 = scalar_select %p88, %s89, %s90
    %p94 = pneg %p88
    %p95 = scmp.eq.s32.totalorder %s11, 1
    %p96 = por %p94, %p95
    %p97 = scmp.ne.s32.totalorder %s89, %s92
    %p98 = scmp.eq.s32.totalorder %s11, 0
    %p99 = por %p97, %p98
    %p100 = scmp.ne.s32.totalorder %s89, %s92
    %p101 = scmp.eq.s32.totalorder %s16, 1
    %p102 = por %p100, %p101
    %p103 = scmp.ne.s32.totalorder %s92, %s93
    %p104 = scmp.eq.s32.totalorder %s16, 0
    %p105 = por %p103, %p104
    %p106 = scmp.ne.s32.totalorder %s92, %s93
    %p107 = scmp.eq.s32.totalorder %s17, 1
    %p108 = por %p106, %p107
    %p110 = scmp.ne.s32.totalorder %s93, %s109
    %p111 = scmp.eq.s32.totalorder %s17, 0
    %p112 = por %p110, %p111
    %s113 = ssub.s32 %s11, %s18
    %p114 = scmp.eq.s32.totalorder %s113, 0
    %s116 = sadd.s32 %s115, 1
    %s117 = scalar_select %p114, %s115, %s116
    %p120 = pneg %p114
    %p121 = scmp.eq.s32.totalorder %s11, 1
    %p122 = por %p120, %p121
    %p123 = scmp.ne.s32.totalorder %s115, %s118
    %p124 = scmp.eq.s32.totalorder %s11, 0
    %p125 = por %p123, %p124
    %p126 = scmp.ne.s32.totalorder %s115, %s118
    %p127 = scmp.eq.s32.totalorder %s16, 1
    %p128 = por %p126, %p127
    %p129 = scmp.ne.s32.totalorder %s118, %s119
    %p130 = scmp.eq.s32.totalorder %s16, 0
    %p131 = por %p129, %p130
    %p132 = scmp.ne.s32.totalorder %s118, %s119
    %p133 = scmp.eq.s32.totalorder %s17, 1
    %p134 = por %p132, %p133
    %p136 = scmp.ne.s32.totalorder %s119, %s135
    %p137 = scmp.eq.s32.totalorder %s17, 0
    %p138 = por %p136, %p137
    %p139 = scmp.le.s32.totalorder 1, %s11
    %p140 = scmp.lt.s32.totalorder %s11, 3
    %p141 = pnand %p139, %p140
    %p142 = pneg %p141
    // Predicated region
    $region9: #{residual_block.4} parent=5 // pred_check
      _
    $region10: #{residual_block.4} parent=5 // pred_check_branch
      %144 = sbr.rel (%p141) target = $region12
    $region11: #{residual_block.4} parent=5 // pred_region
      %s145 = ssub.s32 %s11, 1
      // Predicated region
      $region13: #{residual_block.4} parent=11 // pred_check
        %p146 = pneg %p58
      $region14: #{residual_block.4} parent=11 // pred_check_branch
        %148 = sbr.rel (%p146) target = $region16
      $region15: #{residual_block.4} parent=11 // pred_region
        _
      $region16: #{residual_block.4} parent=11 // pred_fallthru
        _
      // Predicated region
      $region17: #{residual_block.4} parent=11 // pred_check
        %p149 = pneg %p79
      $region18: #{residual_block.4} parent=11 // pred_check_branch
        %151 = sbr.rel (%p149) target = $region20
      $region19: #{residual_block.4} parent=11 // pred_region
        _
      $region20: #{residual_block.4} parent=11 // pred_fallthru
        _
    $region12: #{residual_block.4} parent=5 // pred_fallthru
      _
    %p152 = scmp.lt.s32.totalorder %s11, 2
    // Predicated region
    $region21: #{residual_block.4} parent=5 // pred_check
      %p153 = pneg %p152
    $region22: #{residual_block.4} parent=5 // pred_check_branch
      %155 = sbr.rel (%p153) target = $region24
    $region23: #{residual_block.4} parent=5 // pred_region
      // Predicated region
      $region25: #{residual_block.4} parent=23 // pred_check
        %p156 = pneg %p31
      $region26: #{residual_block.4} parent=23 // pred_check_branch
        %158 = sbr.rel (%p156) target = $region28
      $region27: #{residual_block.4} parent=23 // pred_region
        %p159 = scmp.lt.s32.totalorder %s11, 1
        %s160 = scalar_select %p159, %s11, 1
        %s161 = smul.addr %s160, 32
        %s162 = smul.addr %s161, 8
        %s163 = scalar_lea.vmem %s0, %s162
      $region28: #{residual_block.4} parent=23 // pred_fallthru
        _
    $region24: #{residual_block.4} parent=5 // pred_fallthru
      _
    %p164 = scmp.le.s32.totalorder 1, %s11
    %p165 = scmp.lt.s32.totalorder %s11, 3
    %p166 = pnand %p164, %p165
    %p167 = pneg %p166
    // Predicated region
    $region29: #{residual_block.4} parent=5 // pred_check
      _
    $region30: #{residual_block.4} parent=5 // pred_check_branch
      %169 = sbr.rel (%p166) target = $region32
    $region31: #{residual_block.4} parent=5 // pred_region
      %s170 = ssub.s32 %s11, 1
      %p171 = scmp.lt.s32.totalorder %s16, 1
      %s172 = scalar_select %p171, %s16, 1
      %s173 = smul.addr %s172, 32
      %s174 = smul.addr %s173, 8
      %s175 = scalar_lea.vmem %s0, %s174
      %p176 = pneg %p37
      %p177 = pneg %p34
      %p178 = pneg %p58
      %p179 = pneg %p55
      %p180 = pneg %p79
      %p181 = pneg %p76
      %p182 = pneg %p105
      %p183 = pneg %p102
      %p184 = scmp.lt.s32.totalorder %s16, 1
      %s185 = scalar_select %p184, %s16, 1
      %s186 = smul.addr %s185, 32
      %s187 = smul.addr %s186, 8
      %s188 = scalar_lea.vmem %s3, %s187
      %p189 = pneg %p131
      %p190 = pneg %p128
      %p191 = scmp.lt.s32.totalorder %s16, 1
      %s192 = scalar_select %p191, %s16, 1
      %s193 = smul.addr %s192, 2
      %s194 = scalar_lea.vmem %s4, %s193
      %p195 = scmp.lt.s32.totalorder %s16, 1
      %s196 = scalar_select %p195, %s16, 1
      %s197 = smul.addr %s196, 32
      %s198 = smul.addr %s197, 8
      %s199 = scalar_lea.vmem %s0, %s198
      %p200 = scmp.lt.s32.totalorder %s16, 1
      %s201 = scalar_select %p200, %s16, 1
      %s202 = smul.addr %s201, 32
      %s203 = smul.addr %s202, 8
      %s204 = scalar_lea.vmem %s3, %s203
      %p205 = scmp.lt.s32.totalorder %s16, 1
      %s206 = scalar_select %p205, %s16, 1
      %s207 = smul.addr %s206, 2
      %s208 = scalar_lea.vmem %s4, %s207
      %v209 = vld [vmem:[%s1] sm:$0x1]
      %v210 = vld [vmem:[%s1 + $0x1] sm:$0x1]
      %v211 = vld [vmem:[%s199] sm:$0xff]
      %v212 = vld [vmem:[%s199 + $0x8] sm:$0xff]
      %v213 = vld [vmem:[%s199 + $0x10] sm:$0xff]
      %v214 = vld [vmem:[%s199 + $0x18] sm:$0xff]
      %v215 = vld [vmem:[%s199 + $0x20] sm:$0xff]
      %v216 = vld [vmem:[%s199 + $0x28] sm:$0xff]
      %v217 = vld [vmem:[%s199 + $0x30] sm:$0xff]
      %v218 = vld [vmem:[%s199 + $0x38] sm:$0xff]
      %v219 = vld [vmem:[%s199 + $0x40] sm:$0xff]
      %v220 = vld [vmem:[%s199 + $0x48] sm:$0xff]
      %v221 = vld [vmem:[%s199 + $0x50] sm:$0xff]
      %v222 = vld [vmem:[%s199 + $0x58] sm:$0xff]
      %v223 = vld [vmem:[%s199 + $0x60] sm:$0xff]
      %v224 = vld [vmem:[%s199 + $0x68] sm:$0xff]
      %v225 = vld [vmem:[%s199 + $0x70] sm:$0xff]
      %v226 = vld [vmem:[%s199 + $0x78] sm:$0xff]
      %v227 = vld [vmem:[%s199 + $0x80] sm:$0xff]
      %v228 = vld [vmem:[%s199 + $0x88] sm:$0xff]
      %v229 = vld [vmem:[%s199 + $0x90] sm:$0xff]
      %v230 = vld [vmem:[%s199 + $0x98] sm:$0xff]
      %v231 = vld [vmem:[%s199 + $0xa0] sm:$0xff]
      %v232 = vld [vmem:[%s199 + $0xa8] sm:$0xff]
      %v233 = vld [vmem:[%s199 + $0xb0] sm:$0xff]
      %v234 = vld [vmem:[%s199 + $0xb8] sm:$0xff]
      %v235 = vld [vmem:[%s199 + $0xc0] sm:$0xff]
      %v236 = vld [vmem:[%s199 + $0xc8] sm:$0xff]
      %v237 = vld [vmem:[%s199 + $0xd0] sm:$0xff]
      %v238 = vld [vmem:[%s199 + $0xd8] sm:$0xff]
      %v239 = vld [vmem:[%s199 + $0xe0] sm:$0xff]
      %v240 = vld [vmem:[%s199 + $0xe8] sm:$0xff]
      %v241 = vld [vmem:[%s199 + $0xf0] sm:$0xff]
      %v242 = vld [vmem:[%s199 + $0xf8] sm:$0xff]
      %v243 = vlaneseq
      %v244 = vshrl.u32 %v243, 7
      %v245 = vsub.s32 0, %v244
      %v246 = vrot.slane %v209, %v245
      %v247 = vmul.f32 %v211, %v246
      %v248 = vmul.f32 %v212, %v246
      %v249 = vmul.f32 %v213, %v246
      %v250 = vmul.f32 %v214, %v246
      %v251 = vmul.f32 %v215, %v246
      %v252 = vmul.f32 %v216, %v246
      %v253 = vmul.f32 %v217, %v246
      %v254 = vmul.f32 %v218, %v246
      %v255 = vmul.f32 %v219, %v246
      %v256 = vmul.f32 %v220, %v246
      %v257 = vmul.f32 %v221, %v246
      %v258 = vmul.f32 %v222, %v246
      %v259 = vmul.f32 %v223, %v246
      %v260 = vmul.f32 %v224, %v246
      %v261 = vmul.f32 %v225, %v246
      %v262 = vmul.f32 %v226, %v246
      %v263 = vmul.f32 %v227, %v246
      %v264 = vmul.f32 %v228, %v246
      %v265 = vmul.f32 %v229, %v246
      %v266 = vmul.f32 %v230, %v246
      %v267 = vmul.f32 %v231, %v246
      %v268 = vmul.f32 %v232, %v246
      %v269 = vmul.f32 %v233, %v246
      %v270 = vmul.f32 %v234, %v246
      %v271 = vmul.f32 %v235, %v246
      %v272 = vmul.f32 %v236, %v246
      %v273 = vmul.f32 %v237, %v246
      %v274 = vmul.f32 %v238, %v246
      %v275 = vmul.f32 %v239, %v246
      %v276 = vmul.f32 %v240, %v246
      %v277 = vmul.f32 %v241, %v246
      %v278 = vmul.f32 %v242, %v246
      %v279 = vlaneseq
      %v280 = vshrl.u32 %v279, 7
      %v281 = vsub.s32 0, %v280
      %v282 = vrot.slane %v210, %v281
      %v283 = vadd.f32 %v247, %v282
      %v284 = vadd.f32 %v248, %v282
      %v285 = vadd.f32 %v249, %v282
      %v286 = vadd.f32 %v250, %v282
      %v287 = vadd.f32 %v251, %v282
      %v288 = vadd.f32 %v252, %v282
      %v289 = vadd.f32 %v253, %v282
      %v290 = vadd.f32 %v254, %v282
      %v291 = vadd.f32 %v255, %v282
      %v292 = vadd.f32 %v256, %v282
      %v293 = vadd.f32 %v257, %v282
      %v294 = vadd.f32 %v258, %v282
      %v295 = vadd.f32 %v259, %v282
      %v296 = vadd.f32 %v260, %v282
      %v297 = vadd.f32 %v261, %v282
      %v298 = vadd.f32 %v262, %v282
      %v299 = vadd.f32 %v263, %v282
      %v300 = vadd.f32 %v264, %v282
      %v301 = vadd.f32 %v265, %v282
      %v302 = vadd.f32 %v266, %v282
      %v303 = vadd.f32 %v267, %v282
      %v304 = vadd.f32 %v268, %v282
      %v305 = vadd.f32 %v269, %v282
      %v306 = vadd.f32 %v270, %v282
      %v307 = vadd.f32 %v271, %v282
      %v308 = vadd.f32 %v272, %v282
      %v309 = vadd.f32 %v273, %v282
      %v310 = vadd.f32 %v274, %v282
      %v311 = vadd.f32 %v275, %v282
      %v312 = vadd.f32 %v276, %v282
      %v313 = vadd.f32 %v277, %v282
      %v314 = vadd.f32 %v278, %v282
      %v315 = vmax.f32 %v283, 0.0
      %v316 = vmax.f32 %v284, 0.0
      %v317 = vmax.f32 %v285, 0.0
      %v318 = vmax.f32 %v286, 0.0
      %v319 = vmax.f32 %v287, 0.0
      %v320 = vmax.f32 %v288, 0.0
      %v321 = vmax.f32 %v289, 0.0
      %v322 = vmax.f32 %v290, 0.0
      %v323 = vmax.f32 %v291, 0.0
      %v324 = vmax.f32 %v292, 0.0
      %v325 = vmax.f32 %v293, 0.0
      %v326 = vmax.f32 %v294, 0.0
      %v327 = vmax.f32 %v295, 0.0
      %v328 = vmax.f32 %v296, 0.0
      %v329 = vmax.f32 %v297, 0.0
      %v330 = vmax.f32 %v298, 0.0
      %v331 = vmax.f32 %v299, 0.0
      %v332 = vmax.f32 %v300, 0.0
      %v333 = vmax.f32 %v301, 0.0
      %v334 = vmax.f32 %v302, 0.0
      %v335 = vmax.f32 %v303, 0.0
      %v336 = vmax.f32 %v304, 0.0
      %v337 = vmax.f32 %v305, 0.0
      %v338 = vmax.f32 %v306, 0.0
      %v339 = vmax.f32 %v307, 0.0
      %v340 = vmax.f32 %v308, 0.0
      %v341 = vmax.f32 %v309, 0.0
      %v342 = vmax.f32 %v310, 0.0
      %v343 = vmax.f32 %v311, 0.0
      %v344 = vmax.f32 %v312, 0.0
      %v345 = vmax.f32 %v313, 0.0
      %v346 = vmax.f32 %v314, 0.0
      %vm347 = vcmask 31744
      %348 = vst.msk [vmem:[#allocation2] sm:$0xff] %vm347, 0.0
      %349 = vst.msk [vmem:[#allocation2 + $0x8] sm:$0xff] %vm347, 0.0
      %vm350 = vcmask 25600
      %351 = vst.msk [vmem:[#allocation2 + $0x10] sm:$0x3] %vm350, 0.0
      %s352 = scalar_lea.vmem [#allocation2], 408
      %353 = vst.msk [vmem:[%s352] sm:$0xff] %vm347, 0.0
      %354 = vst.msk [vmem:[%s352 + $0x8] sm:$0xff] %vm347, 0.0
      %355 = vst.msk [vmem:[%s352 + $0x10] sm:$0x3] %vm350, 0.0
      %vm356 = vcmask 24576
      %357 = vst.msk [vmem:[#allocation2] sm:$0x1] %vm356, 0.0
      %358 = vst.msk [vmem:[#allocation2 + $0x18] sm:$0x1] %vm356, 0.0
      %359 = vst.msk [vmem:[#allocation2 + $0x30] sm:$0x1] %vm356, 0.0
      %360 = vst.msk [vmem:[#allocation2 + $0x48] sm:$0x1] %vm356, 0.0
      %361 = vst.msk [vmem:[#allocation2 + $0x60] sm:$0x1] %vm356, 0.0
      %362 = vst.msk [vmem:[#allocation2 + $0x78] sm:$0x1] %vm356, 0.0
      %363 = vst.msk [vmem:[#allocation2 + $0x90] sm:$0x1] %vm356, 0.0
      %364 = vst.msk [vmem:[#allocation2 + $0xa8] sm:$0x1] %vm356, 0.0
      %365 = vst.msk [vmem:[#allocation2 + $0xc0] sm:$0x1] %vm356, 0.0
      %366 = vst.msk [vmem:[#allocation2 + $0xd8] sm:$0x1] %vm356, 0.0
      %367 = vst.msk [vmem:[#allocation2 + $0xf0] sm:$0x1] %vm356, 0.0
      %368 = vst.msk [vmem:[#allocation2 + $0x108] sm:$0x1] %vm356, 0.0
      %369 = vst.msk [vmem:[#allocation2 + $0x120] sm:$0x1] %vm356, 0.0
      %370 = vst.msk [vmem:[#allocation2 + $0x138] sm:$0x1] %vm356, 0.0
      %371 = vst.msk [vmem:[#allocation2 + $0x150] sm:$0x1] %vm356, 0.0
      %372 = vst.msk [vmem:[#allocation2 + $0x168] sm:$0x1] %vm356, 0.0
      %373 = vst.msk [vmem:[#allocation2 + $0x180] sm:$0x1] %vm356, 0.0
      %374 = vst.msk [vmem:[#allocation2 + $0x198] sm:$0x1] %vm356, 0.0
      %375 = vst.msk [vmem:[#allocation2 + $0x11] sm:$0x1] %vm356, 0.0
      %376 = vst.msk [vmem:[#allocation2 + $0x29] sm:$0x1] %vm356, 0.0
      %377 = vst.msk [vmem:[#allocation2 + $0x41] sm:$0x1] %vm356, 0.0
      %378 = vst.msk [vmem:[#allocation2 + $0x59] sm:$0x1] %vm356, 0.0
      %379 = vst.msk [vmem:[#allocation2 + $0x71] sm:$0x1] %vm356, 0.0
      %380 = vst.msk [vmem:[#allocation2 + $0x89] sm:$0x1] %vm356, 0.0
      %381 = vst.msk [vmem:[#allocation2 + $0xa1] sm:$0x1] %vm356, 0.0
      %382 = vst.msk [vmem:[#allocation2 + $0xb9] sm:$0x1] %vm356, 0.0
      %383 = vst.msk [vmem:[#allocation2 + $0xd1] sm:$0x1] %vm356, 0.0
      %384 = vst.msk [vmem:[#allocation2 + $0xe9] sm:$0x1] %vm356, 0.0
      %385 = vst.msk [vmem:[#allocation2 + $0x101] sm:$0x1] %vm356, 0.0
      %386 = vst.msk [vmem:[#allocation2 + $0x119] sm:$0x1] %vm356, 0.0
      %387 = vst.msk [vmem:[#allocation2 + $0x131] sm:$0x1] %vm356, 0.0
      %388 = vst.msk [vmem:[#allocation2 + $0x149] sm:$0x1] %vm356, 0.0
      %389 = vst.msk [vmem:[#allocation2 + $0x161] sm:$0x1] %vm356, 0.0
      %390 = vst.msk [vmem:[#allocation2 + $0x179] sm:$0x1] %vm356, 0.0
      %391 = vst.msk [vmem:[#allocation2 + $0x191] sm:$0x1] %vm356, 0.0
      %392 = vst.msk [vmem:[#allocation2 + $0x1a9] sm:$0x1] %vm356, 0.0
      %s393 = scalar_lea.vmem [#allocation2], 24
      %394 = vst.msk [vmem:[%s393 + $0x1] sm:$0xff] %vm347, %v315
      %395 = vst.msk [vmem:[%s393 + $0x9] sm:$0xff] %vm347, %v316
      %396 = vst.msk [vmem:[%s393 + $0x19] sm:$0xff] %vm347, %v317
      %397 = vst.msk [vmem:[%s393 + $0x21] sm:$0xff] %vm347, %v318
      %398 = vst.msk [vmem:[%s393 + $0x31] sm:$0xff] %vm347, %v319
      %399 = vst.msk [vmem:[%s393 + $0x39] sm:$0xff] %vm347, %v320
      %400 = vst.msk [vmem:[%s393 + $0x49] sm:$0xff] %vm347, %v321
      %401 = vst.msk [vmem:[%s393 + $0x51] sm:$0xff] %vm347, %v322
      %402 = vst.msk [vmem:[%s393 + $0x61] sm:$0xff] %vm347, %v323
      %403 = vst.msk [vmem:[%s393 + $0x69] sm:$0xff] %vm347, %v324
      %404 = vst.msk [vmem:[%s393 + $0x79] sm:$0xff] %vm347, %v325
      %405 = vst.msk [vmem:[%s393 + $0x81] sm:$0xff] %vm347, %v326
      %406 = vst.msk [vmem:[%s393 + $0x91] sm:$0xff] %vm347, %v327
      %407 = vst.msk [vmem:[%s393 + $0x99] sm:$0xff] %vm347, %v328
      %408 = vst.msk [vmem:[%s393 + $0xa9] sm:$0xff] %vm347, %v329
      %409 = vst.msk [vmem:[%s393 + $0xb1] sm:$0xff] %vm347, %v330
      %410 = vst.msk [vmem:[%s393 + $0xc1] sm:$0xff] %vm347, %v331
      %411 = vst.msk [vmem:[%s393 + $0xc9] sm:$0xff] %vm347, %v332
      %412 = vst.msk [vmem:[%s393 + $0xd9] sm:$0xff] %vm347, %v333
      %413 = vst.msk [vmem:[%s393 + $0xe1] sm:$0xff] %vm347, %v334
      %414 = vst.msk [vmem:[%s393 + $0xf1] sm:$0xff] %vm347, %v335
      %415 = vst.msk [vmem:[%s393 + $0xf9] sm:$0xff] %vm347, %v336
      %416 = vst.msk [vmem:[%s393 + $0x109] sm:$0xff] %vm347, %v337
      %417 = vst.msk [vmem:[%s393 + $0x111] sm:$0xff] %vm347, %v338
      %418 = vst.msk [vmem:[%s393 + $0x121] sm:$0xff] %vm347, %v339
      %419 = vst.msk [vmem:[%s393 + $0x129] sm:$0xff] %vm347, %v340
      %420 = vst.msk [vmem:[%s393 + $0x139] sm:$0xff] %vm347, %v341
      %421 = vst.msk [vmem:[%s393 + $0x141] sm:$0xff] %vm347, %v342
      %422 = vst.msk [vmem:[%s393 + $0x151] sm:$0xff] %vm347, %v343
      %423 = vst.msk [vmem:[%s393 + $0x159] sm:$0xff] %vm347, %v344
      %424 = vst.msk [vmem:[%s393 + $0x169] sm:$0xff] %vm347, %v345
      %425 = vst.msk [vmem:[%s393 + $0x171] sm:$0xff] %vm347, %v346
      %v426 = vld [vmem:[#allocation2] sm:$0xff]
      %v427 = vld [vmem:[#allocation2 + $0x8] sm:$0xff]
      %v428 = vld [vmem:[#allocation2 + $0x18] sm:$0xff]
      %v429 = vld [vmem:[#allocation2 + $0x20] sm:$0xff]
      %v430 = vld [vmem:[#allocation2 + $0x30] sm:$0xff]
      %v431 = vld [vmem:[#allocation2 + $0x38] sm:$0xff]
      %v432 = vld [vmem:[#allocation2 + $0x48] sm:$0xff]
      %v433 = vld [vmem:[#allocation2 + $0x50] sm:$0xff]
      %v434 = vld [vmem:[#allocation2 + $0x60] sm:$0xff]
      %v435 = vld [vmem:[#allocation2 + $0x68] sm:$0xff]
      %v436 = vld [vmem:[#allocation2 + $0x78] sm:$0xff]
      %v437 = vld [vmem:[#allocation2 + $0x80] sm:$0xff]
      %v438 = vld [vmem:[#allocation2 + $0x90] sm:$0xff]
      %v439 = vld [vmem:[#allocation2 + $0x98] sm:$0xff]
      %v440 = vld [vmem:[#allocation2 + $0xa8] sm:$0xff]
      %v441 = vld [vmem:[#allocation2 + $0xb0] sm:$0xff]
      %v442 = vld [vmem:[#allocation2 + $0xc0] sm:$0xff]
      %v443 = vld [vmem:[#allocation2 + $0xc8] sm:$0xff]
      %v444 = vld [vmem:[#allocation2 + $0xd8] sm:$0xff]
      %v445 = vld [vmem:[#allocation2 + $0xe0] sm:$0xff]
      %v446 = vld [vmem:[#allocation2 + $0xf0] sm:$0xff]
      %v447 = vld [vmem:[#allocation2 + $0xf8] sm:$0xff]
      %v448 = vld [vmem:[#allocation2 + $0x108] sm:$0xff]
      %v449 = vld [vmem:[#allocation2 + $0x110] sm:$0xff]
      %v450 = vld [vmem:[#allocation2 + $0x120] sm:$0xff]
      %v451 = vld [vmem:[#allocation2 + $0x128] sm:$0xff]
      %v452 = vld [vmem:[#allocation2 + $0x138] sm:$0xff]
      %v453 = vld [vmem:[#allocation2 + $0x140] sm:$0xff]
      %v454 = vld [vmem:[#allocation2 + $0x150] sm:$0xff]
      %v455 = vld [vmem:[#allocation2 + $0x158] sm:$0xff]
      %v456 = vld [vmem:[#allocation2 + $0x168] sm:$0xff]
      %v457 = vld [vmem:[#allocation2 + $0x170] sm:$0xff]
      %v458 = vld [vmem:[%s2] sm:$0xf]
      %v459 = vld [vmem:[#allocation2 + $0x1] sm:$0xff]
      %v460 = vld [vmem:[#allocation2 + $0x9] sm:$0xff]
      %v461 = vld [vmem:[#allocation2 + $0x19] sm:$0xff]
      %v462 = vld [vmem:[#allocation2 + $0x21] sm:$0xff]
      %v463 = vld [vmem:[#allocation2 + $0x31] sm:$0xff]
      %v464 = vld [vmem:[#allocation2 + $0x39] sm:$0xff]
      %v465 = vld [vmem:[#allocation2 + $0x49] sm:$0xff]
      %v466 = vld [vmem:[#allocation2 + $0x51] sm:$0xff]
      %v467 = vld [vmem:[#allocation2 + $0x61] sm:$0xff]
      %v468 = vld [vmem:[#allocation2 + $0x69] sm:$0xff]
      %v469 = vld [vmem:[#allocation2 + $0x79] sm:$0xff]
      %v470 = vld [vmem:[#allocation2 + $0x81] sm:$0xff]
      %v471 = vld [vmem:[#allocation2 + $0x91] sm:$0xff]
      %v472 = vld [vmem:[#allocation2 + $0x99] sm:$0xff]
      %v473 = vld [vmem:[#allocation2 + $0xa9] sm:$0xff]
      %v474 = vld [vmem:[#allocation2 + $0xb1] sm:$0xff]
      %v475 = vld [vmem:[#allocation2 + $0xc1] sm:$0xff]
      %v476 = vld [vmem:[#allocation2 + $0xc9] sm:$0xff]
      %v477 = vld [vmem:[#allocation2 + $0xd9] sm:$0xff]
      %v478 = vld [vmem:[#allocation2 + $0xe1] sm:$0xff]
      %v479 = vld [vmem:[#allocation2 + $0xf1] sm:$0xff]
      %v480 = vld [vmem:[#allocation2 + $0xf9] sm:$0xff]
      %v481 = vld [vmem:[#allocation2 + $0x109] sm:$0xff]
      %v482 = vld [vmem:[#allocation2 + $0x111] sm:$0xff]
      %v483 = vld [vmem:[#allocation2 + $0x121] sm:$0xff]
      %v484 = vld [vmem:[#allocation2 + $0x129] sm:$0xff]
      %v485 = vld [vmem:[#allocation2 + $0x139] sm:$0xff]
      %v486 = vld [vmem:[#allocation2 + $0x141] sm:$0xff]
      %v487 = vld [vmem:[#allocation2 + $0x151] sm:$0xff]
      %v488 = vld [vmem:[#allocation2 + $0x159] sm:$0xff]
      %v489 = vld [vmem:[#allocation2 + $0x169] sm:$0xff]
      %v490 = vld [vmem:[#allocation2 + $0x171] sm:$0xff]
      %s491 = scalar_lea.vmem %s2, 4
      %v492 = vld [vmem:[%s491] sm:$0xf]
      %v494 = vsel %vm347, %v459, 0
      %v497 = vsel %vm347, %v460, 0
      %v500 = vsel %vm347, %v461, 0
      %v503 = vsel %vm347, %v462, 0
      %v506 = vsel %vm347, %v463, 0
      %v509 = vsel %vm347, %v464, 0
      %v512 = vsel %vm347, %v465, 0
      %v515 = vsel %vm347, %v466, 0
      %v518 = vsel %vm347, %v467, 0
      %v521 = vsel %vm347, %v468, 0
      %v524 = vsel %vm347, %v469, 0
      %v527 = vsel %vm347, %v470, 0
      %v530 = vsel %vm347, %v471, 0
      %v533 = vsel %vm347, %v472, 0
      %v536 = vsel %vm347, %v473, 0
      %v539 = vsel %vm347, %v474, 0
      %v542 = vsel %vm347, %v475, 0
      %v545 = vsel %vm347, %v476, 0
      %v548 = vsel %vm347, %v477, 0
      %v551 = vsel %vm347, %v478, 0
      %v554 = vsel %vm347, %v479, 0
      %v557 = vsel %vm347, %v480, 0
      %v560 = vsel %vm347, %v481, 0
      %v563 = vsel %vm347, %v482, 0
      %v566 = vsel %vm347, %v483, 0
      %v569 = vsel %vm347, %v484, 0
      %v572 = vsel %vm347, %v485, 0
      %v575 = vsel %vm347, %v486, 0
      %v578 = vsel %vm347, %v487, 0
      %v581 = vsel %vm347, %v488, 0
      %v584 = vsel %vm347, %v489, 0
      %v587 = vsel %vm347, %v490, 0
      %vm589 = vcmask 1043456
      %v591 = vsel %vm589, %v492, 0
      %593 = vmatprep.subr.mxu0 0.0
      %594 = vmatpush1.msra.mxu0 0.0
      %595 = vmatprep.subr.mxu0 0.0
      %596 = vmatpush1.msra.mxu0 0.0
      %597 = vmatprep.subr.mxu0 0.0
      %598 = vmatpush1.msra.mxu0 0.0
      %599 = vmatprep.subr.mxu0 0.0
      %600 = vmatpush1.msra.mxu0 0.0
      %601 = vmatprep.subr.mxu0 0.0
      %602 = vmatpush1.msra.mxu0 0.0
      %603 = vmatprep.subr.mxu0 0.0
      %604 = vmatpush1.msra.mxu0 0.0
      %605 = vmatprep.subr.mxu0 0.0
      %606 = vmatpush1.msra.mxu0 0.0
      %607 = vmatprep.subr.mxu0 0.0
      %608 = vmatpush1.msra.mxu0 0.0
      %609 = vmatprep.subr.mxu0 0.0
      %610 = vmatpush1.msra.mxu0 0.0
      %611 = vmatprep.subr.mxu0 0.0
      %612 = vmatpush1.msra.mxu0 0.0
      %613 = vmatprep.subr.mxu0 0.0
      %614 = vmatpush1.msra.mxu0 0.0
      %615 = vmatprep.subr.mxu0 0.0
      %616 = vmatpush1.msra.mxu0 0.0
      %617 = vmatprep.subr.mxu0 0.0
      %618 = vmatpush1.msra.mxu0 0.0
      %619 = vmatprep.subr.mxu0 0.0
      %620 = vmatpush1.msra.mxu0 0.0
      %621 = vmatprep.subr.mxu0 0.0
      %622 = vmatpush1.msra.mxu0 0.0
      %623 = vmatprep.subr.mxu0 0.0
      %624 = vmatpush1.msra.mxu0 %v591
      %625 = vmatprep.subr.mxu0 0.0
      %626 = vmatpush2.msra.mxu0 0.0
      %627 = vmatprep.subr.mxu0 0.0
      %628 = vmatpush2.msra.mxu0 0.0
      %629 = vmatprep.subr.mxu0 0.0
      %630 = vmatpush2.msra.mxu0 0.0
      %631 = vmatprep.subr.mxu0 0.0
      %632 = vmatpush2.msra.mxu0 0.0
      %633 = vmatprep.subr.mxu0 0.0
      %634 = vmatpush2.msra.mxu0 0.0
      %635 = vmatprep.subr.mxu0 0.0
      %636 = vmatpush2.msra.mxu0 0.0
      %637 = vmatprep.subr.mxu0 0.0
      %638 = vmatpush2.msra.mxu0 0.0
      %639 = vmatprep.subr.mxu0 0.0
      %640 = vmatpush2.msra.mxu0 0.0
      %641 = vmatprep.subr.mxu0 0.0
      %642 = vmatpush2.msra.mxu0 0.0
      %643 = vmatprep.subr.mxu0 0.0
      %644 = vmatpush2.msra.mxu0 0.0
      %645 = vmatprep.subr.mxu0 0.0
      %646 = vmatpush2.msra.mxu0 0.0
      %647 = vmatprep.subr.mxu0 0.0
      %648 = vmatpush2.msra.mxu0 0.0
      %649 = vmatprep.subr.mxu0 0.0
      %650 = vmatpush2.msra.mxu0 0.0
      %651 = vmatprep.subr.mxu0 0.0
      %652 = vmatpush2.msra.mxu0 0.0
      %653 = vmatprep.subr.mxu0 0.0
      %654 = vmatpush2.msra.mxu0 0.0
      %655 = vmatprep.subr.mxu0 0.0
      %656 = vmatpush2.msra.mxu0 0.0
      %657 = vmatprep.mubr.f32.mxu0 0.0
      %658 = vmatmul.mubr.f32.gmra.mxu0 %v494
      %v659 = vpop.f32.mrf.mxu0
      %v660 = vadd.f32 0.0, %v659
      %v661 = vpop.f32.mrf.mxu0
      %662 = vmatprep.mubr.f32.mxu0 0.0
      %663 = vmatmul.mubr.f32.gmra.mxu0 %v497
      %v664 = vpop.f32.mrf.mxu0
      %v665 = vadd.f32 0.0, %v664
      %v666 = vpop.f32.mrf.mxu0
      %667 = vmatprep.mubr.f32.mxu0 0.0
      %668 = vmatmul.mubr.f32.gmra.mxu0 %v500
      %v669 = vpop.f32.mrf.mxu0
      %v670 = vadd.f32 0.0, %v669
      %v671 = vpop.f32.mrf.mxu0
      %672 = vmatprep.mubr.f32.mxu0 0.0
      %673 = vmatmul.mubr.f32.gmra.mxu0 %v503
      %v674 = vpop.f32.mrf.mxu0
      %v675 = vadd.f32 0.0, %v674
      %v676 = vpop.f32.mrf.mxu0
      %677 = vmatprep.mubr.f32.mxu0 0.0
      %678 = vmatmul.mubr.f32.gmra.mxu0 %v506
      %v679 = vpop.f32.mrf.mxu0
      %v680 = vadd.f32 0.0, %v679
      %v681 = vpop.f32.mrf.mxu0
      %682 = vmatprep.mubr.f32.mxu0 0.0
      %683 = vmatmul.mubr.f32.gmra.mxu0 %v509
      %v684 = vpop.f32.mrf.mxu0
      %v685 = vadd.f32 0.0, %v684
      %v686 = vpop.f32.mrf.mxu0
      %687 = vmatprep.mubr.f32.mxu0 0.0
      %688 = vmatmul.mubr.f32.gmra.mxu0 %v512
      %v689 = vpop.f32.mrf.mxu0
      %v690 = vadd.f32 0.0, %v689
      %v691 = vpop.f32.mrf.mxu0
      %692 = vmatprep.mubr.f32.mxu0 0.0
      %693 = vmatmul.mubr.f32.gmra.mxu0 %v515
      %v694 = vpop.f32.mrf.mxu0
      %v695 = vadd.f32 0.0, %v694
      %v696 = vpop.f32.mrf.mxu0
      %697 = vmatprep.mubr.f32.mxu0 0.0
      %698 = vmatmul.mubr.f32.gmra.mxu0 %v518
      %v699 = vpop.f32.mrf.mxu0
      %v700 = vadd.f32 0.0, %v699
      %v701 = vpop.f32.mrf.mxu0
      %702 = vmatprep.mubr.f32.mxu0 0.0
      %703 = vmatmul.mubr.f32.gmra.mxu0 %v521
      %v704 = vpop.f32.mrf.mxu0
      %v705 = vadd.f32 0.0, %v704
      %v706 = vpop.f32.mrf.mxu0
      %707 = vmatprep.mubr.f32.mxu0 0.0
      %708 = vmatmul.mubr.f32.gmra.mxu0 %v524
      %v709 = vpop.f32.mrf.mxu0
      %v710 = vadd.f32 0.0, %v709
      %v711 = vpop.f32.mrf.mxu0
      %712 = vmatprep.mubr.f32.mxu0 0.0
      %713 = vmatmul.mubr.f32.gmra.mxu0 %v527
      %v714 = vpop.f32.mrf.mxu0
      %v715 = vadd.f32 0.0, %v714
      %v716 = vpop.f32.mrf.mxu0
      %717 = vmatprep.mubr.f32.mxu0 0.0
      %718 = vmatmul.mubr.f32.gmra.mxu0 %v530
      %v719 = vpop.f32.mrf.mxu0
      %v720 = vadd.f32 0.0, %v719
      %v721 = vpop.f32.mrf.mxu0
      %722 = vmatprep.mubr.f32.mxu0 0.0
      %723 = vmatmul.mubr.f32.gmra.mxu0 %v533
      %v724 = vpop.f32.mrf.mxu0
      %v725 = vadd.f32 0.0, %v724
      %v726 = vpop.f32.mrf.mxu0
      %727 = vmatprep.mubr.f32.mxu0 0.0
      %728 = vmatmul.mubr.f32.gmra.mxu0 %v536
      %v729 = vpop.f32.mrf.mxu0
      %v730 = vadd.f32 0.0, %v729
      %v731 = vpop.f32.mrf.mxu0
      %732 = vmatprep.mubr.f32.mxu0 0.0
      %733 = vmatmul.mubr.f32.gmra.mxu0 %v539
      %v734 = vpop.f32.mrf.mxu0
      %v735 = vadd.f32 0.0, %v734
      %v736 = vpop.f32.mrf.mxu0
      %737 = vmatprep.mubr.f32.mxu0 0.0
      %738 = vmatmul.mubr.f32.gmra.mxu0 %v542
      %v739 = vpop.f32.mrf.mxu0
      %v740 = vadd.f32 0.0, %v739
      %v741 = vpop.f32.mrf.mxu0
      %742 = vmatprep.mubr.f32.mxu0 0.0
      %743 = vmatmul.mubr.f32.gmra.mxu0 %v545
      %v744 = vpop.f32.mrf.mxu0
      %v745 = vadd.f32 0.0, %v744
      %v746 = vpop.f32.mrf.mxu0
      %747 = vmatprep.mubr.f32.mxu0 0.0
      %748 = vmatmul.mubr.f32.gmra.mxu0 %v548
      %v749 = vpop.f32.mrf.mxu0
      %v750 = vadd.f32 0.0, %v749
      %v751 = vpop.f32.mrf.mxu0
      %752 = vmatprep.mubr.f32.mxu0 0.0
      %753 = vmatmul.mubr.f32.gmra.mxu0 %v551
      %v754 = vpop.f32.mrf.mxu0
      %v755 = vadd.f32 0.0, %v754
      %v756 = vpop.f32.mrf.mxu0
      %757 = vmatprep.mubr.f32.mxu0 0.0
      %758 = vmatmul.mubr.f32.gmra.mxu0 %v554
      %v759 = vpop.f32.mrf.mxu0
      %v760 = vadd.f32 0.0, %v759
      %v761 = vpop.f32.mrf.mxu0
      %762 = vmatprep.mubr.f32.mxu0 0.0
      %763 = vmatmul.mubr.f32.gmra.mxu0 %v557
      %v764 = vpop.f32.mrf.mxu0
      %v765 = vadd.f32 0.0, %v764
      %v766 = vpop.f32.mrf.mxu0
      %767 = vmatprep.mubr.f32.mxu0 0.0
      %768 = vmatmul.mubr.f32.gmra.mxu0 %v560
      %v769 = vpop.f32.mrf.mxu0
      %v770 = vadd.f32 0.0, %v769
      %v771 = vpop.f32.mrf.mxu0
      %772 = vmatprep.mubr.f32.mxu0 0.0
      %773 = vmatmul.mubr.f32.gmra.mxu0 %v563
      %v774 = vpop.f32.mrf.mxu0
      %v775 = vadd.f32 0.0, %v774
      %v776 = vpop.f32.mrf.mxu0
      %777 = vmatprep.mubr.f32.mxu0 0.0
      %778 = vmatmul.mubr.f32.gmra.mxu0 %v566
      %v779 = vpop.f32.mrf.mxu0
      %v780 = vadd.f32 0.0, %v779
      %v781 = vpop.f32.mrf.mxu0
      %782 = vmatprep.mubr.f32.mxu0 0.0
      %783 = vmatmul.mubr.f32.gmra.mxu0 %v569
      %v784 = vpop.f32.mrf.mxu0
      %v785 = vadd.f32 0.0, %v784
      %v786 = vpop.f32.mrf.mxu0
      %787 = vmatprep.mubr.f32.mxu0 0.0
      %788 = vmatmul.mubr.f32.gmra.mxu0 %v572
      %v789 = vpop.f32.mrf.mxu0
      %v790 = vadd.f32 0.0, %v789
      %v791 = vpop.f32.mrf.mxu0
      %792 = vmatprep.mubr.f32.mxu0 0.0
      %793 = vmatmul.mubr.f32.gmra.mxu0 %v575
      %v794 = vpop.f32.mrf.mxu0
      %v795 = vadd.f32 0.0, %v794
      %v796 = vpop.f32.mrf.mxu0
      %797 = vmatprep.mubr.f32.mxu0 0.0
      %798 = vmatmul.mubr.f32.gmra.mxu0 %v578
      %v799 = vpop.f32.mrf.mxu0
      %v800 = vadd.f32 0.0, %v799
      %v801 = vpop.f32.mrf.mxu0
      %802 = vmatprep.mubr.f32.mxu0 0.0
      %803 = vmatmul.mubr.f32.gmra.mxu0 %v581
      %v804 = vpop.f32.mrf.mxu0
      %v805 = vadd.f32 0.0, %v804
      %v806 = vpop.f32.mrf.mxu0
      %807 = vmatprep.mubr.f32.mxu0 0.0
      %808 = vmatmul.mubr.f32.gmra.mxu0 %v584
      %v809 = vpop.f32.mrf.mxu0
      %v810 = vadd.f32 0.0, %v809
      %v811 = vpop.f32.mrf.mxu0
      %812 = vmatprep.mubr.f32.mxu0 0.0
      %813 = vmatmul.mubr.f32.gmra.mxu0 %v587
      %v814 = vpop.f32.mrf.mxu0
      %v815 = vadd.f32 0.0, %v814
      %v816 = vpop.f32.mrf.mxu0
      %817 = vdwg.mxu0
      %v819 = vsel %vm347, %v426, 0
      %v822 = vsel %vm347, %v427, 0
      %v825 = vsel %vm347, %v428, 0
      %v828 = vsel %vm347, %v429, 0
      %v831 = vsel %vm347, %v430, 0
      %v834 = vsel %vm347, %v431, 0
      %v837 = vsel %vm347, %v432, 0
      %v840 = vsel %vm347, %v433, 0
      %v843 = vsel %vm347, %v434, 0
      %v846 = vsel %vm347, %v435, 0
      %v849 = vsel %vm347, %v436, 0
      %v852 = vsel %vm347, %v437, 0
      %v855 = vsel %vm347, %v438, 0
      %v858 = vsel %vm347, %v439, 0
      %v861 = vsel %vm347, %v440, 0
      %v864 = vsel %vm347, %v441, 0
      %v867 = vsel %vm347, %v442, 0
      %v870 = vsel %vm347, %v443, 0
      %v873 = vsel %vm347, %v444, 0
      %v876 = vsel %vm347, %v445, 0
      %v879 = vsel %vm347, %v446, 0
      %v882 = vsel %vm347, %v447, 0
      %v885 = vsel %vm347, %v448, 0
      %v888 = vsel %vm347, %v449, 0
      %v891 = vsel %vm347, %v450, 0
      %v894 = vsel %vm347, %v451, 0
      %v897 = vsel %vm347, %v452, 0
      %v900 = vsel %vm347, %v453, 0
      %v903 = vsel %vm347, %v454, 0
      %v906 = vsel %vm347, %v455, 0
      %v909 = vsel %vm347, %v456, 0
      %v912 = vsel %vm347, %v457, 0
      %v915 = vsel %vm589, %v458, 0
      %917 = vmatprep.subr.mxu0 0.0
      %918 = vmatpush1.msra.mxu0 0.0
      %919 = vmatprep.subr.mxu0 0.0
      %920 = vmatpush1.msra.mxu0 0.0
      %921 = vmatprep.subr.mxu0 0.0
      %922 = vmatpush1.msra.mxu0 0.0
      %923 = vmatprep.subr.mxu0 0.0
      %924 = vmatpush1.msra.mxu0 0.0
      %925 = vmatprep.subr.mxu0 0.0
      %926 = vmatpush1.msra.mxu0 0.0
      %927 = vmatprep.subr.mxu0 0.0
      %928 = vmatpush1.msra.mxu0 0.0
      %929 = vmatprep.subr.mxu0 0.0
      %930 = vmatpush1.msra.mxu0 0.0
      %931 = vmatprep.subr.mxu0 0.0
      %932 = vmatpush1.msra.mxu0 0.0
      %933 = vmatprep.subr.mxu0 0.0
      %934 = vmatpush1.msra.mxu0 0.0
      %935 = vmatprep.subr.mxu0 0.0
      %936 = vmatpush1.msra.mxu0 0.0
      %937 = vmatprep.subr.mxu0 0.0
      %938 = vmatpush1.msra.mxu0 0.0
      %939 = vmatprep.subr.mxu0 0.0
      %940 = vmatpush1.msra.mxu0 0.0
      %941 = vmatprep.subr.mxu0 0.0
      %942 = vmatpush1.msra.mxu0 0.0
      %943 = vmatprep.subr.mxu0 0.0
      %944 = vmatpush1.msra.mxu0 0.0
      %945 = vmatprep.subr.mxu0 0.0
      %946 = vmatpush1.msra.mxu0 0.0
      %947 = vmatprep.subr.mxu0 0.0
      %948 = vmatpush1.msra.mxu0 %v915
      %949 = vmatprep.subr.mxu0 0.0
      %950 = vmatpush2.msra.mxu0 0.0
      %951 = vmatprep.subr.mxu0 0.0
      %952 = vmatpush2.msra.mxu0 0.0
      %953 = vmatprep.subr.mxu0 0.0
      %954 = vmatpush2.msra.mxu0 0.0
      %955 = vmatprep.subr.mxu0 0.0
      %956 = vmatpush2.msra.mxu0 0.0
      %957 = vmatprep.subr.mxu0 0.0
      %958 = vmatpush2.msra.mxu0 0.0
      %959 = vmatprep.subr.mxu0 0.0
      %960 = vmatpush2.msra.mxu0 0.0
      %961 = vmatprep.subr.mxu0 0.0
      %962 = vmatpush2.msra.mxu0 0.0
      %963 = vmatprep.subr.mxu0 0.0
      %964 = vmatpush2.msra.mxu0 0.0
      %965 = vmatprep.subr.mxu0 0.0
      %966 = vmatpush2.msra.mxu0 0.0
      %967 = vmatprep.subr.mxu0 0.0
      %968 = vmatpush2.msra.mxu0 0.0
      %969 = vmatprep.subr.mxu0 0.0
      %970 = vmatpush2.msra.mxu0 0.0
      %971 = vmatprep.subr.mxu0 0.0
      %972 = vmatpush2.msra.mxu0 0.0
      %973 = vmatprep.subr.mxu0 0.0
      %974 = vmatpush2.msra.mxu0 0.0
      %975 = vmatprep.subr.mxu0 0.0
      %976 = vmatpush2.msra.mxu0 0.0
      %977 = vmatprep.subr.mxu0 0.0
      %978 = vmatpush2.msra.mxu0 0.0
      %979 = vmatprep.subr.mxu0 0.0
      %980 = vmatpush2.msra.mxu0 0.0
      %981 = vmatprep.mubr.f32.mxu0 0.0
      %982 = vmatmul.mubr.f32.gmra.mxu0 %v819
      %v983 = vpop.f32.mrf.mxu0
      %v984 = vadd.f32 %v660, %v983
      %v985 = vpop.f32.mrf.mxu0
      %986 = vmatprep.mubr.f32.mxu0 0.0
      %987 = vmatmul.mubr.f32.gmra.mxu0 %v822
      %v988 = vpop.f32.mrf.mxu0
      %v989 = vadd.f32 %v665, %v988
      %v990 = vpop.f32.mrf.mxu0
      %991 = vmatprep.mubr.f32.mxu0 0.0
      %992 = vmatmul.mubr.f32.gmra.mxu0 %v825
      %v993 = vpop.f32.mrf.mxu0
      %v994 = vadd.f32 %v670, %v993
      %v995 = vpop.f32.mrf.mxu0
      %996 = vmatprep.mubr.f32.mxu0 0.0
      %997 = vmatmul.mubr.f32.gmra.mxu0 %v828
      %v998 = vpop.f32.mrf.mxu0
      %v999 = vadd.f32 %v675, %v998
      %v1000 = vpop.f32.mrf.mxu0
      %1001 = vmatprep.mubr.f32.mxu0 0.0
      %1002 = vmatmul.mubr.f32.gmra.mxu0 %v831
      %v1003 = vpop.f32.mrf.mxu0
      %v1004 = vadd.f32 %v680, %v1003
      %v1005 = vpop.f32.mrf.mxu0
      %1006 = vmatprep.mubr.f32.mxu0 0.0
      %1007 = vmatmul.mubr.f32.gmra.mxu0 %v834
      %v1008 = vpop.f32.mrf.mxu0
      %v1009 = vadd.f32 %v685, %v1008
      %v1010 = vpop.f32.mrf.mxu0
      %1011 = vmatprep.mubr.f32.mxu0 0.0
      %1012 = vmatmul.mubr.f32.gmra.mxu0 %v837
      %v1013 = vpop.f32.mrf.mxu0
      %v1014 = vadd.f32 %v690, %v1013
      %v1015 = vpop.f32.mrf.mxu0
      %1016 = vmatprep.mubr.f32.mxu0 0.0
      %1017 = vmatmul.mubr.f32.gmra.mxu0 %v840
      %v1018 = vpop.f32.mrf.mxu0
      %v1019 = vadd.f32 %v695, %v1018
      %v1020 = vpop.f32.mrf.mxu0
      %1021 = vmatprep.mubr.f32.mxu0 0.0
      %1022 = vmatmul.mubr.f32.gmra.mxu0 %v843
      %v1023 = vpop.f32.mrf.mxu0
      %v1024 = vadd.f32 %v700, %v1023
      %v1025 = vpop.f32.mrf.mxu0
      %1026 = vmatprep.mubr.f32.mxu0 0.0
      %1027 = vmatmul.mubr.f32.gmra.mxu0 %v846
      %v1028 = vpop.f32.mrf.mxu0
      %v1029 = vadd.f32 %v705, %v1028
      %v1030 = vpop.f32.mrf.mxu0
      %1031 = vmatprep.mubr.f32.mxu0 0.0
      %1032 = vmatmul.mubr.f32.gmra.mxu0 %v849
      %v1033 = vpop.f32.mrf.mxu0
      %v1034 = vadd.f32 %v710, %v1033
      %v1035 = vpop.f32.mrf.mxu0
      %1036 = vmatprep.mubr.f32.mxu0 0.0
      %1037 = vmatmul.mubr.f32.gmra.mxu0 %v852
      %v1038 = vpop.f32.mrf.mxu0
      %v1039 = vadd.f32 %v715, %v1038
      %v1040 = vpop.f32.mrf.mxu0
      %1041 = vmatprep.mubr.f32.mxu0 0.0
      %1042 = vmatmul.mubr.f32.gmra.mxu0 %v855
      %v1043 = vpop.f32.mrf.mxu0
      %v1044 = vadd.f32 %v720, %v1043
      %v1045 = vpop.f32.mrf.mxu0
      %1046 = vmatprep.mubr.f32.mxu0 0.0
      %1047 = vmatmul.mubr.f32.gmra.mxu0 %v858
      %v1048 = vpop.f32.mrf.mxu0
      %v1049 = vadd.f32 %v725, %v1048
      %v1050 = vpop.f32.mrf.mxu0
      %1051 = vmatprep.mubr.f32.mxu0 0.0
      %1052 = vmatmul.mubr.f32.gmra.mxu0 %v861
      %v1053 = vpop.f32.mrf.mxu0
      %v1054 = vadd.f32 %v730, %v1053
      %v1055 = vpop.f32.mrf.mxu0
      %1056 = vmatprep.mubr.f32.mxu0 0.0
      %1057 = vmatmul.mubr.f32.gmra.mxu0 %v864
      %v1058 = vpop.f32.mrf.mxu0
      %v1059 = vadd.f32 %v735, %v1058
      %v1060 = vpop.f32.mrf.mxu0
      %1061 = vmatprep.mubr.f32.mxu0 0.0
      %1062 = vmatmul.mubr.f32.gmra.mxu0 %v867
      %v1063 = vpop.f32.mrf.mxu0
      %v1064 = vadd.f32 %v740, %v1063
      %v1065 = vpop.f32.mrf.mxu0
      %1066 = vmatprep.mubr.f32.mxu0 0.0
      %1067 = vmatmul.mubr.f32.gmra.mxu0 %v870
      %v1068 = vpop.f32.mrf.mxu0
      %v1069 = vadd.f32 %v745, %v1068
      %v1070 = vpop.f32.mrf.mxu0
      %1071 = vmatprep.mubr.f32.mxu0 0.0
      %1072 = vmatmul.mubr.f32.gmra.mxu0 %v873
      %v1073 = vpop.f32.mrf.mxu0
      %v1074 = vadd.f32 %v750, %v1073
      %v1075 = vpop.f32.mrf.mxu0
      %1076 = vmatprep.mubr.f32.mxu0 0.0
      %1077 = vmatmul.mubr.f32.gmra.mxu0 %v876
      %v1078 = vpop.f32.mrf.mxu0
      %v1079 = vadd.f32 %v755, %v1078
      %v1080 = vpop.f32.mrf.mxu0
      %1081 = vmatprep.mubr.f32.mxu0 0.0
      %1082 = vmatmul.mubr.f32.gmra.mxu0 %v879
      %v1083 = vpop.f32.mrf.mxu0
      %v1084 = vadd.f32 %v760, %v1083
      %v1085 = vpop.f32.mrf.mxu0
      %1086 = vmatprep.mubr.f32.mxu0 0.0
      %1087 = vmatmul.mubr.f32.gmra.mxu0 %v882
      %v1088 = vpop.f32.mrf.mxu0
      %v1089 = vadd.f32 %v765, %v1088
      %v1090 = vpop.f32.mrf.mxu0
      %1091 = vmatprep.mubr.f32.mxu0 0.0
      %1092 = vmatmul.mubr.f32.gmra.mxu0 %v885
      %v1093 = vpop.f32.mrf.mxu0
      %v1094 = vadd.f32 %v770, %v1093
      %v1095 = vpop.f32.mrf.mxu0
      %1096 = vmatprep.mubr.f32.mxu0 0.0
      %1097 = vmatmul.mubr.f32.gmra.mxu0 %v888
      %v1098 = vpop.f32.mrf.mxu0
      %v1099 = vadd.f32 %v775, %v1098
      %v1100 = vpop.f32.mrf.mxu0
      %1101 = vmatprep.mubr.f32.mxu0 0.0
      %1102 = vmatmul.mubr.f32.gmra.mxu0 %v891
      %v1103 = vpop.f32.mrf.mxu0
      %v1104 = vadd.f32 %v780, %v1103
      %v1105 = vpop.f32.mrf.mxu0
      %1106 = vmatprep.mubr.f32.mxu0 0.0
      %1107 = vmatmul.mubr.f32.gmra.mxu0 %v894
      %v1108 = vpop.f32.mrf.mxu0
      %v1109 = vadd.f32 %v785, %v1108
      %v1110 = vpop.f32.mrf.mxu0
      %1111 = vmatprep.mubr.f32.mxu0 0.0
      %1112 = vmatmul.mubr.f32.gmra.mxu0 %v897
      %v1113 = vpop.f32.mrf.mxu0
      %v1114 = vadd.f32 %v790, %v1113
      %v1115 = vpop.f32.mrf.mxu0
      %1116 = vmatprep.mubr.f32.mxu0 0.0
      %1117 = vmatmul.mubr.f32.gmra.mxu0 %v900
      %v1118 = vpop.f32.mrf.mxu0
      %v1119 = vadd.f32 %v795, %v1118
      %v1120 = vpop.f32.mrf.mxu0
      %1121 = vmatprep.mubr.f32.mxu0 0.0
      %1122 = vmatmul.mubr.f32.gmra.mxu0 %v903
      %v1123 = vpop.f32.mrf.mxu0
      %v1124 = vadd.f32 %v800, %v1123
      %v1125 = vpop.f32.mrf.mxu0
      %1126 = vmatprep.mubr.f32.mxu0 0.0
      %1127 = vmatmul.mubr.f32.gmra.mxu0 %v906
      %v1128 = vpop.f32.mrf.mxu0
      %v1129 = vadd.f32 %v805, %v1128
      %v1130 = vpop.f32.mrf.mxu0
      %1131 = vmatprep.mubr.f32.mxu0 0.0
      %1132 = vmatmul.mubr.f32.gmra.mxu0 %v909
      %v1133 = vpop.f32.mrf.mxu0
      %v1134 = vadd.f32 %v810, %v1133
      %v1135 = vpop.f32.mrf.mxu0
      %1136 = vmatprep.mubr.f32.mxu0 0.0
      %1137 = vmatmul.mubr.f32.gmra.mxu0 %v912
      %v1138 = vpop.f32.mrf.mxu0
      %v1139 = vadd.f32 %v815, %v1138
      %v1140 = vpop.f32.mrf.mxu0
      %1141 = vdwg.mxu0
      %v1142 = vld [vmem:[#allocation2 + $0x2] sm:$0xff]
      %v1143 = vld [vmem:[#allocation2 + $0xa] sm:$0xff]
      %v1144 = vld [vmem:[#allocation2 + $0x1a] sm:$0xff]
      %v1145 = vld [vmem:[#allocation2 + $0x22] sm:$0xff]
      %v1146 = vld [vmem:[#allocation2 + $0x32] sm:$0xff]
      %v1147 = vld [vmem:[#allocation2 + $0x3a] sm:$0xff]
      %v1148 = vld [vmem:[#allocation2 + $0x4a] sm:$0xff]
      %v1149 = vld [vmem:[#allocation2 + $0x52] sm:$0xff]
      %v1150 = vld [vmem:[#allocation2 + $0x62] sm:$0xff]
      %v1151 = vld [vmem:[#allocation2 + $0x6a] sm:$0xff]
      %v1152 = vld [vmem:[#allocation2 + $0x7a] sm:$0xff]
      %v1153 = vld [vmem:[#allocation2 + $0x82] sm:$0xff]
      %v1154 = vld [vmem:[#allocation2 + $0x92] sm:$0xff]
      %v1155 = vld [vmem:[#allocation2 + $0x9a] sm:$0xff]
      %v1156 = vld [vmem:[#allocation2 + $0xaa] sm:$0xff]
      %v1157 = vld [vmem:[#allocation2 + $0xb2] sm:$0xff]
      %v1158 = vld [vmem:[#allocation2 + $0xc2] sm:$0xff]
      %v1159 = vld [vmem:[#allocation2 + $0xca] sm:$0xff]
      %v1160 = vld [vmem:[#allocation2 + $0xda] sm:$0xff]
      %v1161 = vld [vmem:[#allocation2 + $0xe2] sm:$0xff]
      %v1162 = vld [vmem:[#allocation2 + $0xf2] sm:$0xff]
      %v1163 = vld [vmem:[#allocation2 + $0xfa] sm:$0xff]
      %v1164 = vld [vmem:[#allocation2 + $0x10a] sm:$0xff]
      %v1165 = vld [vmem:[#allocation2 + $0x112] sm:$0xff]
      %v1166 = vld [vmem:[#allocation2 + $0x122] sm:$0xff]
      %v1167 = vld [vmem:[#allocation2 + $0x12a] sm:$0xff]
      %v1168 = vld [vmem:[#allocation2 + $0x13a] sm:$0xff]
      %v1169 = vld [vmem:[#allocation2 + $0x142] sm:$0xff]
      %v1170 = vld [vmem:[#allocation2 + $0x152] sm:$0xff]
      %v1171 = vld [vmem:[#allocation2 + $0x15a] sm:$0xff]
      %v1172 = vld [vmem:[#allocation2 + $0x16a] sm:$0xff]
      %v1173 = vld [vmem:[#allocation2 + $0x172] sm:$0xff]
      %s1174 = scalar_lea.vmem %s2, 8
      %v1175 = vld [vmem:[%s1174] sm:$0xf]
      %v1177 = vsel %vm347, %v1142, 0
      %v1180 = vsel %vm347, %v1143, 0
      %v1183 = vsel %vm347, %v1144, 0
      %v1186 = vsel %vm347, %v1145, 0
      %v1189 = vsel %vm347, %v1146, 0
      %v1192 = vsel %vm347, %v1147, 0
      %v1195 = vsel %vm347, %v1148, 0
      %v1198 = vsel %vm347, %v1149, 0
      %v1201 = vsel %vm347, %v1150, 0
      %v1204 = vsel %vm347, %v1151, 0
      %v1207 = vsel %vm347, %v1152, 0
      %v1210 = vsel %vm347, %v1153, 0
      %v1213 = vsel %vm347, %v1154, 0
      %v1216 = vsel %vm347, %v1155, 0
      %v1219 = vsel %vm347, %v1156, 0
      %v1222 = vsel %vm347, %v1157, 0
      %v1225 = vsel %vm347, %v1158, 0
      %v1228 = vsel %vm347, %v1159, 0
      %v1231 = vsel %vm347, %v1160, 0
      %v1234 = vsel %vm347, %v1161, 0
      %v1237 = vsel %vm347, %v1162, 0
      %v1240 = vsel %vm347, %v1163, 0
      %v1243 = vsel %vm347, %v1164, 0
      %v1246 = vsel %vm347, %v1165, 0
      %v1249 = vsel %vm347, %v1166, 0
      %v1252 = vsel %vm347, %v1167, 0
      %v1255 = vsel %vm347, %v1168, 0
      %v1258 = vsel %vm347, %v1169, 0
      %v1261 = vsel %vm347, %v1170, 0
      %v1264 = vsel %vm347, %v1171, 0
      %v1267 = vsel %vm347, %v1172, 0
      %v1270 = vsel %vm347, %v1173, 0
      %v1273 = vsel %vm589, %v1175, 0
      %1275 = vmatprep.subr.mxu0 0.0
      %1276 = vmatpush1.msra.mxu0 0.0
      %1277 = vmatprep.subr.mxu0 0.0
      %1278 = vmatpush1.msra.mxu0 0.0
      %1279 = vmatprep.subr.mxu0 0.0
      %1280 = vmatpush1.msra.mxu0 0.0
      %1281 = vmatprep.subr.mxu0 0.0
      %1282 = vmatpush1.msra.mxu0 0.0
      %1283 = vmatprep.subr.mxu0 0.0
      %1284 = vmatpush1.msra.mxu0 0.0
      %1285 = vmatprep.subr.mxu0 0.0
      %1286 = vmatpush1.msra.mxu0 0.0
      %1287 = vmatprep.subr.mxu0 0.0
      %1288 = vmatpush1.msra.mxu0 0.0
      %1289 = vmatprep.subr.mxu0 0.0
      %1290 = vmatpush1.msra.mxu0 0.0
      %1291 = vmatprep.subr.mxu0 0.0
      %1292 = vmatpush1.msra.mxu0 0.0
      %1293 = vmatprep.subr.mxu0 0.0
      %1294 = vmatpush1.msra.mxu0 0.0
      %1295 = vmatprep.subr.mxu0 0.0
      %1296 = vmatpush1.msra.mxu0 0.0
      %1297 = vmatprep.subr.mxu0 0.0
      %1298 = vmatpush1.msra.mxu0 0.0
      %1299 = vmatprep.subr.mxu0 0.0
      %1300 = vmatpush1.msra.mxu0 0.0
      %1301 = vmatprep.subr.mxu0 0.0
      %1302 = vmatpush1.msra.mxu0 0.0
      %1303 = vmatprep.subr.mxu0 0.0
      %1304 = vmatpush1.msra.mxu0 0.0
      %1305 = vmatprep.subr.mxu0 0.0
      %1306 = vmatpush1.msra.mxu0 %v1273
      %1307 = vmatprep.subr.mxu0 0.0
      %1308 = vmatpush2.msra.mxu0 0.0
      %1309 = vmatprep.subr.mxu0 0.0
      %1310 = vmatpush2.msra.mxu0 0.0
      %1311 = vmatprep.subr.mxu0 0.0
      %1312 = vmatpush2.msra.mxu0 0.0
      %1313 = vmatprep.subr.mxu0 0.0
      %1314 = vmatpush2.msra.mxu0 0.0
      %1315 = vmatprep.subr.mxu0 0.0
      %1316 = vmatpush2.msra.mxu0 0.0
      %1317 = vmatprep.subr.mxu0 0.0
      %1318 = vmatpush2.msra.mxu0 0.0
      %1319 = vmatprep.subr.mxu0 0.0
      %1320 = vmatpush2.msra.mxu0 0.0
      %1321 = vmatprep.subr.mxu0 0.0
      %1322 = vmatpush2.msra.mxu0 0.0
      %1323 = vmatprep.subr.mxu0 0.0
      %1324 = vmatpush2.msra.mxu0 0.0
      %1325 = vmatprep.subr.mxu0 0.0
      %1326 = vmatpush2.msra.mxu0 0.0
      %1327 = vmatprep.subr.mxu0 0.0
      %1328 = vmatpush2.msra.mxu0 0.0
      %1329 = vmatprep.subr.mxu0 0.0
      %1330 = vmatpush2.msra.mxu0 0.0
      %1331 = vmatprep.subr.mxu0 0.0
      %1332 = vmatpush2.msra.mxu0 0.0
      %1333 = vmatprep.subr.mxu0 0.0
      %1334 = vmatpush2.msra.mxu0 0.0
      %1335 = vmatprep.subr.mxu0 0.0
      %1336 = vmatpush2.msra.mxu0 0.0
      %1337 = vmatprep.subr.mxu0 0.0
      %1338 = vmatpush2.msra.mxu0 0.0
      %1339 = vmatprep.mubr.f32.mxu0 0.0
      %1340 = vmatmul.mubr.f32.gmra.mxu0 %v1177
      %v1341 = vpop.f32.mrf.mxu0
      %v1342 = vadd.f32 0.0, %v1341
      %v1343 = vpop.f32.mrf.mxu0
      %1344 = vmatprep.mubr.f32.mxu0 0.0
      %1345 = vmatmul.mubr.f32.gmra.mxu0 %v1180
      %v1346 = vpop.f32.mrf.mxu0
      %v1347 = vadd.f32 0.0, %v1346
      %v1348 = vpop.f32.mrf.mxu0
      %1349 = vmatprep.mubr.f32.mxu0 0.0
      %1350 = vmatmul.mubr.f32.gmra.mxu0 %v1183
      %v1351 = vpop.f32.mrf.mxu0
      %v1352 = vadd.f32 0.0, %v1351
      %v1353 = vpop.f32.mrf.mxu0
      %1354 = vmatprep.mubr.f32.mxu0 0.0
      %1355 = vmatmul.mubr.f32.gmra.mxu0 %v1186
      %v1356 = vpop.f32.mrf.mxu0
      %v1357 = vadd.f32 0.0, %v1356
      %v1358 = vpop.f32.mrf.mxu0
      %1359 = vmatprep.mubr.f32.mxu0 0.0
      %1360 = vmatmul.mubr.f32.gmra.mxu0 %v1189
      %v1361 = vpop.f32.mrf.mxu0
      %v1362 = vadd.f32 0.0, %v1361
      %v1363 = vpop.f32.mrf.mxu0
      %1364 = vmatprep.mubr.f32.mxu0 0.0
      %1365 = vmatmul.mubr.f32.gmra.mxu0 %v1192
      %v1366 = vpop.f32.mrf.mxu0
      %v1367 = vadd.f32 0.0, %v1366
      %v1368 = vpop.f32.mrf.mxu0
      %1369 = vmatprep.mubr.f32.mxu0 0.0
      %1370 = vmatmul.mubr.f32.gmra.mxu0 %v1195
      %v1371 = vpop.f32.mrf.mxu0
      %v1372 = vadd.f32 0.0, %v1371
      %v1373 = vpop.f32.mrf.mxu0
      %1374 = vmatprep.mubr.f32.mxu0 0.0
      %1375 = vmatmul.mubr.f32.gmra.mxu0 %v1198
      %v1376 = vpop.f32.mrf.mxu0
      %v1377 = vadd.f32 0.0, %v1376
      %v1378 = vpop.f32.mrf.mxu0
      %1379 = vmatprep.mubr.f32.mxu0 0.0
      %1380 = vmatmul.mubr.f32.gmra.mxu0 %v1201
      %v1381 = vpop.f32.mrf.mxu0
      %v1382 = vadd.f32 0.0, %v1381
      %v1383 = vpop.f32.mrf.mxu0
      %1384 = vmatprep.mubr.f32.mxu0 0.0
      %1385 = vmatmul.mubr.f32.gmra.mxu0 %v1204
      %v1386 = vpop.f32.mrf.mxu0
      %v1387 = vadd.f32 0.0, %v1386
      %v1388 = vpop.f32.mrf.mxu0
      %1389 = vmatprep.mubr.f32.mxu0 0.0
      %1390 = vmatmul.mubr.f32.gmra.mxu0 %v1207
      %v1391 = vpop.f32.mrf.mxu0
      %v1392 = vadd.f32 0.0, %v1391
      %v1393 = vpop.f32.mrf.mxu0
      %1394 = vmatprep.mubr.f32.mxu0 0.0
      %1395 = vmatmul.mubr.f32.gmra.mxu0 %v1210
      %v1396 = vpop.f32.mrf.mxu0
      %v1397 = vadd.f32 0.0, %v1396
      %v1398 = vpop.f32.mrf.mxu0
      %1399 = vmatprep.mubr.f32.mxu0 0.0
      %1400 = vmatmul.mubr.f32.gmra.mxu0 %v1213
      %v1401 = vpop.f32.mrf.mxu0
      %v1402 = vadd.f32 0.0, %v1401
      %v1403 = vpop.f32.mrf.mxu0
      %1404 = vmatprep.mubr.f32.mxu0 0.0
      %1405 = vmatmul.mubr.f32.gmra.mxu0 %v1216
      %v1406 = vpop.f32.mrf.mxu0
      %v1407 = vadd.f32 0.0, %v1406
      %v1408 = vpop.f32.mrf.mxu0
      %1409 = vmatprep.mubr.f32.mxu0 0.0
      %1410 = vmatmul.mubr.f32.gmra.mxu0 %v1219
      %v1411 = vpop.f32.mrf.mxu0
      %v1412 = vadd.f32 0.0, %v1411
      %v1413 = vpop.f32.mrf.mxu0
      %1414 = vmatprep.mubr.f32.mxu0 0.0
      %1415 = vmatmul.mubr.f32.gmra.mxu0 %v1222
      %v1416 = vpop.f32.mrf.mxu0
      %v1417 = vadd.f32 0.0, %v1416
      %v1418 = vpop.f32.mrf.mxu0
      %1419 = vmatprep.mubr.f32.mxu0 0.0
      %1420 = vmatmul.mubr.f32.gmra.mxu0 %v1225
      %v1421 = vpop.f32.mrf.mxu0
      %v1422 = vadd.f32 0.0, %v1421
      %v1423 = vpop.f32.mrf.mxu0
      %1424 = vmatprep.mubr.f32.mxu0 0.0
      %1425 = vmatmul.mubr.f32.gmra.mxu0 %v1228
      %v1426 = vpop.f32.mrf.mxu0
      %v1427 = vadd.f32 0.0, %v1426
      %v1428 = vpop.f32.mrf.mxu0
      %1429 = vmatprep.mubr.f32.mxu0 0.0
      %1430 = vmatmul.mubr.f32.gmra.mxu0 %v1231
      %v1431 = vpop.f32.mrf.mxu0
      %v1432 = vadd.f32 0.0, %v1431
      %v1433 = vpop.f32.mrf.mxu0
      %1434 = vmatprep.mubr.f32.mxu0 0.0
      %1435 = vmatmul.mubr.f32.gmra.mxu0 %v1234
      %v1436 = vpop.f32.mrf.mxu0
      %v1437 = vadd.f32 0.0, %v1436
      %v1438 = vpop.f32.mrf.mxu0
      %1439 = vmatprep.mubr.f32.mxu0 0.0
      %1440 = vmatmul.mubr.f32.gmra.mxu0 %v1237
      %v1441 = vpop.f32.mrf.mxu0
      %v1442 = vadd.f32 0.0, %v1441
      %v1443 = vpop.f32.mrf.mxu0
      %1444 = vmatprep.mubr.f32.mxu0 0.0
      %1445 = vmatmul.mubr.f32.gmra.mxu0 %v1240
      %v1446 = vpop.f32.mrf.mxu0
      %v1447 = vadd.f32 0.0, %v1446
      %v1448 = vpop.f32.mrf.mxu0
      %1449 = vmatprep.mubr.f32.mxu0 0.0
      %1450 = vmatmul.mubr.f32.gmra.mxu0 %v1243
      %v1451 = vpop.f32.mrf.mxu0
      %v1452 = vadd.f32 0.0, %v1451
      %v1453 = vpop.f32.mrf.mxu0
      %1454 = vmatprep.mubr.f32.mxu0 0.0
      %1455 = vmatmul.mubr.f32.gmra.mxu0 %v1246
      %v1456 = vpop.f32.mrf.mxu0
      %v1457 = vadd.f32 0.0, %v1456
      %v1458 = vpop.f32.mrf.mxu0
      %1459 = vmatprep.mubr.f32.mxu0 0.0
      %1460 = vmatmul.mubr.f32.gmra.mxu0 %v1249
      %v1461 = vpop.f32.mrf.mxu0
      %v1462 = vadd.f32 0.0, %v1461
      %v1463 = vpop.f32.mrf.mxu0
      %1464 = vmatprep.mubr.f32.mxu0 0.0
      %1465 = vmatmul.mubr.f32.gmra.mxu0 %v1252
      %v1466 = vpop.f32.mrf.mxu0
      %v1467 = vadd.f32 0.0, %v1466
      %v1468 = vpop.f32.mrf.mxu0
      %1469 = vmatprep.mubr.f32.mxu0 0.0
      %1470 = vmatmul.mubr.f32.gmra.mxu0 %v1255
      %v1471 = vpop.f32.mrf.mxu0
      %v1472 = vadd.f32 0.0, %v1471
      %v1473 = vpop.f32.mrf.mxu0
      %1474 = vmatprep.mubr.f32.mxu0 0.0
      %1475 = vmatmul.mubr.f32.gmra.mxu0 %v1258
      %v1476 = vpop.f32.mrf.mxu0
      %v1477 = vadd.f32 0.0, %v1476
      %v1478 = vpop.f32.mrf.mxu0
      %1479 = vmatprep.mubr.f32.mxu0 0.0
      %1480 = vmatmul.mubr.f32.gmra.mxu0 %v1261
      %v1481 = vpop.f32.mrf.mxu0
      %v1482 = vadd.f32 0.0, %v1481
      %v1483 = vpop.f32.mrf.mxu0
      %1484 = vmatprep.mubr.f32.mxu0 0.0
      %1485 = vmatmul.mubr.f32.gmra.mxu0 %v1264
      %v1486 = vpop.f32.mrf.mxu0
      %v1487 = vadd.f32 0.0, %v1486
      %v1488 = vpop.f32.mrf.mxu0
      %1489 = vmatprep.mubr.f32.mxu0 0.0
      %1490 = vmatmul.mubr.f32.gmra.mxu0 %v1267
      %v1491 = vpop.f32.mrf.mxu0
      %v1492 = vadd.f32 0.0, %v1491
      %v1493 = vpop.f32.mrf.mxu0
      %1494 = vmatprep.mubr.f32.mxu0 0.0
      %1495 = vmatmul.mubr.f32.gmra.mxu0 %v1270
      %v1496 = vpop.f32.mrf.mxu0
      %v1497 = vadd.f32 0.0, %v1496
      %v1498 = vpop.f32.mrf.mxu0
      %1499 = vdwg.mxu0
      %v1500 = vadd.f32 %v984, %v1342
      %v1501 = vadd.f32 %v989, %v1347
      %v1502 = vadd.f32 %v994, %v1352
      %v1503 = vadd.f32 %v999, %v1357
      %v1504 = vadd.f32 %v1004, %v1362
      %v1505 = vadd.f32 %v1009, %v1367
      %v1506 = vadd.f32 %v1014, %v1372
      %v1507 = vadd.f32 %v1019, %v1377
      %v1508 = vadd.f32 %v1024, %v1382
      %v1509 = vadd.f32 %v1029, %v1387
      %v1510 = vadd.f32 %v1034, %v1392
      %v1511 = vadd.f32 %v1039, %v1397
      %v1512 = vadd.f32 %v1044, %v1402
      %v1513 = vadd.f32 %v1049, %v1407
      %v1514 = vadd.f32 %v1054, %v1412
      %v1515 = vadd.f32 %v1059, %v1417
      %v1516 = vadd.f32 %v1064, %v1422
      %v1517 = vadd.f32 %v1069, %v1427
      %v1518 = vadd.f32 %v1074, %v1432
      %v1519 = vadd.f32 %v1079, %v1437
      %v1520 = vadd.f32 %v1084, %v1442
      %v1521 = vadd.f32 %v1089, %v1447
      %v1522 = vadd.f32 %v1094, %v1452
      %v1523 = vadd.f32 %v1099, %v1457
      %v1524 = vadd.f32 %v1104, %v1462
      %v1525 = vadd.f32 %v1109, %v1467
      %v1526 = vadd.f32 %v1114, %v1472
      %v1527 = vadd.f32 %v1119, %v1477
      %v1528 = vadd.f32 %v1124, %v1482
      %v1529 = vadd.f32 %v1129, %v1487
      %v1530 = vadd.f32 %v1134, %v1492
      %v1531 = vadd.f32 %v1139, %v1497
      %v1532 = vld [vmem:[%s393] sm:$0xff]
      %v1533 = vld [vmem:[%s393 + $0x8] sm:$0xff]
      %v1534 = vld [vmem:[%s393 + $0x18] sm:$0xff]
      %v1535 = vld [vmem:[%s393 + $0x20] sm:$0xff]
      %v1536 = vld [vmem:[%s393 + $0x30] sm:$0xff]
      %v1537 = vld [vmem:[%s393 + $0x38] sm:$0xff]
      %v1538 = vld [vmem:[%s393 + $0x48] sm:$0xff]
      %v1539 = vld [vmem:[%s393 + $0x50] sm:$0xff]
      %v1540 = vld [vmem:[%s393 + $0x60] sm:$0xff]
      %v1541 = vld [vmem:[%s393 + $0x68] sm:$0xff]
      %v1542 = vld [vmem:[%s393 + $0x78] sm:$0xff]
      %v1543 = vld [vmem:[%s393 + $0x80] sm:$0xff]
      %v1544 = vld [vmem:[%s393 + $0x90] sm:$0xff]
      %v1545 = vld [vmem:[%s393 + $0x98] sm:$0xff]
      %v1546 = vld [vmem:[%s393 + $0xa8] sm:$0xff]
      %v1547 = vld [vmem:[%s393 + $0xb0] sm:$0xff]
      %v1548 = vld [vmem:[%s393 + $0xc0] sm:$0xff]
      %v1549 = vld [vmem:[%s393 + $0xc8] sm:$0xff]
      %v1550 = vld [vmem:[%s393 + $0xd8] sm:$0xff]
      %v1551 = vld [vmem:[%s393 + $0xe0] sm:$0xff]
      %v1552 = vld [vmem:[%s393 + $0xf0] sm:$0xff]
      %v1553 = vld [vmem:[%s393 + $0xf8] sm:$0xff]
      %v1554 = vld [vmem:[%s393 + $0x108] sm:$0xff]
      %v1555 = vld [vmem:[%s393 + $0x110] sm:$0xff]
      %v1556 = vld [vmem:[%s393 + $0x120] sm:$0xff]
      %v1557 = vld [vmem:[%s393 + $0x128] sm:$0xff]
      %v1558 = vld [vmem:[%s393 + $0x138] sm:$0xff]
      %v1559 = vld [vmem:[%s393 + $0x140] sm:$0xff]
      %v1560 = vld [vmem:[%s393 + $0x150] sm:$0xff]
      %v1561 = vld [vmem:[%s393 + $0x158] sm:$0xff]
      %v1562 = vld [vmem:[%s393 + $0x168] sm:$0xff]
      %v1563 = vld [vmem:[%s393 + $0x170] sm:$0xff]
      %s1564 = scalar_lea.vmem %s2, 12
      %v1565 = vld [vmem:[%s1564] sm:$0xf]
      %v1567 = vsel %vm347, %v1532, 0
      %v1570 = vsel %vm347, %v1533, 0
      %v1573 = vsel %vm347, %v1534, 0
      %v1576 = vsel %vm347, %v1535, 0
      %v1579 = vsel %vm347, %v1536, 0
      %v1582 = vsel %vm347, %v1537, 0
      %v1585 = vsel %vm347, %v1538, 0
      %v1588 = vsel %vm347, %v1539, 0
      %v1591 = vsel %vm347, %v1540, 0
      %v1594 = vsel %vm347, %v1541, 0
      %v1597 = vsel %vm347, %v1542, 0
      %v1600 = vsel %vm347, %v1543, 0
      %v1603 = vsel %vm347, %v1544, 0
      %v1606 = vsel %vm347, %v1545, 0
      %v1609 = vsel %vm347, %v1546, 0
      %v1612 = vsel %vm347, %v1547, 0
      %v1615 = vsel %vm347, %v1548, 0
      %v1618 = vsel %vm347, %v1549, 0
      %v1621 = vsel %vm347, %v1550, 0
      %v1624 = vsel %vm347, %v1551, 0
      %v1627 = vsel %vm347, %v1552, 0
      %v1630 = vsel %vm347, %v1553, 0
      %v1633 = vsel %vm347, %v1554, 0
      %v1636 = vsel %vm347, %v1555, 0
      %v1639 = vsel %vm347, %v1556, 0
      %v1642 = vsel %vm347, %v1557, 0
      %v1645 = vsel %vm347, %v1558, 0
      %v1648 = vsel %vm347, %v1559, 0
      %v1651 = vsel %vm347, %v1560, 0
      %v1654 = vsel %vm347, %v1561, 0
      %v1657 = vsel %vm347, %v1562, 0
      %v1660 = vsel %vm347, %v1563, 0
      %v1663 = vsel %vm589, %v1565, 0
      %1665 = vmatprep.subr.mxu0 0.0
      %1666 = vmatpush1.msra.mxu0 0.0
      %1667 = vmatprep.subr.mxu0 0.0
      %1668 = vmatpush1.msra.mxu0 0.0
      %1669 = vmatprep.subr.mxu0 0.0
      %1670 = vmatpush1.msra.mxu0 0.0
      %1671 = vmatprep.subr.mxu0 0.0
      %1672 = vmatpush1.msra.mxu0 0.0
      %1673 = vmatprep.subr.mxu0 0.0
      %1674 = vmatpush1.msra.mxu0 0.0
      %1675 = vmatprep.subr.mxu0 0.0
      %1676 = vmatpush1.msra.mxu0 0.0
      %1677 = vmatprep.subr.mxu0 0.0
      %1678 = vmatpush1.msra.mxu0 0.0
      %1679 = vmatprep.subr.mxu0 0.0
      %1680 = vmatpush1.msra.mxu0 0.0
      %1681 = vmatprep.subr.mxu0 0.0
      %1682 = vmatpush1.msra.mxu0 0.0
      %1683 = vmatprep.subr.mxu0 0.0
      %1684 = vmatpush1.msra.mxu0 0.0
      %1685 = vmatprep.subr.mxu0 0.0
      %1686 = vmatpush1.msra.mxu0 0.0
      %1687 = vmatprep.subr.mxu0 0.0
      %1688 = vmatpush1.msra.mxu0 0.0
      %1689 = vmatprep.subr.mxu0 0.0
      %1690 = vmatpush1.msra.mxu0 0.0
      %1691 = vmatprep.subr.mxu0 0.0
      %1692 = vmatpush1.msra.mxu0 0.0
      %1693 = vmatprep.subr.mxu0 0.0
      %1694 = vmatpush1.msra.mxu0 0.0
      %1695 = vmatprep.subr.mxu0 0.0
      %1696 = vmatpush1.msra.mxu0 %v1663
      %1697 = vmatprep.subr.mxu0 0.0
      %1698 = vmatpush2.msra.mxu0 0.0
      %1699 = vmatprep.subr.mxu0 0.0
      %1700 = vmatpush2.msra.mxu0 0.0
      %1701 = vmatprep.subr.mxu0 0.0
      %1702 = vmatpush2.msra.mxu0 0.0
      %1703 = vmatprep.subr.mxu0 0.0
      %1704 = vmatpush2.msra.mxu0 0.0
      %1705 = vmatprep.subr.mxu0 0.0
      %1706 = vmatpush2.msra.mxu0 0.0
      %1707 = vmatprep.subr.mxu0 0.0
      %1708 = vmatpush2.msra.mxu0 0.0
      %1709 = vmatprep.subr.mxu0 0.0
      %1710 = vmatpush2.msra.mxu0 0.0
      %1711 = vmatprep.subr.mxu0 0.0
      %1712 = vmatpush2.msra.mxu0 0.0
      %1713 = vmatprep.subr.mxu0 0.0
      %1714 = vmatpush2.msra.mxu0 0.0
      %1715 = vmatprep.subr.mxu0 0.0
      %1716 = vmatpush2.msra.mxu0 0.0
      %1717 = vmatprep.subr.mxu0 0.0
      %1718 = vmatpush2.msra.mxu0 0.0
      %1719 = vmatprep.subr.mxu0 0.0
      %1720 = vmatpush2.msra.mxu0 0.0
      %1721 = vmatprep.subr.mxu0 0.0
      %1722 = vmatpush2.msra.mxu0 0.0
      %1723 = vmatprep.subr.mxu0 0.0
      %1724 = vmatpush2.msra.mxu0 0.0
      %1725 = vmatprep.subr.mxu0 0.0
      %1726 = vmatpush2.msra.mxu0 0.0
      %1727 = vmatprep.subr.mxu0 0.0
      %1728 = vmatpush2.msra.mxu0 0.0
      %1729 = vmatprep.mubr.f32.mxu0 0.0
      %1730 = vmatmul.mubr.f32.gmra.mxu0 %v1567
      %v1731 = vpop.f32.mrf.mxu0
      %v1732 = vadd.f32 0.0, %v1731
      %v1733 = vpop.f32.mrf.mxu0
      %1734 = vmatprep.mubr.f32.mxu0 0.0
      %1735 = vmatmul.mubr.f32.gmra.mxu0 %v1570
      %v1736 = vpop.f32.mrf.mxu0
      %v1737 = vadd.f32 0.0, %v1736
      %v1738 = vpop.f32.mrf.mxu0
      %1739 = vmatprep.mubr.f32.mxu0 0.0
      %1740 = vmatmul.mubr.f32.gmra.mxu0 %v1573
      %v1741 = vpop.f32.mrf.mxu0
      %v1742 = vadd.f32 0.0, %v1741
      %v1743 = vpop.f32.mrf.mxu0
      %1744 = vmatprep.mubr.f32.mxu0 0.0
      %1745 = vmatmul.mubr.f32.gmra.mxu0 %v1576
      %v1746 = vpop.f32.mrf.mxu0
      %v1747 = vadd.f32 0.0, %v1746
      %v1748 = vpop.f32.mrf.mxu0
      %1749 = vmatprep.mubr.f32.mxu0 0.0
      %1750 = vmatmul.mubr.f32.gmra.mxu0 %v1579
      %v1751 = vpop.f32.mrf.mxu0
      %v1752 = vadd.f32 0.0, %v1751
      %v1753 = vpop.f32.mrf.mxu0
      %1754 = vmatprep.mubr.f32.mxu0 0.0
      %1755 = vmatmul.mubr.f32.gmra.mxu0 %v1582
      %v1756 = vpop.f32.mrf.mxu0
      %v1757 = vadd.f32 0.0, %v1756
      %v1758 = vpop.f32.mrf.mxu0
      %1759 = vmatprep.mubr.f32.mxu0 0.0
      %1760 = vmatmul.mubr.f32.gmra.mxu0 %v1585
      %v1761 = vpop.f32.mrf.mxu0
      %v1762 = vadd.f32 0.0, %v1761
      %v1763 = vpop.f32.mrf.mxu0
      %1764 = vmatprep.mubr.f32.mxu0 0.0
      %1765 = vmatmul.mubr.f32.gmra.mxu0 %v1588
      %v1766 = vpop.f32.mrf.mxu0
      %v1767 = vadd.f32 0.0, %v1766
      %v1768 = vpop.f32.mrf.mxu0
      %1769 = vmatprep.mubr.f32.mxu0 0.0
      %1770 = vmatmul.mubr.f32.gmra.mxu0 %v1591
      %v1771 = vpop.f32.mrf.mxu0
      %v1772 = vadd.f32 0.0, %v1771
      %v1773 = vpop.f32.mrf.mxu0
      %1774 = vmatprep.mubr.f32.mxu0 0.0
      %1775 = vmatmul.mubr.f32.gmra.mxu0 %v1594
      %v1776 = vpop.f32.mrf.mxu0
      %v1777 = vadd.f32 0.0, %v1776
      %v1778 = vpop.f32.mrf.mxu0
      %1779 = vmatprep.mubr.f32.mxu0 0.0
      %1780 = vmatmul.mubr.f32.gmra.mxu0 %v1597
      %v1781 = vpop.f32.mrf.mxu0
      %v1782 = vadd.f32 0.0, %v1781
      %v1783 = vpop.f32.mrf.mxu0
      %1784 = vmatprep.mubr.f32.mxu0 0.0
      %1785 = vmatmul.mubr.f32.gmra.mxu0 %v1600
      %v1786 = vpop.f32.mrf.mxu0
      %v1787 = vadd.f32 0.0, %v1786
      %v1788 = vpop.f32.mrf.mxu0
      %1789 = vmatprep.mubr.f32.mxu0 0.0
      %1790 = vmatmul.mubr.f32.gmra.mxu0 %v1603
      %v1791 = vpop.f32.mrf.mxu0
      %v1792 = vadd.f32 0.0, %v1791
      %v1793 = vpop.f32.mrf.mxu0
      %1794 = vmatprep.mubr.f32.mxu0 0.0
      %1795 = vmatmul.mubr.f32.gmra.mxu0 %v1606
      %v1796 = vpop.f32.mrf.mxu0
      %v1797 = vadd.f32 0.0, %v1796
      %v1798 = vpop.f32.mrf.mxu0
      %1799 = vmatprep.mubr.f32.mxu0 0.0
      %1800 = vmatmul.mubr.f32.gmra.mxu0 %v1609
      %v1801 = vpop.f32.mrf.mxu0
      %v1802 = vadd.f32 0.0, %v1801
      %v1803 = vpop.f32.mrf.mxu0
      %1804 = vmatprep.mubr.f32.mxu0 0.0
      %1805 = vmatmul.mubr.f32.gmra.mxu0 %v1612
      %v1806 = vpop.f32.mrf.mxu0
      %v1807 = vadd.f32 0.0, %v1806
      %v1808 = vpop.f32.mrf.mxu0
      %1809 = vmatprep.mubr.f32.mxu0 0.0
      %1810 = vmatmul.mubr.f32.gmra.mxu0 %v1615
      %v1811 = vpop.f32.mrf.mxu0
      %v1812 = vadd.f32 0.0, %v1811
      %v1813 = vpop.f32.mrf.mxu0
      %1814 = vmatprep.mubr.f32.mxu0 0.0
      %1815 = vmatmul.mubr.f32.gmra.mxu0 %v1618
      %v1816 = vpop.f32.mrf.mxu0
      %v1817 = vadd.f32 0.0, %v1816
      %v1818 = vpop.f32.mrf.mxu0
      %1819 = vmatprep.mubr.f32.mxu0 0.0
      %1820 = vmatmul.mubr.f32.gmra.mxu0 %v1621
      %v1821 = vpop.f32.mrf.mxu0
      %v1822 = vadd.f32 0.0, %v1821
      %v1823 = vpop.f32.mrf.mxu0
      %1824 = vmatprep.mubr.f32.mxu0 0.0
      %1825 = vmatmul.mubr.f32.gmra.mxu0 %v1624
      %v1826 = vpop.f32.mrf.mxu0
      %v1827 = vadd.f32 0.0, %v1826
      %v1828 = vpop.f32.mrf.mxu0
      %1829 = vmatprep.mubr.f32.mxu0 0.0
      %1830 = vmatmul.mubr.f32.gmra.mxu0 %v1627
      %v1831 = vpop.f32.mrf.mxu0
      %v1832 = vadd.f32 0.0, %v1831
      %v1833 = vpop.f32.mrf.mxu0
      %1834 = vmatprep.mubr.f32.mxu0 0.0
      %1835 = vmatmul.mubr.f32.gmra.mxu0 %v1630
      %v1836 = vpop.f32.mrf.mxu0
      %v1837 = vadd.f32 0.0, %v1836
      %v1838 = vpop.f32.mrf.mxu0
      %1839 = vmatprep.mubr.f32.mxu0 0.0
      %1840 = vmatmul.mubr.f32.gmra.mxu0 %v1633
      %v1841 = vpop.f32.mrf.mxu0
      %v1842 = vadd.f32 0.0, %v1841
      %v1843 = vpop.f32.mrf.mxu0
      %1844 = vmatprep.mubr.f32.mxu0 0.0
      %1845 = vmatmul.mubr.f32.gmra.mxu0 %v1636
      %v1846 = vpop.f32.mrf.mxu0
      %v1847 = vadd.f32 0.0, %v1846
      %v1848 = vpop.f32.mrf.mxu0
      %1849 = vmatprep.mubr.f32.mxu0 0.0
      %1850 = vmatmul.mubr.f32.gmra.mxu0 %v1639
      %v1851 = vpop.f32.mrf.mxu0
      %v1852 = vadd.f32 0.0, %v1851
      %v1853 = vpop.f32.mrf.mxu0
      %1854 = vmatprep.mubr.f32.mxu0 0.0
      %1855 = vmatmul.mubr.f32.gmra.mxu0 %v1642
      %v1856 = vpop.f32.mrf.mxu0
      %v1857 = vadd.f32 0.0, %v1856
      %v1858 = vpop.f32.mrf.mxu0
      %1859 = vmatprep.mubr.f32.mxu0 0.0
      %1860 = vmatmul.mubr.f32.gmra.mxu0 %v1645
      %v1861 = vpop.f32.mrf.mxu0
      %v1862 = vadd.f32 0.0, %v1861
      %v1863 = vpop.f32.mrf.mxu0
      %1864 = vmatprep.mubr.f32.mxu0 0.0
      %1865 = vmatmul.mubr.f32.gmra.mxu0 %v1648
      %v1866 = vpop.f32.mrf.mxu0
      %v1867 = vadd.f32 0.0, %v1866
      %v1868 = vpop.f32.mrf.mxu0
      %1869 = vmatprep.mubr.f32.mxu0 0.0
      %1870 = vmatmul.mubr.f32.gmra.mxu0 %v1651
      %v1871 = vpop.f32.mrf.mxu0
      %v1872 = vadd.f32 0.0, %v1871
      %v1873 = vpop.f32.mrf.mxu0
      %1874 = vmatprep.mubr.f32.mxu0 0.0
      %1875 = vmatmul.mubr.f32.gmra.mxu0 %v1654
      %v1876 = vpop.f32.mrf.mxu0
      %v1877 = vadd.f32 0.0, %v1876
      %v1878 = vpop.f32.mrf.mxu0
      %1879 = vmatprep.mubr.f32.mxu0 0.0
      %1880 = vmatmul.mubr.f32.gmra.mxu0 %v1657
      %v1881 = vpop.f32.mrf.mxu0
      %v1882 = vadd.f32 0.0, %v1881
      %v1883 = vpop.f32.mrf.mxu0
      %1884 = vmatprep.mubr.f32.mxu0 0.0
      %1885 = vmatmul.mubr.f32.gmra.mxu0 %v1660
      %v1886 = vpop.f32.mrf.mxu0
      %v1887 = vadd.f32 0.0, %v1886
      %v1888 = vpop.f32.mrf.mxu0
      %1889 = vdwg.mxu0
      %v1890 = vadd.f32 %v1500, %v1732
      %v1891 = vadd.f32 %v1501, %v1737
      %v1892 = vadd.f32 %v1502, %v1742
      %v1893 = vadd.f32 %v1503, %v1747
      %v1894 = vadd.f32 %v1504, %v1752
      %v1895 = vadd.f32 %v1505, %v1757
      %v1896 = vadd.f32 %v1506, %v1762
      %v1897 = vadd.f32 %v1507, %v1767
      %v1898 = vadd.f32 %v1508, %v1772
      %v1899 = vadd.f32 %v1509, %v1777
      %v1900 = vadd.f32 %v1510, %v1782
      %v1901 = vadd.f32 %v1511, %v1787
      %v1902 = vadd.f32 %v1512, %v1792
      %v1903 = vadd.f32 %v1513, %v1797
      %v1904 = vadd.f32 %v1514, %v1802
      %v1905 = vadd.f32 %v1515, %v1807
      %v1906 = vadd.f32 %v1516, %v1812
      %v1907 = vadd.f32 %v1517, %v1817
      %v1908 = vadd.f32 %v1518, %v1822
      %v1909 = vadd.f32 %v1519, %v1827
      %v1910 = vadd.f32 %v1520, %v1832
      %v1911 = vadd.f32 %v1521, %v1837
      %v1912 = vadd.f32 %v1522, %v1842
      %v1913 = vadd.f32 %v1523, %v1847
      %v1914 = vadd.f32 %v1524, %v1852
      %v1915 = vadd.f32 %v1525, %v1857
      %v1916 = vadd.f32 %v1526, %v1862
      %v1917 = vadd.f32 %v1527, %v1867
      %v1918 = vadd.f32 %v1528, %v1872
      %v1919 = vadd.f32 %v1529, %v1877
      %v1920 = vadd.f32 %v1530, %v1882
      %v1921 = vadd.f32 %v1531, %v1887
      %v1922 = vld [vmem:[%s393 + $0x1] sm:$0xff]
      %v1923 = vld [vmem:[%s393 + $0x9] sm:$0xff]
      %v1924 = vld [vmem:[%s393 + $0x19] sm:$0xff]
      %v1925 = vld [vmem:[%s393 + $0x21] sm:$0xff]
      %v1926 = vld [vmem:[%s393 + $0x31] sm:$0xff]
      %v1927 = vld [vmem:[%s393 + $0x39] sm:$0xff]
      %v1928 = vld [vmem:[%s393 + $0x49] sm:$0xff]
      %v1929 = vld [vmem:[%s393 + $0x51] sm:$0xff]
      %v1930 = vld [vmem:[%s393 + $0x61] sm:$0xff]
      %v1931 = vld [vmem:[%s393 + $0x69] sm:$0xff]
      %v1932 = vld [vmem:[%s393 + $0x79] sm:$0xff]
      %v1933 = vld [vmem:[%s393 + $0x81] sm:$0xff]
      %v1934 = vld [vmem:[%s393 + $0x91] sm:$0xff]
      %v1935 = vld [vmem:[%s393 + $0x99] sm:$0xff]
      %v1936 = vld [vmem:[%s393 + $0xa9] sm:$0xff]
      %v1937 = vld [vmem:[%s393 + $0xb1] sm:$0xff]
      %v1938 = vld [vmem:[%s393 + $0xc1] sm:$0xff]
      %v1939 = vld [vmem:[%s393 + $0xc9] sm:$0xff]
      %v1940 = vld [vmem:[%s393 + $0xd9] sm:$0xff]
      %v1941 = vld [vmem:[%s393 + $0xe1] sm:$0xff]
      %v1942 = vld [vmem:[%s393 + $0xf1] sm:$0xff]
      %v1943 = vld [vmem:[%s393 + $0xf9] sm:$0xff]
      %v1944 = vld [vmem:[%s393 + $0x109] sm:$0xff]
      %v1945 = vld [vmem:[%s393 + $0x111] sm:$0xff]
      %v1946 = vld [vmem:[%s393 + $0x121] sm:$0xff]
      %v1947 = vld [vmem:[%s393 + $0x129] sm:$0xff]
      %v1948 = vld [vmem:[%s393 + $0x139] sm:$0xff]
      %v1949 = vld [vmem:[%s393 + $0x141] sm:$0xff]
      %v1950 = vld [vmem:[%s393 + $0x151] sm:$0xff]
      %v1951 = vld [vmem:[%s393 + $0x159] sm:$0xff]
      %v1952 = vld [vmem:[%s393 + $0x169] sm:$0xff]
      %v1953 = vld [vmem:[%s393 + $0x171] sm:$0xff]
      %s1954 = scalar_lea.vmem %s2, 16
      %v1955 = vld [vmem:[%s1954] sm:$0xf]
      %v1957 = vsel %vm347, %v1922, 0
      %v1960 = vsel %vm347, %v1923, 0
      %v1963 = vsel %vm347, %v1924, 0
      %v1966 = vsel %vm347, %v1925, 0
      %v1969 = vsel %vm347, %v1926, 0
      %v1972 = vsel %vm347, %v1927, 0
      %v1975 = vsel %vm347, %v1928, 0
      %v1978 = vsel %vm347, %v1929, 0
      %v1981 = vsel %vm347, %v1930, 0
      %v1984 = vsel %vm347, %v1931, 0
      %v1987 = vsel %vm347, %v1932, 0
      %v1990 = vsel %vm347, %v1933, 0
      %v1993 = vsel %vm347, %v1934, 0
      %v1996 = vsel %vm347, %v1935, 0
      %v1999 = vsel %vm347, %v1936, 0
      %v2002 = vsel %vm347, %v1937, 0
      %v2005 = vsel %vm347, %v1938, 0
      %v2008 = vsel %vm347, %v1939, 0
      %v2011 = vsel %vm347, %v1940, 0
      %v2014 = vsel %vm347, %v1941, 0
      %v2017 = vsel %vm347, %v1942, 0
      %v2020 = vsel %vm347, %v1943, 0
      %v2023 = vsel %vm347, %v1944, 0
      %v2026 = vsel %vm347, %v1945, 0
      %v2029 = vsel %vm347, %v1946, 0
      %v2032 = vsel %vm347, %v1947, 0
      %v2035 = vsel %vm347, %v1948, 0
      %v2038 = vsel %vm347, %v1949, 0
      %v2041 = vsel %vm347, %v1950, 0
      %v2044 = vsel %vm347, %v1951, 0
      %v2047 = vsel %vm347, %v1952, 0
      %v2050 = vsel %vm347, %v1953, 0
      %v2053 = vsel %vm589, %v1955, 0
      %2055 = vmatprep.subr.mxu0 0.0
      %2056 = vmatpush1.msra.mxu0 0.0
      %2057 = vmatprep.subr.mxu0 0.0
      %2058 = vmatpush1.msra.mxu0 0.0
      %2059 = vmatprep.subr.mxu0 0.0
      %2060 = vmatpush1.msra.mxu0 0.0
      %2061 = vmatprep.subr.mxu0 0.0
      %2062 = vmatpush1.msra.mxu0 0.0
      %2063 = vmatprep.subr.mxu0 0.0
      %2064 = vmatpush1.msra.mxu0 0.0
      %2065 = vmatprep.subr.mxu0 0.0
      %2066 = vmatpush1.msra.mxu0 0.0
      %2067 = vmatprep.subr.mxu0 0.0
      %2068 = vmatpush1.msra.mxu0 0.0
      %2069 = vmatprep.subr.mxu0 0.0
      %2070 = vmatpush1.msra.mxu0 0.0
      %2071 = vmatprep.subr.mxu0 0.0
      %2072 = vmatpush1.msra.mxu0 0.0
      %2073 = vmatprep.subr.mxu0 0.0
      %2074 = vmatpush1.msra.mxu0 0.0
      %2075 = vmatprep.subr.mxu0 0.0
      %2076 = vmatpush1.msra.mxu0 0.0
      %2077 = vmatprep.subr.mxu0 0.0
      %2078 = vmatpush1.msra.mxu0 0.0
      %2079 = vmatprep.subr.mxu0 0.0
      %2080 = vmatpush1.msra.mxu0 0.0
      %2081 = vmatprep.subr.mxu0 0.0
      %2082 = vmatpush1.msra.mxu0 0.0
      %2083 = vmatprep.subr.mxu0 0.0
      %2084 = vmatpush1.msra.mxu0 0.0
      %2085 = vmatprep.subr.mxu0 0.0
      %2086 = vmatpush1.msra.mxu0 %v2053
      %2087 = vmatprep.subr.mxu0 0.0
      %2088 = vmatpush2.msra.mxu0 0.0
      %2089 = vmatprep.subr.mxu0 0.0
      %2090 = vmatpush2.msra.mxu0 0.0
      %2091 = vmatprep.subr.mxu0 0.0
      %2092 = vmatpush2.msra.mxu0 0.0
      %2093 = vmatprep.subr.mxu0 0.0
      %2094 = vmatpush2.msra.mxu0 0.0
      %2095 = vmatprep.subr.mxu0 0.0
      %2096 = vmatpush2.msra.mxu0 0.0
      %2097 = vmatprep.subr.mxu0 0.0
      %2098 = vmatpush2.msra.mxu0 0.0
      %2099 = vmatprep.subr.mxu0 0.0
      %2100 = vmatpush2.msra.mxu0 0.0
      %2101 = vmatprep.subr.mxu0 0.0
      %2102 = vmatpush2.msra.mxu0 0.0
      %2103 = vmatprep.subr.mxu0 0.0
      %2104 = vmatpush2.msra.mxu0 0.0
      %2105 = vmatprep.subr.mxu0 0.0
      %2106 = vmatpush2.msra.mxu0 0.0
      %2107 = vmatprep.subr.mxu0 0.0
      %2108 = vmatpush2.msra.mxu0 0.0
      %2109 = vmatprep.subr.mxu0 0.0
      %2110 = vmatpush2.msra.mxu0 0.0
      %2111 = vmatprep.subr.mxu0 0.0
      %2112 = vmatpush2.msra.mxu0 0.0
      %2113 = vmatprep.subr.mxu0 0.0
      %2114 = vmatpush2.msra.mxu0 0.0
      %2115 = vmatprep.subr.mxu0 0.0
      %2116 = vmatpush2.msra.mxu0 0.0
      %2117 = vmatprep.subr.mxu0 0.0
      %2118 = vmatpush2.msra.mxu0 0.0
      %2119 = vmatprep.mubr.f32.mxu0 0.0
      %2120 = vmatmul.mubr.f32.gmra.mxu0 %v1957
      %v2121 = vpop.f32.mrf.mxu0
      %v2122 = vadd.f32 0.0, %v2121
      %v2123 = vpop.f32.mrf.mxu0
      %2124 = vmatprep.mubr.f32.mxu0 0.0
      %2125 = vmatmul.mubr.f32.gmra.mxu0 %v1960
      %v2126 = vpop.f32.mrf.mxu0
      %v2127 = vadd.f32 0.0, %v2126
      %v2128 = vpop.f32.mrf.mxu0
      %2129 = vmatprep.mubr.f32.mxu0 0.0
      %2130 = vmatmul.mubr.f32.gmra.mxu0 %v1963
      %v2131 = vpop.f32.mrf.mxu0
      %v2132 = vadd.f32 0.0, %v2131
      %v2133 = vpop.f32.mrf.mxu0
      %2134 = vmatprep.mubr.f32.mxu0 0.0
      %2135 = vmatmul.mubr.f32.gmra.mxu0 %v1966
      %v2136 = vpop.f32.mrf.mxu0
      %v2137 = vadd.f32 0.0, %v2136
      %v2138 = vpop.f32.mrf.mxu0
      %2139 = vmatprep.mubr.f32.mxu0 0.0
      %2140 = vmatmul.mubr.f32.gmra.mxu0 %v1969
      %v2141 = vpop.f32.mrf.mxu0
      %v2142 = vadd.f32 0.0, %v2141
      %v2143 = vpop.f32.mrf.mxu0
      %2144 = vmatprep.mubr.f32.mxu0 0.0
      %2145 = vmatmul.mubr.f32.gmra.mxu0 %v1972
      %v2146 = vpop.f32.mrf.mxu0
      %v2147 = vadd.f32 0.0, %v2146
      %v2148 = vpop.f32.mrf.mxu0
      %2149 = vmatprep.mubr.f32.mxu0 0.0
      %2150 = vmatmul.mubr.f32.gmra.mxu0 %v1975
      %v2151 = vpop.f32.mrf.mxu0
      %v2152 = vadd.f32 0.0, %v2151
      %v2153 = vpop.f32.mrf.mxu0
      %2154 = vmatprep.mubr.f32.mxu0 0.0
      %2155 = vmatmul.mubr.f32.gmra.mxu0 %v1978
      %v2156 = vpop.f32.mrf.mxu0
      %v2157 = vadd.f32 0.0, %v2156
      %v2158 = vpop.f32.mrf.mxu0
      %2159 = vmatprep.mubr.f32.mxu0 0.0
      %2160 = vmatmul.mubr.f32.gmra.mxu0 %v1981
      %v2161 = vpop.f32.mrf.mxu0
      %v2162 = vadd.f32 0.0, %v2161
      %v2163 = vpop.f32.mrf.mxu0
      %2164 = vmatprep.mubr.f32.mxu0 0.0
      %2165 = vmatmul.mubr.f32.gmra.mxu0 %v1984
      %v2166 = vpop.f32.mrf.mxu0
      %v2167 = vadd.f32 0.0, %v2166
      %v2168 = vpop.f32.mrf.mxu0
      %2169 = vmatprep.mubr.f32.mxu0 0.0
      %2170 = vmatmul.mubr.f32.gmra.mxu0 %v1987
      %v2171 = vpop.f32.mrf.mxu0
      %v2172 = vadd.f32 0.0, %v2171
      %v2173 = vpop.f32.mrf.mxu0
      %2174 = vmatprep.mubr.f32.mxu0 0.0
      %2175 = vmatmul.mubr.f32.gmra.mxu0 %v1990
      %v2176 = vpop.f32.mrf.mxu0
      %v2177 = vadd.f32 0.0, %v2176
      %v2178 = vpop.f32.mrf.mxu0
      %2179 = vmatprep.mubr.f32.mxu0 0.0
      %2180 = vmatmul.mubr.f32.gmra.mxu0 %v1993
      %v2181 = vpop.f32.mrf.mxu0
      %v2182 = vadd.f32 0.0, %v2181
      %v2183 = vpop.f32.mrf.mxu0
      %2184 = vmatprep.mubr.f32.mxu0 0.0
      %2185 = vmatmul.mubr.f32.gmra.mxu0 %v1996
      %v2186 = vpop.f32.mrf.mxu0
      %v2187 = vadd.f32 0.0, %v2186
      %v2188 = vpop.f32.mrf.mxu0
      %2189 = vmatprep.mubr.f32.mxu0 0.0
      %2190 = vmatmul.mubr.f32.gmra.mxu0 %v1999
      %v2191 = vpop.f32.mrf.mxu0
      %v2192 = vadd.f32 0.0, %v2191
      %v2193 = vpop.f32.mrf.mxu0
      %2194 = vmatprep.mubr.f32.mxu0 0.0
      %2195 = vmatmul.mubr.f32.gmra.mxu0 %v2002
      %v2196 = vpop.f32.mrf.mxu0
      %v2197 = vadd.f32 0.0, %v2196
      %v2198 = vpop.f32.mrf.mxu0
      %2199 = vmatprep.mubr.f32.mxu0 0.0
      %2200 = vmatmul.mubr.f32.gmra.mxu0 %v2005
      %v2201 = vpop.f32.mrf.mxu0
      %v2202 = vadd.f32 0.0, %v2201
      %v2203 = vpop.f32.mrf.mxu0
      %2204 = vmatprep.mubr.f32.mxu0 0.0
      %2205 = vmatmul.mubr.f32.gmra.mxu0 %v2008
      %v2206 = vpop.f32.mrf.mxu0
      %v2207 = vadd.f32 0.0, %v2206
      %v2208 = vpop.f32.mrf.mxu0
      %2209 = vmatprep.mubr.f32.mxu0 0.0
      %2210 = vmatmul.mubr.f32.gmra.mxu0 %v2011
      %v2211 = vpop.f32.mrf.mxu0
      %v2212 = vadd.f32 0.0, %v2211
      %v2213 = vpop.f32.mrf.mxu0
      %2214 = vmatprep.mubr.f32.mxu0 0.0
      %2215 = vmatmul.mubr.f32.gmra.mxu0 %v2014
      %v2216 = vpop.f32.mrf.mxu0
      %v2217 = vadd.f32 0.0, %v2216
      %v2218 = vpop.f32.mrf.mxu0
      %2219 = vmatprep.mubr.f32.mxu0 0.0
      %2220 = vmatmul.mubr.f32.gmra.mxu0 %v2017
      %v2221 = vpop.f32.mrf.mxu0
      %v2222 = vadd.f32 0.0, %v2221
      %v2223 = vpop.f32.mrf.mxu0
      %2224 = vmatprep.mubr.f32.mxu0 0.0
      %2225 = vmatmul.mubr.f32.gmra.mxu0 %v2020
      %v2226 = vpop.f32.mrf.mxu0
      %v2227 = vadd.f32 0.0, %v2226
      %v2228 = vpop.f32.mrf.mxu0
      %2229 = vmatprep.mubr.f32.mxu0 0.0
      %2230 = vmatmul.mubr.f32.gmra.mxu0 %v2023
      %v2231 = vpop.f32.mrf.mxu0
      %v2232 = vadd.f32 0.0, %v2231
      %v2233 = vpop.f32.mrf.mxu0
      %2234 = vmatprep.mubr.f32.mxu0 0.0
      %2235 = vmatmul.mubr.f32.gmra.mxu0 %v2026
      %v2236 = vpop.f32.mrf.mxu0
      %v2237 = vadd.f32 0.0, %v2236
      %v2238 = vpop.f32.mrf.mxu0
      %2239 = vmatprep.mubr.f32.mxu0 0.0
      %2240 = vmatmul.mubr.f32.gmra.mxu0 %v2029
      %v2241 = vpop.f32.mrf.mxu0
      %v2242 = vadd.f32 0.0, %v2241
      %v2243 = vpop.f32.mrf.mxu0
      %2244 = vmatprep.mubr.f32.mxu0 0.0
      %2245 = vmatmul.mubr.f32.gmra.mxu0 %v2032
      %v2246 = vpop.f32.mrf.mxu0
      %v2247 = vadd.f32 0.0, %v2246
      %v2248 = vpop.f32.mrf.mxu0
      %2249 = vmatprep.mubr.f32.mxu0 0.0
      %2250 = vmatmul.mubr.f32.gmra.mxu0 %v2035
      %v2251 = vpop.f32.mrf.mxu0
      %v2252 = vadd.f32 0.0, %v2251
      %v2253 = vpop.f32.mrf.mxu0
      %2254 = vmatprep.mubr.f32.mxu0 0.0
      %2255 = vmatmul.mubr.f32.gmra.mxu0 %v2038
      %v2256 = vpop.f32.mrf.mxu0
      %v2257 = vadd.f32 0.0, %v2256
      %v2258 = vpop.f32.mrf.mxu0
      %2259 = vmatprep.mubr.f32.mxu0 0.0
      %2260 = vmatmul.mubr.f32.gmra.mxu0 %v2041
      %v2261 = vpop.f32.mrf.mxu0
      %v2262 = vadd.f32 0.0, %v2261
      %v2263 = vpop.f32.mrf.mxu0
      %2264 = vmatprep.mubr.f32.mxu0 0.0
      %2265 = vmatmul.mubr.f32.gmra.mxu0 %v2044
      %v2266 = vpop.f32.mrf.mxu0
      %v2267 = vadd.f32 0.0, %v2266
      %v2268 = vpop.f32.mrf.mxu0
      %2269 = vmatprep.mubr.f32.mxu0 0.0
      %2270 = vmatmul.mubr.f32.gmra.mxu0 %v2047
      %v2271 = vpop.f32.mrf.mxu0
      %v2272 = vadd.f32 0.0, %v2271
      %v2273 = vpop.f32.mrf.mxu0
      %2274 = vmatprep.mubr.f32.mxu0 0.0
      %2275 = vmatmul.mubr.f32.gmra.mxu0 %v2050
      %v2276 = vpop.f32.mrf.mxu0
      %v2277 = vadd.f32 0.0, %v2276
      %v2278 = vpop.f32.mrf.mxu0
      %2279 = vdwg.mxu0
      %v2280 = vadd.f32 %v1890, %v2122
      %v2281 = vadd.f32 %v1891, %v2127
      %v2282 = vadd.f32 %v1892, %v2132
      %v2283 = vadd.f32 %v1893, %v2137
      %v2284 = vadd.f32 %v1894, %v2142
      %v2285 = vadd.f32 %v1895, %v2147
      %v2286 = vadd.f32 %v1896, %v2152
      %v2287 = vadd.f32 %v1897, %v2157
      %v2288 = vadd.f32 %v1898, %v2162
      %v2289 = vadd.f32 %v1899, %v2167
      %v2290 = vadd.f32 %v1900, %v2172
      %v2291 = vadd.f32 %v1901, %v2177
      %v2292 = vadd.f32 %v1902, %v2182
      %v2293 = vadd.f32 %v1903, %v2187
      %v2294 = vadd.f32 %v1904, %v2192
      %v2295 = vadd.f32 %v1905, %v2197
      %v2296 = vadd.f32 %v1906, %v2202
      %v2297 = vadd.f32 %v1907, %v2207
      %v2298 = vadd.f32 %v1908, %v2212
      %v2299 = vadd.f32 %v1909, %v2217
      %v2300 = vadd.f32 %v1910, %v2222
      %v2301 = vadd.f32 %v1911, %v2227
      %v2302 = vadd.f32 %v1912, %v2232
      %v2303 = vadd.f32 %v1913, %v2237
      %v2304 = vadd.f32 %v1914, %v2242
      %v2305 = vadd.f32 %v1915, %v2247
      %v2306 = vadd.f32 %v1916, %v2252
      %v2307 = vadd.f32 %v1917, %v2257
      %v2308 = vadd.f32 %v1918, %v2262
      %v2309 = vadd.f32 %v1919, %v2267
      %v2310 = vadd.f32 %v1920, %v2272
      %v2311 = vadd.f32 %v1921, %v2277
      %v2312 = vld [vmem:[%s393 + $0x2] sm:$0xff]
      %v2313 = vld [vmem:[%s393 + $0xa] sm:$0xff]
      %v2314 = vld [vmem:[%s393 + $0x1a] sm:$0xff]
      %v2315 = vld [vmem:[%s393 + $0x22] sm:$0xff]
      %v2316 = vld [vmem:[%s393 + $0x32] sm:$0xff]
      %v2317 = vld [vmem:[%s393 + $0x3a] sm:$0xff]
      %v2318 = vld [vmem:[%s393 + $0x4a] sm:$0xff]
      %v2319 = vld [vmem:[%s393 + $0x52] sm:$0xff]
      %v2320 = vld [vmem:[%s393 + $0x62] sm:$0xff]
      %v2321 = vld [vmem:[%s393 + $0x6a] sm:$0xff]
      %v2322 = vld [vmem:[%s393 + $0x7a] sm:$0xff]
      %v2323 = vld [vmem:[%s393 + $0x82] sm:$0xff]
      %v2324 = vld [vmem:[%s393 + $0x92] sm:$0xff]
      %v2325 = vld [vmem:[%s393 + $0x9a] sm:$0xff]
      %v2326 = vld [vmem:[%s393 + $0xaa] sm:$0xff]
      %v2327 = vld [vmem:[%s393 + $0xb2] sm:$0xff]
      %v2328 = vld [vmem:[%s393 + $0xc2] sm:$0xff]
      %v2329 = vld [vmem:[%s393 + $0xca] sm:$0xff]
      %v2330 = vld [vmem:[%s393 + $0xda] sm:$0xff]
      %v2331 = vld [vmem:[%s393 + $0xe2] sm:$0xff]
      %v2332 = vld [vmem:[%s393 + $0xf2] sm:$0xff]
      %v2333 = vld [vmem:[%s393 + $0xfa] sm:$0xff]
      %v2334 = vld [vmem:[%s393 + $0x10a] sm:$0xff]
      %v2335 = vld [vmem:[%s393 + $0x112] sm:$0xff]
      %v2336 = vld [vmem:[%s393 + $0x122] sm:$0xff]
      %v2337 = vld [vmem:[%s393 + $0x12a] sm:$0xff]
      %v2338 = vld [vmem:[%s393 + $0x13a] sm:$0xff]
      %v2339 = vld [vmem:[%s393 + $0x142] sm:$0xff]
      %v2340 = vld [vmem:[%s393 + $0x152] sm:$0xff]
      %v2341 = vld [vmem:[%s393 + $0x15a] sm:$0xff]
      %v2342 = vld [vmem:[%s393 + $0x16a] sm:$0xff]
      %v2343 = vld [vmem:[%s393 + $0x172] sm:$0xff]
      %s2344 = scalar_lea.vmem %s2, 20
      %v2345 = vld [vmem:[%s2344] sm:$0xf]
      %v2347 = vsel %vm347, %v2312, 0
      %v2350 = vsel %vm347, %v2313, 0
      %v2353 = vsel %vm347, %v2314, 0
      %v2356 = vsel %vm347, %v2315, 0
      %v2359 = vsel %vm347, %v2316, 0
      %v2362 = vsel %vm347, %v2317, 0
      %v2365 = vsel %vm347, %v2318, 0
      %v2368 = vsel %vm347, %v2319, 0
      %v2371 = vsel %vm347, %v2320, 0
      %v2374 = vsel %vm347, %v2321, 0
      %v2377 = vsel %vm347, %v2322, 0
      %v2380 = vsel %vm347, %v2323, 0
      %v2383 = vsel %vm347, %v2324, 0
      %v2386 = vsel %vm347, %v2325, 0
      %v2389 = vsel %vm347, %v2326, 0
      %v2392 = vsel %vm347, %v2327, 0
      %v2395 = vsel %vm347, %v2328, 0
      %v2398 = vsel %vm347, %v2329, 0
      %v2401 = vsel %vm347, %v2330, 0
      %v2404 = vsel %vm347, %v2331, 0
      %v2407 = vsel %vm347, %v2332, 0
      %v2410 = vsel %vm347, %v2333, 0
      %v2413 = vsel %vm347, %v2334, 0
      %v2416 = vsel %vm347, %v2335, 0
      %v2419 = vsel %vm347, %v2336, 0
      %v2422 = vsel %vm347, %v2337, 0
      %v2425 = vsel %vm347, %v2338, 0
      %v2428 = vsel %vm347, %v2339, 0
      %v2431 = vsel %vm347, %v2340, 0
      %v2434 = vsel %vm347, %v2341, 0
      %v2437 = vsel %vm347, %v2342, 0
      %v2440 = vsel %vm347, %v2343, 0
      %v2443 = vsel %vm589, %v2345, 0
      %2445 = vmatprep.subr.mxu0 0.0
      %2446 = vmatpush1.msra.mxu0 0.0
      %2447 = vmatprep.subr.mxu0 0.0
      %2448 = vmatpush1.msra.mxu0 0.0
      %2449 = vmatprep.subr.mxu0 0.0
      %2450 = vmatpush1.msra.mxu0 0.0
      %2451 = vmatprep.subr.mxu0 0.0
      %2452 = vmatpush1.msra.mxu0 0.0
      %2453 = vmatprep.subr.mxu0 0.0
      %2454 = vmatpush1.msra.mxu0 0.0
      %2455 = vmatprep.subr.mxu0 0.0
      %2456 = vmatpush1.msra.mxu0 0.0
      %2457 = vmatprep.subr.mxu0 0.0
      %2458 = vmatpush1.msra.mxu0 0.0
      %2459 = vmatprep.subr.mxu0 0.0
      %2460 = vmatpush1.msra.mxu0 0.0
      %2461 = vmatprep.subr.mxu0 0.0
      %2462 = vmatpush1.msra.mxu0 0.0
      %2463 = vmatprep.subr.mxu0 0.0
      %2464 = vmatpush1.msra.mxu0 0.0
      %2465 = vmatprep.subr.mxu0 0.0
      %2466 = vmatpush1.msra.mxu0 0.0
      %2467 = vmatprep.subr.mxu0 0.0
      %2468 = vmatpush1.msra.mxu0 0.0
      %2469 = vmatprep.subr.mxu0 0.0
      %2470 = vmatpush1.msra.mxu0 0.0
      %2471 = vmatprep.subr.mxu0 0.0
      %2472 = vmatpush1.msra.mxu0 0.0
      %2473 = vmatprep.subr.mxu0 0.0
      %2474 = vmatpush1.msra.mxu0 0.0
      %2475 = vmatprep.subr.mxu0 0.0
      %2476 = vmatpush1.msra.mxu0 %v2443
      %2477 = vmatprep.subr.mxu0 0.0
      %2478 = vmatpush2.msra.mxu0 0.0
      %2479 = vmatprep.subr.mxu0 0.0
      %2480 = vmatpush2.msra.mxu0 0.0
      %2481 = vmatprep.subr.mxu0 0.0
      %2482 = vmatpush2.msra.mxu0 0.0
      %2483 = vmatprep.subr.mxu0 0.0
      %2484 = vmatpush2.msra.mxu0 0.0
      %2485 = vmatprep.subr.mxu0 0.0
      %2486 = vmatpush2.msra.mxu0 0.0
      %2487 = vmatprep.subr.mxu0 0.0
      %2488 = vmatpush2.msra.mxu0 0.0
      %2489 = vmatprep.subr.mxu0 0.0
      %2490 = vmatpush2.msra.mxu0 0.0
      %2491 = vmatprep.subr.mxu0 0.0
      %2492 = vmatpush2.msra.mxu0 0.0
      %2493 = vmatprep.subr.mxu0 0.0
      %2494 = vmatpush2.msra.mxu0 0.0
      %2495 = vmatprep.subr.mxu0 0.0
      %2496 = vmatpush2.msra.mxu0 0.0
      %2497 = vmatprep.subr.mxu0 0.0
      %2498 = vmatpush2.msra.mxu0 0.0
      %2499 = vmatprep.subr.mxu0 0.0
      %2500 = vmatpush2.msra.mxu0 0.0
      %2501 = vmatprep.subr.mxu0 0.0
      %2502 = vmatpush2.msra.mxu0 0.0
      %2503 = vmatprep.subr.mxu0 0.0
      %2504 = vmatpush2.msra.mxu0 0.0
      %2505 = vmatprep.subr.mxu0 0.0
      %2506 = vmatpush2.msra.mxu0 0.0
      %2507 = vmatprep.subr.mxu0 0.0
      %2508 = vmatpush2.msra.mxu0 0.0
      %2509 = vmatprep.mubr.f32.mxu0 0.0
      %2510 = vmatmul.mubr.f32.gmra.mxu0 %v2347
      %v2511 = vpop.f32.mrf.mxu0
      %v2512 = vadd.f32 0.0, %v2511
      %v2513 = vpop.f32.mrf.mxu0
      %2514 = vmatprep.mubr.f32.mxu0 0.0
      %2515 = vmatmul.mubr.f32.gmra.mxu0 %v2350
      %v2516 = vpop.f32.mrf.mxu0
      %v2517 = vadd.f32 0.0, %v2516
      %v2518 = vpop.f32.mrf.mxu0
      %2519 = vmatprep.mubr.f32.mxu0 0.0
      %2520 = vmatmul.mubr.f32.gmra.mxu0 %v2353
      %v2521 = vpop.f32.mrf.mxu0
      %v2522 = vadd.f32 0.0, %v2521
      %v2523 = vpop.f32.mrf.mxu0
      %2524 = vmatprep.mubr.f32.mxu0 0.0
      %2525 = vmatmul.mubr.f32.gmra.mxu0 %v2356
      %v2526 = vpop.f32.mrf.mxu0
      %v2527 = vadd.f32 0.0, %v2526
      %v2528 = vpop.f32.mrf.mxu0
      %2529 = vmatprep.mubr.f32.mxu0 0.0
      %2530 = vmatmul.mubr.f32.gmra.mxu0 %v2359
      %v2531 = vpop.f32.mrf.mxu0
      %v2532 = vadd.f32 0.0, %v2531
      %v2533 = vpop.f32.mrf.mxu0
      %2534 = vmatprep.mubr.f32.mxu0 0.0
      %2535 = vmatmul.mubr.f32.gmra.mxu0 %v2362
      %v2536 = vpop.f32.mrf.mxu0
      %v2537 = vadd.f32 0.0, %v2536
      %v2538 = vpop.f32.mrf.mxu0
      %2539 = vmatprep.mubr.f32.mxu0 0.0
      %2540 = vmatmul.mubr.f32.gmra.mxu0 %v2365
      %v2541 = vpop.f32.mrf.mxu0
      %v2542 = vadd.f32 0.0, %v2541
      %v2543 = vpop.f32.mrf.mxu0
      %2544 = vmatprep.mubr.f32.mxu0 0.0
      %2545 = vmatmul.mubr.f32.gmra.mxu0 %v2368
      %v2546 = vpop.f32.mrf.mxu0
      %v2547 = vadd.f32 0.0, %v2546
      %v2548 = vpop.f32.mrf.mxu0
      %2549 = vmatprep.mubr.f32.mxu0 0.0
      %2550 = vmatmul.mubr.f32.gmra.mxu0 %v2371
      %v2551 = vpop.f32.mrf.mxu0
      %v2552 = vadd.f32 0.0, %v2551
      %v2553 = vpop.f32.mrf.mxu0
      %2554 = vmatprep.mubr.f32.mxu0 0.0
      %2555 = vmatmul.mubr.f32.gmra.mxu0 %v2374
      %v2556 = vpop.f32.mrf.mxu0
      %v2557 = vadd.f32 0.0, %v2556
      %v2558 = vpop.f32.mrf.mxu0
      %2559 = vmatprep.mubr.f32.mxu0 0.0
      %2560 = vmatmul.mubr.f32.gmra.mxu0 %v2377
      %v2561 = vpop.f32.mrf.mxu0
      %v2562 = vadd.f32 0.0, %v2561
      %v2563 = vpop.f32.mrf.mxu0
      %2564 = vmatprep.mubr.f32.mxu0 0.0
      %2565 = vmatmul.mubr.f32.gmra.mxu0 %v2380
      %v2566 = vpop.f32.mrf.mxu0
      %v2567 = vadd.f32 0.0, %v2566
      %v2568 = vpop.f32.mrf.mxu0
      %2569 = vmatprep.mubr.f32.mxu0 0.0
      %2570 = vmatmul.mubr.f32.gmra.mxu0 %v2383
      %v2571 = vpop.f32.mrf.mxu0
      %v2572 = vadd.f32 0.0, %v2571
      %v2573 = vpop.f32.mrf.mxu0
      %2574 = vmatprep.mubr.f32.mxu0 0.0
      %2575 = vmatmul.mubr.f32.gmra.mxu0 %v2386
      %v2576 = vpop.f32.mrf.mxu0
      %v2577 = vadd.f32 0.0, %v2576
      %v2578 = vpop.f32.mrf.mxu0
      %2579 = vmatprep.mubr.f32.mxu0 0.0
      %2580 = vmatmul.mubr.f32.gmra.mxu0 %v2389
      %v2581 = vpop.f32.mrf.mxu0
      %v2582 = vadd.f32 0.0, %v2581
      %v2583 = vpop.f32.mrf.mxu0
      %2584 = vmatprep.mubr.f32.mxu0 0.0
      %2585 = vmatmul.mubr.f32.gmra.mxu0 %v2392
      %v2586 = vpop.f32.mrf.mxu0
      %v2587 = vadd.f32 0.0, %v2586
      %v2588 = vpop.f32.mrf.mxu0
      %2589 = vmatprep.mubr.f32.mxu0 0.0
      %2590 = vmatmul.mubr.f32.gmra.mxu0 %v2395
      %v2591 = vpop.f32.mrf.mxu0
      %v2592 = vadd.f32 0.0, %v2591
      %v2593 = vpop.f32.mrf.mxu0
      %2594 = vmatprep.mubr.f32.mxu0 0.0
      %2595 = vmatmul.mubr.f32.gmra.mxu0 %v2398
      %v2596 = vpop.f32.mrf.mxu0
      %v2597 = vadd.f32 0.0, %v2596
      %v2598 = vpop.f32.mrf.mxu0
      %2599 = vmatprep.mubr.f32.mxu0 0.0
      %2600 = vmatmul.mubr.f32.gmra.mxu0 %v2401
      %v2601 = vpop.f32.mrf.mxu0
      %v2602 = vadd.f32 0.0, %v2601
      %v2603 = vpop.f32.mrf.mxu0
      %2604 = vmatprep.mubr.f32.mxu0 0.0
      %2605 = vmatmul.mubr.f32.gmra.mxu0 %v2404
      %v2606 = vpop.f32.mrf.mxu0
      %v2607 = vadd.f32 0.0, %v2606
      %v2608 = vpop.f32.mrf.mxu0
      %2609 = vmatprep.mubr.f32.mxu0 0.0
      %2610 = vmatmul.mubr.f32.gmra.mxu0 %v2407
      %v2611 = vpop.f32.mrf.mxu0
      %v2612 = vadd.f32 0.0, %v2611
      %v2613 = vpop.f32.mrf.mxu0
      %2614 = vmatprep.mubr.f32.mxu0 0.0
      %2615 = vmatmul.mubr.f32.gmra.mxu0 %v2410
      %v2616 = vpop.f32.mrf.mxu0
      %v2617 = vadd.f32 0.0, %v2616
      %v2618 = vpop.f32.mrf.mxu0
      %2619 = vmatprep.mubr.f32.mxu0 0.0
      %2620 = vmatmul.mubr.f32.gmra.mxu0 %v2413
      %v2621 = vpop.f32.mrf.mxu0
      %v2622 = vadd.f32 0.0, %v2621
      %v2623 = vpop.f32.mrf.mxu0
      %2624 = vmatprep.mubr.f32.mxu0 0.0
      %2625 = vmatmul.mubr.f32.gmra.mxu0 %v2416
      %v2626 = vpop.f32.mrf.mxu0
      %v2627 = vadd.f32 0.0, %v2626
      %v2628 = vpop.f32.mrf.mxu0
      %2629 = vmatprep.mubr.f32.mxu0 0.0
      %2630 = vmatmul.mubr.f32.gmra.mxu0 %v2419
      %v2631 = vpop.f32.mrf.mxu0
      %v2632 = vadd.f32 0.0, %v2631
      %v2633 = vpop.f32.mrf.mxu0
      %2634 = vmatprep.mubr.f32.mxu0 0.0
      %2635 = vmatmul.mubr.f32.gmra.mxu0 %v2422
      %v2636 = vpop.f32.mrf.mxu0
      %v2637 = vadd.f32 0.0, %v2636
      %v2638 = vpop.f32.mrf.mxu0
      %2639 = vmatprep.mubr.f32.mxu0 0.0
      %2640 = vmatmul.mubr.f32.gmra.mxu0 %v2425
      %v2641 = vpop.f32.mrf.mxu0
      %v2642 = vadd.f32 0.0, %v2641
      %v2643 = vpop.f32.mrf.mxu0
      %2644 = vmatprep.mubr.f32.mxu0 0.0
      %2645 = vmatmul.mubr.f32.gmra.mxu0 %v2428
      %v2646 = vpop.f32.mrf.mxu0
      %v2647 = vadd.f32 0.0, %v2646
      %v2648 = vpop.f32.mrf.mxu0
      %2649 = vmatprep.mubr.f32.mxu0 0.0
      %2650 = vmatmul.mubr.f32.gmra.mxu0 %v2431
      %v2651 = vpop.f32.mrf.mxu0
      %v2652 = vadd.f32 0.0, %v2651
      %v2653 = vpop.f32.mrf.mxu0
      %2654 = vmatprep.mubr.f32.mxu0 0.0
      %2655 = vmatmul.mubr.f32.gmra.mxu0 %v2434
      %v2656 = vpop.f32.mrf.mxu0
      %v2657 = vadd.f32 0.0, %v2656
      %v2658 = vpop.f32.mrf.mxu0
      %2659 = vmatprep.mubr.f32.mxu0 0.0
      %2660 = vmatmul.mubr.f32.gmra.mxu0 %v2437
      %v2661 = vpop.f32.mrf.mxu0
      %v2662 = vadd.f32 0.0, %v2661
      %v2663 = vpop.f32.mrf.mxu0
      %2664 = vmatprep.mubr.f32.mxu0 0.0
      %2665 = vmatmul.mubr.f32.gmra.mxu0 %v2440
      %v2666 = vpop.f32.mrf.mxu0
      %v2667 = vadd.f32 0.0, %v2666
      %v2668 = vpop.f32.mrf.mxu0
      %2669 = vdwg.mxu0
      %v2670 = vadd.f32 %v2280, %v2512
      %v2671 = vadd.f32 %v2281, %v2517
      %v2672 = vadd.f32 %v2282, %v2522
      %v2673 = vadd.f32 %v2283, %v2527
      %v2674 = vadd.f32 %v2284, %v2532
      %v2675 = vadd.f32 %v2285, %v2537
      %v2676 = vadd.f32 %v2286, %v2542
      %v2677 = vadd.f32 %v2287, %v2547
      %v2678 = vadd.f32 %v2288, %v2552
      %v2679 = vadd.f32 %v2289, %v2557
      %v2680 = vadd.f32 %v2290, %v2562
      %v2681 = vadd.f32 %v2291, %v2567
      %v2682 = vadd.f32 %v2292, %v2572
      %v2683 = vadd.f32 %v2293, %v2577
      %v2684 = vadd.f32 %v2294, %v2582
      %v2685 = vadd.f32 %v2295, %v2587
      %v2686 = vadd.f32 %v2296, %v2592
      %v2687 = vadd.f32 %v2297, %v2597
      %v2688 = vadd.f32 %v2298, %v2602
      %v2689 = vadd.f32 %v2299, %v2607
      %v2690 = vadd.f32 %v2300, %v2612
      %v2691 = vadd.f32 %v2301, %v2617
      %v2692 = vadd.f32 %v2302, %v2622
      %v2693 = vadd.f32 %v2303, %v2627
      %v2694 = vadd.f32 %v2304, %v2632
      %v2695 = vadd.f32 %v2305, %v2637
      %v2696 = vadd.f32 %v2306, %v2642
      %v2697 = vadd.f32 %v2307, %v2647
      %v2698 = vadd.f32 %v2308, %v2652
      %v2699 = vadd.f32 %v2309, %v2657
      %v2700 = vadd.f32 %v2310, %v2662
      %v2701 = vadd.f32 %v2311, %v2667
      %s2702 = scalar_lea.vmem [#allocation2], 48
      %v2703 = vld [vmem:[%s2702] sm:$0xff]
      %v2704 = vld [vmem:[%s2702 + $0x8] sm:$0xff]
      %v2705 = vld [vmem:[%s2702 + $0x18] sm:$0xff]
      %v2706 = vld [vmem:[%s2702 + $0x20] sm:$0xff]
      %v2707 = vld [vmem:[%s2702 + $0x30] sm:$0xff]
      %v2708 = vld [vmem:[%s2702 + $0x38] sm:$0xff]
      %v2709 = vld [vmem:[%s2702 + $0x48] sm:$0xff]
      %v2710 = vld [vmem:[%s2702 + $0x50] sm:$0xff]
      %v2711 = vld [vmem:[%s2702 + $0x60] sm:$0xff]
      %v2712 = vld [vmem:[%s2702 + $0x68] sm:$0xff]
      %v2713 = vld [vmem:[%s2702 + $0x78] sm:$0xff]
      %v2714 = vld [vmem:[%s2702 + $0x80] sm:$0xff]
      %v2715 = vld [vmem:[%s2702 + $0x90] sm:$0xff]
      %v2716 = vld [vmem:[%s2702 + $0x98] sm:$0xff]
      %v2717 = vld [vmem:[%s2702 + $0xa8] sm:$0xff]
      %v2718 = vld [vmem:[%s2702 + $0xb0] sm:$0xff]
      %v2719 = vld [vmem:[%s2702 + $0xc0] sm:$0xff]
      %v2720 = vld [vmem:[%s2702 + $0xc8] sm:$0xff]
      %v2721 = vld [vmem:[%s2702 + $0xd8] sm:$0xff]
      %v2722 = vld [vmem:[%s2702 + $0xe0] sm:$0xff]
      %v2723 = vld [vmem:[%s2702 + $0xf0] sm:$0xff]
      %v2724 = vld [vmem:[%s2702 + $0xf8] sm:$0xff]
      %v2725 = vld [vmem:[%s2702 + $0x108] sm:$0xff]
      %v2726 = vld [vmem:[%s2702 + $0x110] sm:$0xff]
      %v2727 = vld [vmem:[%s2702 + $0x120] sm:$0xff]
      %v2728 = vld [vmem:[%s2702 + $0x128] sm:$0xff]
      %v2729 = vld [vmem:[%s2702 + $0x138] sm:$0xff]
      %v2730 = vld [vmem:[%s2702 + $0x140] sm:$0xff]
      %v2731 = vld [vmem:[%s2702 + $0x150] sm:$0xff]
      %v2732 = vld [vmem:[%s2702 + $0x158] sm:$0xff]
      %v2733 = vld [vmem:[%s2702 + $0x168] sm:$0xff]
      %v2734 = vld [vmem:[%s2702 + $0x170] sm:$0xff]
      %s2735 = scalar_lea.vmem %s2, 24
      %v2736 = vld [vmem:[%s2735] sm:$0xf]
      %v2738 = vsel %vm347, %v2703, 0
      %v2741 = vsel %vm347, %v2704, 0
      %v2744 = vsel %vm347, %v2705, 0
      %v2747 = vsel %vm347, %v2706, 0
      %v2750 = vsel %vm347, %v2707, 0
      %v2753 = vsel %vm347, %v2708, 0
      %v2756 = vsel %vm347, %v2709, 0
      %v2759 = vsel %vm347, %v2710, 0
      %v2762 = vsel %vm347, %v2711, 0
      %v2765 = vsel %vm347, %v2712, 0
      %v2768 = vsel %vm347, %v2713, 0
      %v2771 = vsel %vm347, %v2714, 0
      %v2774 = vsel %vm347, %v2715, 0
      %v2777 = vsel %vm347, %v2716, 0
      %v2780 = vsel %vm347, %v2717, 0
      %v2783 = vsel %vm347, %v2718, 0
      %v2786 = vsel %vm347, %v2719, 0
      %v2789 = vsel %vm347, %v2720, 0
      %v2792 = vsel %vm347, %v2721, 0
      %v2795 = vsel %vm347, %v2722, 0
      %v2798 = vsel %vm347, %v2723, 0
      %v2801 = vsel %vm347, %v2724, 0
      %v2804 = vsel %vm347, %v2725, 0
      %v2807 = vsel %vm347, %v2726, 0
      %v2810 = vsel %vm347, %v2727, 0
      %v2813 = vsel %vm347, %v2728, 0
      %v2816 = vsel %vm347, %v2729, 0
      %v2819 = vsel %vm347, %v2730, 0
      %v2822 = vsel %vm347, %v2731, 0
      %v2825 = vsel %vm347, %v2732, 0
      %v2828 = vsel %vm347, %v2733, 0
      %v2831 = vsel %vm347, %v2734, 0
      %v2834 = vsel %vm589, %v2736, 0
      %2836 = vmatprep.subr.mxu0 0.0
      %2837 = vmatpush1.msra.mxu0 0.0
      %2838 = vmatprep.subr.mxu0 0.0
      %2839 = vmatpush1.msra.mxu0 0.0
      %2840 = vmatprep.subr.mxu0 0.0
      %2841 = vmatpush1.msra.mxu0 0.0
      %2842 = vmatprep.subr.mxu0 0.0
      %2843 = vmatpush1.msra.mxu0 0.0
      %2844 = vmatprep.subr.mxu0 0.0
      %2845 = vmatpush1.msra.mxu0 0.0
      %2846 = vmatprep.subr.mxu0 0.0
      %2847 = vmatpush1.msra.mxu0 0.0
      %2848 = vmatprep.subr.mxu0 0.0
      %2849 = vmatpush1.msra.mxu0 0.0
      %2850 = vmatprep.subr.mxu0 0.0
      %2851 = vmatpush1.msra.mxu0 0.0
      %2852 = vmatprep.subr.mxu0 0.0
      %2853 = vmatpush1.msra.mxu0 0.0
      %2854 = vmatprep.subr.mxu0 0.0
      %2855 = vmatpush1.msra.mxu0 0.0
      %2856 = vmatprep.subr.mxu0 0.0
      %2857 = vmatpush1.msra.mxu0 0.0
      %2858 = vmatprep.subr.mxu0 0.0
      %2859 = vmatpush1.msra.mxu0 0.0
      %2860 = vmatprep.subr.mxu0 0.0
      %2861 = vmatpush1.msra.mxu0 0.0
      %2862 = vmatprep.subr.mxu0 0.0
      %2863 = vmatpush1.msra.mxu0 0.0
      %2864 = vmatprep.subr.mxu0 0.0
      %2865 = vmatpush1.msra.mxu0 0.0
      %2866 = vmatprep.subr.mxu0 0.0
      %2867 = vmatpush1.msra.mxu0 %v2834
      %2868 = vmatprep.subr.mxu0 0.0
      %2869 = vmatpush2.msra.mxu0 0.0
      %2870 = vmatprep.subr.mxu0 0.0
      %2871 = vmatpush2.msra.mxu0 0.0
      %2872 = vmatprep.subr.mxu0 0.0
      %2873 = vmatpush2.msra.mxu0 0.0
      %2874 = vmatprep.subr.mxu0 0.0
      %2875 = vmatpush2.msra.mxu0 0.0
      %2876 = vmatprep.subr.mxu0 0.0
      %2877 = vmatpush2.msra.mxu0 0.0
      %2878 = vmatprep.subr.mxu0 0.0
      %2879 = vmatpush2.msra.mxu0 0.0
      %2880 = vmatprep.subr.mxu0 0.0
      %2881 = vmatpush2.msra.mxu0 0.0
      %2882 = vmatprep.subr.mxu0 0.0
      %2883 = vmatpush2.msra.mxu0 0.0
      %2884 = vmatprep.subr.mxu0 0.0
      %2885 = vmatpush2.msra.mxu0 0.0
      %2886 = vmatprep.subr.mxu0 0.0
      %2887 = vmatpush2.msra.mxu0 0.0
      %2888 = vmatprep.subr.mxu0 0.0
      %2889 = vmatpush2.msra.mxu0 0.0
      %2890 = vmatprep.subr.mxu0 0.0
      %2891 = vmatpush2.msra.mxu0 0.0
      %2892 = vmatprep.subr.mxu0 0.0
      %2893 = vmatpush2.msra.mxu0 0.0
      %2894 = vmatprep.subr.mxu0 0.0
      %2895 = vmatpush2.msra.mxu0 0.0
      %2896 = vmatprep.subr.mxu0 0.0
      %2897 = vmatpush2.msra.mxu0 0.0
      %2898 = vmatprep.subr.mxu0 0.0
      %2899 = vmatpush2.msra.mxu0 0.0
      %2900 = vmatprep.mubr.f32.mxu0 0.0
      %2901 = vmatmul.mubr.f32.gmra.mxu0 %v2738
      %v2902 = vpop.f32.mrf.mxu0
      %v2903 = vadd.f32 0.0, %v2902
      %v2904 = vpop.f32.mrf.mxu0
      %2905 = vmatprep.mubr.f32.mxu0 0.0
      %2906 = vmatmul.mubr.f32.gmra.mxu0 %v2741
      %v2907 = vpop.f32.mrf.mxu0
      %v2908 = vadd.f32 0.0, %v2907
      %v2909 = vpop.f32.mrf.mxu0
      %2910 = vmatprep.mubr.f32.mxu0 0.0
      %2911 = vmatmul.mubr.f32.gmra.mxu0 %v2744
      %v2912 = vpop.f32.mrf.mxu0
      %v2913 = vadd.f32 0.0, %v2912
      %v2914 = vpop.f32.mrf.mxu0
      %2915 = vmatprep.mubr.f32.mxu0 0.0
      %2916 = vmatmul.mubr.f32.gmra.mxu0 %v2747
      %v2917 = vpop.f32.mrf.mxu0
      %v2918 = vadd.f32 0.0, %v2917
      %v2919 = vpop.f32.mrf.mxu0
      %2920 = vmatprep.mubr.f32.mxu0 0.0
      %2921 = vmatmul.mubr.f32.gmra.mxu0 %v2750
      %v2922 = vpop.f32.mrf.mxu0
      %v2923 = vadd.f32 0.0, %v2922
      %v2924 = vpop.f32.mrf.mxu0
      %2925 = vmatprep.mubr.f32.mxu0 0.0
      %2926 = vmatmul.mubr.f32.gmra.mxu0 %v2753
      %v2927 = vpop.f32.mrf.mxu0
      %v2928 = vadd.f32 0.0, %v2927
      %v2929 = vpop.f32.mrf.mxu0
      %2930 = vmatprep.mubr.f32.mxu0 0.0
      %2931 = vmatmul.mubr.f32.gmra.mxu0 %v2756
      %v2932 = vpop.f32.mrf.mxu0
      %v2933 = vadd.f32 0.0, %v2932
      %v2934 = vpop.f32.mrf.mxu0
      %2935 = vmatprep.mubr.f32.mxu0 0.0
      %2936 = vmatmul.mubr.f32.gmra.mxu0 %v2759
      %v2937 = vpop.f32.mrf.mxu0
      %v2938 = vadd.f32 0.0, %v2937
      %v2939 = vpop.f32.mrf.mxu0
      %2940 = vmatprep.mubr.f32.mxu0 0.0
      %2941 = vmatmul.mubr.f32.gmra.mxu0 %v2762
      %v2942 = vpop.f32.mrf.mxu0
      %v2943 = vadd.f32 0.0, %v2942
      %v2944 = vpop.f32.mrf.mxu0
      %2945 = vmatprep.mubr.f32.mxu0 0.0
      %2946 = vmatmul.mubr.f32.gmra.mxu0 %v2765
      %v2947 = vpop.f32.mrf.mxu0
      %v2948 = vadd.f32 0.0, %v2947
      %v2949 = vpop.f32.mrf.mxu0
      %2950 = vmatprep.mubr.f32.mxu0 0.0
      %2951 = vmatmul.mubr.f32.gmra.mxu0 %v2768
      %v2952 = vpop.f32.mrf.mxu0
      %v2953 = vadd.f32 0.0, %v2952
      %v2954 = vpop.f32.mrf.mxu0
      %2955 = vmatprep.mubr.f32.mxu0 0.0
      %2956 = vmatmul.mubr.f32.gmra.mxu0 %v2771
      %v2957 = vpop.f32.mrf.mxu0
      %v2958 = vadd.f32 0.0, %v2957
      %v2959 = vpop.f32.mrf.mxu0
      %2960 = vmatprep.mubr.f32.mxu0 0.0
      %2961 = vmatmul.mubr.f32.gmra.mxu0 %v2774
      %v2962 = vpop.f32.mrf.mxu0
      %v2963 = vadd.f32 0.0, %v2962
      %v2964 = vpop.f32.mrf.mxu0
      %2965 = vmatprep.mubr.f32.mxu0 0.0
      %2966 = vmatmul.mubr.f32.gmra.mxu0 %v2777
      %v2967 = vpop.f32.mrf.mxu0
      %v2968 = vadd.f32 0.0, %v2967
      %v2969 = vpop.f32.mrf.mxu0
      %2970 = vmatprep.mubr.f32.mxu0 0.0
      %2971 = vmatmul.mubr.f32.gmra.mxu0 %v2780
      %v2972 = vpop.f32.mrf.mxu0
      %v2973 = vadd.f32 0.0, %v2972
      %v2974 = vpop.f32.mrf.mxu0
      %2975 = vmatprep.mubr.f32.mxu0 0.0
      %2976 = vmatmul.mubr.f32.gmra.mxu0 %v2783
      %v2977 = vpop.f32.mrf.mxu0
      %v2978 = vadd.f32 0.0, %v2977
      %v2979 = vpop.f32.mrf.mxu0
      %2980 = vmatprep.mubr.f32.mxu0 0.0
      %2981 = vmatmul.mubr.f32.gmra.mxu0 %v2786
      %v2982 = vpop.f32.mrf.mxu0
      %v2983 = vadd.f32 0.0, %v2982
      %v2984 = vpop.f32.mrf.mxu0
      %2985 = vmatprep.mubr.f32.mxu0 0.0
      %2986 = vmatmul.mubr.f32.gmra.mxu0 %v2789
      %v2987 = vpop.f32.mrf.mxu0
      %v2988 = vadd.f32 0.0, %v2987
      %v2989 = vpop.f32.mrf.mxu0
      %2990 = vmatprep.mubr.f32.mxu0 0.0
      %2991 = vmatmul.mubr.f32.gmra.mxu0 %v2792
      %v2992 = vpop.f32.mrf.mxu0
      %v2993 = vadd.f32 0.0, %v2992
      %v2994 = vpop.f32.mrf.mxu0
      %2995 = vmatprep.mubr.f32.mxu0 0.0
      %2996 = vmatmul.mubr.f32.gmra.mxu0 %v2795
      %v2997 = vpop.f32.mrf.mxu0
      %v2998 = vadd.f32 0.0, %v2997
      %v2999 = vpop.f32.mrf.mxu0
      %3000 = vmatprep.mubr.f32.mxu0 0.0
      %3001 = vmatmul.mubr.f32.gmra.mxu0 %v2798
      %v3002 = vpop.f32.mrf.mxu0
      %v3003 = vadd.f32 0.0, %v3002
      %v3004 = vpop.f32.mrf.mxu0
      %3005 = vmatprep.mubr.f32.mxu0 0.0
      %3006 = vmatmul.mubr.f32.gmra.mxu0 %v2801
      %v3007 = vpop.f32.mrf.mxu0
      %v3008 = vadd.f32 0.0, %v3007
      %v3009 = vpop.f32.mrf.mxu0
      %3010 = vmatprep.mubr.f32.mxu0 0.0
      %3011 = vmatmul.mubr.f32.gmra.mxu0 %v2804
      %v3012 = vpop.f32.mrf.mxu0
      %v3013 = vadd.f32 0.0, %v3012
      %v3014 = vpop.f32.mrf.mxu0
      %3015 = vmatprep.mubr.f32.mxu0 0.0
      %3016 = vmatmul.mubr.f32.gmra.mxu0 %v2807
      %v3017 = vpop.f32.mrf.mxu0
      %v3018 = vadd.f32 0.0, %v3017
      %v3019 = vpop.f32.mrf.mxu0
      %3020 = vmatprep.mubr.f32.mxu0 0.0
      %3021 = vmatmul.mubr.f32.gmra.mxu0 %v2810
      %v3022 = vpop.f32.mrf.mxu0
      %v3023 = vadd.f32 0.0, %v3022
      %v3024 = vpop.f32.mrf.mxu0
      %3025 = vmatprep.mubr.f32.mxu0 0.0
      %3026 = vmatmul.mubr.f32.gmra.mxu0 %v2813
      %v3027 = vpop.f32.mrf.mxu0
      %v3028 = vadd.f32 0.0, %v3027
      %v3029 = vpop.f32.mrf.mxu0
      %3030 = vmatprep.mubr.f32.mxu0 0.0
      %3031 = vmatmul.mubr.f32.gmra.mxu0 %v2816
      %v3032 = vpop.f32.mrf.mxu0
      %v3033 = vadd.f32 0.0, %v3032
      %v3034 = vpop.f32.mrf.mxu0
      %3035 = vmatprep.mubr.f32.mxu0 0.0
      %3036 = vmatmul.mubr.f32.gmra.mxu0 %v2819
      %v3037 = vpop.f32.mrf.mxu0
      %v3038 = vadd.f32 0.0, %v3037
      %v3039 = vpop.f32.mrf.mxu0
      %3040 = vmatprep.mubr.f32.mxu0 0.0
      %3041 = vmatmul.mubr.f32.gmra.mxu0 %v2822
      %v3042 = vpop.f32.mrf.mxu0
      %v3043 = vadd.f32 0.0, %v3042
      %v3044 = vpop.f32.mrf.mxu0
      %3045 = vmatprep.mubr.f32.mxu0 0.0
      %3046 = vmatmul.mubr.f32.gmra.mxu0 %v2825
      %v3047 = vpop.f32.mrf.mxu0
      %v3048 = vadd.f32 0.0, %v3047
      %v3049 = vpop.f32.mrf.mxu0
      %3050 = vmatprep.mubr.f32.mxu0 0.0
      %3051 = vmatmul.mubr.f32.gmra.mxu0 %v2828
      %v3052 = vpop.f32.mrf.mxu0
      %v3053 = vadd.f32 0.0, %v3052
      %v3054 = vpop.f32.mrf.mxu0
      %3055 = vmatprep.mubr.f32.mxu0 0.0
      %3056 = vmatmul.mubr.f32.gmra.mxu0 %v2831
      %v3057 = vpop.f32.mrf.mxu0
      %v3058 = vadd.f32 0.0, %v3057
      %v3059 = vpop.f32.mrf.mxu0
      %3060 = vdwg.mxu0
      %v3061 = vadd.f32 %v2670, %v2903
      %v3062 = vadd.f32 %v2671, %v2908
      %v3063 = vadd.f32 %v2672, %v2913
      %v3064 = vadd.f32 %v2673, %v2918
      %v3065 = vadd.f32 %v2674, %v2923
      %v3066 = vadd.f32 %v2675, %v2928
      %v3067 = vadd.f32 %v2676, %v2933
      %v3068 = vadd.f32 %v2677, %v2938
      %v3069 = vadd.f32 %v2678, %v2943
      %v3070 = vadd.f32 %v2679, %v2948
      %v3071 = vadd.f32 %v2680, %v2953
      %v3072 = vadd.f32 %v2681, %v2958
      %v3073 = vadd.f32 %v2682, %v2963
      %v3074 = vadd.f32 %v2683, %v2968
      %v3075 = vadd.f32 %v2684, %v2973
      %v3076 = vadd.f32 %v2685, %v2978
      %v3077 = vadd.f32 %v2686, %v2983
      %v3078 = vadd.f32 %v2687, %v2988
      %v3079 = vadd.f32 %v2688, %v2993
      %v3080 = vadd.f32 %v2689, %v2998
      %v3081 = vadd.f32 %v2690, %v3003
      %v3082 = vadd.f32 %v2691, %v3008
      %v3083 = vadd.f32 %v2692, %v3013
      %v3084 = vadd.f32 %v2693, %v3018
      %v3085 = vadd.f32 %v2694, %v3023
      %v3086 = vadd.f32 %v2695, %v3028
      %v3087 = vadd.f32 %v2696, %v3033
      %v3088 = vadd.f32 %v2697, %v3038
      %v3089 = vadd.f32 %v2698, %v3043
      %v3090 = vadd.f32 %v2699, %v3048
      %v3091 = vadd.f32 %v2700, %v3053
      %v3092 = vadd.f32 %v2701, %v3058
      %v3093 = vld [vmem:[%s2702 + $0x1] sm:$0xff]
      %v3094 = vld [vmem:[%s2702 + $0x9] sm:$0xff]
      %v3095 = vld [vmem:[%s2702 + $0x19] sm:$0xff]
      %v3096 = vld [vmem:[%s2702 + $0x21] sm:$0xff]
      %v3097 = vld [vmem:[%s2702 + $0x31] sm:$0xff]
      %v3098 = vld [vmem:[%s2702 + $0x39] sm:$0xff]
      %v3099 = vld [vmem:[%s2702 + $0x49] sm:$0xff]
      %v3100 = vld [vmem:[%s2702 + $0x51] sm:$0xff]
      %v3101 = vld [vmem:[%s2702 + $0x61] sm:$0xff]
      %v3102 = vld [vmem:[%s2702 + $0x69] sm:$0xff]
      %v3103 = vld [vmem:[%s2702 + $0x79] sm:$0xff]
      %v3104 = vld [vmem:[%s2702 + $0x81] sm:$0xff]
      %v3105 = vld [vmem:[%s2702 + $0x91] sm:$0xff]
      %v3106 = vld [vmem:[%s2702 + $0x99] sm:$0xff]
      %v3107 = vld [vmem:[%s2702 + $0xa9] sm:$0xff]
      %v3108 = vld [vmem:[%s2702 + $0xb1] sm:$0xff]
      %v3109 = vld [vmem:[%s2702 + $0xc1] sm:$0xff]
      %v3110 = vld [vmem:[%s2702 + $0xc9] sm:$0xff]
      %v3111 = vld [vmem:[%s2702 + $0xd9] sm:$0xff]
      %v3112 = vld [vmem:[%s2702 + $0xe1] sm:$0xff]
      %v3113 = vld [vmem:[%s2702 + $0xf1] sm:$0xff]
      %v3114 = vld [vmem:[%s2702 + $0xf9] sm:$0xff]
      %v3115 = vld [vmem:[%s2702 + $0x109] sm:$0xff]
      %v3116 = vld [vmem:[%s2702 + $0x111] sm:$0xff]
      %v3117 = vld [vmem:[%s2702 + $0x121] sm:$0xff]
      %v3118 = vld [vmem:[%s2702 + $0x129] sm:$0xff]
      %v3119 = vld [vmem:[%s2702 + $0x139] sm:$0xff]
      %v3120 = vld [vmem:[%s2702 + $0x141] sm:$0xff]
      %v3121 = vld [vmem:[%s2702 + $0x151] sm:$0xff]
      %v3122 = vld [vmem:[%s2702 + $0x159] sm:$0xff]
      %v3123 = vld [vmem:[%s2702 + $0x169] sm:$0xff]
      %v3124 = vld [vmem:[%s2702 + $0x171] sm:$0xff]
      %s3125 = scalar_lea.vmem %s2, 28
      %v3126 = vld [vmem:[%s3125] sm:$0xf]
      %v3128 = vsel %vm347, %v3093, 0
      %v3131 = vsel %vm347, %v3094, 0
      %v3134 = vsel %vm347, %v3095, 0
      %v3137 = vsel %vm347, %v3096, 0
      %v3140 = vsel %vm347, %v3097, 0
      %v3143 = vsel %vm347, %v3098, 0
      %v3146 = vsel %vm347, %v3099, 0
      %v3149 = vsel %vm347, %v3100, 0
      %v3152 = vsel %vm347, %v3101, 0
      %v3155 = vsel %vm347, %v3102, 0
      %v3158 = vsel %vm347, %v3103, 0
      %v3161 = vsel %vm347, %v3104, 0
      %v3164 = vsel %vm347, %v3105, 0
      %v3167 = vsel %vm347, %v3106, 0
      %v3170 = vsel %vm347, %v3107, 0
      %v3173 = vsel %vm347, %v3108, 0
      %v3176 = vsel %vm347, %v3109, 0
      %v3179 = vsel %vm347, %v3110, 0
      %v3182 = vsel %vm347, %v3111, 0
      %v3185 = vsel %vm347, %v3112, 0
      %v3188 = vsel %vm347, %v3113, 0
      %v3191 = vsel %vm347, %v3114, 0
      %v3194 = vsel %vm347, %v3115, 0
      %v3197 = vsel %vm347, %v3116, 0
      %v3200 = vsel %vm347, %v3117, 0
      %v3203 = vsel %vm347, %v3118, 0
      %v3206 = vsel %vm347, %v3119, 0
      %v3209 = vsel %vm347, %v3120, 0
      %v3212 = vsel %vm347, %v3121, 0
      %v3215 = vsel %vm347, %v3122, 0
      %v3218 = vsel %vm347, %v3123, 0
      %v3221 = vsel %vm347, %v3124, 0
      %v3224 = vsel %vm589, %v3126, 0
      %3226 = vmatprep.subr.mxu0 0.0
      %3227 = vmatpush1.msra.mxu0 0.0
      %3228 = vmatprep.subr.mxu0 0.0
      %3229 = vmatpush1.msra.mxu0 0.0
      %3230 = vmatprep.subr.mxu0 0.0
      %3231 = vmatpush1.msra.mxu0 0.0
      %3232 = vmatprep.subr.mxu0 0.0
      %3233 = vmatpush1.msra.mxu0 0.0
      %3234 = vmatprep.subr.mxu0 0.0
      %3235 = vmatpush1.msra.mxu0 0.0
      %3236 = vmatprep.subr.mxu0 0.0
      %3237 = vmatpush1.msra.mxu0 0.0
      %3238 = vmatprep.subr.mxu0 0.0
      %3239 = vmatpush1.msra.mxu0 0.0
      %3240 = vmatprep.subr.mxu0 0.0
      %3241 = vmatpush1.msra.mxu0 0.0
      %3242 = vmatprep.subr.mxu0 0.0
      %3243 = vmatpush1.msra.mxu0 0.0
      %3244 = vmatprep.subr.mxu0 0.0
      %3245 = vmatpush1.msra.mxu0 0.0
      %3246 = vmatprep.subr.mxu0 0.0
      %3247 = vmatpush1.msra.mxu0 0.0
      %3248 = vmatprep.subr.mxu0 0.0
      %3249 = vmatpush1.msra.mxu0 0.0
      %3250 = vmatprep.subr.mxu0 0.0
      %3251 = vmatpush1.msra.mxu0 0.0
      %3252 = vmatprep.subr.mxu0 0.0
      %3253 = vmatpush1.msra.mxu0 0.0
      %3254 = vmatprep.subr.mxu0 0.0
      %3255 = vmatpush1.msra.mxu0 0.0
      %3256 = vmatprep.subr.mxu0 0.0
      %3257 = vmatpush1.msra.mxu0 %v3224
      %3258 = vmatprep.subr.mxu0 0.0
      %3259 = vmatpush2.msra.mxu0 0.0
      %3260 = vmatprep.subr.mxu0 0.0
      %3261 = vmatpush2.msra.mxu0 0.0
      %3262 = vmatprep.subr.mxu0 0.0
      %3263 = vmatpush2.msra.mxu0 0.0
      %3264 = vmatprep.subr.mxu0 0.0
      %3265 = vmatpush2.msra.mxu0 0.0
      %3266 = vmatprep.subr.mxu0 0.0
      %3267 = vmatpush2.msra.mxu0 0.0
      %3268 = vmatprep.subr.mxu0 0.0
      %3269 = vmatpush2.msra.mxu0 0.0
      %3270 = vmatprep.subr.mxu0 0.0
      %3271 = vmatpush2.msra.mxu0 0.0
      %3272 = vmatprep.subr.mxu0 0.0
      %3273 = vmatpush2.msra.mxu0 0.0
      %3274 = vmatprep.subr.mxu0 0.0
      %3275 = vmatpush2.msra.mxu0 0.0
      %3276 = vmatprep.subr.mxu0 0.0
      %3277 = vmatpush2.msra.mxu0 0.0
      %3278 = vmatprep.subr.mxu0 0.0
      %3279 = vmatpush2.msra.mxu0 0.0
      %3280 = vmatprep.subr.mxu0 0.0
      %3281 = vmatpush2.msra.mxu0 0.0
      %3282 = vmatprep.subr.mxu0 0.0
      %3283 = vmatpush2.msra.mxu0 0.0
      %3284 = vmatprep.subr.mxu0 0.0
      %3285 = vmatpush2.msra.mxu0 0.0
      %3286 = vmatprep.subr.mxu0 0.0
      %3287 = vmatpush2.msra.mxu0 0.0
      %3288 = vmatprep.subr.mxu0 0.0
      %3289 = vmatpush2.msra.mxu0 0.0
      %3290 = vmatprep.mubr.f32.mxu0 0.0
      %3291 = vmatmul.mubr.f32.gmra.mxu0 %v3128
      %v3292 = vpop.f32.mrf.mxu0
      %v3293 = vadd.f32 0.0, %v3292
      %v3294 = vpop.f32.mrf.mxu0
      %3295 = vmatprep.mubr.f32.mxu0 0.0
      %3296 = vmatmul.mubr.f32.gmra.mxu0 %v3131
      %v3297 = vpop.f32.mrf.mxu0
      %v3298 = vadd.f32 0.0, %v3297
      %v3299 = vpop.f32.mrf.mxu0
      %3300 = vmatprep.mubr.f32.mxu0 0.0
      %3301 = vmatmul.mubr.f32.gmra.mxu0 %v3134
      %v3302 = vpop.f32.mrf.mxu0
      %v3303 = vadd.f32 0.0, %v3302
      %v3304 = vpop.f32.mrf.mxu0
      %3305 = vmatprep.mubr.f32.mxu0 0.0
      %3306 = vmatmul.mubr.f32.gmra.mxu0 %v3137
      %v3307 = vpop.f32.mrf.mxu0
      %v3308 = vadd.f32 0.0, %v3307
      %v3309 = vpop.f32.mrf.mxu0
      %3310 = vmatprep.mubr.f32.mxu0 0.0
      %3311 = vmatmul.mubr.f32.gmra.mxu0 %v3140
      %v3312 = vpop.f32.mrf.mxu0
      %v3313 = vadd.f32 0.0, %v3312
      %v3314 = vpop.f32.mrf.mxu0
      %3315 = vmatprep.mubr.f32.mxu0 0.0
      %3316 = vmatmul.mubr.f32.gmra.mxu0 %v3143
      %v3317 = vpop.f32.mrf.mxu0
      %v3318 = vadd.f32 0.0, %v3317
      %v3319 = vpop.f32.mrf.mxu0
      %3320 = vmatprep.mubr.f32.mxu0 0.0
      %3321 = vmatmul.mubr.f32.gmra.mxu0 %v3146
      %v3322 = vpop.f32.mrf.mxu0
      %v3323 = vadd.f32 0.0, %v3322
      %v3324 = vpop.f32.mrf.mxu0
      %3325 = vmatprep.mubr.f32.mxu0 0.0
      %3326 = vmatmul.mubr.f32.gmra.mxu0 %v3149
      %v3327 = vpop.f32.mrf.mxu0
      %v3328 = vadd.f32 0.0, %v3327
      %v3329 = vpop.f32.mrf.mxu0
      %3330 = vmatprep.mubr.f32.mxu0 0.0
      %3331 = vmatmul.mubr.f32.gmra.mxu0 %v3152
      %v3332 = vpop.f32.mrf.mxu0
      %v3333 = vadd.f32 0.0, %v3332
      %v3334 = vpop.f32.mrf.mxu0
      %3335 = vmatprep.mubr.f32.mxu0 0.0
      %3336 = vmatmul.mubr.f32.gmra.mxu0 %v3155
      %v3337 = vpop.f32.mrf.mxu0
      %v3338 = vadd.f32 0.0, %v3337
      %v3339 = vpop.f32.mrf.mxu0
      %3340 = vmatprep.mubr.f32.mxu0 0.0
      %3341 = vmatmul.mubr.f32.gmra.mxu0 %v3158
      %v3342 = vpop.f32.mrf.mxu0
      %v3343 = vadd.f32 0.0, %v3342
      %v3344 = vpop.f32.mrf.mxu0
      %3345 = vmatprep.mubr.f32.mxu0 0.0
      %3346 = vmatmul.mubr.f32.gmra.mxu0 %v3161
      %v3347 = vpop.f32.mrf.mxu0
      %v3348 = vadd.f32 0.0, %v3347
      %v3349 = vpop.f32.mrf.mxu0
      %3350 = vmatprep.mubr.f32.mxu0 0.0
      %3351 = vmatmul.mubr.f32.gmra.mxu0 %v3164
      %v3352 = vpop.f32.mrf.mxu0
      %v3353 = vadd.f32 0.0, %v3352
      %v3354 = vpop.f32.mrf.mxu0
      %3355 = vmatprep.mubr.f32.mxu0 0.0
      %3356 = vmatmul.mubr.f32.gmra.mxu0 %v3167
      %v3357 = vpop.f32.mrf.mxu0
      %v3358 = vadd.f32 0.0, %v3357
      %v3359 = vpop.f32.mrf.mxu0
      %3360 = vmatprep.mubr.f32.mxu0 0.0
      %3361 = vmatmul.mubr.f32.gmra.mxu0 %v3170
      %v3362 = vpop.f32.mrf.mxu0
      %v3363 = vadd.f32 0.0, %v3362
      %v3364 = vpop.f32.mrf.mxu0
      %3365 = vmatprep.mubr.f32.mxu0 0.0
      %3366 = vmatmul.mubr.f32.gmra.mxu0 %v3173
      %v3367 = vpop.f32.mrf.mxu0
      %v3368 = vadd.f32 0.0, %v3367
      %v3369 = vpop.f32.mrf.mxu0
      %3370 = vmatprep.mubr.f32.mxu0 0.0
      %3371 = vmatmul.mubr.f32.gmra.mxu0 %v3176
      %v3372 = vpop.f32.mrf.mxu0
      %v3373 = vadd.f32 0.0, %v3372
      %v3374 = vpop.f32.mrf.mxu0
      %3375 = vmatprep.mubr.f32.mxu0 0.0
      %3376 = vmatmul.mubr.f32.gmra.mxu0 %v3179
      %v3377 = vpop.f32.mrf.mxu0
      %v3378 = vadd.f32 0.0, %v3377
      %v3379 = vpop.f32.mrf.mxu0
      %3380 = vmatprep.mubr.f32.mxu0 0.0
      %3381 = vmatmul.mubr.f32.gmra.mxu0 %v3182
      %v3382 = vpop.f32.mrf.mxu0
      %v3383 = vadd.f32 0.0, %v3382
      %v3384 = vpop.f32.mrf.mxu0
      %3385 = vmatprep.mubr.f32.mxu0 0.0
      %3386 = vmatmul.mubr.f32.gmra.mxu0 %v3185
      %v3387 = vpop.f32.mrf.mxu0
      %v3388 = vadd.f32 0.0, %v3387
      %v3389 = vpop.f32.mrf.mxu0
      %3390 = vmatprep.mubr.f32.mxu0 0.0
      %3391 = vmatmul.mubr.f32.gmra.mxu0 %v3188
      %v3392 = vpop.f32.mrf.mxu0
      %v3393 = vadd.f32 0.0, %v3392
      %v3394 = vpop.f32.mrf.mxu0
      %3395 = vmatprep.mubr.f32.mxu0 0.0
      %3396 = vmatmul.mubr.f32.gmra.mxu0 %v3191
      %v3397 = vpop.f32.mrf.mxu0
      %v3398 = vadd.f32 0.0, %v3397
      %v3399 = vpop.f32.mrf.mxu0
      %3400 = vmatprep.mubr.f32.mxu0 0.0
      %3401 = vmatmul.mubr.f32.gmra.mxu0 %v3194
      %v3402 = vpop.f32.mrf.mxu0
      %v3403 = vadd.f32 0.0, %v3402
      %v3404 = vpop.f32.mrf.mxu0
      %3405 = vmatprep.mubr.f32.mxu0 0.0
      %3406 = vmatmul.mubr.f32.gmra.mxu0 %v3197
      %v3407 = vpop.f32.mrf.mxu0
      %v3408 = vadd.f32 0.0, %v3407
      %v3409 = vpop.f32.mrf.mxu0
      %3410 = vmatprep.mubr.f32.mxu0 0.0
      %3411 = vmatmul.mubr.f32.gmra.mxu0 %v3200
      %v3412 = vpop.f32.mrf.mxu0
      %v3413 = vadd.f32 0.0, %v3412
      %v3414 = vpop.f32.mrf.mxu0
      %3415 = vmatprep.mubr.f32.mxu0 0.0
      %3416 = vmatmul.mubr.f32.gmra.mxu0 %v3203
      %v3417 = vpop.f32.mrf.mxu0
      %v3418 = vadd.f32 0.0, %v3417
      %v3419 = vpop.f32.mrf.mxu0
      %3420 = vmatprep.mubr.f32.mxu0 0.0
      %3421 = vmatmul.mubr.f32.gmra.mxu0 %v3206
      %v3422 = vpop.f32.mrf.mxu0
      %v3423 = vadd.f32 0.0, %v3422
      %v3424 = vpop.f32.mrf.mxu0
      %3425 = vmatprep.mubr.f32.mxu0 0.0
      %3426 = vmatmul.mubr.f32.gmra.mxu0 %v3209
      %v3427 = vpop.f32.mrf.mxu0
      %v3428 = vadd.f32 0.0, %v3427
      %v3429 = vpop.f32.mrf.mxu0
      %3430 = vmatprep.mubr.f32.mxu0 0.0
      %3431 = vmatmul.mubr.f32.gmra.mxu0 %v3212
      %v3432 = vpop.f32.mrf.mxu0
      %v3433 = vadd.f32 0.0, %v3432
      %v3434 = vpop.f32.mrf.mxu0
      %3435 = vmatprep.mubr.f32.mxu0 0.0
      %3436 = vmatmul.mubr.f32.gmra.mxu0 %v3215
      %v3437 = vpop.f32.mrf.mxu0
      %v3438 = vadd.f32 0.0, %v3437
      %v3439 = vpop.f32.mrf.mxu0
      %3440 = vmatprep.mubr.f32.mxu0 0.0
      %3441 = vmatmul.mubr.f32.gmra.mxu0 %v3218
      %v3442 = vpop.f32.mrf.mxu0
      %v3443 = vadd.f32 0.0, %v3442
      %v3444 = vpop.f32.mrf.mxu0
      %3445 = vmatprep.mubr.f32.mxu0 0.0
      %3446 = vmatmul.mubr.f32.gmra.mxu0 %v3221
      %v3447 = vpop.f32.mrf.mxu0
      %v3448 = vadd.f32 0.0, %v3447
      %v3449 = vpop.f32.mrf.mxu0
      %3450 = vdwg.mxu0
      %v3451 = vadd.f32 %v3061, %v3293
      %v3452 = vadd.f32 %v3062, %v3298
      %v3453 = vadd.f32 %v3063, %v3303
      %v3454 = vadd.f32 %v3064, %v3308
      %v3455 = vadd.f32 %v3065, %v3313
      %v3456 = vadd.f32 %v3066, %v3318
      %v3457 = vadd.f32 %v3067, %v3323
      %v3458 = vadd.f32 %v3068, %v3328
      %v3459 = vadd.f32 %v3069, %v3333
      %v3460 = vadd.f32 %v3070, %v3338
      %v3461 = vadd.f32 %v3071, %v3343
      %v3462 = vadd.f32 %v3072, %v3348
      %v3463 = vadd.f32 %v3073, %v3353
      %v3464 = vadd.f32 %v3074, %v3358
      %v3465 = vadd.f32 %v3075, %v3363
      %v3466 = vadd.f32 %v3076, %v3368
      %v3467 = vadd.f32 %v3077, %v3373
      %v3468 = vadd.f32 %v3078, %v3378
      %v3469 = vadd.f32 %v3079, %v3383
      %v3470 = vadd.f32 %v3080, %v3388
      %v3471 = vadd.f32 %v3081, %v3393
      %v3472 = vadd.f32 %v3082, %v3398
      %v3473 = vadd.f32 %v3083, %v3403
      %v3474 = vadd.f32 %v3084, %v3408
      %v3475 = vadd.f32 %v3085, %v3413
      %v3476 = vadd.f32 %v3086, %v3418
      %v3477 = vadd.f32 %v3087, %v3423
      %v3478 = vadd.f32 %v3088, %v3428
      %v3479 = vadd.f32 %v3089, %v3433
      %v3480 = vadd.f32 %v3090, %v3438
      %v3481 = vadd.f32 %v3091, %v3443
      %v3482 = vadd.f32 %v3092, %v3448
      %v3483 = vld [vmem:[%s2702 + $0x2] sm:$0xff]
      %v3484 = vld [vmem:[%s2702 + $0xa] sm:$0xff]
      %v3485 = vld [vmem:[%s2702 + $0x1a] sm:$0xff]
      %v3486 = vld [vmem:[%s2702 + $0x22] sm:$0xff]
      %v3487 = vld [vmem:[%s2702 + $0x32] sm:$0xff]
      %v3488 = vld [vmem:[%s2702 + $0x3a] sm:$0xff]
      %v3489 = vld [vmem:[%s2702 + $0x4a] sm:$0xff]
      %v3490 = vld [vmem:[%s2702 + $0x52] sm:$0xff]
      %v3491 = vld [vmem:[%s2702 + $0x62] sm:$0xff]
      %v3492 = vld [vmem:[%s2702 + $0x6a] sm:$0xff]
      %v3493 = vld [vmem:[%s2702 + $0x7a] sm:$0xff]
      %v3494 = vld [vmem:[%s2702 + $0x82] sm:$0xff]
      %v3495 = vld [vmem:[%s2702 + $0x92] sm:$0xff]
      %v3496 = vld [vmem:[%s2702 + $0x9a] sm:$0xff]
      %v3497 = vld [vmem:[%s2702 + $0xaa] sm:$0xff]
      %v3498 = vld [vmem:[%s2702 + $0xb2] sm:$0xff]
      %v3499 = vld [vmem:[%s2702 + $0xc2] sm:$0xff]
      %v3500 = vld [vmem:[%s2702 + $0xca] sm:$0xff]
      %v3501 = vld [vmem:[%s2702 + $0xda] sm:$0xff]
      %v3502 = vld [vmem:[%s2702 + $0xe2] sm:$0xff]
      %v3503 = vld [vmem:[%s2702 + $0xf2] sm:$0xff]
      %v3504 = vld [vmem:[%s2702 + $0xfa] sm:$0xff]
      %v3505 = vld [vmem:[%s2702 + $0x10a] sm:$0xff]
      %v3506 = vld [vmem:[%s2702 + $0x112] sm:$0xff]
      %v3507 = vld [vmem:[%s2702 + $0x122] sm:$0xff]
      %v3508 = vld [vmem:[%s2702 + $0x12a] sm:$0xff]
      %v3509 = vld [vmem:[%s2702 + $0x13a] sm:$0xff]
      %v3510 = vld [vmem:[%s2702 + $0x142] sm:$0xff]
      %v3511 = vld [vmem:[%s2702 + $0x152] sm:$0xff]
      %v3512 = vld [vmem:[%s2702 + $0x15a] sm:$0xff]
      %v3513 = vld [vmem:[%s2702 + $0x16a] sm:$0xff]
      %v3514 = vld [vmem:[%s2702 + $0x172] sm:$0xff]
      %s3515 = scalar_lea.vmem %s2, 32
      %v3516 = vld [vmem:[%s3515] sm:$0xf]
      %v3518 = vsel %vm347, %v3483, 0
      %v3521 = vsel %vm347, %v3484, 0
      %v3524 = vsel %vm347, %v3485, 0
      %v3527 = vsel %vm347, %v3486, 0
      %v3530 = vsel %vm347, %v3487, 0
      %v3533 = vsel %vm347, %v3488, 0
      %v3536 = vsel %vm347, %v3489, 0
      %v3539 = vsel %vm347, %v3490, 0
      %v3542 = vsel %vm347, %v3491, 0
      %v3545 = vsel %vm347, %v3492, 0
      %v3548 = vsel %vm347, %v3493, 0
      %v3551 = vsel %vm347, %v3494, 0
      %v3554 = vsel %vm347, %v3495, 0
      %v3557 = vsel %vm347, %v3496, 0
      %v3560 = vsel %vm347, %v3497, 0
      %v3563 = vsel %vm347, %v3498, 0
      %v3566 = vsel %vm347, %v3499, 0
      %v3569 = vsel %vm347, %v3500, 0
      %v3572 = vsel %vm347, %v3501, 0
      %v3575 = vsel %vm347, %v3502, 0
      %v3578 = vsel %vm347, %v3503, 0
      %v3581 = vsel %vm347, %v3504, 0
      %v3584 = vsel %vm347, %v3505, 0
      %v3587 = vsel %vm347, %v3506, 0
      %v3590 = vsel %vm347, %v3507, 0
      %v3593 = vsel %vm347, %v3508, 0
      %v3596 = vsel %vm347, %v3509, 0
      %v3599 = vsel %vm347, %v3510, 0
      %v3602 = vsel %vm347, %v3511, 0
      %v3605 = vsel %vm347, %v3512, 0
      %v3608 = vsel %vm347, %v3513, 0
      %v3611 = vsel %vm347, %v3514, 0
      %v3614 = vsel %vm589, %v3516, 0
      %3616 = vmatprep.subr.mxu0 0.0
      %3617 = vmatpush1.msra.mxu0 0.0
      %3618 = vmatprep.subr.mxu0 0.0
      %3619 = vmatpush1.msra.mxu0 0.0
      %3620 = vmatprep.subr.mxu0 0.0
      %3621 = vmatpush1.msra.mxu0 0.0
      %3622 = vmatprep.subr.mxu0 0.0
      %3623 = vmatpush1.msra.mxu0 0.0
      %3624 = vmatprep.subr.mxu0 0.0
      %3625 = vmatpush1.msra.mxu0 0.0
      %3626 = vmatprep.subr.mxu0 0.0
      %3627 = vmatpush1.msra.mxu0 0.0
      %3628 = vmatprep.subr.mxu0 0.0
      %3629 = vmatpush1.msra.mxu0 0.0
      %3630 = vmatprep.subr.mxu0 0.0
      %3631 = vmatpush1.msra.mxu0 0.0
      %3632 = vmatprep.subr.mxu0 0.0
      %3633 = vmatpush1.msra.mxu0 0.0
      %3634 = vmatprep.subr.mxu0 0.0
      %3635 = vmatpush1.msra.mxu0 0.0
      %3636 = vmatprep.subr.mxu0 0.0
      %3637 = vmatpush1.msra.mxu0 0.0
      %3638 = vmatprep.subr.mxu0 0.0
      %3639 = vmatpush1.msra.mxu0 0.0
      %3640 = vmatprep.subr.mxu0 0.0
      %3641 = vmatpush1.msra.mxu0 0.0
      %3642 = vmatprep.subr.mxu0 0.0
      %3643 = vmatpush1.msra.mxu0 0.0
      %3644 = vmatprep.subr.mxu0 0.0
      %3645 = vmatpush1.msra.mxu0 0.0
      %3646 = vmatprep.subr.mxu0 0.0
      %3647 = vmatpush1.msra.mxu0 %v3614
      %3648 = vmatprep.subr.mxu0 0.0
      %3649 = vmatpush2.msra.mxu0 0.0
      %3650 = vmatprep.subr.mxu0 0.0
      %3651 = vmatpush2.msra.mxu0 0.0
      %3652 = vmatprep.subr.mxu0 0.0
      %3653 = vmatpush2.msra.mxu0 0.0
      %3654 = vmatprep.subr.mxu0 0.0
      %3655 = vmatpush2.msra.mxu0 0.0
      %3656 = vmatprep.subr.mxu0 0.0
      %3657 = vmatpush2.msra.mxu0 0.0
      %3658 = vmatprep.subr.mxu0 0.0
      %3659 = vmatpush2.msra.mxu0 0.0
      %3660 = vmatprep.subr.mxu0 0.0
      %3661 = vmatpush2.msra.mxu0 0.0
      %3662 = vmatprep.subr.mxu0 0.0
      %3663 = vmatpush2.msra.mxu0 0.0
      %3664 = vmatprep.subr.mxu0 0.0
      %3665 = vmatpush2.msra.mxu0 0.0
      %3666 = vmatprep.subr.mxu0 0.0
      %3667 = vmatpush2.msra.mxu0 0.0
      %3668 = vmatprep.subr.mxu0 0.0
      %3669 = vmatpush2.msra.mxu0 0.0
      %3670 = vmatprep.subr.mxu0 0.0
      %3671 = vmatpush2.msra.mxu0 0.0
      %3672 = vmatprep.subr.mxu0 0.0
      %3673 = vmatpush2.msra.mxu0 0.0
      %3674 = vmatprep.subr.mxu0 0.0
      %3675 = vmatpush2.msra.mxu0 0.0
      %3676 = vmatprep.subr.mxu0 0.0
      %3677 = vmatpush2.msra.mxu0 0.0
      %3678 = vmatprep.subr.mxu0 0.0
      %3679 = vmatpush2.msra.mxu0 0.0
      %3680 = vmatprep.mubr.f32.mxu0 0.0
      %3681 = vmatmul.mubr.f32.gmra.mxu0 %v3518
      %v3682 = vpop.f32.mrf.mxu0
      %v3683 = vadd.f32 0.0, %v3682
      %v3684 = vpop.f32.mrf.mxu0
      %3685 = vmatprep.mubr.f32.mxu0 0.0
      %3686 = vmatmul.mubr.f32.gmra.mxu0 %v3521
      %v3687 = vpop.f32.mrf.mxu0
      %v3688 = vadd.f32 0.0, %v3687
      %v3689 = vpop.f32.mrf.mxu0
      %3690 = vmatprep.mubr.f32.mxu0 0.0
      %3691 = vmatmul.mubr.f32.gmra.mxu0 %v3524
      %v3692 = vpop.f32.mrf.mxu0
      %v3693 = vadd.f32 0.0, %v3692
      %v3694 = vpop.f32.mrf.mxu0
      %3695 = vmatprep.mubr.f32.mxu0 0.0
      %3696 = vmatmul.mubr.f32.gmra.mxu0 %v3527
      %v3697 = vpop.f32.mrf.mxu0
      %v3698 = vadd.f32 0.0, %v3697
      %v3699 = vpop.f32.mrf.mxu0
      %3700 = vmatprep.mubr.f32.mxu0 0.0
      %3701 = vmatmul.mubr.f32.gmra.mxu0 %v3530
      %v3702 = vpop.f32.mrf.mxu0
      %v3703 = vadd.f32 0.0, %v3702
      %v3704 = vpop.f32.mrf.mxu0
      %3705 = vmatprep.mubr.f32.mxu0 0.0
      %3706 = vmatmul.mubr.f32.gmra.mxu0 %v3533
      %v3707 = vpop.f32.mrf.mxu0
      %v3708 = vadd.f32 0.0, %v3707
      %v3709 = vpop.f32.mrf.mxu0
      %3710 = vmatprep.mubr.f32.mxu0 0.0
      %3711 = vmatmul.mubr.f32.gmra.mxu0 %v3536
      %v3712 = vpop.f32.mrf.mxu0
      %v3713 = vadd.f32 0.0, %v3712
      %v3714 = vpop.f32.mrf.mxu0
      %3715 = vmatprep.mubr.f32.mxu0 0.0
      %3716 = vmatmul.mubr.f32.gmra.mxu0 %v3539
      %v3717 = vpop.f32.mrf.mxu0
      %v3718 = vadd.f32 0.0, %v3717
      %v3719 = vpop.f32.mrf.mxu0
      %3720 = vmatprep.mubr.f32.mxu0 0.0
      %3721 = vmatmul.mubr.f32.gmra.mxu0 %v3542
      %v3722 = vpop.f32.mrf.mxu0
      %v3723 = vadd.f32 0.0, %v3722
      %v3724 = vpop.f32.mrf.mxu0
      %3725 = vmatprep.mubr.f32.mxu0 0.0
      %3726 = vmatmul.mubr.f32.gmra.mxu0 %v3545
      %v3727 = vpop.f32.mrf.mxu0
      %v3728 = vadd.f32 0.0, %v3727
      %v3729 = vpop.f32.mrf.mxu0
      %3730 = vmatprep.mubr.f32.mxu0 0.0
      %3731 = vmatmul.mubr.f32.gmra.mxu0 %v3548
      %v3732 = vpop.f32.mrf.mxu0
      %v3733 = vadd.f32 0.0, %v3732
      %v3734 = vpop.f32.mrf.mxu0
      %3735 = vmatprep.mubr.f32.mxu0 0.0
      %3736 = vmatmul.mubr.f32.gmra.mxu0 %v3551
      %v3737 = vpop.f32.mrf.mxu0
      %v3738 = vadd.f32 0.0, %v3737
      %v3739 = vpop.f32.mrf.mxu0
      %3740 = vmatprep.mubr.f32.mxu0 0.0
      %3741 = vmatmul.mubr.f32.gmra.mxu0 %v3554
      %v3742 = vpop.f32.mrf.mxu0
      %v3743 = vadd.f32 0.0, %v3742
      %v3744 = vpop.f32.mrf.mxu0
      %3745 = vmatprep.mubr.f32.mxu0 0.0
      %3746 = vmatmul.mubr.f32.gmra.mxu0 %v3557
      %v3747 = vpop.f32.mrf.mxu0
      %v3748 = vadd.f32 0.0, %v3747
      %v3749 = vpop.f32.mrf.mxu0
      %3750 = vmatprep.mubr.f32.mxu0 0.0
      %3751 = vmatmul.mubr.f32.gmra.mxu0 %v3560
      %v3752 = vpop.f32.mrf.mxu0
      %v3753 = vadd.f32 0.0, %v3752
      %v3754 = vpop.f32.mrf.mxu0
      %3755 = vmatprep.mubr.f32.mxu0 0.0
      %3756 = vmatmul.mubr.f32.gmra.mxu0 %v3563
      %v3757 = vpop.f32.mrf.mxu0
      %v3758 = vadd.f32 0.0, %v3757
      %v3759 = vpop.f32.mrf.mxu0
      %3760 = vmatprep.mubr.f32.mxu0 0.0
      %3761 = vmatmul.mubr.f32.gmra.mxu0 %v3566
      %v3762 = vpop.f32.mrf.mxu0
      %v3763 = vadd.f32 0.0, %v3762
      %v3764 = vpop.f32.mrf.mxu0
      %3765 = vmatprep.mubr.f32.mxu0 0.0
      %3766 = vmatmul.mubr.f32.gmra.mxu0 %v3569
      %v3767 = vpop.f32.mrf.mxu0
      %v3768 = vadd.f32 0.0, %v3767
      %v3769 = vpop.f32.mrf.mxu0
      %3770 = vmatprep.mubr.f32.mxu0 0.0
      %3771 = vmatmul.mubr.f32.gmra.mxu0 %v3572
      %v3772 = vpop.f32.mrf.mxu0
      %v3773 = vadd.f32 0.0, %v3772
      %v3774 = vpop.f32.mrf.mxu0
      %3775 = vmatprep.mubr.f32.mxu0 0.0
      %3776 = vmatmul.mubr.f32.gmra.mxu0 %v3575
      %v3777 = vpop.f32.mrf.mxu0
      %v3778 = vadd.f32 0.0, %v3777
      %v3779 = vpop.f32.mrf.mxu0
      %3780 = vmatprep.mubr.f32.mxu0 0.0
      %3781 = vmatmul.mubr.f32.gmra.mxu0 %v3578
      %v3782 = vpop.f32.mrf.mxu0
      %v3783 = vadd.f32 0.0, %v3782
      %v3784 = vpop.f32.mrf.mxu0
      %3785 = vmatprep.mubr.f32.mxu0 0.0
      %3786 = vmatmul.mubr.f32.gmra.mxu0 %v3581
      %v3787 = vpop.f32.mrf.mxu0
      %v3788 = vadd.f32 0.0, %v3787
      %v3789 = vpop.f32.mrf.mxu0
      %3790 = vmatprep.mubr.f32.mxu0 0.0
      %3791 = vmatmul.mubr.f32.gmra.mxu0 %v3584
      %v3792 = vpop.f32.mrf.mxu0
      %v3793 = vadd.f32 0.0, %v3792
      %v3794 = vpop.f32.mrf.mxu0
      %3795 = vmatprep.mubr.f32.mxu0 0.0
      %3796 = vmatmul.mubr.f32.gmra.mxu0 %v3587
      %v3797 = vpop.f32.mrf.mxu0
      %v3798 = vadd.f32 0.0, %v3797
      %v3799 = vpop.f32.mrf.mxu0
      %3800 = vmatprep.mubr.f32.mxu0 0.0
      %3801 = vmatmul.mubr.f32.gmra.mxu0 %v3590
      %v3802 = vpop.f32.mrf.mxu0
      %v3803 = vadd.f32 0.0, %v3802
      %v3804 = vpop.f32.mrf.mxu0
      %3805 = vmatprep.mubr.f32.mxu0 0.0
      %3806 = vmatmul.mubr.f32.gmra.mxu0 %v3593
      %v3807 = vpop.f32.mrf.mxu0
      %v3808 = vadd.f32 0.0, %v3807
      %v3809 = vpop.f32.mrf.mxu0
      %3810 = vmatprep.mubr.f32.mxu0 0.0
      %3811 = vmatmul.mubr.f32.gmra.mxu0 %v3596
      %v3812 = vpop.f32.mrf.mxu0
      %v3813 = vadd.f32 0.0, %v3812
      %v3814 = vpop.f32.mrf.mxu0
      %3815 = vmatprep.mubr.f32.mxu0 0.0
      %3816 = vmatmul.mubr.f32.gmra.mxu0 %v3599
      %v3817 = vpop.f32.mrf.mxu0
      %v3818 = vadd.f32 0.0, %v3817
      %v3819 = vpop.f32.mrf.mxu0
      %3820 = vmatprep.mubr.f32.mxu0 0.0
      %3821 = vmatmul.mubr.f32.gmra.mxu0 %v3602
      %v3822 = vpop.f32.mrf.mxu0
      %v3823 = vadd.f32 0.0, %v3822
      %v3824 = vpop.f32.mrf.mxu0
      %3825 = vmatprep.mubr.f32.mxu0 0.0
      %3826 = vmatmul.mubr.f32.gmra.mxu0 %v3605
      %v3827 = vpop.f32.mrf.mxu0
      %v3828 = vadd.f32 0.0, %v3827
      %v3829 = vpop.f32.mrf.mxu0
      %3830 = vmatprep.mubr.f32.mxu0 0.0
      %3831 = vmatmul.mubr.f32.gmra.mxu0 %v3608
      %v3832 = vpop.f32.mrf.mxu0
      %v3833 = vadd.f32 0.0, %v3832
      %v3834 = vpop.f32.mrf.mxu0
      %3835 = vmatprep.mubr.f32.mxu0 0.0
      %3836 = vmatmul.mubr.f32.gmra.mxu0 %v3611
      %v3837 = vpop.f32.mrf.mxu0
      %v3838 = vadd.f32 0.0, %v3837
      %v3839 = vpop.f32.mrf.mxu0
      %3840 = vdwg.mxu0
      %v3841 = vadd.f32 %v3451, %v3683
      %v3842 = vadd.f32 %v3452, %v3688
      %v3843 = vadd.f32 %v3453, %v3693
      %v3844 = vadd.f32 %v3454, %v3698
      %v3845 = vadd.f32 %v3455, %v3703
      %v3846 = vadd.f32 %v3456, %v3708
      %v3847 = vadd.f32 %v3457, %v3713
      %v3848 = vadd.f32 %v3458, %v3718
      %v3849 = vadd.f32 %v3459, %v3723
      %v3850 = vadd.f32 %v3460, %v3728
      %v3851 = vadd.f32 %v3461, %v3733
      %v3852 = vadd.f32 %v3462, %v3738
      %v3853 = vadd.f32 %v3463, %v3743
      %v3854 = vadd.f32 %v3464, %v3748
      %v3855 = vadd.f32 %v3465, %v3753
      %v3856 = vadd.f32 %v3466, %v3758
      %v3857 = vadd.f32 %v3467, %v3763
      %v3858 = vadd.f32 %v3468, %v3768
      %v3859 = vadd.f32 %v3469, %v3773
      %v3860 = vadd.f32 %v3470, %v3778
      %v3861 = vadd.f32 %v3471, %v3783
      %v3862 = vadd.f32 %v3472, %v3788
      %v3863 = vadd.f32 %v3473, %v3793
      %v3864 = vadd.f32 %v3474, %v3798
      %v3865 = vadd.f32 %v3475, %v3803
      %v3866 = vadd.f32 %v3476, %v3808
      %v3867 = vadd.f32 %v3477, %v3813
      %v3868 = vadd.f32 %v3478, %v3818
      %v3869 = vadd.f32 %v3479, %v3823
      %v3870 = vadd.f32 %v3480, %v3828
      %v3871 = vadd.f32 %v3481, %v3833
      %v3872 = vadd.f32 %v3482, %v3838
      %3873 = vst.msk [vmem:[%s204] sm:$0xff] %vm347, %v3841
      %3874 = vst.msk [vmem:[%s204 + $0x8] sm:$0xff] %vm347, %v3842
      %3875 = vst.msk [vmem:[%s204 + $0x10] sm:$0xff] %vm347, %v3843
      %3876 = vst.msk [vmem:[%s204 + $0x18] sm:$0xff] %vm347, %v3844
      %3877 = vst.msk [vmem:[%s204 + $0x20] sm:$0xff] %vm347, %v3845
      %3878 = vst.msk [vmem:[%s204 + $0x28] sm:$0xff] %vm347, %v3846
      %3879 = vst.msk [vmem:[%s204 + $0x30] sm:$0xff] %vm347, %v3847
      %3880 = vst.msk [vmem:[%s204 + $0x38] sm:$0xff] %vm347, %v3848
      %3881 = vst.msk [vmem:[%s204 + $0x40] sm:$0xff] %vm347, %v3849
      %3882 = vst.msk [vmem:[%s204 + $0x48] sm:$0xff] %vm347, %v3850
      %3883 = vst.msk [vmem:[%s204 + $0x50] sm:$0xff] %vm347, %v3851
      %3884 = vst.msk [vmem:[%s204 + $0x58] sm:$0xff] %vm347, %v3852
      %3885 = vst.msk [vmem:[%s204 + $0x60] sm:$0xff] %vm347, %v3853
      %3886 = vst.msk [vmem:[%s204 + $0x68] sm:$0xff] %vm347, %v3854
      %3887 = vst.msk [vmem:[%s204 + $0x70] sm:$0xff] %vm347, %v3855
      %3888 = vst.msk [vmem:[%s204 + $0x78] sm:$0xff] %vm347, %v3856
      %3889 = vst.msk [vmem:[%s204 + $0x80] sm:$0xff] %vm347, %v3857
      %3890 = vst.msk [vmem:[%s204 + $0x88] sm:$0xff] %vm347, %v3858
      %3891 = vst.msk [vmem:[%s204 + $0x90] sm:$0xff] %vm347, %v3859
      %3892 = vst.msk [vmem:[%s204 + $0x98] sm:$0xff] %vm347, %v3860
      %3893 = vst.msk [vmem:[%s204 + $0xa0] sm:$0xff] %vm347, %v3861
      %3894 = vst.msk [vmem:[%s204 + $0xa8] sm:$0xff] %vm347, %v3862
      %3895 = vst.msk [vmem:[%s204 + $0xb0] sm:$0xff] %vm347, %v3863
      %3896 = vst.msk [vmem:[%s204 + $0xb8] sm:$0xff] %vm347, %v3864
      %3897 = vst.msk [vmem:[%s204 + $0xc0] sm:$0xff] %vm347, %v3865
      %3898 = vst.msk [vmem:[%s204 + $0xc8] sm:$0xff] %vm347, %v3866
      %3899 = vst.msk [vmem:[%s204 + $0xd0] sm:$0xff] %vm347, %v3867
      %3900 = vst.msk [vmem:[%s204 + $0xd8] sm:$0xff] %vm347, %v3868
      %3901 = vst.msk [vmem:[%s204 + $0xe0] sm:$0xff] %vm347, %v3869
      %3902 = vst.msk [vmem:[%s204 + $0xe8] sm:$0xff] %vm347, %v3870
      %3903 = vst.msk [vmem:[%s204 + $0xf0] sm:$0xff] %vm347, %v3871
      %3904 = vst.msk [vmem:[%s204 + $0xf8] sm:$0xff] %vm347, %v3872
      %v3905 = vsel %vm347, %v3841, 0.0
      %v3906 = vsel %vm347, %v3842, 0.0
      %v3907 = vadd.f32 %v3905, %v3906
      %v3908 = vsel %vm347, %v3843, 0.0
      %v3909 = vadd.f32 %v3907, %v3908
      %v3910 = vsel %vm347, %v3844, 0.0
      %v3911 = vadd.f32 %v3909, %v3910
      %v3912 = vsel %vm347, %v3845, 0.0
      %v3913 = vadd.f32 %v3911, %v3912
      %v3914 = vsel %vm347, %v3846, 0.0
      %v3915 = vadd.f32 %v3913, %v3914
      %v3916 = vsel %vm347, %v3847, 0.0
      %v3917 = vadd.f32 %v3915, %v3916
      %v3918 = vsel %vm347, %v3848, 0.0
      %v3919 = vadd.f32 %v3917, %v3918
      %v3920 = vsel %vm347, %v3849, 0.0
      %v3921 = vadd.f32 %v3919, %v3920
      %v3922 = vsel %vm347, %v3850, 0.0
      %v3923 = vadd.f32 %v3921, %v3922
      %v3924 = vsel %vm347, %v3851, 0.0
      %v3925 = vadd.f32 %v3923, %v3924
      %v3926 = vsel %vm347, %v3852, 0.0
      %v3927 = vadd.f32 %v3925, %v3926
      %v3928 = vsel %vm347, %v3853, 0.0
      %v3929 = vadd.f32 %v3927, %v3928
      %v3930 = vsel %vm347, %v3854, 0.0
      %v3931 = vadd.f32 %v3929, %v3930
      %v3932 = vsel %vm347, %v3855, 0.0
      %v3933 = vadd.f32 %v3931, %v3932
      %v3934 = vsel %vm347, %v3856, 0.0
      %v3935 = vadd.f32 %v3933, %v3934
      %v3936 = vsel %vm347, %v3857, 0.0
      %v3937 = vadd.f32 %v3935, %v3936
      %v3938 = vsel %vm347, %v3858, 0.0
      %v3939 = vadd.f32 %v3937, %v3938
      %v3940 = vsel %vm347, %v3859, 0.0
      %v3941 = vadd.f32 %v3939, %v3940
      %v3942 = vsel %vm347, %v3860, 0.0
      %v3943 = vadd.f32 %v3941, %v3942
      %v3944 = vsel %vm347, %v3861, 0.0
      %v3945 = vadd.f32 %v3943, %v3944
      %v3946 = vsel %vm347, %v3862, 0.0
      %v3947 = vadd.f32 %v3945, %v3946
      %v3948 = vsel %vm347, %v3863, 0.0
      %v3949 = vadd.f32 %v3947, %v3948
      %v3950 = vsel %vm347, %v3864, 0.0
      %v3951 = vadd.f32 %v3949, %v3950
      %v3952 = vsel %vm347, %v3865, 0.0
      %v3953 = vadd.f32 %v3951, %v3952
      %v3954 = vsel %vm347, %v3866, 0.0
      %v3955 = vadd.f32 %v3953, %v3954
      %v3956 = vsel %vm347, %v3867, 0.0
      %v3957 = vadd.f32 %v3955, %v3956
      %v3958 = vsel %vm347, %v3868, 0.0
      %v3959 = vadd.f32 %v3957, %v3958
      %v3960 = vsel %vm347, %v3869, 0.0
      %v3961 = vadd.f32 %v3959, %v3960
      %v3962 = vsel %vm347, %v3870, 0.0
      %v3963 = vadd.f32 %v3961, %v3962
      %v3964 = vsel %vm347, %v3871, 0.0
      %v3965 = vadd.f32 %v3963, %v3964
      %v3966 = vsel %vm347, %v3872, 0.0
      %v3967 = vadd.f32 %v3965, %v3966
      %v3968 = vrot.slane %v3967, 4
      %v3969 = vadd.f32 %v3967, %v3968
      %v3970 = vrot.slane %v3969, 2
      %v3971 = vadd.f32 %v3969, %v3970
      %v3972 = vrot.slane %v3971, 1
      %v3973 = vadd.f32 %v3971, %v3972
      %3974 = vst.msk [vmem:[%s208] sm:$0x1] %vm356, %v3973
      %v3975 = vmul.f32 %v3841, %v3841
      %v3976 = vmul.f32 %v3842, %v3842
      %v3977 = vmul.f32 %v3843, %v3843
      %v3978 = vmul.f32 %v3844, %v3844
      %v3979 = vmul.f32 %v3845, %v3845
      %v3980 = vmul.f32 %v3846, %v3846
      %v3981 = vmul.f32 %v3847, %v3847
      %v3982 = vmul.f32 %v3848, %v3848
      %v3983 = vmul.f32 %v3849, %v3849
      %v3984 = vmul.f32 %v3850, %v3850
      %v3985 = vmul.f32 %v3851, %v3851
      %v3986 = vmul.f32 %v3852, %v3852
      %v3987 = vmul.f32 %v3853, %v3853
      %v3988 = vmul.f32 %v3854, %v3854
      %v3989 = vmul.f32 %v3855, %v3855
      %v3990 = vmul.f32 %v3856, %v3856
      %v3991 = vmul.f32 %v3857, %v3857
      %v3992 = vmul.f32 %v3858, %v3858
      %v3993 = vmul.f32 %v3859, %v3859
      %v3994 = vmul.f32 %v3860, %v3860
      %v3995 = vmul.f32 %v3861, %v3861
      %v3996 = vmul.f32 %v3862, %v3862
      %v3997 = vmul.f32 %v3863, %v3863
      %v3998 = vmul.f32 %v3864, %v3864
      %v3999 = vmul.f32 %v3865, %v3865
      %v4000 = vmul.f32 %v3866, %v3866
      %v4001 = vmul.f32 %v3867, %v3867
      %v4002 = vmul.f32 %v3868, %v3868
      %v4003 = vmul.f32 %v3869, %v3869
      %v4004 = vmul.f32 %v3870, %v3870
      %v4005 = vmul.f32 %v3871, %v3871
      %v4006 = vmul.f32 %v3872, %v3872
      %v4007 = vsel %vm347, %v3975, 0.0
      %v4008 = vsel %vm347, %v3976, 0.0
      %v4009 = vadd.f32 %v4007, %v4008
      %v4010 = vsel %vm347, %v3977, 0.0
      %v4011 = vadd.f32 %v4009, %v4010
      %v4012 = vsel %vm347, %v3978, 0.0
      %v4013 = vadd.f32 %v4011, %v4012
      %v4014 = vsel %vm347, %v3979, 0.0
      %v4015 = vadd.f32 %v4013, %v4014
      %v4016 = vsel %vm347, %v3980, 0.0
      %v4017 = vadd.f32 %v4015, %v4016
      %v4018 = vsel %vm347, %v3981, 0.0
      %v4019 = vadd.f32 %v4017, %v4018
      %v4020 = vsel %vm347, %v3982, 0.0
      %v4021 = vadd.f32 %v4019, %v4020
      %v4022 = vsel %vm347, %v3983, 0.0
      %v4023 = vadd.f32 %v4021, %v4022
      %v4024 = vsel %vm347, %v3984, 0.0
      %v4025 = vadd.f32 %v4023, %v4024
      %v4026 = vsel %vm347, %v3985, 0.0
      %v4027 = vadd.f32 %v4025, %v4026
      %v4028 = vsel %vm347, %v3986, 0.0
      %v4029 = vadd.f32 %v4027, %v4028
      %v4030 = vsel %vm347, %v3987, 0.0
      %v4031 = vadd.f32 %v4029, %v4030
      %v4032 = vsel %vm347, %v3988, 0.0
      %v4033 = vadd.f32 %v4031, %v4032
      %v4034 = vsel %vm347, %v3989, 0.0
      %v4035 = vadd.f32 %v4033, %v4034
      %v4036 = vsel %vm347, %v3990, 0.0
      %v4037 = vadd.f32 %v4035, %v4036
      %v4038 = vsel %vm347, %v3991, 0.0
      %v4039 = vadd.f32 %v4037, %v4038
      %v4040 = vsel %vm347, %v3992, 0.0
      %v4041 = vadd.f32 %v4039, %v4040
      %v4042 = vsel %vm347, %v3993, 0.0
      %v4043 = vadd.f32 %v4041, %v4042
      %v4044 = vsel %vm347, %v3994, 0.0
      %v4045 = vadd.f32 %v4043, %v4044
      %v4046 = vsel %vm347, %v3995, 0.0
      %v4047 = vadd.f32 %v4045, %v4046
      %v4048 = vsel %vm347, %v3996, 0.0
      %v4049 = vadd.f32 %v4047, %v4048
      %v4050 = vsel %vm347, %v3997, 0.0
      %v4051 = vadd.f32 %v4049, %v4050
      %v4052 = vsel %vm347, %v3998, 0.0
      %v4053 = vadd.f32 %v4051, %v4052
      %v4054 = vsel %vm347, %v3999, 0.0
      %v4055 = vadd.f32 %v4053, %v4054
      %v4056 = vsel %vm347, %v4000, 0.0
      %v4057 = vadd.f32 %v4055, %v4056
      %v4058 = vsel %vm347, %v4001, 0.0
      %v4059 = vadd.f32 %v4057, %v4058
      %v4060 = vsel %vm347, %v4002, 0.0
      %v4061 = vadd.f32 %v4059, %v4060
      %v4062 = vsel %vm347, %v4003, 0.0
      %v4063 = vadd.f32 %v4061, %v4062
      %v4064 = vsel %vm347, %v4004, 0.0
      %v4065 = vadd.f32 %v4063, %v4064
      %v4066 = vsel %vm347, %v4005, 0.0
      %v4067 = vadd.f32 %v4065, %v4066
      %v4068 = vsel %vm347, %v4006, 0.0
      %v4069 = vadd.f32 %v4067, %v4068
      %v4070 = vrot.slane %v4069, 4
      %v4071 = vadd.f32 %v4069, %v4070
      %v4072 = vrot.slane %v4071, 2
      %v4073 = vadd.f32 %v4071, %v4072
      %v4074 = vrot.slane %v4073, 1
      %v4075 = vadd.f32 %v4073, %v4074
      %4076 = vst.msk [vmem:[%s208 + $0x1] sm:$0x1] %vm356, %v4075
      %p4077 = scmp.lt.s32.totalorder %s16, 1
      %s4078 = scalar_select %p4077, %s16, 1
      %s4079 = smul.addr %s4078, 32
      %s4080 = smul.addr %s4079, 8
      %s4081 = scalar_lea.vmem %s3, %s4080
      %p4082 = scmp.lt.s32.totalorder %s16, 1
      %s4083 = scalar_select %p4082, %s16, 1
      %s4084 = smul.addr %s4083, 2
      %s4085 = scalar_lea.vmem %s4, %s4084
      // Predicated region
      $region33: #{residual_block.4} parent=31 // pred_check
        %p4086 = pneg %p102
      $region34: #{residual_block.4} parent=31 // pred_check_branch
        %4088 = sbr.rel (%p4086) target = $region36
      $region35: #{residual_block.4} parent=31 // pred_region
        _
      $region36: #{residual_block.4} parent=31 // pred_fallthru
        _
      // Predicated region
      $region37: #{residual_block.4} parent=31 // pred_check
        %p4089 = pneg %p128
      $region38: #{residual_block.4} parent=31 // pred_check_branch
        %4091 = sbr.rel (%p4089) target = $region40
      $region39: #{residual_block.4} parent=31 // pred_region
        _
      $region40: #{residual_block.4} parent=31 // pred_fallthru
        _
    $region32: #{residual_block.4} parent=5 // pred_fallthru
      _
    %p4092 = scmp.le.s32.totalorder 2, %s11
    // Predicated region
    $region41: #{residual_block.4} parent=5 // pred_check
      %p4093 = pneg %p4092
    $region42: #{residual_block.4} parent=5 // pred_check_branch
      %4095 = sbr.rel (%p4093) target = $region44
    $region43: #{residual_block.4} parent=5 // pred_region
      %s4096 = ssub.s32 %s11, 2
      // Predicated region
      $region45: #{residual_block.4} parent=43 // pred_check
        %p4097 = pneg %p108
      $region46: #{residual_block.4} parent=43 // pred_check_branch
        %4099 = sbr.rel (%p4097) target = $region48
      $region47: #{residual_block.4} parent=43 // pred_region
        %p4100 = scmp.lt.s32.totalorder %s17, 1
        %s4101 = scalar_select %p4100, %s17, 1
        %s4102 = smul.addr %s4101, 32
        %s4103 = smul.addr %s4102, 8
        %s4104 = scalar_lea.vmem %s3, %s4103
      $region48: #{residual_block.4} parent=43 // pred_fallthru
        _
      // Predicated region
      $region49: #{residual_block.4} parent=43 // pred_check
        %p4105 = pneg %p134
      $region50: #{residual_block.4} parent=43 // pred_check_branch
        %4107 = sbr.rel (%p4105) target = $region52
      $region51: #{residual_block.4} parent=43 // pred_region
        %p4108 = scmp.lt.s32.totalorder %s17, 1
        %s4109 = scalar_select %p4108, %s17, 1
        %s4110 = smul.addr %s4109, 2
        %s4111 = scalar_lea.vmem %s4, %s4110
      $region52: #{residual_block.4} parent=43 // pred_fallthru
        _
    $region44: #{residual_block.4} parent=5 // pred_fallthru
      _
  $region6: #{residual_block.4} parent=0 // loop_footer
    %s15 = sadd.s32 1, %s11
  $region7: #{residual_block.4} parent=0 // loop_footer_branch
    %10 = sbr.rel target = $region3
  $region8: #{residual_block.4} parent=0 // loop_exit
    _

</llo_original>
